<compile_context>
chip_gen: v7x
topology: tpu7x:2x2x1
jax: 0.10.0
libtpu: 0.0.40
codegen_flags: <defaults>
</compile_context>

<pallas_src>
import functools
import numpy as np
import jax
import jax.numpy as jnp
from jax.experimental import pallas as pl
from jax.experimental.pallas import tpu as pltpu


# ----------------------------------------------------------------------------
# Pallas kernel: fused matmul + bias + activation
# ----------------------------------------------------------------------------
def _matmul_bias_act_kernel(a_ref, w_ref, bias_ref, o_ref, *, act):
    r = jnp.dot(a_ref[...], w_ref[...], preferred_element_type=jnp.float32)
    r = r + bias_ref[...]                     # (1, Np) broadcasts over rows
    if act == "relu":
        r = jnp.maximum(r, 0.0)
    elif act == "sigmoid":
        r = jax.nn.sigmoid(r)
    o_ref[...] = r.astype(o_ref.dtype)


def _round_up(x, m):
    return (x + m - 1) // m * m


def matmul_bias_act(a, w, bias, act="none"):
    """a: (M, K), w: (K, N), bias: (N,) -> (M, N) f32.

    Full-K / full-N blocks (single-pass, no accumulator); M tiled at 256 only
    when large.  A and W are fed to the MXU as bf16; epilogue stays f32.
    """
    M, K = a.shape
    K2, N = w.shape
    assert K == K2

    a = a.astype(jnp.bfloat16)
    w = w.astype(jnp.bfloat16)
    bias = bias.astype(jnp.float32)

    # Pad only the (small) weight / bias along N up to a lane multiple so the
    # output stays lane-dense (unmasked vst).  Activations are never padded
    # along K or N.
    Np = _round_up(N, 128)
    if Np != N:
        w = jnp.pad(w, ((0, 0), (0, Np - N)))
        bias = jnp.pad(bias, (0, Np - N))
    bias2d = bias.reshape(1, Np)

    # M: one full-extent block when small (block == full dim is legal even if
    # not 8-aligned); otherwise 256-row tiles on a "parallel" grid axis.
    if M <= 256:
        tm, Mp = M, M
    else:
        tm = 256
        Mp = _round_up(M, tm)
        if Mp != M:
            a = jnp.pad(a, ((0, Mp - M), (0, 0)))

    out = pl.pallas_call(
        functools.partial(_matmul_bias_act_kernel, act=act),
        out_shape=jax.ShapeDtypeStruct((Mp, Np), jnp.float32),
        grid_spec=pltpu.PrefetchScalarGridSpec(
            num_scalar_prefetch=0,
            grid=(Mp // tm,),
            in_specs=[
                pl.BlockSpec((tm, K), lambda i: (i, 0)),
                pl.BlockSpec((K, Np), lambda i: (0, 0)),
                pl.BlockSpec((1, Np), lambda i: (0, 0)),
            ],
            out_specs=pl.BlockSpec((tm, Np), lambda i: (i, 0)),
        ),
        compiler_params=pltpu.CompilerParams(
            dimension_semantics=("parallel",)),
    )(a, w, bias2d)

    if Mp != M or Np != N:
        out = out[:M, :N]
    return out


# ----------------------------------------------------------------------------
# NHWC im2col + conv / deconv lowerings (pure slicing/reshape glue in JAX)
# ----------------------------------------------------------------------------
def _im2col_nhwc(x, kh, kw, stride, pad):
    """x: (B, H, W, C) -> patches (B*Hout*Wout, kh*kw*C), Hout, Wout.
    Patch column order is (ki, kj, c)."""
    if pad > 0:
        x = jnp.pad(x, ((0, 0), (pad, pad), (pad, pad), (0, 0)))
    B, H, W, C = x.shape
    Hout = (H - kh) // stride + 1
    Wout = (W - kw) // stride + 1
    cols = []
    for ki in range(kh):
        for kj in range(kw):
            cols.append(x[:, ki:ki + stride * Hout:stride,
                          kj:kj + stride * Wout:stride, :])   # (B,Hout,Wout,C)
    cols = jnp.stack(cols, axis=3)               # (B, Hout, Wout, kh*kw, C)
    return cols.reshape(B * Hout * Wout, kh * kw * C), Hout, Wout


def conv2d_nhwc(x, w, b, stride, pad, act):
    """PyTorch Conv2d semantics on NHWC activations. w: (Cout, Cin, kh, kw)."""
    B = x.shape[0]
    Cout, Cin, kh, kw = w.shape
    patches, Hout, Wout = _im2col_nhwc(x, kh, kw, stride, pad)
    w_mat = jnp.transpose(w, (2, 3, 1, 0)).reshape(kh * kw * Cin, Cout)
    out = matmul_bias_act(patches, w_mat, b, act)       # (B*Hout*Wout, Cout)
    return out.reshape(B, Hout, Wout, Cout)             # stays NHWC


def conv_transpose2d_from1x1_nhwc(x, w, b, act):
    """ConvTranspose2d(stride=1, pad=0) on a 1x1 spatial map == plain linear.
    x: (B, Cin) or (B, 1, 1, Cin); w: (Cin, Cout, kh, kw)."""
    Cin, Cout, kh, kw = w.shape
    B = x.shape[0]
    x2 = x.reshape(B, Cin)
    # out[b, ky, kx, co] = bias[co] + sum_ci x[b, ci] * w[ci, co, ky, kx]
    w_mat = jnp.transpose(w, (0, 2, 3, 1)).reshape(Cin, kh * kw * Cout)
    b_mat = jnp.tile(b, kh * kw)
    out = matmul_bias_act(x2, w_mat, b_mat, act)        # (B, kh*kw*Cout)
    return out.reshape(B, kh, kw, Cout)


def conv_transpose2d_s2_nhwc(x, w, b, act):
    """ConvTranspose2d(k=4, stride=2, pad=1), NHWC, zero-free phase form.

    out[2q+ry, 2p+rx, co] = sum_{a,bb in {0,1}, ci}
        xp[q+ry+a, p+rx+bb, ci] * w[ci, co, 3-ry-2a, 3-rx-2bb]
    with xp = x zero-padded by 1 on each spatial side.  All four phases are
    computed with ONE 2x2/stride-1 im2col and ONE matmul of width 4*Cout.
    """
    B, H, W, Cin = x.shape
    Cin2, Cout, kh, kw = w.shape
    assert (Cin2, kh, kw) == (Cin, 4, 4)

    xp = jnp.pad(x, ((0, 0), (1, 1), (1, 1), (0, 0)))          # (B, H+2, W+2, C)
    patches, _, _ = _im2col_nhwc(xp, 2, 2, stride=1, pad=0)    # (B*(H+1)*(W+1), 4*Cin)

    # Weight matrix: rows (a, bb, cin), columns (phase = 2*ry+rx, cout).
    blocks = []
    for a in range(2):
        for bb in range(2):
            cols = []
            for ry in range(2):
                for rx in range(2):
                    cols.append(w[:, :, 3 - ry - 2 * a, 3 - rx - 2 * bb])  # (Cin,Cout)
            blocks.append(jnp.stack(cols, axis=1).reshape(Cin, 4 * Cout))
    w_mat = jnp.concatenate(blocks, axis=0)                    # (4*Cin, 4*Cout)
    bias = jnp.tile(b, 4)                                      # bias[phase*Cout+co] = b[co]

    out = matmul_bias_act(patches, w_mat, bias, act)           # (B*(H+1)*(W+1), 4*Cout)
    out = out.reshape(B, H + 1, W + 1, 2, 2, Cout)             # (..., ry, rx, Cout)

    # Select each phase's valid window and interleave -> (B, 2H, 2W, Cout).
    o00 = out[:, 0:H,     0:W,     0, 0, :]
    o01 = out[:, 0:H,     1:W + 1, 0, 1, :]
    o10 = out[:, 1:H + 1, 0:W,     1, 0, :]
    o11 = out[:, 1:H + 1, 1:W + 1, 1, 1, :]
    row0 = jnp.stack([o00, o01], axis=3)                       # (B, H, W, rx, C)
    row1 = jnp.stack([o10, o11], axis=3)
    y = jnp.stack([row0, row1], axis=2)                        # (B, H, ry, W, rx, C)
    return y.reshape(B, 2 * H, 2 * W, Cout)


def linear(x, w, b, act):
    """x: (B, in), w: (out, in) PyTorch layout."""
    return matmul_bias_act(x, w.T, b, act)


# ----------------------------------------------------------------------------
# VAE forward
# ----------------------------------------------------------------------------
Z_DIM = 32
HIDDEN = 256


def init_params(key):
    def u(k, shape, fan_in):
        bound = 1.0 / np.sqrt(fan_in)
        return jax.random.uniform(k, shape, jnp.float32, -bound, bound)

    keys = jax.random.split(key, 40)
    ki = iter(keys)
    p = {}
    # encoder convs: (Cout, Cin, 4, 4)
    enc_cfg = [(32, 3), (32, 32), (64, 32), (128, 64), (HIDDEN, 128)]
    for idx, (co, ci) in enumerate(enc_cfg):
        fan = ci * 16
        p[f"enc_conv{idx}_w"] = u(next(ki), (co, ci, 4, 4), fan)
        p[f"enc_conv{idx}_b"] = u(next(ki), (co,), fan)
    p["enc_fc_w"] = u(next(ki), (2 * Z_DIM, HIDDEN), HIDDEN)
    p["enc_fc_b"] = u(next(ki), (2 * Z_DIM,), HIDDEN)
    # decoder
    p["dec_fc_w"] = u(next(ki), (HIDDEN, Z_DIM), Z_DIM)
    p["dec_fc_b"] = u(next(ki), (HIDDEN,), Z_DIM)
    # deconvs: (Cin, Cout, 4, 4)
    dec_cfg = [(HIDDEN, 128), (128, 64), (64, 32), (32, 32), (32, 3)]
    for idx, (ci, co) in enumerate(dec_cfg):
        fan = ci * 16
        p[f"dec_conv{idx}_w"] = u(next(ki), (ci, co, 4, 4), fan)
        p[f"dec_conv{idx}_b"] = u(next(ki), (co,), fan)
    return p


def encoder(p, x_nhwc):
    h = conv2d_nhwc(x_nhwc, p["enc_conv0_w"], p["enc_conv0_b"], 2, 1, "relu")  # 32x32
    h = conv2d_nhwc(h, p["enc_conv1_w"], p["enc_conv1_b"], 2, 1, "relu")       # 16x16
    h = conv2d_nhwc(h, p["enc_conv2_w"], p["enc_conv2_b"], 2, 1, "relu")       # 8x8
    h = conv2d_nhwc(h, p["enc_conv3_w"], p["enc_conv3_b"], 2, 1, "relu")       # 4x4
    h = conv2d_nhwc(h, p["enc_conv4_w"], p["enc_conv4_b"], 1, 0, "relu")       # 1x1
    h = h.reshape(h.shape[0], HIDDEN)                                          # View
    h = linear(h, p["enc_fc_w"], p["enc_fc_b"], "none")                        # (B, 2z)
    return h[:, :Z_DIM], h[:, Z_DIM:]


def decoder(p, z):
    h = linear(z, p["dec_fc_w"], p["dec_fc_b"], "relu")                            # (B,256)
    h = conv_transpose2d_from1x1_nhwc(h, p["dec_conv0_w"], p["dec_conv0_b"], "relu")   # 4x4
    h = conv_transpose2d_s2_nhwc(h, p["dec_conv1_w"], p["dec_conv1_b"], "relu")        # 8x8
    h = conv_transpose2d_s2_nhwc(h, p["dec_conv2_w"], p["dec_conv2_b"], "relu")        # 16
    h = conv_transpose2d_s2_nhwc(h, p["dec_conv3_w"], p["dec_conv3_b"], "relu")        # 32
    h = conv_transpose2d_s2_nhwc(h, p["dec_conv4_w"], p["dec_conv4_b"], "sigmoid")     # 64
    return h                                                                       # NHWC


@jax.jit
def vae_forward(p, x_nchw, eps):
    x = jnp.transpose(x_nchw, (0, 2, 3, 1))          # NCHW -> NHWC once
    mean, log_var = encoder(p, x)
    # Reparameterization on (B, Z_DIM): kept in plain jnp — a dedicated Pallas
    # launch for 64 elements is pure overhead (masked 32-wide stores + DMA).
    z = mean + jnp.exp(0.5 * log_var) * eps
    hat_x = decoder(p, z)
    return jnp.transpose(hat_x, (0, 3, 1, 2)), mean, log_var   # back to NCHW


# ----------------------------------------------------------------------------
if __name__ == "__main__":
    key = jax.random.PRNGKey(0)
    k_param, k_x, k_eps = jax.random.split(key, 3)

    params = init_params(k_param)
    # encoder topology requires 64x64 spatial input (5 convs -> 1x1)
    x = jax.random.normal(k_x, (2, 3, 64, 64), jnp.float32)
    eps = jax.random.normal(k_eps, (2, Z_DIM), jnp.float32)  # deterministic randn stand-in

    hat_x, mean, log_var = vae_forward(params, x, eps)
    jax.block_until_ready((hat_x, mean, log_var))

    assert hat_x.shape == (2, 3, 64, 64)
    assert mean.shape == (2, Z_DIM)
    assert log_var.shape == (2, Z_DIM)
    assert bool(jnp.all(jnp.isfinite(hat_x)))
    assert bool(jnp.all((hat_x >= 0.0) & (hat_x <= 1.0)))
    print("KERNEL_OK")
</pallas_src>

<mosaic_0001>
module attributes {stable_mosaic.version = 11 : i64} {
  func.func @_matmul_bias_act_kernel(%arg0: i32, %arg1: memref<256x48xbf16, #tpu.memory_space<vmem>>, %arg2: memref<48x128xbf16, #tpu.memory_space<vmem>>, %arg3: memref<1x128xf32, #tpu.memory_space<vmem>>, %arg4: memref<256x128xf32, #tpu.memory_space<vmem>>) attributes {dimension_semantics = [#tpu.dimension_semantics<parallel>], iteration_bounds = array<i64: 8>, scalar_prefetch = 0 : i64, scratch_operands = 0 : i64, tpu.core_type = #tpu.core_type<tc>, window_params = [{transform_indices = @transform_0, window_bounds = array<i64: 256, 48>}, {pipeline_mode = #tpu.pipeline_mode<synchronous>, transform_indices = @transform_1, window_bounds = array<i64: 48, 128>}, {pipeline_mode = #tpu.pipeline_mode<synchronous>, transform_indices = @transform_2, window_bounds = array<i64: 1, 128>}, {transform_indices = @transform_3, window_bounds = array<i64: 256, 128>}]} {
    %c0 = arith.constant 0 : index
    %c0_0 = arith.constant 0 : index
    %0 = vector.load %arg1[%c0, %c0_0] : memref<256x48xbf16, #tpu.memory_space<vmem>>, vector<256x48xbf16>
    %c0_1 = arith.constant 0 : index
    %c0_2 = arith.constant 0 : index
    %1 = vector.load %arg2[%c0_1, %c0_2] : memref<48x128xbf16, #tpu.memory_space<vmem>>, vector<48x128xbf16>
    %cst = arith.constant dense<0.000000e+00> : vector<256x128xf32>
    %2 = tpu.matmul %0, %1, %cst {dimension_numbers = #tpu.dot_dimension_numbers<[1], [0], [0], [1], [0, 0, 1, 1], [], []>} : vector<256x48xbf16>, vector<48x128xbf16>, vector<256x128xf32> -> vector<256x128xf32>
    %c0_3 = arith.constant 0 : index
    %c0_4 = arith.constant 0 : index
    %3 = vector.load %arg3[%c0_3, %c0_4] : memref<1x128xf32, #tpu.memory_space<vmem>>, vector<1x128xf32>
    %4 = vector.broadcast %3 : vector<1x128xf32> to vector<256x128xf32>
    %5 = arith.addf %2, %4 : vector<256x128xf32>
    %cst_5 = arith.constant 0.000000e+00 : f32
    %6 = vector.broadcast %cst_5 : f32 to vector<256x128xf32>
    %7 = arith.maximumf %5, %6 : vector<256x128xf32>
    %c0_6 = arith.constant 0 : index
    %c0_7 = arith.constant 0 : index
    %8 = vector.load %arg4[%c0_6, %c0_7] : memref<256x128xf32, #tpu.memory_space<vmem>>, vector<256x128xf32>
    tpu.vector_store %arg4[%c0_6, %c0_7], %7 {strides = array<i32>} : memref<256x128xf32, #tpu.memory_space<vmem>>, vector<256x128xf32>,
    return
  }
  func.func @transform_0(%arg0: i32) -> (i32, i32) {
    %c0_i32 = arith.constant 0 : i32
    %c0_i32_0 = arith.constant 0 : i32
    return %arg0, %c0_i32 : i32, i32
  }
  func.func @transform_1(%arg0: i32) -> (i32, i32) {
    %c0_i32 = arith.constant 0 : i32
    %c0_i32_0 = arith.constant 0 : i32
    %c0_i32_1 = arith.constant 0 : i32
    return %c0_i32, %c0_i32_0 : i32, i32
  }
  func.func @transform_2(%arg0: i32) -> (i32, i32) {
    %c0_i32 = arith.constant 0 : i32
    %c0_i32_0 = arith.constant 0 : i32
    %c0_i32_1 = arith.constant 0 : i32
    return %c0_i32, %c0_i32_0 : i32, i32
  }
  func.func @transform_3(%arg0: i32) -> (i32, i32) {
    %c0_i32 = arith.constant 0 : i32
    %c0_i32_0 = arith.constant 0 : i32
    return %arg0, %c0_i32 : i32, i32
  }
}

module attributes {stable_mosaic.version = 11 : i64} {
  func.func @_matmul_bias_act_kernel(%arg0: i32, %arg1: memref<256x512xbf16, #tpu.memory_space<vmem>>, %arg2: memref<512x128xbf16, #tpu.memory_space<vmem>>, %arg3: memref<1x128xf32, #tpu.memory_space<vmem>>, %arg4: memref<256x128xf32, #tpu.memory_space<vmem>>) attributes {dimension_semantics = [#tpu.dimension_semantics<parallel>], iteration_bounds = array<i64: 2>, scalar_prefetch = 0 : i64, scratch_operands = 0 : i64, tpu.core_type = #tpu.core_type<tc>, window_params = [{transform_indices = @transform_0, window_bounds = array<i64: 256, 512>}, {pipeline_mode = #tpu.pipeline_mode<synchronous>, transform_indices = @transform_1, window_bounds = array<i64: 512, 128>}, {pipeline_mode = #tpu.pipeline_mode<synchronous>, transform_indices = @transform_2, window_bounds = array<i64: 1, 128>}, {transform_indices = @transform_3, window_bounds = array<i64: 256, 128>}]} {
    %c0 = arith.constant 0 : index
    %c0_0 = arith.constant 0 : index
    %0 = vector.load %arg1[%c0, %c0_0] : memref<256x512xbf16, #tpu.memory_space<vmem>>, vector<256x512xbf16>
    %c0_1 = arith.constant 0 : index
    %c0_2 = arith.constant 0 : index
    %1 = vector.load %arg2[%c0_1, %c0_2] : memref<512x128xbf16, #tpu.memory_space<vmem>>, vector<512x128xbf16>
    %cst = arith.constant dense<0.000000e+00> : vector<256x128xf32>
    %2 = tpu.matmul %0, %1, %cst {dimension_numbers = #tpu.dot_dimension_numbers<[1], [0], [0], [1], [0, 0, 1, 1], [], []>} : vector<256x512xbf16>, vector<512x128xbf16>, vector<256x128xf32> -> vector<256x128xf32>
    %c0_3 = arith.constant 0 : index
    %c0_4 = arith.constant 0 : index
    %3 = vector.load %arg3[%c0_3, %c0_4] : memref<1x128xf32, #tpu.memory_space<vmem>>, vector<1x128xf32>
    %4 = vector.broadcast %3 : vector<1x128xf32> to vector<256x128xf32>
    %5 = arith.addf %2, %4 : vector<256x128xf32>
    %cst_5 = arith.constant 0.000000e+00 : f32
    %6 = vector.broadcast %cst_5 : f32 to vector<256x128xf32>
    %7 = arith.maximumf %5, %6 : vector<256x128xf32>
    %c0_6 = arith.constant 0 : index
    %c0_7 = arith.constant 0 : index
    %8 = vector.load %arg4[%c0_6, %c0_7] : memref<256x128xf32, #tpu.memory_space<vmem>>, vector<256x128xf32>
    tpu.vector_store %arg4[%c0_6, %c0_7], %7 {strides = array<i32>} : memref<256x128xf32, #tpu.memory_space<vmem>>, vector<256x128xf32>,
    return
  }
  func.func @transform_0(%arg0: i32) -> (i32, i32) {
    %c0_i32 = arith.constant 0 : i32
    %c0_i32_0 = arith.constant 0 : i32
    return %arg0, %c0_i32 : i32, i32
  }
  func.func @transform_1(%arg0: i32) -> (i32, i32) {
    %c0_i32 = arith.constant 0 : i32
    %c0_i32_0 = arith.constant 0 : i32
    %c0_i32_1 = arith.constant 0 : i32
    return %c0_i32, %c0_i32_0 : i32, i32
  }
  func.func @transform_2(%arg0: i32) -> (i32, i32) {
    %c0_i32 = arith.constant 0 : i32
    %c0_i32_0 = arith.constant 0 : i32
    %c0_i32_1 = arith.constant 0 : i32
    return %c0_i32, %c0_i32_0 : i32, i32
  }
  func.func @transform_3(%arg0: i32) -> (i32, i32) {
    %c0_i32 = arith.constant 0 : i32
    %c0_i32_0 = arith.constant 0 : i32
    return %arg0, %c0_i32 : i32, i32
  }
}

module attributes {stable_mosaic.version = 11 : i64} {
  func.func @_matmul_bias_act_kernel(%arg0: i32, %arg1: memref<128x512xbf16, #tpu.memory_space<vmem>>, %arg2: memref<512x128xbf16, #tpu.memory_space<vmem>>, %arg3: memref<1x128xf32, #tpu.memory_space<vmem>>, %arg4: memref<128x128xf32, #tpu.memory_space<vmem>>) attributes {dimension_semantics = [#tpu.dimension_semantics<parallel>], iteration_bounds = array<i64: 1>, scalar_prefetch = 0 : i64, scratch_operands = 0 : i64, tpu.core_type = #tpu.core_type<tc>, window_params = [{transform_indices = @transform_0, window_bounds = array<i64: 128, 512>}, {pipeline_mode = #tpu.pipeline_mode<synchronous>, transform_indices = @transform_1, window_bounds = array<i64: 512, 128>}, {pipeline_mode = #tpu.pipeline_mode<synchronous>, transform_indices = @transform_2, window_bounds = array<i64: 1, 128>}, {transform_indices = @transform_3, window_bounds = array<i64: 128, 128>}]} {
    %c0 = arith.constant 0 : index
    %c0_0 = arith.constant 0 : index
    %0 = vector.load %arg1[%c0, %c0_0] : memref<128x512xbf16, #tpu.memory_space<vmem>>, vector<128x512xbf16>
    %c0_1 = arith.constant 0 : index
    %c0_2 = arith.constant 0 : index
    %1 = vector.load %arg2[%c0_1, %c0_2] : memref<512x128xbf16, #tpu.memory_space<vmem>>, vector<512x128xbf16>
    %cst = arith.constant dense<0.000000e+00> : vector<128x128xf32>
    %2 = tpu.matmul %0, %1, %cst {dimension_numbers = #tpu.dot_dimension_numbers<[1], [0], [0], [1], [0, 0, 1, 1], [], []>} : vector<128x512xbf16>, vector<512x128xbf16>, vector<128x128xf32> -> vector<128x128xf32>
    %c0_3 = arith.constant 0 : index
    %c0_4 = arith.constant 0 : index
    %3 = vector.load %arg3[%c0_3, %c0_4] : memref<1x128xf32, #tpu.memory_space<vmem>>, vector<1x128xf32>
    %4 = vector.broadcast %3 : vector<1x128xf32> to vector<128x128xf32>
    %5 = arith.addf %2, %4 : vector<128x128xf32>
    %cst_5 = arith.constant 0.000000e+00 : f32
    %6 = vector.broadcast %cst_5 : f32 to vector<128x128xf32>
    %7 = arith.maximumf %5, %6 : vector<128x128xf32>
    %c0_6 = arith.constant 0 : index
    %c0_7 = arith.constant 0 : index
    %8 = vector.load %arg4[%c0_6, %c0_7] : memref<128x128xf32, #tpu.memory_space<vmem>>, vector<128x128xf32>
    tpu.vector_store %arg4[%c0_6, %c0_7], %7 {strides = array<i32>} : memref<128x128xf32, #tpu.memory_space<vmem>>, vector<128x128xf32>,
    return
  }
  func.func @transform_0(%arg0: i32) -> (i32, i32) {
    %c0_i32 = arith.constant 0 : i32
    %c0_i32_0 = arith.constant 0 : i32
    return %arg0, %c0_i32 : i32, i32
  }
  func.func @transform_1(%arg0: i32) -> (i32, i32) {
    %c0_i32 = arith.constant 0 : i32
    %c0_i32_0 = arith.constant 0 : i32
    %c0_i32_1 = arith.constant 0 : i32
    return %c0_i32, %c0_i32_0 : i32, i32
  }
  func.func @transform_2(%arg0: i32) -> (i32, i32) {
    %c0_i32 = arith.constant 0 : i32
    %c0_i32_0 = arith.constant 0 : i32
    %c0_i32_1 = arith.constant 0 : i32
    return %c0_i32, %c0_i32_0 : i32, i32
  }
  func.func @transform_3(%arg0: i32) -> (i32, i32) {
    %c0_i32 = arith.constant 0 : i32
    %c0_i32_0 = arith.constant 0 : i32
    return %arg0, %c0_i32 : i32, i32
  }
}

module attributes {stable_mosaic.version = 11 : i64} {
  func.func @_matmul_bias_act_kernel(%arg0: i32, %arg1: memref<32x1024xbf16, #tpu.memory_space<vmem>>, %arg2: memref<1024x128xbf16, #tpu.memory_space<vmem>>, %arg3: memref<1x128xf32, #tpu.memory_space<vmem>>, %arg4: memref<32x128xf32, #tpu.memory_space<vmem>>) attributes {dimension_semantics = [#tpu.dimension_semantics<parallel>], iteration_bounds = array<i64: 1>, scalar_prefetch = 0 : i64, scratch_operands = 0 : i64, tpu.core_type = #tpu.core_type<tc>, window_params = [{transform_indices = @transform_0, window_bounds = array<i64: 32, 1024>}, {pipeline_mode = #tpu.pipeline_mode<synchronous>, transform_indices = @transform_1, window_bounds = array<i64: 1024, 128>}, {pipeline_mode = #tpu.pipeline_mode<synchronous>, transform_indices = @transform_2, window_bounds = array<i64: 1, 128>}, {transform_indices = @transform_3, window_bounds = array<i64: 32, 128>}]} {
    %c0 = arith.constant 0 : index
    %c0_0 = arith.constant 0 : index
    %0 = vector.load %arg1[%c0, %c0_0] : memref<32x1024xbf16, #tpu.memory_space<vmem>>, vector<32x1024xbf16>
    %c0_1 = arith.constant 0 : index
    %c0_2 = arith.constant 0 : index
    %1 = vector.load %arg2[%c0_1, %c0_2] : memref<1024x128xbf16, #tpu.memory_space<vmem>>, vector<1024x128xbf16>
    %cst = arith.constant dense<0.000000e+00> : vector<32x128xf32>
    %2 = tpu.matmul %0, %1, %cst {dimension_numbers = #tpu.dot_dimension_numbers<[1], [0], [0], [1], [0, 0, 1, 1], [], []>} : vector<32x1024xbf16>, vector<1024x128xbf16>, vector<32x128xf32> -> vector<32x128xf32>
    %c0_3 = arith.constant 0 : index
    %c0_4 = arith.constant 0 : index
    %3 = vector.load %arg3[%c0_3, %c0_4] : memref<1x128xf32, #tpu.memory_space<vmem>>, vector<1x128xf32>
    %4 = vector.broadcast %3 : vector<1x128xf32> to vector<32x128xf32>
    %5 = arith.addf %2, %4 : vector<32x128xf32>
    %cst_5 = arith.constant 0.000000e+00 : f32
    %6 = vector.broadcast %cst_5 : f32 to vector<32x128xf32>
    %7 = arith.maximumf %5, %6 : vector<32x128xf32>
    %c0_6 = arith.constant 0 : index
    %c0_7 = arith.constant 0 : index
    %8 = vector.load %arg4[%c0_6, %c0_7] : memref<32x128xf32, #tpu.memory_space<vmem>>, vector<32x128xf32>
    tpu.vector_store %arg4[%c0_6, %c0_7], %7 {strides = array<i32>} : memref<32x128xf32, #tpu.memory_space<vmem>>, vector<32x128xf32>,
    return
  }
  func.func @transform_0(%arg0: i32) -> (i32, i32) {
    %c0_i32 = arith.constant 0 : i32
    %c0_i32_0 = arith.constant 0 : i32
    return %arg0, %c0_i32 : i32, i32
  }
  func.func @transform_1(%arg0: i32) -> (i32, i32) {
    %c0_i32 = arith.constant 0 : i32
    %c0_i32_0 = arith.constant 0 : i32
    %c0_i32_1 = arith.constant 0 : i32
    return %c0_i32, %c0_i32_0 : i32, i32
  }
  func.func @transform_2(%arg0: i32) -> (i32, i32) {
    %c0_i32 = arith.constant 0 : i32
    %c0_i32_0 = arith.constant 0 : i32
    %c0_i32_1 = arith.constant 0 : i32
    return %c0_i32, %c0_i32_0 : i32, i32
  }
  func.func @transform_3(%arg0: i32) -> (i32, i32) {
    %c0_i32 = arith.constant 0 : i32
    %c0_i32_0 = arith.constant 0 : i32
    return %arg0, %c0_i32 : i32, i32
  }
}

module attributes {stable_mosaic.version = 11 : i64} {
  func.func @_matmul_bias_act_kernel(%arg0: i32, %arg1: memref<2x2048xbf16, #tpu.memory_space<vmem>>, %arg2: memref<2048x256xbf16, #tpu.memory_space<vmem>>, %arg3: memref<1x256xf32, #tpu.memory_space<vmem>>, %arg4: memref<2x256xf32, #tpu.memory_space<vmem>>) attributes {dimension_semantics = [#tpu.dimension_semantics<parallel>], iteration_bounds = array<i64: 1>, scalar_prefetch = 0 : i64, scratch_operands = 0 : i64, tpu.core_type = #tpu.core_type<tc>, window_params = [{transform_indices = @transform_0, window_bounds = array<i64: 2, 2048>}, {pipeline_mode = #tpu.pipeline_mode<synchronous>, transform_indices = @transform_1, window_bounds = array<i64: 2048, 256>}, {pipeline_mode = #tpu.pipeline_mode<synchronous>, transform_indices = @transform_2, window_bounds = array<i64: 1, 256>}, {transform_indices = @transform_3, window_bounds = array<i64: 2, 256>}]} {
    %c0 = arith.constant 0 : index
    %c0_0 = arith.constant 0 : index
    %0 = vector.load %arg1[%c0, %c0_0] : memref<2x2048xbf16, #tpu.memory_space<vmem>>, vector<2x2048xbf16>
    %c0_1 = arith.constant 0 : index
    %c0_2 = arith.constant 0 : index
    %1 = vector.load %arg2[%c0_1, %c0_2] : memref<2048x256xbf16, #tpu.memory_space<vmem>>, vector<2048x256xbf16>
    %cst = arith.constant dense<0.000000e+00> : vector<2x256xf32>
    %2 = tpu.matmul %0, %1, %cst {dimension_numbers = #tpu.dot_dimension_numbers<[1], [0], [0], [1], [0, 0, 1, 1], [], []>} : vector<2x2048xbf16>, vector<2048x256xbf16>, vector<2x256xf32> -> vector<2x256xf32>
    %c0_3 = arith.constant 0 : index
    %c0_4 = arith.constant 0 : index
    %3 = vector.load %arg3[%c0_3, %c0_4] : memref<1x256xf32, #tpu.memory_space<vmem>>, vector<1x256xf32>
    %4 = vector.broadcast %3 : vector<1x256xf32> to vector<2x256xf32>
    %5 = arith.addf %2, %4 : vector<2x256xf32>
    %cst_5 = arith.constant 0.000000e+00 : f32
    %6 = vector.broadcast %cst_5 : f32 to vector<2x256xf32>
    %7 = arith.maximumf %5, %6 : vector<2x256xf32>
    %c0_6 = arith.constant 0 : index
    %c0_7 = arith.constant 0 : index
    %8 = vector.load %arg4[%c0_6, %c0_7] : memref<2x256xf32, #tpu.memory_space<vmem>>, vector<2x256xf32>
    tpu.vector_store %arg4[%c0_6, %c0_7], %7 {strides = array<i32>} : memref<2x256xf32, #tpu.memory_space<vmem>>, vector<2x256xf32>,
    return
  }
  func.func @transform_0(%arg0: i32) -> (i32, i32) {
    %c0_i32 = arith.constant 0 : i32
    %c0_i32_0 = arith.constant 0 : i32
    return %arg0, %c0_i32 : i32, i32
  }
  func.func @transform_1(%arg0: i32) -> (i32, i32) {
    %c0_i32 = arith.constant 0 : i32
    %c0_i32_0 = arith.constant 0 : i32
    %c0_i32_1 = arith.constant 0 : i32
    return %c0_i32, %c0_i32_0 : i32, i32
  }
  func.func @transform_2(%arg0: i32) -> (i32, i32) {
    %c0_i32 = arith.constant 0 : i32
    %c0_i32_0 = arith.constant 0 : i32
    %c0_i32_1 = arith.constant 0 : i32
    return %c0_i32, %c0_i32_0 : i32, i32
  }
  func.func @transform_3(%arg0: i32) -> (i32, i32) {
    %c0_i32 = arith.constant 0 : i32
    %c0_i32_0 = arith.constant 0 : i32
    return %arg0, %c0_i32 : i32, i32
  }
}

module attributes {stable_mosaic.version = 11 : i64} {
  func.func @_matmul_bias_act_kernel(%arg0: i32, %arg1: memref<2x256xbf16, #tpu.memory_space<vmem>>, %arg2: memref<256x128xbf16, #tpu.memory_space<vmem>>, %arg3: memref<1x128xf32, #tpu.memory_space<vmem>>, %arg4: memref<2x128xf32, #tpu.memory_space<vmem>>) attributes {dimension_semantics = [#tpu.dimension_semantics<parallel>], iteration_bounds = array<i64: 1>, scalar_prefetch = 0 : i64, scratch_operands = 0 : i64, tpu.core_type = #tpu.core_type<tc>, window_params = [{transform_indices = @transform_0, window_bounds = array<i64: 2, 256>}, {pipeline_mode = #tpu.pipeline_mode<synchronous>, transform_indices = @transform_1, window_bounds = array<i64: 256, 128>}, {pipeline_mode = #tpu.pipeline_mode<synchronous>, transform_indices = @transform_2, window_bounds = array<i64: 1, 128>}, {transform_indices = @transform_3, window_bounds = array<i64: 2, 128>}]} {
    %c0 = arith.constant 0 : index
    %c0_0 = arith.constant 0 : index
    %0 = vector.load %arg1[%c0, %c0_0] : memref<2x256xbf16, #tpu.memory_space<vmem>>, vector<2x256xbf16>
    %c0_1 = arith.constant 0 : index
    %c0_2 = arith.constant 0 : index
    %1 = vector.load %arg2[%c0_1, %c0_2] : memref<256x128xbf16, #tpu.memory_space<vmem>>, vector<256x128xbf16>
    %cst = arith.constant dense<0.000000e+00> : vector<2x128xf32>
    %2 = tpu.matmul %0, %1, %cst {dimension_numbers = #tpu.dot_dimension_numbers<[1], [0], [0], [1], [0, 0, 1, 1], [], []>} : vector<2x256xbf16>, vector<256x128xbf16>, vector<2x128xf32> -> vector<2x128xf32>
    %c0_3 = arith.constant 0 : index
    %c0_4 = arith.constant 0 : index
    %3 = vector.load %arg3[%c0_3, %c0_4] : memref<1x128xf32, #tpu.memory_space<vmem>>, vector<1x128xf32>
    %4 = vector.broadcast %3 : vector<1x128xf32> to vector<2x128xf32>
    %5 = arith.addf %2, %4 : vector<2x128xf32>
    %c0_5 = arith.constant 0 : index
    %c0_6 = arith.constant 0 : index
    %6 = vector.load %arg4[%c0_5, %c0_6] : memref<2x128xf32, #tpu.memory_space<vmem>>, vector<2x128xf32>
    tpu.vector_store %arg4[%c0_5, %c0_6], %5 {strides = array<i32>} : memref<2x128xf32, #tpu.memory_space<vmem>>, vector<2x128xf32>,
    return
  }
  func.func @transform_0(%arg0: i32) -> (i32, i32) {
    %c0_i32 = arith.constant 0 : i32
    %c0_i32_0 = arith.constant 0 : i32
    return %arg0, %c0_i32 : i32, i32
  }
  func.func @transform_1(%arg0: i32) -> (i32, i32) {
    %c0_i32 = arith.constant 0 : i32
    %c0_i32_0 = arith.constant 0 : i32
    %c0_i32_1 = arith.constant 0 : i32
    return %c0_i32, %c0_i32_0 : i32, i32
  }
  func.func @transform_2(%arg0: i32) -> (i32, i32) {
    %c0_i32 = arith.constant 0 : i32
    %c0_i32_0 = arith.constant 0 : i32
    %c0_i32_1 = arith.constant 0 : i32
    return %c0_i32, %c0_i32_0 : i32, i32
  }
  func.func @transform_3(%arg0: i32) -> (i32, i32) {
    %c0_i32 = arith.constant 0 : i32
    %c0_i32_0 = arith.constant 0 : i32
    return %arg0, %c0_i32 : i32, i32
  }
}

module attributes {stable_mosaic.version = 11 : i64} {
  func.func @_matmul_bias_act_kernel(%arg0: i32, %arg1: memref<2x32xbf16, #tpu.memory_space<vmem>>, %arg2: memref<32x256xbf16, #tpu.memory_space<vmem>>, %arg3: memref<1x256xf32, #tpu.memory_space<vmem>>, %arg4: memref<2x256xf32, #tpu.memory_space<vmem>>) attributes {dimension_semantics = [#tpu.dimension_semantics<parallel>], iteration_bounds = array<i64: 1>, scalar_prefetch = 0 : i64, scratch_operands = 0 : i64, tpu.core_type = #tpu.core_type<tc>, window_params = [{transform_indices = @transform_0, window_bounds = array<i64: 2, 32>}, {pipeline_mode = #tpu.pipeline_mode<synchronous>, transform_indices = @transform_1, window_bounds = array<i64: 32, 256>}, {pipeline_mode = #tpu.pipeline_mode<synchronous>, transform_indices = @transform_2, window_bounds = array<i64: 1, 256>}, {transform_indices = @transform_3, window_bounds = array<i64: 2, 256>}]} {
    %c0 = arith.constant 0 : index
    %c0_0 = arith.constant 0 : index
    %0 = vector.load %arg1[%c0, %c0_0] : memref<2x32xbf16, #tpu.memory_space<vmem>>, vector<2x32xbf16>
    %c0_1 = arith.constant 0 : index
    %c0_2 = arith.constant 0 : index
    %1 = vector.load %arg2[%c0_1, %c0_2] : memref<32x256xbf16, #tpu.memory_space<vmem>>, vector<32x256xbf16>
    %cst = arith.constant dense<0.000000e+00> : vector<2x256xf32>
    %2 = tpu.matmul %0, %1, %cst {dimension_numbers = #tpu.dot_dimension_numbers<[1], [0], [0], [1], [0, 0, 1, 1], [], []>} : vector<2x32xbf16>, vector<32x256xbf16>, vector<2x256xf32> -> vector<2x256xf32>
    %c0_3 = arith.constant 0 : index
    %c0_4 = arith.constant 0 : index
    %3 = vector.load %arg3[%c0_3, %c0_4] : memref<1x256xf32, #tpu.memory_space<vmem>>, vector<1x256xf32>
    %4 = vector.broadcast %3 : vector<1x256xf32> to vector<2x256xf32>
    %5 = arith.addf %2, %4 : vector<2x256xf32>
    %cst_5 = arith.constant 0.000000e+00 : f32
    %6 = vector.broadcast %cst_5 : f32 to vector<2x256xf32>
    %7 = arith.maximumf %5, %6 : vector<2x256xf32>
    %c0_6 = arith.constant 0 : index
    %c0_7 = arith.constant 0 : index
    %8 = vector.load %arg4[%c0_6, %c0_7] : memref<2x256xf32, #tpu.memory_space<vmem>>, vector<2x256xf32>
    tpu.vector_store %arg4[%c0_6, %c0_7], %7 {strides = array<i32>} : memref<2x256xf32, #tpu.memory_space<vmem>>, vector<2x256xf32>,
    return
  }
  func.func @transform_0(%arg0: i32) -> (i32, i32) {
    %c0_i32 = arith.constant 0 : i32
    %c0_i32_0 = arith.constant 0 : i32
    return %arg0, %c0_i32 : i32, i32
  }
  func.func @transform_1(%arg0: i32) -> (i32, i32) {
    %c0_i32 = arith.constant 0 : i32
    %c0_i32_0 = arith.constant 0 : i32
    %c0_i32_1 = arith.constant 0 : i32
    return %c0_i32, %c0_i32_0 : i32, i32
  }
  func.func @transform_2(%arg0: i32) -> (i32, i32) {
    %c0_i32 = arith.constant 0 : i32
    %c0_i32_0 = arith.constant 0 : i32
    %c0_i32_1 = arith.constant 0 : i32
    return %c0_i32, %c0_i32_0 : i32, i32
  }
  func.func @transform_3(%arg0: i32) -> (i32, i32) {
    %c0_i32 = arith.constant 0 : i32
    %c0_i32_0 = arith.constant 0 : i32
    return %arg0, %c0_i32 : i32, i32
  }
}

module attributes {stable_mosaic.version = 11 : i64} {
  func.func @_matmul_bias_act_kernel(%arg0: i32, %arg1: memref<2x256xbf16, #tpu.memory_space<vmem>>, %arg2: memref<256x2048xbf16, #tpu.memory_space<vmem>>, %arg3: memref<1x2048xf32, #tpu.memory_space<vmem>>, %arg4: memref<2x2048xf32, #tpu.memory_space<vmem>>) attributes {dimension_semantics = [#tpu.dimension_semantics<parallel>], iteration_bounds = array<i64: 1>, scalar_prefetch = 0 : i64, scratch_operands = 0 : i64, tpu.core_type = #tpu.core_type<tc>, window_params = [{transform_indices = @transform_0, window_bounds = array<i64: 2, 256>}, {pipeline_mode = #tpu.pipeline_mode<synchronous>, transform_indices = @transform_1, window_bounds = array<i64: 256, 2048>}, {pipeline_mode = #tpu.pipeline_mode<synchronous>, transform_indices = @transform_2, window_bounds = array<i64: 1, 2048>}, {transform_indices = @transform_3, window_bounds = array<i64: 2, 2048>}]} {
    %c0 = arith.constant 0 : index
    %c0_0 = arith.constant 0 : index
    %0 = vector.load %arg1[%c0, %c0_0] : memref<2x256xbf16, #tpu.memory_space<vmem>>, vector<2x256xbf16>
    %c0_1 = arith.constant 0 : index
    %c0_2 = arith.constant 0 : index
    %1 = vector.load %arg2[%c0_1, %c0_2] : memref<256x2048xbf16, #tpu.memory_space<vmem>>, vector<256x2048xbf16>
    %cst = arith.constant dense<0.000000e+00> : vector<2x2048xf32>
    %2 = tpu.matmul %0, %1, %cst {dimension_numbers = #tpu.dot_dimension_numbers<[1], [0], [0], [1], [0, 0, 1, 1], [], []>} : vector<2x256xbf16>, vector<256x2048xbf16>, vector<2x2048xf32> -> vector<2x2048xf32>
    %c0_3 = arith.constant 0 : index
    %c0_4 = arith.constant 0 : index
    %3 = vector.load %arg3[%c0_3, %c0_4] : memref<1x2048xf32, #tpu.memory_space<vmem>>, vector<1x2048xf32>
    %4 = vector.broadcast %3 : vector<1x2048xf32> to vector<2x2048xf32>
    %5 = arith.addf %2, %4 : vector<2x2048xf32>
    %cst_5 = arith.constant 0.000000e+00 : f32
    %6 = vector.broadcast %cst_5 : f32 to vector<2x2048xf32>
    %7 = arith.maximumf %5, %6 : vector<2x2048xf32>
    %c0_6 = arith.constant 0 : index
    %c0_7 = arith.constant 0 : index
    %8 = vector.load %arg4[%c0_6, %c0_7] : memref<2x2048xf32, #tpu.memory_space<vmem>>, vector<2x2048xf32>
    tpu.vector_store %arg4[%c0_6, %c0_7], %7 {strides = array<i32>} : memref<2x2048xf32, #tpu.memory_space<vmem>>, vector<2x2048xf32>,
    return
  }
  func.func @transform_0(%arg0: i32) -> (i32, i32) {
    %c0_i32 = arith.constant 0 : i32
    %c0_i32_0 = arith.constant 0 : i32
    return %arg0, %c0_i32 : i32, i32
  }
  func.func @transform_1(%arg0: i32) -> (i32, i32) {
    %c0_i32 = arith.constant 0 : i32
    %c0_i32_0 = arith.constant 0 : i32
    %c0_i32_1 = arith.constant 0 : i32
    return %c0_i32, %c0_i32_0 : i32, i32
  }
  func.func @transform_2(%arg0: i32) -> (i32, i32) {
    %c0_i32 = arith.constant 0 : i32
    %c0_i32_0 = arith.constant 0 : i32
    %c0_i32_1 = arith.constant 0 : i32
    return %c0_i32, %c0_i32_0 : i32, i32
  }
  func.func @transform_3(%arg0: i32) -> (i32, i32) {
    %c0_i32 = arith.constant 0 : i32
    %c0_i32_0 = arith.constant 0 : i32
    return %arg0, %c0_i32 : i32, i32
  }
}

module attributes {stable_mosaic.version = 11 : i64} {
  func.func @_matmul_bias_act_kernel(%arg0: i32, %arg1: memref<50x512xbf16, #tpu.memory_space<vmem>>, %arg2: memref<512x256xbf16, #tpu.memory_space<vmem>>, %arg3: memref<1x256xf32, #tpu.memory_space<vmem>>, %arg4: memref<50x256xf32, #tpu.memory_space<vmem>>) attributes {dimension_semantics = [#tpu.dimension_semantics<parallel>], iteration_bounds = array<i64: 1>, scalar_prefetch = 0 : i64, scratch_operands = 0 : i64, tpu.core_type = #tpu.core_type<tc>, window_params = [{transform_indices = @transform_0, window_bounds = array<i64: 50, 512>}, {pipeline_mode = #tpu.pipeline_mode<synchronous>, transform_indices = @transform_1, window_bounds = array<i64: 512, 256>}, {pipeline_mode = #tpu.pipeline_mode<synchronous>, transform_indices = @transform_2, window_bounds = array<i64: 1, 256>}, {transform_indices = @transform_3, window_bounds = array<i64: 50, 256>}]} {
    %c0 = arith.constant 0 : index
    %c0_0 = arith.constant 0 : index
    %0 = vector.load %arg1[%c0, %c0_0] : memref<50x512xbf16, #tpu.memory_space<vmem>>, vector<50x512xbf16>
    %c0_1 = arith.constant 0 : index
    %c0_2 = arith.constant 0 : index
    %1 = vector.load %arg2[%c0_1, %c0_2] : memref<512x256xbf16, #tpu.memory_space<vmem>>, vector<512x256xbf16>
    %cst = arith.constant dense<0.000000e+00> : vector<50x256xf32>
    %2 = tpu.matmul %0, %1, %cst {dimension_numbers = #tpu.dot_dimension_numbers<[1], [0], [0], [1], [0, 0, 1, 1], [], []>} : vector<50x512xbf16>, vector<512x256xbf16>, vector<50x256xf32> -> vector<50x256xf32>
    %c0_3 = arith.constant 0 : index
    %c0_4 = arith.constant 0 : index
    %3 = vector.load %arg3[%c0_3, %c0_4] : memref<1x256xf32, #tpu.memory_space<vmem>>, vector<1x256xf32>
    %4 = vector.broadcast %3 : vector<1x256xf32> to vector<50x256xf32>
    %5 = arith.addf %2, %4 : vector<50x256xf32>
    %cst_5 = arith.constant 0.000000e+00 : f32
    %6 = vector.broadcast %cst_5 : f32 to vector<50x256xf32>
    %7 = arith.maximumf %5, %6 : vector<50x256xf32>
    %c0_6 = arith.constant 0 : index
    %c0_7 = arith.constant 0 : index
    %8 = vector.load %arg4[%c0_6, %c0_7] : memref<50x256xf32, #tpu.memory_space<vmem>>, vector<50x256xf32>
    tpu.vector_store %arg4[%c0_6, %c0_7], %7 {strides = array<i32>} : memref<50x256xf32, #tpu.memory_space<vmem>>, vector<50x256xf32>,
    return
  }
  func.func @transform_0(%arg0: i32) -> (i32, i32) {
    %c0_i32 = arith.constant 0 : i32
    %c0_i32_0 = arith.constant 0 : i32
    return %arg0, %c0_i32 : i32, i32
  }
  func.func @transform_1(%arg0: i32) -> (i32, i32) {
    %c0_i32 = arith.constant 0 : i32
    %c0_i32_0 = arith.constant 0 : i32
    %c0_i32_1 = arith.constant 0 : i32
    return %c0_i32, %c0_i32_0 : i32, i32
  }
  func.func @transform_2(%arg0: i32) -> (i32, i32) {
    %c0_i32 = arith.constant 0 : i32
    %c0_i32_0 = arith.constant 0 : i32
    %c0_i32_1 = arith.constant 0 : i32
    return %c0_i32, %c0_i32_0 : i32, i32
  }
  func.func @transform_3(%arg0: i32) -> (i32, i32) {
    %c0_i32 = arith.constant 0 : i32
    %c0_i32_0 = arith.constant 0 : i32
    return %arg0, %c0_i32 : i32, i32
  }
}

module attributes {stable_mosaic.version = 11 : i64} {
  func.func @_matmul_bias_act_kernel(%arg0: i32, %arg1: memref<162x256xbf16, #tpu.memory_space<vmem>>, %arg2: memref<256x128xbf16, #tpu.memory_space<vmem>>, %arg3: memref<1x128xf32, #tpu.memory_space<vmem>>, %arg4: memref<162x128xf32, #tpu.memory_space<vmem>>) attributes {dimension_semantics = [#tpu.dimension_semantics<parallel>], iteration_bounds = array<i64: 1>, scalar_prefetch = 0 : i64, scratch_operands = 0 : i64, tpu.core_type = #tpu.core_type<tc>, window_params = [{transform_indices = @transform_0, window_bounds = array<i64: 162, 256>}, {pipeline_mode = #tpu.pipeline_mode<synchronous>, transform_indices = @transform_1, window_bounds = array<i64: 256, 128>}, {pipeline_mode = #tpu.pipeline_mode<synchronous>, transform_indices = @transform_2, window_bounds = array<i64: 1, 128>}, {transform_indices = @transform_3, window_bounds = array<i64: 162, 128>}]} {
    %c0 = arith.constant 0 : index
    %c0_0 = arith.constant 0 : index
    %0 = vector.load %arg1[%c0, %c0_0] : memref<162x256xbf16, #tpu.memory_space<vmem>>, vector<162x256xbf16>
    %c0_1 = arith.constant 0 : index
    %c0_2 = arith.constant 0 : index
    %1 = vector.load %arg2[%c0_1, %c0_2] : memref<256x128xbf16, #tpu.memory_space<vmem>>, vector<256x128xbf16>
    %cst = arith.constant dense<0.000000e+00> : vector<162x128xf32>
    %2 = tpu.matmul %0, %1, %cst {dimension_numbers = #tpu.dot_dimension_numbers<[1], [0], [0], [1], [0, 0, 1, 1], [], []>} : vector<162x256xbf16>, vector<256x128xbf16>, vector<162x128xf32> -> vector<162x128xf32>
    %c0_3 = arith.constant 0 : index
    %c0_4 = arith.constant 0 : index
    %3 = vector.load %arg3[%c0_3, %c0_4] : memref<1x128xf32, #tpu.memory_space<vmem>>, vector<1x128xf32>
    %4 = vector.broadcast %3 : vector<1x128xf32> to vector<162x128xf32>
    %5 = arith.addf %2, %4 : vector<162x128xf32>
    %cst_5 = arith.constant 0.000000e+00 : f32
    %6 = vector.broadcast %cst_5 : f32 to vector<162x128xf32>
    %7 = arith.maximumf %5, %6 : vector<162x128xf32>
    %c0_6 = arith.constant 0 : index
    %c0_7 = arith.constant 0 : index
    %8 = vector.load %arg4[%c0_6, %c0_7] : memref<162x128xf32, #tpu.memory_space<vmem>>, vector<162x128xf32>
    tpu.vector_store %arg4[%c0_6, %c0_7], %7 {strides = array<i32>} : memref<162x128xf32, #tpu.memory_space<vmem>>, vector<162x128xf32>,
    return
  }
  func.func @transform_0(%arg0: i32) -> (i32, i32) {
    %c0_i32 = arith.constant 0 : i32
    %c0_i32_0 = arith.constant 0 : i32
    return %arg0, %c0_i32 : i32, i32
  }
  func.func @transform_1(%arg0: i32) -> (i32, i32) {
    %c0_i32 = arith.constant 0 : i32
    %c0_i32_0 = arith.constant 0 : i32
    %c0_i32_1 = arith.constant 0 : i32
    return %c0_i32, %c0_i32_0 : i32, i32
  }
  func.func @transform_2(%arg0: i32) -> (i32, i32) {
    %c0_i32 = arith.constant 0 : i32
    %c0_i32_0 = arith.constant 0 : i32
    %c0_i32_1 = arith.constant 0 : i32
    return %c0_i32, %c0_i32_0 : i32, i32
  }
  func.func @transform_3(%arg0: i32) -> (i32, i32) {
    %c0_i32 = arith.constant 0 : i32
    %c0_i32_0 = arith.constant 0 : i32
    return %arg0, %c0_i32 : i32, i32
  }
}

module attributes {stable_mosaic.version = 11 : i64} {
  func.func @_matmul_bias_act_kernel(%arg0: i32, %arg1: memref<256x128xbf16, #tpu.memory_space<vmem>>, %arg2: memref<128x128xbf16, #tpu.memory_space<vmem>>, %arg3: memref<1x128xf32, #tpu.memory_space<vmem>>, %arg4: memref<256x128xf32, #tpu.memory_space<vmem>>) attributes {dimension_semantics = [#tpu.dimension_semantics<parallel>], iteration_bounds = array<i64: 3>, scalar_prefetch = 0 : i64, scratch_operands = 0 : i64, tpu.core_type = #tpu.core_type<tc>, window_params = [{transform_indices = @transform_0, window_bounds = array<i64: 256, 128>}, {pipeline_mode = #tpu.pipeline_mode<synchronous>, transform_indices = @transform_1, window_bounds = array<i64: 128, 128>}, {pipeline_mode = #tpu.pipeline_mode<synchronous>, transform_indices = @transform_2, window_bounds = array<i64: 1, 128>}, {transform_indices = @transform_3, window_bounds = array<i64: 256, 128>}]} {
    %c0 = arith.constant 0 : index
    %c0_0 = arith.constant 0 : index
    %0 = vector.load %arg1[%c0, %c0_0] : memref<256x128xbf16, #tpu.memory_space<vmem>>, vector<256x128xbf16>
    %c0_1 = arith.constant 0 : index
    %c0_2 = arith.constant 0 : index
    %1 = vector.load %arg2[%c0_1, %c0_2] : memref<128x128xbf16, #tpu.memory_space<vmem>>, vector<128x128xbf16>
    %cst = arith.constant dense<0.000000e+00> : vector<256x128xf32>
    %2 = tpu.matmul %0, %1, %cst {dimension_numbers = #tpu.dot_dimension_numbers<[1], [0], [0], [1], [0, 0, 1, 1], [], []>} : vector<256x128xbf16>, vector<128x128xbf16>, vector<256x128xf32> -> vector<256x128xf32>
    %c0_3 = arith.constant 0 : index
    %c0_4 = arith.constant 0 : index
    %3 = vector.load %arg3[%c0_3, %c0_4] : memref<1x128xf32, #tpu.memory_space<vmem>>, vector<1x128xf32>
    %4 = vector.broadcast %3 : vector<1x128xf32> to vector<256x128xf32>
    %5 = arith.addf %2, %4 : vector<256x128xf32>
    %cst_5 = arith.constant 0.000000e+00 : f32
    %6 = vector.broadcast %cst_5 : f32 to vector<256x128xf32>
    %7 = arith.maximumf %5, %6 : vector<256x128xf32>
    %c0_6 = arith.constant 0 : index
    %c0_7 = arith.constant 0 : index
    %8 = vector.load %arg4[%c0_6, %c0_7] : memref<256x128xf32, #tpu.memory_space<vmem>>, vector<256x128xf32>
    tpu.vector_store %arg4[%c0_6, %c0_7], %7 {strides = array<i32>} : memref<256x128xf32, #tpu.memory_space<vmem>>, vector<256x128xf32>,
    return
  }
  func.func @transform_0(%arg0: i32) -> (i32, i32) {
    %c0_i32 = arith.constant 0 : i32
    %c0_i32_0 = arith.constant 0 : i32
    return %arg0, %c0_i32 : i32, i32
  }
  func.func @transform_1(%arg0: i32) -> (i32, i32) {
    %c0_i32 = arith.constant 0 : i32
    %c0_i32_0 = arith.constant 0 : i32
    %c0_i32_1 = arith.constant 0 : i32
    return %c0_i32, %c0_i32_0 : i32, i32
  }
  func.func @transform_2(%arg0: i32) -> (i32, i32) {
    %c0_i32 = arith.constant 0 : i32
    %c0_i32_0 = arith.constant 0 : i32
    %c0_i32_1 = arith.constant 0 : i32
    return %c0_i32, %c0_i32_0 : i32, i32
  }
  func.func @transform_3(%arg0: i32) -> (i32, i32) {
    %c0_i32 = arith.constant 0 : i32
    %c0_i32_0 = arith.constant 0 : i32
    return %arg0, %c0_i32 : i32, i32
  }
}

module attributes {stable_mosaic.version = 11 : i64} {
  func.func @_matmul_bias_act_kernel(%arg0: i32, %arg1: memref<256x128xbf16, #tpu.memory_space<vmem>>, %arg2: memref<128x128xbf16, #tpu.memory_space<vmem>>, %arg3: memref<1x128xf32, #tpu.memory_space<vmem>>, %arg4: memref<256x128xf32, #tpu.memory_space<vmem>>) attributes {dimension_semantics = [#tpu.dimension_semantics<parallel>], iteration_bounds = array<i64: 9>, scalar_prefetch = 0 : i64, scratch_operands = 0 : i64, tpu.core_type = #tpu.core_type<tc>, window_params = [{transform_indices = @transform_0, window_bounds = array<i64: 256, 128>}, {pipeline_mode = #tpu.pipeline_mode<synchronous>, transform_indices = @transform_1, window_bounds = array<i64: 128, 128>}, {pipeline_mode = #tpu.pipeline_mode<synchronous>, transform_indices = @transform_2, window_bounds = array<i64: 1, 128>}, {transform_indices = @transform_3, window_bounds = array<i64: 256, 128>}]} {
    %c0 = arith.constant 0 : index
    %c0_0 = arith.constant 0 : index
    %0 = vector.load %arg1[%c0, %c0_0] : memref<256x128xbf16, #tpu.memory_space<vmem>>, vector<256x128xbf16>
    %c0_1 = arith.constant 0 : index
    %c0_2 = arith.constant 0 : index
    %1 = vector.load %arg2[%c0_1, %c0_2] : memref<128x128xbf16, #tpu.memory_space<vmem>>, vector<128x128xbf16>
    %cst = arith.constant dense<0.000000e+00> : vector<256x128xf32>
    %2 = tpu.matmul %0, %1, %cst {dimension_numbers = #tpu.dot_dimension_numbers<[1], [0], [0], [1], [0, 0, 1, 1], [], []>} : vector<256x128xbf16>, vector<128x128xbf16>, vector<256x128xf32> -> vector<256x128xf32>
    %c0_3 = arith.constant 0 : index
    %c0_4 = arith.constant 0 : index
    %3 = vector.load %arg3[%c0_3, %c0_4] : memref<1x128xf32, #tpu.memory_space<vmem>>, vector<1x128xf32>
    %4 = vector.broadcast %3 : vector<1x128xf32> to vector<256x128xf32>
    %5 = arith.addf %2, %4 : vector<256x128xf32>
    %6 = arith.negf %5 : vector<256x128xf32>
    %7 = math.exp %6 : vector<256x128xf32>
    %cst_5 = arith.constant 1.000000e+00 : f32
    %8 = vector.broadcast %cst_5 : f32 to vector<256x128xf32>
    %9 = arith.addf %8, %7 : vector<256x128xf32>
    %10 = arith.divf %8, %9 : vector<256x128xf32>
    %c0_6 = arith.constant 0 : index
    %c0_7 = arith.constant 0 : index
    %11 = vector.load %arg4[%c0_6, %c0_7] : memref<256x128xf32, #tpu.memory_space<vmem>>, vector<256x128xf32>
    tpu.vector_store %arg4[%c0_6, %c0_7], %10 {strides = array<i32>} : memref<256x128xf32, #tpu.memory_space<vmem>>, vector<256x128xf32>,
    return
  }
  func.func @transform_0(%arg0: i32) -> (i32, i32) {
    %c0_i32 = arith.constant 0 : i32
    %c0_i32_0 = arith.constant 0 : i32
    return %arg0, %c0_i32 : i32, i32
  }
  func.func @transform_1(%arg0: i32) -> (i32, i32) {
    %c0_i32 = arith.constant 0 : i32
    %c0_i32_0 = arith.constant 0 : i32
    %c0_i32_1 = arith.constant 0 : i32
    return %c0_i32, %c0_i32_0 : i32, i32
  }
  func.func @transform_2(%arg0: i32) -> (i32, i32) {
    %c0_i32 = arith.constant 0 : i32
    %c0_i32_0 = arith.constant 0 : i32
    %c0_i32_1 = arith.constant 0 : i32
    return %c0_i32, %c0_i32_0 : i32, i32
  }
  func.func @transform_3(%arg0: i32) -> (i32, i32) {
    %c0_i32 = arith.constant 0 : i32
    %c0_i32_0 = arith.constant 0 : i32
    return %arg0, %c0_i32 : i32, i32
  }
}

</mosaic_0001>

<llo_original>
// kernel: vae_forward.12
$region0: #{vae_forward.12}
  #allocation0 [shape = 'u32[]', space=smem, size = 0x4, offset = 0x4, fixed_abs, tag = 'smem constant byte address 0x4 - core index']
  #allocation1 [shape = 'u32[144,128]{1,0:T(1,128)}', space=vmem, size = 0x12000, scoped, tag = 'internal scratch']
  %s0 = inlined_call_operand.vmem [shape: bf16[2048,48], index: 0, kind: input, shape index: {}]
  %s1 = inlined_call_operand.vmem [shape: bf16[48,128], index: 1, kind: input, shape index: {}]
  %s2 = inlined_call_operand.vmem [shape: f32[1,128], index: 2, kind: input, shape index: {}]
  %s3 = inlined_call_operand.vmem [shape: f32[2048,128], index: 3, kind: output, shape index: {}]
  %s4 = sld [smem:[#allocation0]]
  $region45: #{vae_forward.12} parent=0
    _
  %s6 = ssub.s32 1, %s4
  %s7 = scalar_select 0, %s6, %s4
  loop: start=0, step=1, limit=10
  $region2: #{vae_forward.12} parent=0 // loop_pre_header
    _
  $region3: #{vae_forward.12} parent=0 // loop_header
    %s9 = sphi 0, %s13
    %p10 = scmp.ge.s32.totalorder %s9, 10
    %s19 = sphi 0, %s21
    %s22 = sphi 0, %s19
    %s23 = sphi 0, %s22
    %s39 = sphi 0, %s23
    %s43 = sphi 0, %s43
    %s45 = sphi 0, %s43
    %s46 = sphi 0, %s45
    %s60 = sphi 0, %s46
    %s64 = sphi 0, %s64
    %s66 = sphi 0, %s64
    %s67 = sphi 0, %s66
    %s81 = sphi 0, %s67
    %s87 = sphi 0, %s89
    %s90 = sphi 0, %s87
    %s91 = sphi 0, %s90
    %s107 = sphi 0, %s91
  $region4: #{vae_forward.12} parent=0 // loop_header_branch
    %12 = sbr.rel (%p10) target = $region8
  $region5: #{vae_forward.12} parent=0 // loop_body
    %s14 = ssub.s32 %s9, 1
    %s15 = ssub.s32 %s9, 2
    %s16 = sadd.s32 %s9, 1
    %s17 = ssub.s32 %s9, %s16
    %p18 = scmp.eq.s32.totalorder %s17, 0
    %s20 = sadd.s32 %s19, 1
    %s21 = scalar_select %p18, %s19, %s20
    %p24 = pneg %p18
    %p25 = scmp.eq.s32.totalorder %s9, 7
    %p26 = por %p24, %p25
    %p27 = scmp.ne.s32.totalorder %s19, %s22
    %p28 = scmp.eq.s32.totalorder %s9, 0
    %p29 = por %p27, %p28
    %p30 = scmp.ne.s32.totalorder %s19, %s22
    %p31 = scmp.eq.s32.totalorder %s14, 7
    %p32 = por %p30, %p31
    %p33 = scmp.ne.s32.totalorder %s22, %s23
    %p34 = scmp.eq.s32.totalorder %s14, 0
    %p35 = por %p33, %p34
    %p36 = scmp.ne.s32.totalorder %s22, %s23
    %p37 = scmp.eq.s32.totalorder %s15, 7
    %p38 = por %p36, %p37
    %p40 = scmp.ne.s32.totalorder %s23, %s39
    %p41 = scmp.eq.s32.totalorder %s15, 0
    %p42 = por %p40, %p41
    %s44 = sadd.s32 %s43, 1
    %p47 = scmp.eq.s32.totalorder %s9, 7
    %p48 = scmp.ne.s32.totalorder %s43, %s45
    %p49 = scmp.eq.s32.totalorder %s9, 0
    %p50 = por %p48, %p49
    %p51 = scmp.ne.s32.totalorder %s43, %s45
    %p52 = scmp.eq.s32.totalorder %s14, 7
    %p53 = por %p51, %p52
    %p54 = scmp.ne.s32.totalorder %s45, %s46
    %p55 = scmp.eq.s32.totalorder %s14, 0
    %p56 = por %p54, %p55
    %p57 = scmp.ne.s32.totalorder %s45, %s46
    %p58 = scmp.eq.s32.totalorder %s15, 7
    %p59 = por %p57, %p58
    %p61 = scmp.ne.s32.totalorder %s46, %s60
    %p62 = scmp.eq.s32.totalorder %s15, 0
    %p63 = por %p61, %p62
    %s65 = sadd.s32 %s64, 1
    %p68 = scmp.eq.s32.totalorder %s9, 7
    %p69 = scmp.ne.s32.totalorder %s64, %s66
    %p70 = scmp.eq.s32.totalorder %s9, 0
    %p71 = por %p69, %p70
    %p72 = scmp.ne.s32.totalorder %s64, %s66
    %p73 = scmp.eq.s32.totalorder %s14, 7
    %p74 = por %p72, %p73
    %p75 = scmp.ne.s32.totalorder %s66, %s67
    %p76 = scmp.eq.s32.totalorder %s14, 0
    %p77 = por %p75, %p76
    %p78 = scmp.ne.s32.totalorder %s66, %s67
    %p79 = scmp.eq.s32.totalorder %s15, 7
    %p80 = por %p78, %p79
    %p82 = scmp.ne.s32.totalorder %s67, %s81
    %p83 = scmp.eq.s32.totalorder %s15, 0
    %p84 = por %p82, %p83
    %s85 = ssub.s32 %s9, %s16
    %p86 = scmp.eq.s32.totalorder %s85, 0
    %s88 = sadd.s32 %s87, 1
    %s89 = scalar_select %p86, %s87, %s88
    %p92 = pneg %p86
    %p93 = scmp.eq.s32.totalorder %s9, 7
    %p94 = por %p92, %p93
    %p95 = scmp.ne.s32.totalorder %s87, %s90
    %p96 = scmp.eq.s32.totalorder %s9, 0
    %p97 = por %p95, %p96
    %p98 = scmp.ne.s32.totalorder %s87, %s90
    %p99 = scmp.eq.s32.totalorder %s14, 7
    %p100 = por %p98, %p99
    %p101 = scmp.ne.s32.totalorder %s90, %s91
    %p102 = scmp.eq.s32.totalorder %s14, 0
    %p103 = por %p101, %p102
    %p104 = scmp.ne.s32.totalorder %s90, %s91
    %p105 = scmp.eq.s32.totalorder %s15, 7
    %p106 = por %p104, %p105
    %p108 = scmp.ne.s32.totalorder %s91, %s107
    %p109 = scmp.eq.s32.totalorder %s15, 0
    %p110 = por %p108, %p109
    %p111 = scmp.le.s32.totalorder 1, %s9
    %p112 = scmp.lt.s32.totalorder %s9, 9
    %p113 = pnand %p111, %p112
    %p114 = pneg %p113
    // Predicated region
    $region9: #{vae_forward.12} parent=5 // pred_check
      _
    $region10: #{vae_forward.12} parent=5 // pred_check_branch
      %116 = sbr.rel (%p113) target = $region12
    $region11: #{vae_forward.12} parent=5 // pred_region
      %s117 = ssub.s32 %s9, 1
      // Predicated region
      $region13: #{vae_forward.12} parent=11 // pred_check
        %p118 = pneg %p56
      $region14: #{vae_forward.12} parent=11 // pred_check_branch
        %120 = sbr.rel (%p118) target = $region16
      $region15: #{vae_forward.12} parent=11 // pred_region
        _
      $region16: #{vae_forward.12} parent=11 // pred_fallthru
        _
      // Predicated region
      $region17: #{vae_forward.12} parent=11 // pred_check
        %p121 = pneg %p77
      $region18: #{vae_forward.12} parent=11 // pred_check_branch
        %123 = sbr.rel (%p121) target = $region20
      $region19: #{vae_forward.12} parent=11 // pred_region
        _
      $region20: #{vae_forward.12} parent=11 // pred_fallthru
        _
    $region12: #{vae_forward.12} parent=5 // pred_fallthru
      _
    %p124 = scmp.lt.s32.totalorder %s9, 8
    // Predicated region
    $region21: #{vae_forward.12} parent=5 // pred_check
      %p125 = pneg %p124
    $region22: #{vae_forward.12} parent=5 // pred_check_branch
      %127 = sbr.rel (%p125) target = $region24
    $region23: #{vae_forward.12} parent=5 // pred_region
      // Predicated region
      $region25: #{vae_forward.12} parent=23 // pred_check
        %p128 = pneg %p29
      $region26: #{vae_forward.12} parent=23 // pred_check_branch
        %130 = sbr.rel (%p128) target = $region28
      $region27: #{vae_forward.12} parent=23 // pred_region
        %s131 = smul.u32 32, %s9
        %p132 = scmp.lt.s32.totalorder %s131, 255
        %s133 = scalar_select %p132, %s131, 255
        %s134 = smul.addr %s133, 4
        %s135 = scalar_lea.vmem %s0, %s134
        %s136 = smul.u32 32, %s9
      $region28: #{vae_forward.12} parent=23 // pred_fallthru
        _
    $region24: #{vae_forward.12} parent=5 // pred_fallthru
      _
    %p137 = scmp.le.s32.totalorder 1, %s9
    %p138 = scmp.lt.s32.totalorder %s9, 9
    %p139 = pnand %p137, %p138
    %p140 = pneg %p139
    // Predicated region
    $region29: #{vae_forward.12} parent=5 // pred_check
      _
    $region30: #{vae_forward.12} parent=5 // pred_check_branch
      %142 = sbr.rel (%p139) target = $region32
    $region31: #{vae_forward.12} parent=5 // pred_region
      %s143 = ssub.s32 %s9, 1
      %s144 = smul.u32 32, %s14
      %p145 = scmp.lt.s32.totalorder %s144, 255
      %s146 = scalar_select %p145, %s144, 255
      %s147 = smul.addr %s146, 4
      %s148 = scalar_lea.vmem %s0, %s147
      %p149 = pneg %p35
      %p150 = pneg %p32
      %p151 = pneg %p56
      %p152 = pneg %p53
      %p153 = pneg %p77
      %p154 = pneg %p74
      %p155 = pneg %p103
      %p156 = pneg %p100
      %s157 = smul.u32 32, %s14
      %p158 = scmp.lt.s32.totalorder %s157, 255
      %s159 = scalar_select %p158, %s157, 255
      %s160 = smul.addr %s159, 8
      %s161 = scalar_lea.vmem %s3, %s160
      %s162 = smul.u32 32, %s14
      %p163 = scmp.lt.s32.totalorder %s162, 255
      %s164 = scalar_select %p163, %s162, 255
      %s165 = smul.addr %s164, 4
      %s166 = scalar_lea.vmem %s0, %s165
      %s167 = smul.u32 32, %s14
      %s168 = smul.u32 32, %s14
      %p169 = scmp.lt.s32.totalorder %s168, 255
      %s170 = scalar_select %p169, %s168, 255
      %s171 = smul.addr %s170, 8
      %s172 = scalar_lea.vmem %s3, %s171
      %s173 = smul.u32 32, %s14
      %v175 = vld [vmem:[%s166] sm:$0xf]
      %v176 = vld [vmem:[%s166 + $0x4] sm:$0xf]
      %v177 = vld [vmem:[%s166 + $0x8] sm:$0xf]
      %v178 = vld [vmem:[%s166 + $0xc] sm:$0xf]
      %v179 = vld [vmem:[%s166 + $0x10] sm:$0xf]
      %v180 = vld [vmem:[%s166 + $0x14] sm:$0xf]
      %v181 = vld [vmem:[%s166 + $0x18] sm:$0xf]
      %v182 = vld [vmem:[%s166 + $0x1c] sm:$0xf]
      %v183 = vld [vmem:[%s166 + $0x20] sm:$0xf]
      %v184 = vld [vmem:[%s166 + $0x24] sm:$0xf]
      %v185 = vld [vmem:[%s166 + $0x28] sm:$0xf]
      %v186 = vld [vmem:[%s166 + $0x2c] sm:$0xf]
      %v187 = vld [vmem:[%s166 + $0x30] sm:$0xf]
      %v188 = vld [vmem:[%s166 + $0x34] sm:$0xf]
      %v189 = vld [vmem:[%s166 + $0x38] sm:$0xf]
      %v190 = vld [vmem:[%s166 + $0x3c] sm:$0xf]
      %v191 = vld [vmem:[%s166 + $0x40] sm:$0xf]
      %v192 = vld [vmem:[%s166 + $0x44] sm:$0xf]
      %v193 = vld [vmem:[%s166 + $0x48] sm:$0xf]
      %v194 = vld [vmem:[%s166 + $0x4c] sm:$0xf]
      %v195 = vld [vmem:[%s166 + $0x50] sm:$0xf]
      %v196 = vld [vmem:[%s166 + $0x54] sm:$0xf]
      %v197 = vld [vmem:[%s166 + $0x58] sm:$0xf]
      %v198 = vld [vmem:[%s166 + $0x5c] sm:$0xf]
      %v199 = vld [vmem:[%s166 + $0x60] sm:$0xf]
      %v200 = vld [vmem:[%s166 + $0x64] sm:$0xf]
      %v201 = vld [vmem:[%s166 + $0x68] sm:$0xf]
      %v202 = vld [vmem:[%s166 + $0x6c] sm:$0xf]
      %v203 = vld [vmem:[%s166 + $0x70] sm:$0xf]
      %v204 = vld [vmem:[%s166 + $0x74] sm:$0xf]
      %v205 = vld [vmem:[%s166 + $0x78] sm:$0xf]
      %v206 = vld [vmem:[%s166 + $0x7c] sm:$0xf]
      %v207 = vld [vmem:[%s1] sm:$0xf]
      %v208 = vld [vmem:[%s1 + $0x4] sm:$0xf]
      %v209 = vld [vmem:[%s1 + $0x8] sm:$0xf]
      %v210 = vld [vmem:[%s1 + $0xc] sm:$0xf]
      %v211 = vld [vmem:[%s1 + $0x10] sm:$0xf]
      %v212 = vld [vmem:[%s1 + $0x14] sm:$0xf]
      %v213 = vld [vmem:[%s2] sm:$0x1]
      %v215 = vlaneseq
      %v216 = vshrl.u32 %v215, 7
      %v217 = vsub.s32 0, %v216
      %v218 = vrot.slane %v213, %v217
      %v252 = vunpack.c.l.b16 %v175
      %v253 = vunpack.c.l.b16 %v176
      %v254 = vunpack.c.l.b16 %v177
      %v255 = vunpack.c.l.b16 %v178
      %v256 = vunpack.c.l.b16 %v179
      %v257 = vunpack.c.l.b16 %v180
      %v258 = vunpack.c.l.b16 %v181
      %v259 = vunpack.c.l.b16 %v182
      %v260 = vunpack.c.l.b16 %v183
      %v261 = vunpack.c.l.b16 %v184
      %v262 = vunpack.c.l.b16 %v185
      %v263 = vunpack.c.l.b16 %v186
      %v264 = vunpack.c.l.b16 %v187
      %v265 = vunpack.c.l.b16 %v188
      %v266 = vunpack.c.l.b16 %v189
      %v267 = vunpack.c.l.b16 %v190
      %v268 = vunpack.c.l.b16 %v191
      %v269 = vunpack.c.l.b16 %v192
      %v270 = vunpack.c.l.b16 %v193
      %v271 = vunpack.c.l.b16 %v194
      %v272 = vunpack.c.l.b16 %v195
      %v273 = vunpack.c.l.b16 %v196
      %v274 = vunpack.c.l.b16 %v197
      %v275 = vunpack.c.l.b16 %v198
      %v276 = vunpack.c.l.b16 %v199
      %v277 = vunpack.c.l.b16 %v200
      %v278 = vunpack.c.l.b16 %v201
      %v279 = vunpack.c.l.b16 %v202
      %v280 = vunpack.c.l.b16 %v203
      %v281 = vunpack.c.l.b16 %v204
      %v282 = vunpack.c.l.b16 %v205
      %v283 = vunpack.c.l.b16 %v206
      %v284 = vpack.c.b16 %v253, %v252
      %v285 = vpack.c.b16 %v255, %v254
      %v286 = vpack.c.b16 %v257, %v256
      %v287 = vpack.c.b16 %v259, %v258
      %v288 = vpack.c.b16 %v261, %v260
      %v289 = vpack.c.b16 %v263, %v262
      %v290 = vpack.c.b16 %v265, %v264
      %v291 = vpack.c.b16 %v267, %v266
      %v292 = vpack.c.b16 %v269, %v268
      %v293 = vpack.c.b16 %v271, %v270
      %v294 = vpack.c.b16 %v273, %v272
      %v295 = vpack.c.b16 %v275, %v274
      %v296 = vpack.c.b16 %v277, %v276
      %v297 = vpack.c.b16 %v279, %v278
      %v298 = vpack.c.b16 %v281, %v280
      %v299 = vpack.c.b16 %v283, %v282
      %v306 = vunpack.c.l.b16 %v207
      %v307 = vunpack.c.l.b16 %v208
      %v308 = vunpack.c.l.b16 %v209
      %v309 = vunpack.c.l.b16 %v210
      %v310 = vunpack.c.l.b16 %v211
      %v311 = vunpack.c.l.b16 %v212
      %v312 = vpack.c.b16 %v307, %v306
      %v313 = vpack.c.b16 %v309, %v308
      %v314 = vpack.c.b16 %v311, %v310
      %vm318 = vcmask 392192
      %v320 = vsel %vm318, %v284, 0
      %v323 = vsel %vm318, %v285, 0
      %v326 = vsel %vm318, %v286, 0
      %v329 = vsel %vm318, %v287, 0
      %v332 = vsel %vm318, %v288, 0
      %v335 = vsel %vm318, %v289, 0
      %v338 = vsel %vm318, %v290, 0
      %v341 = vsel %vm318, %v291, 0
      %v344 = vsel %vm318, %v292, 0
      %v347 = vsel %vm318, %v293, 0
      %v350 = vsel %vm318, %v294, 0
      %v353 = vsel %vm318, %v295, 0
      %v356 = vsel %vm318, %v296, 0
      %v359 = vsel %vm318, %v297, 0
      %v362 = vsel %vm318, %v298, 0
      %v365 = vsel %vm318, %v299, 0
      %367 = vmatprep.subr.bf16.mxu0 0
      %368 = vmatpush1.bf16.msra.mxu0 %v312
      %369 = vmatprep.subr.bf16.mxu0 0
      %370 = vmatpush1.bf16.msra.mxu0 %v313
      %371 = vmatprep.subr.bf16.mxu0 0
      %372 = vmatpush1.bf16.msra.mxu0 %v314
      %373 = vmatprep.subr.bf16.mxu0 0
      %374 = vmatpush1.bf16.msra.mxu0 0
      %375 = vmatprep.subr.bf16.mxu0 0
      %376 = vmatpush1.bf16.msra.mxu0 0
      %377 = vmatprep.subr.bf16.mxu0 0
      %378 = vmatpush1.bf16.msra.mxu0 0
      %379 = vmatprep.subr.bf16.mxu0 0
      %380 = vmatpush1.bf16.msra.mxu0 0
      %381 = vmatprep.subr.bf16.mxu0 0
      %382 = vmatpush1.bf16.msra.mxu0 0
      %383 = vmatprep.subr.bf16.mxu0 0
      %384 = vmatpush1.bf16.msra.mxu0 0
      %385 = vmatprep.subr.bf16.mxu0 0
      %386 = vmatpush1.bf16.msra.mxu0 0
      %387 = vmatprep.subr.bf16.mxu0 0
      %388 = vmatpush1.bf16.msra.mxu0 0
      %389 = vmatprep.subr.bf16.mxu0 0
      %390 = vmatpush1.bf16.msra.mxu0 0
      %391 = vmatprep.subr.bf16.mxu0 0
      %392 = vmatpush1.bf16.msra.mxu0 0
      %393 = vmatprep.subr.bf16.mxu0 0
      %394 = vmatpush1.bf16.msra.mxu0 0
      %395 = vmatprep.subr.bf16.mxu0 0
      %396 = vmatpush1.bf16.msra.mxu0 0
      %397 = vmatprep.subr.bf16.mxu0 0
      %398 = vmatpush1.bf16.msra.mxu0 0
      %399 = vmatprep.mubr.bf16.mxu0 0
      %400 = vmatmul.mubr.bf16.gmra.mrb[0].mxu0 %v320
      %v401 = vpop.f32.mrb[0].mxu0
      %v402 = vadd.f32 %v218, %v401
      %v403 = vpop.f32.mrb[0].mxu0
      %v404 = vpop.f32.mrb[0].mxu0
      %v405 = vadd.f32 %v218, %v404
      %v406 = vpop.f32.mrb[0].mxu0
      %407 = vmatprep.mubr.bf16.mxu0 0
      %408 = vmatmul.mubr.bf16.gmra.mrb[0].mxu0 %v323
      %v409 = vpop.f32.mrb[0].mxu0
      %v410 = vadd.f32 %v218, %v409
      %v411 = vpop.f32.mrb[0].mxu0
      %v412 = vpop.f32.mrb[0].mxu0
      %v413 = vadd.f32 %v218, %v412
      %v414 = vpop.f32.mrb[0].mxu0
      %415 = vmatprep.mubr.bf16.mxu0 0
      %416 = vmatmul.mubr.bf16.gmra.mrb[0].mxu0 %v326
      %v417 = vpop.f32.mrb[0].mxu0
      %v418 = vadd.f32 %v218, %v417
      %v419 = vpop.f32.mrb[0].mxu0
      %v420 = vpop.f32.mrb[0].mxu0
      %v421 = vadd.f32 %v218, %v420
      %v422 = vpop.f32.mrb[0].mxu0
      %423 = vmatprep.mubr.bf16.mxu0 0
      %424 = vmatmul.mubr.bf16.gmra.mrb[0].mxu0 %v329
      %v425 = vpop.f32.mrb[0].mxu0
      %v426 = vadd.f32 %v218, %v425
      %v427 = vpop.f32.mrb[0].mxu0
      %v428 = vpop.f32.mrb[0].mxu0
      %v429 = vadd.f32 %v218, %v428
      %v430 = vpop.f32.mrb[0].mxu0
      %431 = vmatprep.mubr.bf16.mxu0 0
      %432 = vmatmul.mubr.bf16.gmra.mrb[0].mxu0 %v332
      %v433 = vpop.f32.mrb[0].mxu0
      %v434 = vadd.f32 %v218, %v433
      %v435 = vpop.f32.mrb[0].mxu0
      %v436 = vpop.f32.mrb[0].mxu0
      %v437 = vadd.f32 %v218, %v436
      %v438 = vpop.f32.mrb[0].mxu0
      %439 = vmatprep.mubr.bf16.mxu0 0
      %440 = vmatmul.mubr.bf16.gmra.mrb[0].mxu0 %v335
      %v441 = vpop.f32.mrb[0].mxu0
      %v442 = vadd.f32 %v218, %v441
      %v443 = vpop.f32.mrb[0].mxu0
      %v444 = vpop.f32.mrb[0].mxu0
      %v445 = vadd.f32 %v218, %v444
      %v446 = vpop.f32.mrb[0].mxu0
      %447 = vmatprep.mubr.bf16.mxu0 0
      %448 = vmatmul.mubr.bf16.gmra.mrb[0].mxu0 %v338
      %v449 = vpop.f32.mrb[0].mxu0
      %v450 = vadd.f32 %v218, %v449
      %v451 = vpop.f32.mrb[0].mxu0
      %v452 = vpop.f32.mrb[0].mxu0
      %v453 = vadd.f32 %v218, %v452
      %v454 = vpop.f32.mrb[0].mxu0
      %455 = vmatprep.mubr.bf16.mxu0 0
      %456 = vmatmul.mubr.bf16.gmra.mrb[0].mxu0 %v341
      %v457 = vpop.f32.mrb[0].mxu0
      %v458 = vadd.f32 %v218, %v457
      %v459 = vpop.f32.mrb[0].mxu0
      %v460 = vpop.f32.mrb[0].mxu0
      %v461 = vadd.f32 %v218, %v460
      %v462 = vpop.f32.mrb[0].mxu0
      %463 = vmatprep.mubr.bf16.mxu0 0
      %464 = vmatmul.mubr.bf16.gmra.mrb[0].mxu0 %v344
      %v465 = vpop.f32.mrb[0].mxu0
      %v466 = vadd.f32 %v218, %v465
      %v467 = vpop.f32.mrb[0].mxu0
      %v468 = vpop.f32.mrb[0].mxu0
      %v469 = vadd.f32 %v218, %v468
      %v470 = vpop.f32.mrb[0].mxu0
      %471 = vmatprep.mubr.bf16.mxu0 0
      %472 = vmatmul.mubr.bf16.gmra.mrb[0].mxu0 %v347
      %v473 = vpop.f32.mrb[0].mxu0
      %v474 = vadd.f32 %v218, %v473
      %v475 = vpop.f32.mrb[0].mxu0
      %v476 = vpop.f32.mrb[0].mxu0
      %v477 = vadd.f32 %v218, %v476
      %v478 = vpop.f32.mrb[0].mxu0
      %479 = vmatprep.mubr.bf16.mxu0 0
      %480 = vmatmul.mubr.bf16.gmra.mrb[0].mxu0 %v350
      %v481 = vpop.f32.mrb[0].mxu0
      %v482 = vadd.f32 %v218, %v481
      %v483 = vpop.f32.mrb[0].mxu0
      %v484 = vpop.f32.mrb[0].mxu0
      %v485 = vadd.f32 %v218, %v484
      %v486 = vpop.f32.mrb[0].mxu0
      %487 = vmatprep.mubr.bf16.mxu0 0
      %488 = vmatmul.mubr.bf16.gmra.mrb[0].mxu0 %v353
      %v489 = vpop.f32.mrb[0].mxu0
      %v490 = vadd.f32 %v218, %v489
      %v491 = vpop.f32.mrb[0].mxu0
      %v492 = vpop.f32.mrb[0].mxu0
      %v493 = vadd.f32 %v218, %v492
      %v494 = vpop.f32.mrb[0].mxu0
      %495 = vmatprep.mubr.bf16.mxu0 0
      %496 = vmatmul.mubr.bf16.gmra.mrb[0].mxu0 %v356
      %v497 = vpop.f32.mrb[0].mxu0
      %v498 = vadd.f32 %v218, %v497
      %v499 = vpop.f32.mrb[0].mxu0
      %v500 = vpop.f32.mrb[0].mxu0
      %v501 = vadd.f32 %v218, %v500
      %v502 = vpop.f32.mrb[0].mxu0
      %503 = vmatprep.mubr.bf16.mxu0 0
      %504 = vmatmul.mubr.bf16.gmra.mrb[0].mxu0 %v359
      %v505 = vpop.f32.mrb[0].mxu0
      %v506 = vadd.f32 %v218, %v505
      %v507 = vpop.f32.mrb[0].mxu0
      %v508 = vpop.f32.mrb[0].mxu0
      %v509 = vadd.f32 %v218, %v508
      %v510 = vpop.f32.mrb[0].mxu0
      %511 = vmatprep.mubr.bf16.mxu0 0
      %512 = vmatmul.mubr.bf16.gmra.mrb[0].mxu0 %v362
      %v513 = vpop.f32.mrb[0].mxu0
      %v514 = vadd.f32 %v218, %v513
      %v515 = vpop.f32.mrb[0].mxu0
      %v516 = vpop.f32.mrb[0].mxu0
      %v517 = vadd.f32 %v218, %v516
      %v518 = vpop.f32.mrb[0].mxu0
      %519 = vmatprep.mubr.bf16.mxu0 0
      %520 = vmatmul.mubr.bf16.gmra.mrb[0].mxu0 %v365
      %v521 = vpop.f32.mrb[0].mxu0
      %v522 = vadd.f32 %v218, %v521
      %v523 = vpop.f32.mrb[0].mxu0
      %v524 = vpop.f32.mrb[0].mxu0
      %v525 = vadd.f32 %v218, %v524
      %v526 = vpop.f32.mrb[0].mxu0
      %527 = vdwg.mxu0
      %v528 = vmax.f32 %v402, 0.0
      %v529 = vmax.f32 %v405, 0.0
      %v530 = vmax.f32 %v410, 0.0
      %v531 = vmax.f32 %v413, 0.0
      %v532 = vmax.f32 %v418, 0.0
      %v533 = vmax.f32 %v421, 0.0
      %v534 = vmax.f32 %v426, 0.0
      %v535 = vmax.f32 %v429, 0.0
      %v536 = vmax.f32 %v434, 0.0
      %v537 = vmax.f32 %v437, 0.0
      %v538 = vmax.f32 %v442, 0.0
      %v539 = vmax.f32 %v445, 0.0
      %v540 = vmax.f32 %v450, 0.0
      %v541 = vmax.f32 %v453, 0.0
      %v542 = vmax.f32 %v458, 0.0
      %v543 = vmax.f32 %v461, 0.0
      %v544 = vmax.f32 %v466, 0.0
      %v545 = vmax.f32 %v469, 0.0
      %v546 = vmax.f32 %v474, 0.0
      %v547 = vmax.f32 %v477, 0.0
      %v548 = vmax.f32 %v482, 0.0
      %v549 = vmax.f32 %v485, 0.0
      %v550 = vmax.f32 %v490, 0.0
      %v551 = vmax.f32 %v493, 0.0
      %v552 = vmax.f32 %v498, 0.0
      %v553 = vmax.f32 %v501, 0.0
      %v554 = vmax.f32 %v506, 0.0
      %v555 = vmax.f32 %v509, 0.0
      %v556 = vmax.f32 %v514, 0.0
      %v557 = vmax.f32 %v517, 0.0
      %v558 = vmax.f32 %v522, 0.0
      %v559 = vmax.f32 %v525, 0.0
      %560 = vst [vmem:[%s172] sm:$0xff] %v528
      %561 = vst [vmem:[%s172 + $0x8] sm:$0xff] %v529
      %562 = vst [vmem:[%s172 + $0x10] sm:$0xff] %v530
      %563 = vst [vmem:[%s172 + $0x18] sm:$0xff] %v531
      %564 = vst [vmem:[%s172 + $0x20] sm:$0xff] %v532
      %565 = vst [vmem:[%s172 + $0x28] sm:$0xff] %v533
      %566 = vst [vmem:[%s172 + $0x30] sm:$0xff] %v534
      %567 = vst [vmem:[%s172 + $0x38] sm:$0xff] %v535
      %568 = vst [vmem:[%s172 + $0x40] sm:$0xff] %v536
      %569 = vst [vmem:[%s172 + $0x48] sm:$0xff] %v537
      %570 = vst [vmem:[%s172 + $0x50] sm:$0xff] %v538
      %571 = vst [vmem:[%s172 + $0x58] sm:$0xff] %v539
      %572 = vst [vmem:[%s172 + $0x60] sm:$0xff] %v540
      %573 = vst [vmem:[%s172 + $0x68] sm:$0xff] %v541
      %574 = vst [vmem:[%s172 + $0x70] sm:$0xff] %v542
      %575 = vst [vmem:[%s172 + $0x78] sm:$0xff] %v543
      %576 = vst [vmem:[%s172 + $0x80] sm:$0xff] %v544
      %577 = vst [vmem:[%s172 + $0x88] sm:$0xff] %v545
      %578 = vst [vmem:[%s172 + $0x90] sm:$0xff] %v546
      %579 = vst [vmem:[%s172 + $0x98] sm:$0xff] %v547
      %580 = vst [vmem:[%s172 + $0xa0] sm:$0xff] %v548
      %581 = vst [vmem:[%s172 + $0xa8] sm:$0xff] %v549
      %582 = vst [vmem:[%s172 + $0xb0] sm:$0xff] %v550
      %583 = vst [vmem:[%s172 + $0xb8] sm:$0xff] %v551
      %584 = vst [vmem:[%s172 + $0xc0] sm:$0xff] %v552
      %585 = vst [vmem:[%s172 + $0xc8] sm:$0xff] %v553
      %586 = vst [vmem:[%s172 + $0xd0] sm:$0xff] %v554
      %587 = vst [vmem:[%s172 + $0xd8] sm:$0xff] %v555
      %588 = vst [vmem:[%s172 + $0xe0] sm:$0xff] %v556
      %589 = vst [vmem:[%s172 + $0xe8] sm:$0xff] %v557
      %590 = vst [vmem:[%s172 + $0xf0] sm:$0xff] %v558
      %591 = vst [vmem:[%s172 + $0xf8] sm:$0xff] %v559
      %s592 = smul.u32 32, %s14
      %p593 = scmp.lt.s32.totalorder %s592, 255
      %s594 = scalar_select %p593, %s592, 255
      %s595 = smul.addr %s594, 8
      %s596 = scalar_lea.vmem %s3, %s595
      // Predicated region
      $region33: #{vae_forward.12} parent=31 // pred_check
        %p597 = pneg %p100
      $region34: #{vae_forward.12} parent=31 // pred_check_branch
        %599 = sbr.rel (%p597) target = $region36
      $region35: #{vae_forward.12} parent=31 // pred_region
        %s600 = smul.u32 32, %s14
      $region36: #{vae_forward.12} parent=31 // pred_fallthru
        _
    $region32: #{vae_forward.12} parent=5 // pred_fallthru
      _
    %p601 = scmp.le.s32.totalorder 2, %s9
    // Predicated region
    $region37: #{vae_forward.12} parent=5 // pred_check
      %p602 = pneg %p601
    $region38: #{vae_forward.12} parent=5 // pred_check_branch
      %604 = sbr.rel (%p602) target = $region40
    $region39: #{vae_forward.12} parent=5 // pred_region
      %s605 = ssub.s32 %s9, 2
      // Predicated region
      $region41: #{vae_forward.12} parent=39 // pred_check
        %p606 = pneg %p106
      $region42: #{vae_forward.12} parent=39 // pred_check_branch
        %608 = sbr.rel (%p606) target = $region44
      $region43: #{vae_forward.12} parent=39 // pred_region
        %s609 = smul.u32 32, %s15
        %p610 = scmp.lt.s32.totalorder %s609, 255
        %s611 = scalar_select %p610, %s609, 255
        %s612 = smul.addr %s611, 8
        %s613 = scalar_lea.vmem %s3, %s612
      $region44: #{vae_forward.12} parent=39 // pred_fallthru
        _
    $region40: #{vae_forward.12} parent=5 // pred_fallthru
      _
  $region6: #{vae_forward.12} parent=0 // loop_footer
    %s13 = sadd.s32 1, %s9
  $region7: #{vae_forward.12} parent=0 // loop_footer_branch
    %8 = sbr.rel target = $region3
  $region8: #{vae_forward.12} parent=0 // loop_exit
    _

// kernel: vae_forward.13
$region0: #{vae_forward.13}
  #allocation0 [shape = 'u32[]', space=smem, size = 0x4, offset = 0x4, fixed_abs, tag = 'smem constant byte address 0x4 - core index']
  #allocation1 [shape = 'u32[144,128]{1,0:T(1,128)}', space=vmem, size = 0x12000, scoped, tag = 'internal scratch']
  %s0 = inlined_call_operand.vmem [shape: bf16[512,512], index: 0, kind: input, shape index: {}]
  %s1 = inlined_call_operand.vmem [shape: bf16[512,128], index: 1, kind: input, shape index: {}]
  %s2 = inlined_call_operand.vmem [shape: f32[1,128], index: 2, kind: input, shape index: {}]
  %s3 = inlined_call_operand.vmem [shape: f32[512,128], index: 3, kind: output, shape index: {}]
  %s4 = sld [smem:[#allocation0]]
  $region45: #{vae_forward.13} parent=0
    _
  %s6 = ssub.s32 1, %s4
  %s7 = scalar_select 0, %s6, %s4
  loop: start=0, step=1, limit=4
  $region2: #{vae_forward.13} parent=0 // loop_pre_header
    _
  $region3: #{vae_forward.13} parent=0 // loop_header
    %s9 = sphi 0, %s13
    %p10 = scmp.ge.s32.totalorder %s9, 4
    %s19 = sphi 0, %s21
    %s22 = sphi 0, %s19
    %s23 = sphi 0, %s22
    %s39 = sphi 0, %s23
    %s43 = sphi 0, %s43
    %s45 = sphi 0, %s43
    %s46 = sphi 0, %s45
    %s60 = sphi 0, %s46
    %s64 = sphi 0, %s64
    %s66 = sphi 0, %s64
    %s67 = sphi 0, %s66
    %s81 = sphi 0, %s67
    %s87 = sphi 0, %s89
    %s90 = sphi 0, %s87
    %s91 = sphi 0, %s90
    %s107 = sphi 0, %s91
  $region4: #{vae_forward.13} parent=0 // loop_header_branch
    %12 = sbr.rel (%p10) target = $region8
  $region5: #{vae_forward.13} parent=0 // loop_body
    %s14 = ssub.s32 %s9, 1
    %s15 = ssub.s32 %s9, 2
    %s16 = sadd.s32 %s9, 1
    %s17 = ssub.s32 %s9, %s16
    %p18 = scmp.eq.s32.totalorder %s17, 0
    %s20 = sadd.s32 %s19, 1
    %s21 = scalar_select %p18, %s19, %s20
    %p24 = pneg %p18
    %p25 = scmp.eq.s32.totalorder %s9, 1
    %p26 = por %p24, %p25
    %p27 = scmp.ne.s32.totalorder %s19, %s22
    %p28 = scmp.eq.s32.totalorder %s9, 0
    %p29 = por %p27, %p28
    %p30 = scmp.ne.s32.totalorder %s19, %s22
    %p31 = scmp.eq.s32.totalorder %s14, 1
    %p32 = por %p30, %p31
    %p33 = scmp.ne.s32.totalorder %s22, %s23
    %p34 = scmp.eq.s32.totalorder %s14, 0
    %p35 = por %p33, %p34
    %p36 = scmp.ne.s32.totalorder %s22, %s23
    %p37 = scmp.eq.s32.totalorder %s15, 1
    %p38 = por %p36, %p37
    %p40 = scmp.ne.s32.totalorder %s23, %s39
    %p41 = scmp.eq.s32.totalorder %s15, 0
    %p42 = por %p40, %p41
    %s44 = sadd.s32 %s43, 1
    %p47 = scmp.eq.s32.totalorder %s9, 1
    %p48 = scmp.ne.s32.totalorder %s43, %s45
    %p49 = scmp.eq.s32.totalorder %s9, 0
    %p50 = por %p48, %p49
    %p51 = scmp.ne.s32.totalorder %s43, %s45
    %p52 = scmp.eq.s32.totalorder %s14, 1
    %p53 = por %p51, %p52
    %p54 = scmp.ne.s32.totalorder %s45, %s46
    %p55 = scmp.eq.s32.totalorder %s14, 0
    %p56 = por %p54, %p55
    %p57 = scmp.ne.s32.totalorder %s45, %s46
    %p58 = scmp.eq.s32.totalorder %s15, 1
    %p59 = por %p57, %p58
    %p61 = scmp.ne.s32.totalorder %s46, %s60
    %p62 = scmp.eq.s32.totalorder %s15, 0
    %p63 = por %p61, %p62
    %s65 = sadd.s32 %s64, 1
    %p68 = scmp.eq.s32.totalorder %s9, 1
    %p69 = scmp.ne.s32.totalorder %s64, %s66
    %p70 = scmp.eq.s32.totalorder %s9, 0
    %p71 = por %p69, %p70
    %p72 = scmp.ne.s32.totalorder %s64, %s66
    %p73 = scmp.eq.s32.totalorder %s14, 1
    %p74 = por %p72, %p73
    %p75 = scmp.ne.s32.totalorder %s66, %s67
    %p76 = scmp.eq.s32.totalorder %s14, 0
    %p77 = por %p75, %p76
    %p78 = scmp.ne.s32.totalorder %s66, %s67
    %p79 = scmp.eq.s32.totalorder %s15, 1
    %p80 = por %p78, %p79
    %p82 = scmp.ne.s32.totalorder %s67, %s81
    %p83 = scmp.eq.s32.totalorder %s15, 0
    %p84 = por %p82, %p83
    %s85 = ssub.s32 %s9, %s16
    %p86 = scmp.eq.s32.totalorder %s85, 0
    %s88 = sadd.s32 %s87, 1
    %s89 = scalar_select %p86, %s87, %s88
    %p92 = pneg %p86
    %p93 = scmp.eq.s32.totalorder %s9, 1
    %p94 = por %p92, %p93
    %p95 = scmp.ne.s32.totalorder %s87, %s90
    %p96 = scmp.eq.s32.totalorder %s9, 0
    %p97 = por %p95, %p96
    %p98 = scmp.ne.s32.totalorder %s87, %s90
    %p99 = scmp.eq.s32.totalorder %s14, 1
    %p100 = por %p98, %p99
    %p101 = scmp.ne.s32.totalorder %s90, %s91
    %p102 = scmp.eq.s32.totalorder %s14, 0
    %p103 = por %p101, %p102
    %p104 = scmp.ne.s32.totalorder %s90, %s91
    %p105 = scmp.eq.s32.totalorder %s15, 1
    %p106 = por %p104, %p105
    %p108 = scmp.ne.s32.totalorder %s91, %s107
    %p109 = scmp.eq.s32.totalorder %s15, 0
    %p110 = por %p108, %p109
    %p111 = scmp.le.s32.totalorder 1, %s9
    %p112 = scmp.lt.s32.totalorder %s9, 3
    %p113 = pnand %p111, %p112
    %p114 = pneg %p113
    // Predicated region
    $region9: #{vae_forward.13} parent=5 // pred_check
      _
    $region10: #{vae_forward.13} parent=5 // pred_check_branch
      %116 = sbr.rel (%p113) target = $region12
    $region11: #{vae_forward.13} parent=5 // pred_region
      %s117 = ssub.s32 %s9, 1
      // Predicated region
      $region13: #{vae_forward.13} parent=11 // pred_check
        %p118 = pneg %p56
      $region14: #{vae_forward.13} parent=11 // pred_check_branch
        %120 = sbr.rel (%p118) target = $region16
      $region15: #{vae_forward.13} parent=11 // pred_region
        _
      $region16: #{vae_forward.13} parent=11 // pred_fallthru
        _
      // Predicated region
      $region17: #{vae_forward.13} parent=11 // pred_check
        %p121 = pneg %p77
      $region18: #{vae_forward.13} parent=11 // pred_check_branch
        %123 = sbr.rel (%p121) target = $region20
      $region19: #{vae_forward.13} parent=11 // pred_region
        _
      $region20: #{vae_forward.13} parent=11 // pred_fallthru
        _
    $region12: #{vae_forward.13} parent=5 // pred_fallthru
      _
    %p124 = scmp.lt.s32.totalorder %s9, 2
    // Predicated region
    $region21: #{vae_forward.13} parent=5 // pred_check
      %p125 = pneg %p124
    $region22: #{vae_forward.13} parent=5 // pred_check_branch
      %127 = sbr.rel (%p125) target = $region24
    $region23: #{vae_forward.13} parent=5 // pred_region
      // Predicated region
      $region25: #{vae_forward.13} parent=23 // pred_check
        %p128 = pneg %p29
      $region26: #{vae_forward.13} parent=23 // pred_check_branch
        %130 = sbr.rel (%p128) target = $region28
      $region27: #{vae_forward.13} parent=23 // pred_region
        %s131 = smul.u32 32, %s9
        %p132 = scmp.lt.s32.totalorder %s131, 63
        %s133 = scalar_select %p132, %s131, 63
        %s134 = smul.addr %s133, 4
        %s135 = smul.addr %s134, 4
        %s136 = scalar_lea.vmem %s0, %s135
        %s137 = smul.u32 32, %s9
      $region28: #{vae_forward.13} parent=23 // pred_fallthru
        _
    $region24: #{vae_forward.13} parent=5 // pred_fallthru
      _
    %p138 = scmp.le.s32.totalorder 1, %s9
    %p139 = scmp.lt.s32.totalorder %s9, 3
    %p140 = pnand %p138, %p139
    %p141 = pneg %p140
    // Predicated region
    $region29: #{vae_forward.13} parent=5 // pred_check
      _
    $region30: #{vae_forward.13} parent=5 // pred_check_branch
      %143 = sbr.rel (%p140) target = $region32
    $region31: #{vae_forward.13} parent=5 // pred_region
      %s144 = ssub.s32 %s9, 1
      %s145 = smul.u32 32, %s14
      %p146 = scmp.lt.s32.totalorder %s145, 63
      %s147 = scalar_select %p146, %s145, 63
      %s148 = smul.addr %s147, 4
      %s149 = smul.addr %s148, 4
      %s150 = scalar_lea.vmem %s0, %s149
      %p151 = pneg %p35
      %p152 = pneg %p32
      %p153 = pneg %p56
      %p154 = pneg %p53
      %p155 = pneg %p77
      %p156 = pneg %p74
      %p157 = pneg %p103
      %p158 = pneg %p100
      %s159 = smul.u32 32, %s14
      %p160 = scmp.lt.s32.totalorder %s159, 63
      %s161 = scalar_select %p160, %s159, 63
      %s162 = smul.addr %s161, 8
      %s163 = scalar_lea.vmem %s3, %s162
      %s164 = smul.u32 32, %s14
      %p165 = scmp.lt.s32.totalorder %s164, 63
      %s166 = scalar_select %p165, %s164, 63
      %s167 = smul.addr %s166, 4
      %s168 = smul.addr %s167, 4
      %s169 = scalar_lea.vmem %s0, %s168
      %s170 = smul.u32 32, %s14
      %s171 = smul.u32 32, %s14
      %p172 = scmp.lt.s32.totalorder %s171, 63
      %s173 = scalar_select %p172, %s171, 63
      %s174 = smul.addr %s173, 8
      %s175 = scalar_lea.vmem %s3, %s174
      %s176 = smul.u32 32, %s14
      %v178 = vld [vmem:[%s169] sm:$0xff]
      %v179 = vld [vmem:[%s169 + $0x8] sm:$0xff]
      %v180 = vld [vmem:[%s169 + $0x10] sm:$0xff]
      %v181 = vld [vmem:[%s169 + $0x18] sm:$0xff]
      %v182 = vld [vmem:[%s169 + $0x20] sm:$0xff]
      %v183 = vld [vmem:[%s169 + $0x28] sm:$0xff]
      %v184 = vld [vmem:[%s169 + $0x30] sm:$0xff]
      %v185 = vld [vmem:[%s169 + $0x38] sm:$0xff]
      %v186 = vld [vmem:[%s169 + $0x40] sm:$0xff]
      %v187 = vld [vmem:[%s169 + $0x48] sm:$0xff]
      %v188 = vld [vmem:[%s169 + $0x50] sm:$0xff]
      %v189 = vld [vmem:[%s169 + $0x58] sm:$0xff]
      %v190 = vld [vmem:[%s169 + $0x60] sm:$0xff]
      %v191 = vld [vmem:[%s169 + $0x68] sm:$0xff]
      %v192 = vld [vmem:[%s169 + $0x70] sm:$0xff]
      %v193 = vld [vmem:[%s169 + $0x78] sm:$0xff]
      %v194 = vld [vmem:[%s169 + $0x80] sm:$0xff]
      %v195 = vld [vmem:[%s169 + $0x88] sm:$0xff]
      %v196 = vld [vmem:[%s169 + $0x90] sm:$0xff]
      %v197 = vld [vmem:[%s169 + $0x98] sm:$0xff]
      %v198 = vld [vmem:[%s169 + $0xa0] sm:$0xff]
      %v199 = vld [vmem:[%s169 + $0xa8] sm:$0xff]
      %v200 = vld [vmem:[%s169 + $0xb0] sm:$0xff]
      %v201 = vld [vmem:[%s169 + $0xb8] sm:$0xff]
      %v202 = vld [vmem:[%s169 + $0xc0] sm:$0xff]
      %v203 = vld [vmem:[%s169 + $0xc8] sm:$0xff]
      %v204 = vld [vmem:[%s169 + $0xd0] sm:$0xff]
      %v205 = vld [vmem:[%s169 + $0xd8] sm:$0xff]
      %v206 = vld [vmem:[%s169 + $0xe0] sm:$0xff]
      %v207 = vld [vmem:[%s169 + $0xe8] sm:$0xff]
      %v208 = vld [vmem:[%s169 + $0xf0] sm:$0xff]
      %v209 = vld [vmem:[%s169 + $0xf8] sm:$0xff]
      %v210 = vld [vmem:[%s169 + $0x100] sm:$0xff]
      %v211 = vld [vmem:[%s169 + $0x108] sm:$0xff]
      %v212 = vld [vmem:[%s169 + $0x110] sm:$0xff]
      %v213 = vld [vmem:[%s169 + $0x118] sm:$0xff]
      %v214 = vld [vmem:[%s169 + $0x120] sm:$0xff]
      %v215 = vld [vmem:[%s169 + $0x128] sm:$0xff]
      %v216 = vld [vmem:[%s169 + $0x130] sm:$0xff]
      %v217 = vld [vmem:[%s169 + $0x138] sm:$0xff]
      %v218 = vld [vmem:[%s169 + $0x140] sm:$0xff]
      %v219 = vld [vmem:[%s169 + $0x148] sm:$0xff]
      %v220 = vld [vmem:[%s169 + $0x150] sm:$0xff]
      %v221 = vld [vmem:[%s169 + $0x158] sm:$0xff]
      %v222 = vld [vmem:[%s169 + $0x160] sm:$0xff]
      %v223 = vld [vmem:[%s169 + $0x168] sm:$0xff]
      %v224 = vld [vmem:[%s169 + $0x170] sm:$0xff]
      %v225 = vld [vmem:[%s169 + $0x178] sm:$0xff]
      %v226 = vld [vmem:[%s169 + $0x180] sm:$0xff]
      %v227 = vld [vmem:[%s169 + $0x188] sm:$0xff]
      %v228 = vld [vmem:[%s169 + $0x190] sm:$0xff]
      %v229 = vld [vmem:[%s169 + $0x198] sm:$0xff]
      %v230 = vld [vmem:[%s169 + $0x1a0] sm:$0xff]
      %v231 = vld [vmem:[%s169 + $0x1a8] sm:$0xff]
      %v232 = vld [vmem:[%s169 + $0x1b0] sm:$0xff]
      %v233 = vld [vmem:[%s169 + $0x1b8] sm:$0xff]
      %v234 = vld [vmem:[%s169 + $0x1c0] sm:$0xff]
      %v235 = vld [vmem:[%s169 + $0x1c8] sm:$0xff]
      %v236 = vld [vmem:[%s169 + $0x1d0] sm:$0xff]
      %v237 = vld [vmem:[%s169 + $0x1d8] sm:$0xff]
      %v238 = vld [vmem:[%s169 + $0x1e0] sm:$0xff]
      %v239 = vld [vmem:[%s169 + $0x1e8] sm:$0xff]
      %v240 = vld [vmem:[%s169 + $0x1f0] sm:$0xff]
      %v241 = vld [vmem:[%s169 + $0x1f8] sm:$0xff]
      %v242 = vld [vmem:[%s1] sm:$0xf]
      %v243 = vld [vmem:[%s1 + $0x4] sm:$0xf]
      %v244 = vld [vmem:[%s1 + $0x8] sm:$0xf]
      %v245 = vld [vmem:[%s1 + $0xc] sm:$0xf]
      %v246 = vld [vmem:[%s1 + $0x10] sm:$0xf]
      %v247 = vld [vmem:[%s1 + $0x14] sm:$0xf]
      %v248 = vld [vmem:[%s1 + $0x18] sm:$0xf]
      %v249 = vld [vmem:[%s1 + $0x1c] sm:$0xf]
      %v250 = vld [vmem:[%s1 + $0x20] sm:$0xf]
      %v251 = vld [vmem:[%s1 + $0x24] sm:$0xf]
      %v252 = vld [vmem:[%s1 + $0x28] sm:$0xf]
      %v253 = vld [vmem:[%s1 + $0x2c] sm:$0xf]
      %v254 = vld [vmem:[%s1 + $0x30] sm:$0xf]
      %v255 = vld [vmem:[%s1 + $0x34] sm:$0xf]
      %v256 = vld [vmem:[%s1 + $0x38] sm:$0xf]
      %v257 = vld [vmem:[%s1 + $0x3c] sm:$0xf]
      %v258 = vld [vmem:[%s1 + $0x40] sm:$0xf]
      %v259 = vld [vmem:[%s1 + $0x44] sm:$0xf]
      %v260 = vld [vmem:[%s1 + $0x48] sm:$0xf]
      %v261 = vld [vmem:[%s1 + $0x4c] sm:$0xf]
      %v262 = vld [vmem:[%s1 + $0x50] sm:$0xf]
      %v263 = vld [vmem:[%s1 + $0x54] sm:$0xf]
      %v264 = vld [vmem:[%s1 + $0x58] sm:$0xf]
      %v265 = vld [vmem:[%s1 + $0x5c] sm:$0xf]
      %v266 = vld [vmem:[%s1 + $0x60] sm:$0xf]
      %v267 = vld [vmem:[%s1 + $0x64] sm:$0xf]
      %v268 = vld [vmem:[%s1 + $0x68] sm:$0xf]
      %v269 = vld [vmem:[%s1 + $0x6c] sm:$0xf]
      %v270 = vld [vmem:[%s1 + $0x70] sm:$0xf]
      %v271 = vld [vmem:[%s1 + $0x74] sm:$0xf]
      %v272 = vld [vmem:[%s1 + $0x78] sm:$0xf]
      %v273 = vld [vmem:[%s1 + $0x7c] sm:$0xf]
      %v274 = vld [vmem:[%s1 + $0x80] sm:$0xf]
      %v275 = vld [vmem:[%s1 + $0x84] sm:$0xf]
      %v276 = vld [vmem:[%s1 + $0x88] sm:$0xf]
      %v277 = vld [vmem:[%s1 + $0x8c] sm:$0xf]
      %v278 = vld [vmem:[%s1 + $0x90] sm:$0xf]
      %v279 = vld [vmem:[%s1 + $0x94] sm:$0xf]
      %v280 = vld [vmem:[%s1 + $0x98] sm:$0xf]
      %v281 = vld [vmem:[%s1 + $0x9c] sm:$0xf]
      %v282 = vld [vmem:[%s1 + $0xa0] sm:$0xf]
      %v283 = vld [vmem:[%s1 + $0xa4] sm:$0xf]
      %v284 = vld [vmem:[%s1 + $0xa8] sm:$0xf]
      %v285 = vld [vmem:[%s1 + $0xac] sm:$0xf]
      %v286 = vld [vmem:[%s1 + $0xb0] sm:$0xf]
      %v287 = vld [vmem:[%s1 + $0xb4] sm:$0xf]
      %v288 = vld [vmem:[%s1 + $0xb8] sm:$0xf]
      %v289 = vld [vmem:[%s1 + $0xbc] sm:$0xf]
      %v290 = vld [vmem:[%s1 + $0xc0] sm:$0xf]
      %v291 = vld [vmem:[%s1 + $0xc4] sm:$0xf]
      %v292 = vld [vmem:[%s1 + $0xc8] sm:$0xf]
      %v293 = vld [vmem:[%s1 + $0xcc] sm:$0xf]
      %v294 = vld [vmem:[%s1 + $0xd0] sm:$0xf]
      %v295 = vld [vmem:[%s1 + $0xd4] sm:$0xf]
      %v296 = vld [vmem:[%s1 + $0xd8] sm:$0xf]
      %v297 = vld [vmem:[%s1 + $0xdc] sm:$0xf]
      %v298 = vld [vmem:[%s1 + $0xe0] sm:$0xf]
      %v299 = vld [vmem:[%s1 + $0xe4] sm:$0xf]
      %v300 = vld [vmem:[%s1 + $0xe8] sm:$0xf]
      %v301 = vld [vmem:[%s1 + $0xec] sm:$0xf]
      %v302 = vld [vmem:[%s1 + $0xf0] sm:$0xf]
      %v303 = vld [vmem:[%s1 + $0xf4] sm:$0xf]
      %v304 = vld [vmem:[%s1 + $0xf8] sm:$0xf]
      %v305 = vld [vmem:[%s1 + $0xfc] sm:$0xf]
      %v306 = vld [vmem:[%s2] sm:$0x1]
      %v308 = vlaneseq
      %v309 = vshrl.u32 %v308, 7
      %v310 = vsub.s32 0, %v309
      %v311 = vrot.slane %v306, %v310
      %v377 = vunpack.c.l.b16 %v178
      %v378 = vunpack.c.h.b16 %v178
      %v379 = vunpack.c.l.b16 %v179
      %v380 = vunpack.c.h.b16 %v179
      %v381 = vunpack.c.l.b16 %v180
      %v382 = vunpack.c.h.b16 %v180
      %v383 = vunpack.c.l.b16 %v181
      %v384 = vunpack.c.h.b16 %v181
      %v385 = vunpack.c.l.b16 %v182
      %v386 = vunpack.c.h.b16 %v182
      %v387 = vunpack.c.l.b16 %v183
      %v388 = vunpack.c.h.b16 %v183
      %v389 = vunpack.c.l.b16 %v184
      %v390 = vunpack.c.h.b16 %v184
      %v391 = vunpack.c.l.b16 %v185
      %v392 = vunpack.c.h.b16 %v185
      %v393 = vunpack.c.l.b16 %v186
      %v394 = vunpack.c.h.b16 %v186
      %v395 = vunpack.c.l.b16 %v187
      %v396 = vunpack.c.h.b16 %v187
      %v397 = vunpack.c.l.b16 %v188
      %v398 = vunpack.c.h.b16 %v188
      %v399 = vunpack.c.l.b16 %v189
      %v400 = vunpack.c.h.b16 %v189
      %v401 = vunpack.c.l.b16 %v190
      %v402 = vunpack.c.h.b16 %v190
      %v403 = vunpack.c.l.b16 %v191
      %v404 = vunpack.c.h.b16 %v191
      %v405 = vunpack.c.l.b16 %v192
      %v406 = vunpack.c.h.b16 %v192
      %v407 = vunpack.c.l.b16 %v193
      %v408 = vunpack.c.h.b16 %v193
      %v409 = vunpack.c.l.b16 %v194
      %v410 = vunpack.c.h.b16 %v194
      %v411 = vunpack.c.l.b16 %v195
      %v412 = vunpack.c.h.b16 %v195
      %v413 = vunpack.c.l.b16 %v196
      %v414 = vunpack.c.h.b16 %v196
      %v415 = vunpack.c.l.b16 %v197
      %v416 = vunpack.c.h.b16 %v197
      %v417 = vunpack.c.l.b16 %v198
      %v418 = vunpack.c.h.b16 %v198
      %v419 = vunpack.c.l.b16 %v199
      %v420 = vunpack.c.h.b16 %v199
      %v421 = vunpack.c.l.b16 %v200
      %v422 = vunpack.c.h.b16 %v200
      %v423 = vunpack.c.l.b16 %v201
      %v424 = vunpack.c.h.b16 %v201
      %v425 = vunpack.c.l.b16 %v202
      %v426 = vunpack.c.h.b16 %v202
      %v427 = vunpack.c.l.b16 %v203
      %v428 = vunpack.c.h.b16 %v203
      %v429 = vunpack.c.l.b16 %v204
      %v430 = vunpack.c.h.b16 %v204
      %v431 = vunpack.c.l.b16 %v205
      %v432 = vunpack.c.h.b16 %v205
      %v433 = vunpack.c.l.b16 %v206
      %v434 = vunpack.c.h.b16 %v206
      %v435 = vunpack.c.l.b16 %v207
      %v436 = vunpack.c.h.b16 %v207
      %v437 = vunpack.c.l.b16 %v208
      %v438 = vunpack.c.h.b16 %v208
      %v439 = vunpack.c.l.b16 %v209
      %v440 = vunpack.c.h.b16 %v209
      %v441 = vunpack.c.l.b16 %v210
      %v442 = vunpack.c.h.b16 %v210
      %v443 = vunpack.c.l.b16 %v211
      %v444 = vunpack.c.h.b16 %v211
      %v445 = vunpack.c.l.b16 %v212
      %v446 = vunpack.c.h.b16 %v212
      %v447 = vunpack.c.l.b16 %v213
      %v448 = vunpack.c.h.b16 %v213
      %v449 = vunpack.c.l.b16 %v214
      %v450 = vunpack.c.h.b16 %v214
      %v451 = vunpack.c.l.b16 %v215
      %v452 = vunpack.c.h.b16 %v215
      %v453 = vunpack.c.l.b16 %v216
      %v454 = vunpack.c.h.b16 %v216
      %v455 = vunpack.c.l.b16 %v217
      %v456 = vunpack.c.h.b16 %v217
      %v457 = vunpack.c.l.b16 %v218
      %v458 = vunpack.c.h.b16 %v218
      %v459 = vunpack.c.l.b16 %v219
      %v460 = vunpack.c.h.b16 %v219
      %v461 = vunpack.c.l.b16 %v220
      %v462 = vunpack.c.h.b16 %v220
      %v463 = vunpack.c.l.b16 %v221
      %v464 = vunpack.c.h.b16 %v221
      %v465 = vunpack.c.l.b16 %v222
      %v466 = vunpack.c.h.b16 %v222
      %v467 = vunpack.c.l.b16 %v223
      %v468 = vunpack.c.h.b16 %v223
      %v469 = vunpack.c.l.b16 %v224
      %v470 = vunpack.c.h.b16 %v224
      %v471 = vunpack.c.l.b16 %v225
      %v472 = vunpack.c.h.b16 %v225
      %v473 = vunpack.c.l.b16 %v226
      %v474 = vunpack.c.h.b16 %v226
      %v475 = vunpack.c.l.b16 %v227
      %v476 = vunpack.c.h.b16 %v227
      %v477 = vunpack.c.l.b16 %v228
      %v478 = vunpack.c.h.b16 %v228
      %v479 = vunpack.c.l.b16 %v229
      %v480 = vunpack.c.h.b16 %v229
      %v481 = vunpack.c.l.b16 %v230
      %v482 = vunpack.c.h.b16 %v230
      %v483 = vunpack.c.l.b16 %v231
      %v484 = vunpack.c.h.b16 %v231
      %v485 = vunpack.c.l.b16 %v232
      %v486 = vunpack.c.h.b16 %v232
      %v487 = vunpack.c.l.b16 %v233
      %v488 = vunpack.c.h.b16 %v233
      %v489 = vunpack.c.l.b16 %v234
      %v490 = vunpack.c.h.b16 %v234
      %v491 = vunpack.c.l.b16 %v235
      %v492 = vunpack.c.h.b16 %v235
      %v493 = vunpack.c.l.b16 %v236
      %v494 = vunpack.c.h.b16 %v236
      %v495 = vunpack.c.l.b16 %v237
      %v496 = vunpack.c.h.b16 %v237
      %v497 = vunpack.c.l.b16 %v238
      %v498 = vunpack.c.h.b16 %v238
      %v499 = vunpack.c.l.b16 %v239
      %v500 = vunpack.c.h.b16 %v239
      %v501 = vunpack.c.l.b16 %v240
      %v502 = vunpack.c.h.b16 %v240
      %v503 = vunpack.c.l.b16 %v241
      %v504 = vunpack.c.h.b16 %v241
      %v505 = vpack.c.b16 %v381, %v377
      %v506 = vpack.c.b16 %v382, %v378
      %v507 = vpack.c.b16 %v383, %v379
      %v508 = vpack.c.b16 %v384, %v380
      %v509 = vpack.c.b16 %v389, %v385
      %v510 = vpack.c.b16 %v390, %v386
      %v511 = vpack.c.b16 %v391, %v387
      %v512 = vpack.c.b16 %v392, %v388
      %v513 = vpack.c.b16 %v397, %v393
      %v514 = vpack.c.b16 %v398, %v394
      %v515 = vpack.c.b16 %v399, %v395
      %v516 = vpack.c.b16 %v400, %v396
      %v517 = vpack.c.b16 %v405, %v401
      %v518 = vpack.c.b16 %v406, %v402
      %v519 = vpack.c.b16 %v407, %v403
      %v520 = vpack.c.b16 %v408, %v404
      %v521 = vpack.c.b16 %v413, %v409
      %v522 = vpack.c.b16 %v414, %v410
      %v523 = vpack.c.b16 %v415, %v411
      %v524 = vpack.c.b16 %v416, %v412
      %v525 = vpack.c.b16 %v421, %v417
      %v526 = vpack.c.b16 %v422, %v418
      %v527 = vpack.c.b16 %v423, %v419
      %v528 = vpack.c.b16 %v424, %v420
      %v529 = vpack.c.b16 %v429, %v425
      %v530 = vpack.c.b16 %v430, %v426
      %v531 = vpack.c.b16 %v431, %v427
      %v532 = vpack.c.b16 %v432, %v428
      %v533 = vpack.c.b16 %v437, %v433
      %v534 = vpack.c.b16 %v438, %v434
      %v535 = vpack.c.b16 %v439, %v435
      %v536 = vpack.c.b16 %v440, %v436
      %v537 = vpack.c.b16 %v445, %v441
      %v538 = vpack.c.b16 %v446, %v442
      %v539 = vpack.c.b16 %v447, %v443
      %v540 = vpack.c.b16 %v448, %v444
      %v541 = vpack.c.b16 %v453, %v449
      %v542 = vpack.c.b16 %v454, %v450
      %v543 = vpack.c.b16 %v455, %v451
      %v544 = vpack.c.b16 %v456, %v452
      %v545 = vpack.c.b16 %v461, %v457
      %v546 = vpack.c.b16 %v462, %v458
      %v547 = vpack.c.b16 %v463, %v459
      %v548 = vpack.c.b16 %v464, %v460
      %v549 = vpack.c.b16 %v469, %v465
      %v550 = vpack.c.b16 %v470, %v466
      %v551 = vpack.c.b16 %v471, %v467
      %v552 = vpack.c.b16 %v472, %v468
      %v553 = vpack.c.b16 %v477, %v473
      %v554 = vpack.c.b16 %v478, %v474
      %v555 = vpack.c.b16 %v479, %v475
      %v556 = vpack.c.b16 %v480, %v476
      %v557 = vpack.c.b16 %v485, %v481
      %v558 = vpack.c.b16 %v486, %v482
      %v559 = vpack.c.b16 %v487, %v483
      %v560 = vpack.c.b16 %v488, %v484
      %v561 = vpack.c.b16 %v493, %v489
      %v562 = vpack.c.b16 %v494, %v490
      %v563 = vpack.c.b16 %v495, %v491
      %v564 = vpack.c.b16 %v496, %v492
      %v565 = vpack.c.b16 %v501, %v497
      %v566 = vpack.c.b16 %v502, %v498
      %v567 = vpack.c.b16 %v503, %v499
      %v568 = vpack.c.b16 %v504, %v500
      %v697 = vunpack.c.l.b16 %v242
      %v698 = vunpack.c.l.b16 %v243
      %v699 = vunpack.c.l.b16 %v244
      %v700 = vunpack.c.l.b16 %v245
      %v701 = vunpack.c.l.b16 %v246
      %v702 = vunpack.c.l.b16 %v247
      %v703 = vunpack.c.l.b16 %v248
      %v704 = vunpack.c.l.b16 %v249
      %v705 = vunpack.c.l.b16 %v250
      %v706 = vunpack.c.l.b16 %v251
      %v707 = vunpack.c.l.b16 %v252
      %v708 = vunpack.c.l.b16 %v253
      %v709 = vunpack.c.l.b16 %v254
      %v710 = vunpack.c.l.b16 %v255
      %v711 = vunpack.c.l.b16 %v256
      %v712 = vunpack.c.l.b16 %v257
      %v713 = vunpack.c.l.b16 %v258
      %v714 = vunpack.c.l.b16 %v259
      %v715 = vunpack.c.l.b16 %v260
      %v716 = vunpack.c.l.b16 %v261
      %v717 = vunpack.c.l.b16 %v262
      %v718 = vunpack.c.l.b16 %v263
      %v719 = vunpack.c.l.b16 %v264
      %v720 = vunpack.c.l.b16 %v265
      %v721 = vunpack.c.l.b16 %v266
      %v722 = vunpack.c.l.b16 %v267
      %v723 = vunpack.c.l.b16 %v268
      %v724 = vunpack.c.l.b16 %v269
      %v725 = vunpack.c.l.b16 %v270
      %v726 = vunpack.c.l.b16 %v271
      %v727 = vunpack.c.l.b16 %v272
      %v728 = vunpack.c.l.b16 %v273
      %v729 = vunpack.c.l.b16 %v274
      %v730 = vunpack.c.l.b16 %v275
      %v731 = vunpack.c.l.b16 %v276
      %v732 = vunpack.c.l.b16 %v277
      %v733 = vunpack.c.l.b16 %v278
      %v734 = vunpack.c.l.b16 %v279
      %v735 = vunpack.c.l.b16 %v280
      %v736 = vunpack.c.l.b16 %v281
      %v737 = vunpack.c.l.b16 %v282
      %v738 = vunpack.c.l.b16 %v283
      %v739 = vunpack.c.l.b16 %v284
      %v740 = vunpack.c.l.b16 %v285
      %v741 = vunpack.c.l.b16 %v286
      %v742 = vunpack.c.l.b16 %v287
      %v743 = vunpack.c.l.b16 %v288
      %v744 = vunpack.c.l.b16 %v289
      %v745 = vunpack.c.l.b16 %v290
      %v746 = vunpack.c.l.b16 %v291
      %v747 = vunpack.c.l.b16 %v292
      %v748 = vunpack.c.l.b16 %v293
      %v749 = vunpack.c.l.b16 %v294
      %v750 = vunpack.c.l.b16 %v295
      %v751 = vunpack.c.l.b16 %v296
      %v752 = vunpack.c.l.b16 %v297
      %v753 = vunpack.c.l.b16 %v298
      %v754 = vunpack.c.l.b16 %v299
      %v755 = vunpack.c.l.b16 %v300
      %v756 = vunpack.c.l.b16 %v301
      %v757 = vunpack.c.l.b16 %v302
      %v758 = vunpack.c.l.b16 %v303
      %v759 = vunpack.c.l.b16 %v304
      %v760 = vunpack.c.l.b16 %v305
      %v761 = vpack.c.b16 %v698, %v697
      %v762 = vpack.c.b16 %v700, %v699
      %v763 = vpack.c.b16 %v702, %v701
      %v764 = vpack.c.b16 %v704, %v703
      %v765 = vpack.c.b16 %v706, %v705
      %v766 = vpack.c.b16 %v708, %v707
      %v767 = vpack.c.b16 %v710, %v709
      %v768 = vpack.c.b16 %v712, %v711
      %v769 = vpack.c.b16 %v714, %v713
      %v770 = vpack.c.b16 %v716, %v715
      %v771 = vpack.c.b16 %v718, %v717
      %v772 = vpack.c.b16 %v720, %v719
      %v773 = vpack.c.b16 %v722, %v721
      %v774 = vpack.c.b16 %v724, %v723
      %v775 = vpack.c.b16 %v726, %v725
      %v776 = vpack.c.b16 %v728, %v727
      %v777 = vpack.c.b16 %v730, %v729
      %v778 = vpack.c.b16 %v732, %v731
      %v779 = vpack.c.b16 %v734, %v733
      %v780 = vpack.c.b16 %v736, %v735
      %v781 = vpack.c.b16 %v738, %v737
      %v782 = vpack.c.b16 %v740, %v739
      %v783 = vpack.c.b16 %v742, %v741
      %v784 = vpack.c.b16 %v744, %v743
      %v785 = vpack.c.b16 %v746, %v745
      %v786 = vpack.c.b16 %v748, %v747
      %v787 = vpack.c.b16 %v750, %v749
      %v788 = vpack.c.b16 %v752, %v751
      %v789 = vpack.c.b16 %v754, %v753
      %v790 = vpack.c.b16 %v756, %v755
      %v791 = vpack.c.b16 %v758, %v757
      %v792 = vpack.c.b16 %v760, %v759
      %825 = vmatprep.subr.bf16.mxu0 0
      %826 = vmatpush1.bf16.msra.mxu0 %v761
      %827 = vmatprep.subr.bf16.mxu0 0
      %828 = vmatpush1.bf16.msra.mxu0 %v762
      %829 = vmatprep.subr.bf16.mxu0 0
      %830 = vmatpush1.bf16.msra.mxu0 %v763
      %831 = vmatprep.subr.bf16.mxu0 0
      %832 = vmatpush1.bf16.msra.mxu0 %v764
      %833 = vmatprep.subr.bf16.mxu0 0
      %834 = vmatpush1.bf16.msra.mxu0 %v765
      %835 = vmatprep.subr.bf16.mxu0 0
      %836 = vmatpush1.bf16.msra.mxu0 %v766
      %837 = vmatprep.subr.bf16.mxu0 0
      %838 = vmatpush1.bf16.msra.mxu0 %v767
      %839 = vmatprep.subr.bf16.mxu0 0
      %840 = vmatpush1.bf16.msra.mxu0 %v768
      %841 = vmatprep.subr.bf16.mxu0 0
      %842 = vmatpush1.bf16.msra.mxu0 %v769
      %843 = vmatprep.subr.bf16.mxu0 0
      %844 = vmatpush1.bf16.msra.mxu0 %v770
      %845 = vmatprep.subr.bf16.mxu0 0
      %846 = vmatpush1.bf16.msra.mxu0 %v771
      %847 = vmatprep.subr.bf16.mxu0 0
      %848 = vmatpush1.bf16.msra.mxu0 %v772
      %849 = vmatprep.subr.bf16.mxu0 0
      %850 = vmatpush1.bf16.msra.mxu0 %v773
      %851 = vmatprep.subr.bf16.mxu0 0
      %852 = vmatpush1.bf16.msra.mxu0 %v774
      %853 = vmatprep.subr.bf16.mxu0 0
      %854 = vmatpush1.bf16.msra.mxu0 %v775
      %855 = vmatprep.subr.bf16.mxu0 0
      %856 = vmatpush1.bf16.msra.mxu0 %v776
      %857 = vmatprep.mubr.bf16.mxu0 %v506
      %858 = vmatmul.mubr.bf16.gmra.mrb[0].mxu0 %v505
      %v859 = vpop.f32.mrb[0].mxu0
      %v860 = vadd.f32 %v311, %v859
      %v861 = vpop.f32.mrb[0].mxu0
      %v862 = vpop.f32.mrb[0].mxu0
      %v863 = vadd.f32 %v311, %v862
      %v864 = vpop.f32.mrb[0].mxu0
      %865 = vmatprep.mubr.bf16.mxu0 %v510
      %866 = vmatmul.mubr.bf16.gmra.mrb[0].mxu0 %v509
      %v867 = vpop.f32.mrb[0].mxu0
      %v868 = vadd.f32 %v311, %v867
      %v869 = vpop.f32.mrb[0].mxu0
      %v870 = vpop.f32.mrb[0].mxu0
      %v871 = vadd.f32 %v311, %v870
      %v872 = vpop.f32.mrb[0].mxu0
      %873 = vmatprep.mubr.bf16.mxu0 %v514
      %874 = vmatmul.mubr.bf16.gmra.mrb[0].mxu0 %v513
      %v875 = vpop.f32.mrb[0].mxu0
      %v876 = vadd.f32 %v311, %v875
      %v877 = vpop.f32.mrb[0].mxu0
      %v878 = vpop.f32.mrb[0].mxu0
      %v879 = vadd.f32 %v311, %v878
      %v880 = vpop.f32.mrb[0].mxu0
      %881 = vmatprep.mubr.bf16.mxu0 %v518
      %882 = vmatmul.mubr.bf16.gmra.mrb[0].mxu0 %v517
      %v883 = vpop.f32.mrb[0].mxu0
      %v884 = vadd.f32 %v311, %v883
      %v885 = vpop.f32.mrb[0].mxu0
      %v886 = vpop.f32.mrb[0].mxu0
      %v887 = vadd.f32 %v311, %v886
      %v888 = vpop.f32.mrb[0].mxu0
      %889 = vmatprep.mubr.bf16.mxu0 %v522
      %890 = vmatmul.mubr.bf16.gmra.mrb[0].mxu0 %v521
      %v891 = vpop.f32.mrb[0].mxu0
      %v892 = vadd.f32 %v311, %v891
      %v893 = vpop.f32.mrb[0].mxu0
      %v894 = vpop.f32.mrb[0].mxu0
      %v895 = vadd.f32 %v311, %v894
      %v896 = vpop.f32.mrb[0].mxu0
      %897 = vmatprep.mubr.bf16.mxu0 %v526
      %898 = vmatmul.mubr.bf16.gmra.mrb[0].mxu0 %v525
      %v899 = vpop.f32.mrb[0].mxu0
      %v900 = vadd.f32 %v311, %v899
      %v901 = vpop.f32.mrb[0].mxu0
      %v902 = vpop.f32.mrb[0].mxu0
      %v903 = vadd.f32 %v311, %v902
      %v904 = vpop.f32.mrb[0].mxu0
      %905 = vmatprep.mubr.bf16.mxu0 %v530
      %906 = vmatmul.mubr.bf16.gmra.mrb[0].mxu0 %v529
      %v907 = vpop.f32.mrb[0].mxu0
      %v908 = vadd.f32 %v311, %v907
      %v909 = vpop.f32.mrb[0].mxu0
      %v910 = vpop.f32.mrb[0].mxu0
      %v911 = vadd.f32 %v311, %v910
      %v912 = vpop.f32.mrb[0].mxu0
      %913 = vmatprep.mubr.bf16.mxu0 %v534
      %914 = vmatmul.mubr.bf16.gmra.mrb[0].mxu0 %v533
      %v915 = vpop.f32.mrb[0].mxu0
      %v916 = vadd.f32 %v311, %v915
      %v917 = vpop.f32.mrb[0].mxu0
      %v918 = vpop.f32.mrb[0].mxu0
      %v919 = vadd.f32 %v311, %v918
      %v920 = vpop.f32.mrb[0].mxu0
      %921 = vmatprep.mubr.bf16.mxu0 %v538
      %922 = vmatmul.mubr.bf16.gmra.mrb[0].mxu0 %v537
      %v923 = vpop.f32.mrb[0].mxu0
      %v924 = vadd.f32 %v311, %v923
      %v925 = vpop.f32.mrb[0].mxu0
      %v926 = vpop.f32.mrb[0].mxu0
      %v927 = vadd.f32 %v311, %v926
      %v928 = vpop.f32.mrb[0].mxu0
      %929 = vmatprep.mubr.bf16.mxu0 %v542
      %930 = vmatmul.mubr.bf16.gmra.mrb[0].mxu0 %v541
      %v931 = vpop.f32.mrb[0].mxu0
      %v932 = vadd.f32 %v311, %v931
      %v933 = vpop.f32.mrb[0].mxu0
      %v934 = vpop.f32.mrb[0].mxu0
      %v935 = vadd.f32 %v311, %v934
      %v936 = vpop.f32.mrb[0].mxu0
      %937 = vmatprep.mubr.bf16.mxu0 %v546
      %938 = vmatmul.mubr.bf16.gmra.mrb[0].mxu0 %v545
      %v939 = vpop.f32.mrb[0].mxu0
      %v940 = vadd.f32 %v311, %v939
      %v941 = vpop.f32.mrb[0].mxu0
      %v942 = vpop.f32.mrb[0].mxu0
      %v943 = vadd.f32 %v311, %v942
      %v944 = vpop.f32.mrb[0].mxu0
      %945 = vmatprep.mubr.bf16.mxu0 %v550
      %946 = vmatmul.mubr.bf16.gmra.mrb[0].mxu0 %v549
      %v947 = vpop.f32.mrb[0].mxu0
      %v948 = vadd.f32 %v311, %v947
      %v949 = vpop.f32.mrb[0].mxu0
      %v950 = vpop.f32.mrb[0].mxu0
      %v951 = vadd.f32 %v311, %v950
      %v952 = vpop.f32.mrb[0].mxu0
      %953 = vmatprep.mubr.bf16.mxu0 %v554
      %954 = vmatmul.mubr.bf16.gmra.mrb[0].mxu0 %v553
      %v955 = vpop.f32.mrb[0].mxu0
      %v956 = vadd.f32 %v311, %v955
      %v957 = vpop.f32.mrb[0].mxu0
      %v958 = vpop.f32.mrb[0].mxu0
      %v959 = vadd.f32 %v311, %v958
      %v960 = vpop.f32.mrb[0].mxu0
      %961 = vmatprep.mubr.bf16.mxu0 %v558
      %962 = vmatmul.mubr.bf16.gmra.mrb[0].mxu0 %v557
      %v963 = vpop.f32.mrb[0].mxu0
      %v964 = vadd.f32 %v311, %v963
      %v965 = vpop.f32.mrb[0].mxu0
      %v966 = vpop.f32.mrb[0].mxu0
      %v967 = vadd.f32 %v311, %v966
      %v968 = vpop.f32.mrb[0].mxu0
      %969 = vmatprep.mubr.bf16.mxu0 %v562
      %970 = vmatmul.mubr.bf16.gmra.mrb[0].mxu0 %v561
      %v971 = vpop.f32.mrb[0].mxu0
      %v972 = vadd.f32 %v311, %v971
      %v973 = vpop.f32.mrb[0].mxu0
      %v974 = vpop.f32.mrb[0].mxu0
      %v975 = vadd.f32 %v311, %v974
      %v976 = vpop.f32.mrb[0].mxu0
      %977 = vmatprep.mubr.bf16.mxu0 %v566
      %978 = vmatmul.mubr.bf16.gmra.mrb[0].mxu0 %v565
      %v979 = vpop.f32.mrb[0].mxu0
      %v980 = vadd.f32 %v311, %v979
      %v981 = vpop.f32.mrb[0].mxu0
      %v982 = vpop.f32.mrb[0].mxu0
      %v983 = vadd.f32 %v311, %v982
      %v984 = vpop.f32.mrb[0].mxu0
      %985 = vdwg.mxu0
      %986 = vmatprep.subr.bf16.mxu0 0
      %987 = vmatpush1.bf16.msra.mxu0 %v777
      %988 = vmatprep.subr.bf16.mxu0 0
      %989 = vmatpush1.bf16.msra.mxu0 %v778
      %990 = vmatprep.subr.bf16.mxu0 0
      %991 = vmatpush1.bf16.msra.mxu0 %v779
      %992 = vmatprep.subr.bf16.mxu0 0
      %993 = vmatpush1.bf16.msra.mxu0 %v780
      %994 = vmatprep.subr.bf16.mxu0 0
      %995 = vmatpush1.bf16.msra.mxu0 %v781
      %996 = vmatprep.subr.bf16.mxu0 0
      %997 = vmatpush1.bf16.msra.mxu0 %v782
      %998 = vmatprep.subr.bf16.mxu0 0
      %999 = vmatpush1.bf16.msra.mxu0 %v783
      %1000 = vmatprep.subr.bf16.mxu0 0
      %1001 = vmatpush1.bf16.msra.mxu0 %v784
      %1002 = vmatprep.subr.bf16.mxu0 0
      %1003 = vmatpush1.bf16.msra.mxu0 %v785
      %1004 = vmatprep.subr.bf16.mxu0 0
      %1005 = vmatpush1.bf16.msra.mxu0 %v786
      %1006 = vmatprep.subr.bf16.mxu0 0
      %1007 = vmatpush1.bf16.msra.mxu0 %v787
      %1008 = vmatprep.subr.bf16.mxu0 0
      %1009 = vmatpush1.bf16.msra.mxu0 %v788
      %1010 = vmatprep.subr.bf16.mxu0 0
      %1011 = vmatpush1.bf16.msra.mxu0 %v789
      %1012 = vmatprep.subr.bf16.mxu0 0
      %1013 = vmatpush1.bf16.msra.mxu0 %v790
      %1014 = vmatprep.subr.bf16.mxu0 0
      %1015 = vmatpush1.bf16.msra.mxu0 %v791
      %1016 = vmatprep.subr.bf16.mxu0 0
      %1017 = vmatpush1.bf16.msra.mxu0 %v792
      %1018 = vmatprep.mubr.bf16.mxu0 %v508
      %1019 = vmatmul.mubr.bf16.gmra.mrb[0].mxu0 %v507
      %v1020 = vpop.f32.mrb[0].mxu0
      %v1021 = vadd.f32 %v860, %v1020
      %v1022 = vpop.f32.mrb[0].mxu0
      %v1023 = vpop.f32.mrb[0].mxu0
      %v1024 = vadd.f32 %v863, %v1023
      %v1025 = vpop.f32.mrb[0].mxu0
      %1026 = vmatprep.mubr.bf16.mxu0 %v512
      %1027 = vmatmul.mubr.bf16.gmra.mrb[0].mxu0 %v511
      %v1028 = vpop.f32.mrb[0].mxu0
      %v1029 = vadd.f32 %v868, %v1028
      %v1030 = vpop.f32.mrb[0].mxu0
      %v1031 = vpop.f32.mrb[0].mxu0
      %v1032 = vadd.f32 %v871, %v1031
      %v1033 = vpop.f32.mrb[0].mxu0
      %1034 = vmatprep.mubr.bf16.mxu0 %v516
      %1035 = vmatmul.mubr.bf16.gmra.mrb[0].mxu0 %v515
      %v1036 = vpop.f32.mrb[0].mxu0
      %v1037 = vadd.f32 %v876, %v1036
      %v1038 = vpop.f32.mrb[0].mxu0
      %v1039 = vpop.f32.mrb[0].mxu0
      %v1040 = vadd.f32 %v879, %v1039
      %v1041 = vpop.f32.mrb[0].mxu0
      %1042 = vmatprep.mubr.bf16.mxu0 %v520
      %1043 = vmatmul.mubr.bf16.gmra.mrb[0].mxu0 %v519
      %v1044 = vpop.f32.mrb[0].mxu0
      %v1045 = vadd.f32 %v884, %v1044
      %v1046 = vpop.f32.mrb[0].mxu0
      %v1047 = vpop.f32.mrb[0].mxu0
      %v1048 = vadd.f32 %v887, %v1047
      %v1049 = vpop.f32.mrb[0].mxu0
      %1050 = vmatprep.mubr.bf16.mxu0 %v524
      %1051 = vmatmul.mubr.bf16.gmra.mrb[0].mxu0 %v523
      %v1052 = vpop.f32.mrb[0].mxu0
      %v1053 = vadd.f32 %v892, %v1052
      %v1054 = vpop.f32.mrb[0].mxu0
      %v1055 = vpop.f32.mrb[0].mxu0
      %v1056 = vadd.f32 %v895, %v1055
      %v1057 = vpop.f32.mrb[0].mxu0
      %1058 = vmatprep.mubr.bf16.mxu0 %v528
      %1059 = vmatmul.mubr.bf16.gmra.mrb[0].mxu0 %v527
      %v1060 = vpop.f32.mrb[0].mxu0
      %v1061 = vadd.f32 %v900, %v1060
      %v1062 = vpop.f32.mrb[0].mxu0
      %v1063 = vpop.f32.mrb[0].mxu0
      %v1064 = vadd.f32 %v903, %v1063
      %v1065 = vpop.f32.mrb[0].mxu0
      %1066 = vmatprep.mubr.bf16.mxu0 %v532
      %1067 = vmatmul.mubr.bf16.gmra.mrb[0].mxu0 %v531
      %v1068 = vpop.f32.mrb[0].mxu0
      %v1069 = vadd.f32 %v908, %v1068
      %v1070 = vpop.f32.mrb[0].mxu0
      %v1071 = vpop.f32.mrb[0].mxu0
      %v1072 = vadd.f32 %v911, %v1071
      %v1073 = vpop.f32.mrb[0].mxu0
      %1074 = vmatprep.mubr.bf16.mxu0 %v536
      %1075 = vmatmul.mubr.bf16.gmra.mrb[0].mxu0 %v535
      %v1076 = vpop.f32.mrb[0].mxu0
      %v1077 = vadd.f32 %v916, %v1076
      %v1078 = vpop.f32.mrb[0].mxu0
      %v1079 = vpop.f32.mrb[0].mxu0
      %v1080 = vadd.f32 %v919, %v1079
      %v1081 = vpop.f32.mrb[0].mxu0
      %1082 = vmatprep.mubr.bf16.mxu0 %v540
      %1083 = vmatmul.mubr.bf16.gmra.mrb[0].mxu0 %v539
      %v1084 = vpop.f32.mrb[0].mxu0
      %v1085 = vadd.f32 %v924, %v1084
      %v1086 = vpop.f32.mrb[0].mxu0
      %v1087 = vpop.f32.mrb[0].mxu0
      %v1088 = vadd.f32 %v927, %v1087
      %v1089 = vpop.f32.mrb[0].mxu0
      %1090 = vmatprep.mubr.bf16.mxu0 %v544
      %1091 = vmatmul.mubr.bf16.gmra.mrb[0].mxu0 %v543
      %v1092 = vpop.f32.mrb[0].mxu0
      %v1093 = vadd.f32 %v932, %v1092
      %v1094 = vpop.f32.mrb[0].mxu0
      %v1095 = vpop.f32.mrb[0].mxu0
      %v1096 = vadd.f32 %v935, %v1095
      %v1097 = vpop.f32.mrb[0].mxu0
      %1098 = vmatprep.mubr.bf16.mxu0 %v548
      %1099 = vmatmul.mubr.bf16.gmra.mrb[0].mxu0 %v547
      %v1100 = vpop.f32.mrb[0].mxu0
      %v1101 = vadd.f32 %v940, %v1100
      %v1102 = vpop.f32.mrb[0].mxu0
      %v1103 = vpop.f32.mrb[0].mxu0
      %v1104 = vadd.f32 %v943, %v1103
      %v1105 = vpop.f32.mrb[0].mxu0
      %1106 = vmatprep.mubr.bf16.mxu0 %v552
      %1107 = vmatmul.mubr.bf16.gmra.mrb[0].mxu0 %v551
      %v1108 = vpop.f32.mrb[0].mxu0
      %v1109 = vadd.f32 %v948, %v1108
      %v1110 = vpop.f32.mrb[0].mxu0
      %v1111 = vpop.f32.mrb[0].mxu0
      %v1112 = vadd.f32 %v951, %v1111
      %v1113 = vpop.f32.mrb[0].mxu0
      %1114 = vmatprep.mubr.bf16.mxu0 %v556
      %1115 = vmatmul.mubr.bf16.gmra.mrb[0].mxu0 %v555
      %v1116 = vpop.f32.mrb[0].mxu0
      %v1117 = vadd.f32 %v956, %v1116
      %v1118 = vpop.f32.mrb[0].mxu0
      %v1119 = vpop.f32.mrb[0].mxu0
      %v1120 = vadd.f32 %v959, %v1119
      %v1121 = vpop.f32.mrb[0].mxu0
      %1122 = vmatprep.mubr.bf16.mxu0 %v560
      %1123 = vmatmul.mubr.bf16.gmra.mrb[0].mxu0 %v559
      %v1124 = vpop.f32.mrb[0].mxu0
      %v1125 = vadd.f32 %v964, %v1124
      %v1126 = vpop.f32.mrb[0].mxu0
      %v1127 = vpop.f32.mrb[0].mxu0
      %v1128 = vadd.f32 %v967, %v1127
      %v1129 = vpop.f32.mrb[0].mxu0
      %1130 = vmatprep.mubr.bf16.mxu0 %v564
      %1131 = vmatmul.mubr.bf16.gmra.mrb[0].mxu0 %v563
      %v1132 = vpop.f32.mrb[0].mxu0
      %v1133 = vadd.f32 %v972, %v1132
      %v1134 = vpop.f32.mrb[0].mxu0
      %v1135 = vpop.f32.mrb[0].mxu0
      %v1136 = vadd.f32 %v975, %v1135
      %v1137 = vpop.f32.mrb[0].mxu0
      %1138 = vmatprep.mubr.bf16.mxu0 %v568
      %1139 = vmatmul.mubr.bf16.gmra.mrb[0].mxu0 %v567
      %v1140 = vpop.f32.mrb[0].mxu0
      %v1141 = vadd.f32 %v980, %v1140
      %v1142 = vpop.f32.mrb[0].mxu0
      %v1143 = vpop.f32.mrb[0].mxu0
      %v1144 = vadd.f32 %v983, %v1143
      %v1145 = vpop.f32.mrb[0].mxu0
      %1146 = vdwg.mxu0
      %v1147 = vmax.f32 %v1021, 0.0
      %v1148 = vmax.f32 %v1024, 0.0
      %v1149 = vmax.f32 %v1029, 0.0
      %v1150 = vmax.f32 %v1032, 0.0
      %v1151 = vmax.f32 %v1037, 0.0
      %v1152 = vmax.f32 %v1040, 0.0
      %v1153 = vmax.f32 %v1045, 0.0
      %v1154 = vmax.f32 %v1048, 0.0
      %v1155 = vmax.f32 %v1053, 0.0
      %v1156 = vmax.f32 %v1056, 0.0
      %v1157 = vmax.f32 %v1061, 0.0
      %v1158 = vmax.f32 %v1064, 0.0
      %v1159 = vmax.f32 %v1069, 0.0
      %v1160 = vmax.f32 %v1072, 0.0
      %v1161 = vmax.f32 %v1077, 0.0
      %v1162 = vmax.f32 %v1080, 0.0
      %v1163 = vmax.f32 %v1085, 0.0
      %v1164 = vmax.f32 %v1088, 0.0
      %v1165 = vmax.f32 %v1093, 0.0
      %v1166 = vmax.f32 %v1096, 0.0
      %v1167 = vmax.f32 %v1101, 0.0
      %v1168 = vmax.f32 %v1104, 0.0
      %v1169 = vmax.f32 %v1109, 0.0
      %v1170 = vmax.f32 %v1112, 0.0
      %v1171 = vmax.f32 %v1117, 0.0
      %v1172 = vmax.f32 %v1120, 0.0
      %v1173 = vmax.f32 %v1125, 0.0
      %v1174 = vmax.f32 %v1128, 0.0
      %v1175 = vmax.f32 %v1133, 0.0
      %v1176 = vmax.f32 %v1136, 0.0
      %v1177 = vmax.f32 %v1141, 0.0
      %v1178 = vmax.f32 %v1144, 0.0
      %1179 = vst [vmem:[%s175] sm:$0xff] %v1147
      %1180 = vst [vmem:[%s175 + $0x8] sm:$0xff] %v1148
      %1181 = vst [vmem:[%s175 + $0x10] sm:$0xff] %v1149
      %1182 = vst [vmem:[%s175 + $0x18] sm:$0xff] %v1150
      %1183 = vst [vmem:[%s175 + $0x20] sm:$0xff] %v1151
      %1184 = vst [vmem:[%s175 + $0x28] sm:$0xff] %v1152
      %1185 = vst [vmem:[%s175 + $0x30] sm:$0xff] %v1153
      %1186 = vst [vmem:[%s175 + $0x38] sm:$0xff] %v1154
      %1187 = vst [vmem:[%s175 + $0x40] sm:$0xff] %v1155
      %1188 = vst [vmem:[%s175 + $0x48] sm:$0xff] %v1156
      %1189 = vst [vmem:[%s175 + $0x50] sm:$0xff] %v1157
      %1190 = vst [vmem:[%s175 + $0x58] sm:$0xff] %v1158
      %1191 = vst [vmem:[%s175 + $0x60] sm:$0xff] %v1159
      %1192 = vst [vmem:[%s175 + $0x68] sm:$0xff] %v1160
      %1193 = vst [vmem:[%s175 + $0x70] sm:$0xff] %v1161
      %1194 = vst [vmem:[%s175 + $0x78] sm:$0xff] %v1162
      %1195 = vst [vmem:[%s175 + $0x80] sm:$0xff] %v1163
      %1196 = vst [vmem:[%s175 + $0x88] sm:$0xff] %v1164
      %1197 = vst [vmem:[%s175 + $0x90] sm:$0xff] %v1165
      %1198 = vst [vmem:[%s175 + $0x98] sm:$0xff] %v1166
      %1199 = vst [vmem:[%s175 + $0xa0] sm:$0xff] %v1167
      %1200 = vst [vmem:[%s175 + $0xa8] sm:$0xff] %v1168
      %1201 = vst [vmem:[%s175 + $0xb0] sm:$0xff] %v1169
      %1202 = vst [vmem:[%s175 + $0xb8] sm:$0xff] %v1170
      %1203 = vst [vmem:[%s175 + $0xc0] sm:$0xff] %v1171
      %1204 = vst [vmem:[%s175 + $0xc8] sm:$0xff] %v1172
      %1205 = vst [vmem:[%s175 + $0xd0] sm:$0xff] %v1173
      %1206 = vst [vmem:[%s175 + $0xd8] sm:$0xff] %v1174
      %1207 = vst [vmem:[%s175 + $0xe0] sm:$0xff] %v1175
      %1208 = vst [vmem:[%s175 + $0xe8] sm:$0xff] %v1176
      %1209 = vst [vmem:[%s175 + $0xf0] sm:$0xff] %v1177
      %1210 = vst [vmem:[%s175 + $0xf8] sm:$0xff] %v1178
      %s1211 = smul.u32 32, %s14
      %p1212 = scmp.lt.s32.totalorder %s1211, 63
      %s1213 = scalar_select %p1212, %s1211, 63
      %s1214 = smul.addr %s1213, 8
      %s1215 = scalar_lea.vmem %s3, %s1214
      // Predicated region
      $region33: #{vae_forward.13} parent=31 // pred_check
        %p1216 = pneg %p100
      $region34: #{vae_forward.13} parent=31 // pred_check_branch
        %1218 = sbr.rel (%p1216) target = $region36
      $region35: #{vae_forward.13} parent=31 // pred_region
        %s1219 = smul.u32 32, %s14
      $region36: #{vae_forward.13} parent=31 // pred_fallthru
        _
    $region32: #{vae_forward.13} parent=5 // pred_fallthru
      _
    %p1220 = scmp.le.s32.totalorder 2, %s9
    // Predicated region
    $region37: #{vae_forward.13} parent=5 // pred_check
      %p1221 = pneg %p1220
    $region38: #{vae_forward.13} parent=5 // pred_check_branch
      %1223 = sbr.rel (%p1221) target = $region40
    $region39: #{vae_forward.13} parent=5 // pred_region
      %s1224 = ssub.s32 %s9, 2
      // Predicated region
      $region41: #{vae_forward.13} parent=39 // pred_check
        %p1225 = pneg %p106
      $region42: #{vae_forward.13} parent=39 // pred_check_branch
        %1227 = sbr.rel (%p1225) target = $region44
      $region43: #{vae_forward.13} parent=39 // pred_region
        %s1228 = smul.u32 32, %s15
        %p1229 = scmp.lt.s32.totalorder %s1228, 63
        %s1230 = scalar_select %p1229, %s1228, 63
        %s1231 = smul.addr %s1230, 8
        %s1232 = scalar_lea.vmem %s3, %s1231
      $region44: #{vae_forward.13} parent=39 // pred_fallthru
        _
    $region40: #{vae_forward.13} parent=5 // pred_fallthru
      _
  $region6: #{vae_forward.13} parent=0 // loop_footer
    %s13 = sadd.s32 1, %s9
  $region7: #{vae_forward.13} parent=0 // loop_footer_branch
    %8 = sbr.rel target = $region3
  $region8: #{vae_forward.13} parent=0 // loop_exit
    _

// kernel: vae_forward.14
$region0: #{vae_forward.14}
  #allocation0 [shape = 'u32[]', space=smem, size = 0x4, offset = 0x4, fixed_abs, tag = 'smem constant byte address 0x4 - core index']
  #allocation1 [shape = 'u32[144,128]{1,0:T(1,128)}', space=vmem, size = 0x12000, scoped, tag = 'internal scratch']
  %s0 = inlined_call_operand.vmem [shape: bf16[128,512], index: 0, kind: input, shape index: {}]
  %s1 = inlined_call_operand.vmem [shape: bf16[512,128], index: 1, kind: input, shape index: {}]
  %s2 = inlined_call_operand.vmem [shape: f32[1,128], index: 2, kind: input, shape index: {}]
  %s3 = inlined_call_operand.vmem [shape: f32[128,128], index: 3, kind: output, shape index: {}]
  %s4 = sld [smem:[#allocation0]]
  $region22: #{vae_forward.14} parent=0
    _
  %s6 = ssub.s32 1, %s4
  %s7 = scalar_select 0, %s6, %s4
  // Predicated region
  $region2: #{vae_forward.14} parent=0 // pred_check
    _
  $region3: #{vae_forward.14} parent=0 // pred_check_branch
    %9 = sbr.rel (0) target = $region5
  $region4: #{vae_forward.14} parent=0 // pred_region
    _
  $region5: #{vae_forward.14} parent=0 // pred_fallthru
    _
  // Predicated region
  $region6: #{vae_forward.14} parent=0 // pred_check
    _
  $region7: #{vae_forward.14} parent=0 // pred_check_branch
    %11 = sbr.rel (0) target = $region9
  $region8: #{vae_forward.14} parent=0 // pred_region
    _
  $region9: #{vae_forward.14} parent=0 // pred_fallthru
    _
  // Predicated region
  $region10: #{vae_forward.14} parent=0 // pred_check
    _
  $region11: #{vae_forward.14} parent=0 // pred_check_branch
    %13 = sbr.rel (0) target = $region13
  $region12: #{vae_forward.14} parent=0 // pred_region
    _
  $region13: #{vae_forward.14} parent=0 // pred_fallthru
    _
  %v15 = vld [vmem:[%s0] sm:$0xff]
  %v16 = vld [vmem:[%s0 + $0x8] sm:$0xff]
  %v17 = vld [vmem:[%s0 + $0x10] sm:$0xff]
  %v18 = vld [vmem:[%s0 + $0x18] sm:$0xff]
  %v19 = vld [vmem:[%s0 + $0x20] sm:$0xff]
  %v20 = vld [vmem:[%s0 + $0x28] sm:$0xff]
  %v21 = vld [vmem:[%s0 + $0x30] sm:$0xff]
  %v22 = vld [vmem:[%s0 + $0x38] sm:$0xff]
  %v23 = vld [vmem:[%s0 + $0x40] sm:$0xff]
  %v24 = vld [vmem:[%s0 + $0x48] sm:$0xff]
  %v25 = vld [vmem:[%s0 + $0x50] sm:$0xff]
  %v26 = vld [vmem:[%s0 + $0x58] sm:$0xff]
  %v27 = vld [vmem:[%s0 + $0x60] sm:$0xff]
  %v28 = vld [vmem:[%s0 + $0x68] sm:$0xff]
  %v29 = vld [vmem:[%s0 + $0x70] sm:$0xff]
  %v30 = vld [vmem:[%s0 + $0x78] sm:$0xff]
  %v31 = vld [vmem:[%s0 + $0x80] sm:$0xff]
  %v32 = vld [vmem:[%s0 + $0x88] sm:$0xff]
  %v33 = vld [vmem:[%s0 + $0x90] sm:$0xff]
  %v34 = vld [vmem:[%s0 + $0x98] sm:$0xff]
  %v35 = vld [vmem:[%s0 + $0xa0] sm:$0xff]
  %v36 = vld [vmem:[%s0 + $0xa8] sm:$0xff]
  %v37 = vld [vmem:[%s0 + $0xb0] sm:$0xff]
  %v38 = vld [vmem:[%s0 + $0xb8] sm:$0xff]
  %v39 = vld [vmem:[%s0 + $0xc0] sm:$0xff]
  %v40 = vld [vmem:[%s0 + $0xc8] sm:$0xff]
  %v41 = vld [vmem:[%s0 + $0xd0] sm:$0xff]
  %v42 = vld [vmem:[%s0 + $0xd8] sm:$0xff]
  %v43 = vld [vmem:[%s0 + $0xe0] sm:$0xff]
  %v44 = vld [vmem:[%s0 + $0xe8] sm:$0xff]
  %v45 = vld [vmem:[%s0 + $0xf0] sm:$0xff]
  %v46 = vld [vmem:[%s0 + $0xf8] sm:$0xff]
  %v47 = vld [vmem:[%s1] sm:$0xf]
  %v48 = vld [vmem:[%s1 + $0x4] sm:$0xf]
  %v49 = vld [vmem:[%s1 + $0x8] sm:$0xf]
  %v50 = vld [vmem:[%s1 + $0xc] sm:$0xf]
  %v51 = vld [vmem:[%s1 + $0x10] sm:$0xf]
  %v52 = vld [vmem:[%s1 + $0x14] sm:$0xf]
  %v53 = vld [vmem:[%s1 + $0x18] sm:$0xf]
  %v54 = vld [vmem:[%s1 + $0x1c] sm:$0xf]
  %v55 = vld [vmem:[%s1 + $0x20] sm:$0xf]
  %v56 = vld [vmem:[%s1 + $0x24] sm:$0xf]
  %v57 = vld [vmem:[%s1 + $0x28] sm:$0xf]
  %v58 = vld [vmem:[%s1 + $0x2c] sm:$0xf]
  %v59 = vld [vmem:[%s1 + $0x30] sm:$0xf]
  %v60 = vld [vmem:[%s1 + $0x34] sm:$0xf]
  %v61 = vld [vmem:[%s1 + $0x38] sm:$0xf]
  %v62 = vld [vmem:[%s1 + $0x3c] sm:$0xf]
  %v63 = vld [vmem:[%s1 + $0x40] sm:$0xf]
  %v64 = vld [vmem:[%s1 + $0x44] sm:$0xf]
  %v65 = vld [vmem:[%s1 + $0x48] sm:$0xf]
  %v66 = vld [vmem:[%s1 + $0x4c] sm:$0xf]
  %v67 = vld [vmem:[%s1 + $0x50] sm:$0xf]
  %v68 = vld [vmem:[%s1 + $0x54] sm:$0xf]
  %v69 = vld [vmem:[%s1 + $0x58] sm:$0xf]
  %v70 = vld [vmem:[%s1 + $0x5c] sm:$0xf]
  %v71 = vld [vmem:[%s1 + $0x60] sm:$0xf]
  %v72 = vld [vmem:[%s1 + $0x64] sm:$0xf]
  %v73 = vld [vmem:[%s1 + $0x68] sm:$0xf]
  %v74 = vld [vmem:[%s1 + $0x6c] sm:$0xf]
  %v75 = vld [vmem:[%s1 + $0x70] sm:$0xf]
  %v76 = vld [vmem:[%s1 + $0x74] sm:$0xf]
  %v77 = vld [vmem:[%s1 + $0x78] sm:$0xf]
  %v78 = vld [vmem:[%s1 + $0x7c] sm:$0xf]
  %v79 = vld [vmem:[%s1 + $0x80] sm:$0xf]
  %v80 = vld [vmem:[%s1 + $0x84] sm:$0xf]
  %v81 = vld [vmem:[%s1 + $0x88] sm:$0xf]
  %v82 = vld [vmem:[%s1 + $0x8c] sm:$0xf]
  %v83 = vld [vmem:[%s1 + $0x90] sm:$0xf]
  %v84 = vld [vmem:[%s1 + $0x94] sm:$0xf]
  %v85 = vld [vmem:[%s1 + $0x98] sm:$0xf]
  %v86 = vld [vmem:[%s1 + $0x9c] sm:$0xf]
  %v87 = vld [vmem:[%s1 + $0xa0] sm:$0xf]
  %v88 = vld [vmem:[%s1 + $0xa4] sm:$0xf]
  %v89 = vld [vmem:[%s1 + $0xa8] sm:$0xf]
  %v90 = vld [vmem:[%s1 + $0xac] sm:$0xf]
  %v91 = vld [vmem:[%s1 + $0xb0] sm:$0xf]
  %v92 = vld [vmem:[%s1 + $0xb4] sm:$0xf]
  %v93 = vld [vmem:[%s1 + $0xb8] sm:$0xf]
  %v94 = vld [vmem:[%s1 + $0xbc] sm:$0xf]
  %v95 = vld [vmem:[%s1 + $0xc0] sm:$0xf]
  %v96 = vld [vmem:[%s1 + $0xc4] sm:$0xf]
  %v97 = vld [vmem:[%s1 + $0xc8] sm:$0xf]
  %v98 = vld [vmem:[%s1 + $0xcc] sm:$0xf]
  %v99 = vld [vmem:[%s1 + $0xd0] sm:$0xf]
  %v100 = vld [vmem:[%s1 + $0xd4] sm:$0xf]
  %v101 = vld [vmem:[%s1 + $0xd8] sm:$0xf]
  %v102 = vld [vmem:[%s1 + $0xdc] sm:$0xf]
  %v103 = vld [vmem:[%s1 + $0xe0] sm:$0xf]
  %v104 = vld [vmem:[%s1 + $0xe4] sm:$0xf]
  %v105 = vld [vmem:[%s1 + $0xe8] sm:$0xf]
  %v106 = vld [vmem:[%s1 + $0xec] sm:$0xf]
  %v107 = vld [vmem:[%s1 + $0xf0] sm:$0xf]
  %v108 = vld [vmem:[%s1 + $0xf4] sm:$0xf]
  %v109 = vld [vmem:[%s1 + $0xf8] sm:$0xf]
  %v110 = vld [vmem:[%s1 + $0xfc] sm:$0xf]
  %v111 = vld [vmem:[%s2] sm:$0x1]
  %v113 = vlaneseq
  %v114 = vshrl.u32 %v113, 7
  %v115 = vsub.s32 0, %v114
  %v116 = vrot.slane %v111, %v115
  %v150 = vunpack.c.l.b16 %v15
  %v151 = vunpack.c.h.b16 %v15
  %v152 = vunpack.c.l.b16 %v16
  %v153 = vunpack.c.h.b16 %v16
  %v154 = vunpack.c.l.b16 %v17
  %v155 = vunpack.c.h.b16 %v17
  %v156 = vunpack.c.l.b16 %v18
  %v157 = vunpack.c.h.b16 %v18
  %v158 = vunpack.c.l.b16 %v19
  %v159 = vunpack.c.h.b16 %v19
  %v160 = vunpack.c.l.b16 %v20
  %v161 = vunpack.c.h.b16 %v20
  %v162 = vunpack.c.l.b16 %v21
  %v163 = vunpack.c.h.b16 %v21
  %v164 = vunpack.c.l.b16 %v22
  %v165 = vunpack.c.h.b16 %v22
  %v166 = vunpack.c.l.b16 %v23
  %v167 = vunpack.c.h.b16 %v23
  %v168 = vunpack.c.l.b16 %v24
  %v169 = vunpack.c.h.b16 %v24
  %v170 = vunpack.c.l.b16 %v25
  %v171 = vunpack.c.h.b16 %v25
  %v172 = vunpack.c.l.b16 %v26
  %v173 = vunpack.c.h.b16 %v26
  %v174 = vunpack.c.l.b16 %v27
  %v175 = vunpack.c.h.b16 %v27
  %v176 = vunpack.c.l.b16 %v28
  %v177 = vunpack.c.h.b16 %v28
  %v178 = vunpack.c.l.b16 %v29
  %v179 = vunpack.c.h.b16 %v29
  %v180 = vunpack.c.l.b16 %v30
  %v181 = vunpack.c.h.b16 %v30
  %v182 = vunpack.c.l.b16 %v31
  %v183 = vunpack.c.h.b16 %v31
  %v184 = vunpack.c.l.b16 %v32
  %v185 = vunpack.c.h.b16 %v32
  %v186 = vunpack.c.l.b16 %v33
  %v187 = vunpack.c.h.b16 %v33
  %v188 = vunpack.c.l.b16 %v34
  %v189 = vunpack.c.h.b16 %v34
  %v190 = vunpack.c.l.b16 %v35
  %v191 = vunpack.c.h.b16 %v35
  %v192 = vunpack.c.l.b16 %v36
  %v193 = vunpack.c.h.b16 %v36
  %v194 = vunpack.c.l.b16 %v37
  %v195 = vunpack.c.h.b16 %v37
  %v196 = vunpack.c.l.b16 %v38
  %v197 = vunpack.c.h.b16 %v38
  %v198 = vunpack.c.l.b16 %v39
  %v199 = vunpack.c.h.b16 %v39
  %v200 = vunpack.c.l.b16 %v40
  %v201 = vunpack.c.h.b16 %v40
  %v202 = vunpack.c.l.b16 %v41
  %v203 = vunpack.c.h.b16 %v41
  %v204 = vunpack.c.l.b16 %v42
  %v205 = vunpack.c.h.b16 %v42
  %v206 = vunpack.c.l.b16 %v43
  %v207 = vunpack.c.h.b16 %v43
  %v208 = vunpack.c.l.b16 %v44
  %v209 = vunpack.c.h.b16 %v44
  %v210 = vunpack.c.l.b16 %v45
  %v211 = vunpack.c.h.b16 %v45
  %v212 = vunpack.c.l.b16 %v46
  %v213 = vunpack.c.h.b16 %v46
  %v214 = vpack.c.b16 %v154, %v150
  %v215 = vpack.c.b16 %v155, %v151
  %v216 = vpack.c.b16 %v156, %v152
  %v217 = vpack.c.b16 %v157, %v153
  %v218 = vpack.c.b16 %v162, %v158
  %v219 = vpack.c.b16 %v163, %v159
  %v220 = vpack.c.b16 %v164, %v160
  %v221 = vpack.c.b16 %v165, %v161
  %v222 = vpack.c.b16 %v170, %v166
  %v223 = vpack.c.b16 %v171, %v167
  %v224 = vpack.c.b16 %v172, %v168
  %v225 = vpack.c.b16 %v173, %v169
  %v226 = vpack.c.b16 %v178, %v174
  %v227 = vpack.c.b16 %v179, %v175
  %v228 = vpack.c.b16 %v180, %v176
  %v229 = vpack.c.b16 %v181, %v177
  %v230 = vpack.c.b16 %v186, %v182
  %v231 = vpack.c.b16 %v187, %v183
  %v232 = vpack.c.b16 %v188, %v184
  %v233 = vpack.c.b16 %v189, %v185
  %v234 = vpack.c.b16 %v194, %v190
  %v235 = vpack.c.b16 %v195, %v191
  %v236 = vpack.c.b16 %v196, %v192
  %v237 = vpack.c.b16 %v197, %v193
  %v238 = vpack.c.b16 %v202, %v198
  %v239 = vpack.c.b16 %v203, %v199
  %v240 = vpack.c.b16 %v204, %v200
  %v241 = vpack.c.b16 %v205, %v201
  %v242 = vpack.c.b16 %v210, %v206
  %v243 = vpack.c.b16 %v211, %v207
  %v244 = vpack.c.b16 %v212, %v208
  %v245 = vpack.c.b16 %v213, %v209
  %v342 = vunpack.c.l.b16 %v47
  %v343 = vunpack.c.l.b16 %v48
  %v344 = vunpack.c.l.b16 %v49
  %v345 = vunpack.c.l.b16 %v50
  %v346 = vunpack.c.l.b16 %v51
  %v347 = vunpack.c.l.b16 %v52
  %v348 = vunpack.c.l.b16 %v53
  %v349 = vunpack.c.l.b16 %v54
  %v350 = vunpack.c.l.b16 %v55
  %v351 = vunpack.c.l.b16 %v56
  %v352 = vunpack.c.l.b16 %v57
  %v353 = vunpack.c.l.b16 %v58
  %v354 = vunpack.c.l.b16 %v59
  %v355 = vunpack.c.l.b16 %v60
  %v356 = vunpack.c.l.b16 %v61
  %v357 = vunpack.c.l.b16 %v62
  %v358 = vunpack.c.l.b16 %v63
  %v359 = vunpack.c.l.b16 %v64
  %v360 = vunpack.c.l.b16 %v65
  %v361 = vunpack.c.l.b16 %v66
  %v362 = vunpack.c.l.b16 %v67
  %v363 = vunpack.c.l.b16 %v68
  %v364 = vunpack.c.l.b16 %v69
  %v365 = vunpack.c.l.b16 %v70
  %v366 = vunpack.c.l.b16 %v71
  %v367 = vunpack.c.l.b16 %v72
  %v368 = vunpack.c.l.b16 %v73
  %v369 = vunpack.c.l.b16 %v74
  %v370 = vunpack.c.l.b16 %v75
  %v371 = vunpack.c.l.b16 %v76
  %v372 = vunpack.c.l.b16 %v77
  %v373 = vunpack.c.l.b16 %v78
  %v374 = vunpack.c.l.b16 %v79
  %v375 = vunpack.c.l.b16 %v80
  %v376 = vunpack.c.l.b16 %v81
  %v377 = vunpack.c.l.b16 %v82
  %v378 = vunpack.c.l.b16 %v83
  %v379 = vunpack.c.l.b16 %v84
  %v380 = vunpack.c.l.b16 %v85
  %v381 = vunpack.c.l.b16 %v86
  %v382 = vunpack.c.l.b16 %v87
  %v383 = vunpack.c.l.b16 %v88
  %v384 = vunpack.c.l.b16 %v89
  %v385 = vunpack.c.l.b16 %v90
  %v386 = vunpack.c.l.b16 %v91
  %v387 = vunpack.c.l.b16 %v92
  %v388 = vunpack.c.l.b16 %v93
  %v389 = vunpack.c.l.b16 %v94
  %v390 = vunpack.c.l.b16 %v95
  %v391 = vunpack.c.l.b16 %v96
  %v392 = vunpack.c.l.b16 %v97
  %v393 = vunpack.c.l.b16 %v98
  %v394 = vunpack.c.l.b16 %v99
  %v395 = vunpack.c.l.b16 %v100
  %v396 = vunpack.c.l.b16 %v101
  %v397 = vunpack.c.l.b16 %v102
  %v398 = vunpack.c.l.b16 %v103
  %v399 = vunpack.c.l.b16 %v104
  %v400 = vunpack.c.l.b16 %v105
  %v401 = vunpack.c.l.b16 %v106
  %v402 = vunpack.c.l.b16 %v107
  %v403 = vunpack.c.l.b16 %v108
  %v404 = vunpack.c.l.b16 %v109
  %v405 = vunpack.c.l.b16 %v110
  %v406 = vpack.c.b16 %v343, %v342
  %v407 = vpack.c.b16 %v345, %v344
  %v408 = vpack.c.b16 %v347, %v346
  %v409 = vpack.c.b16 %v349, %v348
  %v410 = vpack.c.b16 %v351, %v350
  %v411 = vpack.c.b16 %v353, %v352
  %v412 = vpack.c.b16 %v355, %v354
  %v413 = vpack.c.b16 %v357, %v356
  %v414 = vpack.c.b16 %v359, %v358
  %v415 = vpack.c.b16 %v361, %v360
  %v416 = vpack.c.b16 %v363, %v362
  %v417 = vpack.c.b16 %v365, %v364
  %v418 = vpack.c.b16 %v367, %v366
  %v419 = vpack.c.b16 %v369, %v368
  %v420 = vpack.c.b16 %v371, %v370
  %v421 = vpack.c.b16 %v373, %v372
  %v422 = vpack.c.b16 %v375, %v374
  %v423 = vpack.c.b16 %v377, %v376
  %v424 = vpack.c.b16 %v379, %v378
  %v425 = vpack.c.b16 %v381, %v380
  %v426 = vpack.c.b16 %v383, %v382
  %v427 = vpack.c.b16 %v385, %v384
  %v428 = vpack.c.b16 %v387, %v386
  %v429 = vpack.c.b16 %v389, %v388
  %v430 = vpack.c.b16 %v391, %v390
  %v431 = vpack.c.b16 %v393, %v392
  %v432 = vpack.c.b16 %v395, %v394
  %v433 = vpack.c.b16 %v397, %v396
  %v434 = vpack.c.b16 %v399, %v398
  %v435 = vpack.c.b16 %v401, %v400
  %v436 = vpack.c.b16 %v403, %v402
  %v437 = vpack.c.b16 %v405, %v404
  %470 = vmatprep.subr.bf16.mxu0 0
  %471 = vmatpush1.bf16.msra.mxu0 %v406
  %472 = vmatprep.subr.bf16.mxu0 0
  %473 = vmatpush1.bf16.msra.mxu0 %v407
  %474 = vmatprep.subr.bf16.mxu0 0
  %475 = vmatpush1.bf16.msra.mxu0 %v408
  %476 = vmatprep.subr.bf16.mxu0 0
  %477 = vmatpush1.bf16.msra.mxu0 %v409
  %478 = vmatprep.subr.bf16.mxu0 0
  %479 = vmatpush1.bf16.msra.mxu0 %v410
  %480 = vmatprep.subr.bf16.mxu0 0
  %481 = vmatpush1.bf16.msra.mxu0 %v411
  %482 = vmatprep.subr.bf16.mxu0 0
  %483 = vmatpush1.bf16.msra.mxu0 %v412
  %484 = vmatprep.subr.bf16.mxu0 0
  %485 = vmatpush1.bf16.msra.mxu0 %v413
  %486 = vmatprep.subr.bf16.mxu0 0
  %487 = vmatpush1.bf16.msra.mxu0 %v414
  %488 = vmatprep.subr.bf16.mxu0 0
  %489 = vmatpush1.bf16.msra.mxu0 %v415
  %490 = vmatprep.subr.bf16.mxu0 0
  %491 = vmatpush1.bf16.msra.mxu0 %v416
  %492 = vmatprep.subr.bf16.mxu0 0
  %493 = vmatpush1.bf16.msra.mxu0 %v417
  %494 = vmatprep.subr.bf16.mxu0 0
  %495 = vmatpush1.bf16.msra.mxu0 %v418
  %496 = vmatprep.subr.bf16.mxu0 0
  %497 = vmatpush1.bf16.msra.mxu0 %v419
  %498 = vmatprep.subr.bf16.mxu0 0
  %499 = vmatpush1.bf16.msra.mxu0 %v420
  %500 = vmatprep.subr.bf16.mxu0 0
  %501 = vmatpush1.bf16.msra.mxu0 %v421
  %502 = vmatprep.mubr.bf16.mxu0 %v215
  %503 = vmatmul.mubr.bf16.gmra.mrb[0].mxu0 %v214
  %v504 = vpop.f32.mrb[0].mxu0
  %v505 = vadd.f32 %v116, %v504
  %v506 = vpop.f32.mrb[0].mxu0
  %v507 = vpop.f32.mrb[0].mxu0
  %v508 = vadd.f32 %v116, %v507
  %v509 = vpop.f32.mrb[0].mxu0
  %510 = vmatprep.mubr.bf16.mxu0 %v219
  %511 = vmatmul.mubr.bf16.gmra.mrb[0].mxu0 %v218
  %v512 = vpop.f32.mrb[0].mxu0
  %v513 = vadd.f32 %v116, %v512
  %v514 = vpop.f32.mrb[0].mxu0
  %v515 = vpop.f32.mrb[0].mxu0
  %v516 = vadd.f32 %v116, %v515
  %v517 = vpop.f32.mrb[0].mxu0
  %518 = vmatprep.mubr.bf16.mxu0 %v223
  %519 = vmatmul.mubr.bf16.gmra.mrb[0].mxu0 %v222
  %v520 = vpop.f32.mrb[0].mxu0
  %v521 = vadd.f32 %v116, %v520
  %v522 = vpop.f32.mrb[0].mxu0
  %v523 = vpop.f32.mrb[0].mxu0
  %v524 = vadd.f32 %v116, %v523
  %v525 = vpop.f32.mrb[0].mxu0
  %526 = vmatprep.mubr.bf16.mxu0 %v227
  %527 = vmatmul.mubr.bf16.gmra.mrb[0].mxu0 %v226
  %v528 = vpop.f32.mrb[0].mxu0
  %v529 = vadd.f32 %v116, %v528
  %v530 = vpop.f32.mrb[0].mxu0
  %v531 = vpop.f32.mrb[0].mxu0
  %v532 = vadd.f32 %v116, %v531
  %v533 = vpop.f32.mrb[0].mxu0
  %534 = vmatprep.mubr.bf16.mxu0 %v231
  %535 = vmatmul.mubr.bf16.gmra.mrb[0].mxu0 %v230
  %v536 = vpop.f32.mrb[0].mxu0
  %v537 = vadd.f32 %v116, %v536
  %v538 = vpop.f32.mrb[0].mxu0
  %v539 = vpop.f32.mrb[0].mxu0
  %v540 = vadd.f32 %v116, %v539
  %v541 = vpop.f32.mrb[0].mxu0
  %542 = vmatprep.mubr.bf16.mxu0 %v235
  %543 = vmatmul.mubr.bf16.gmra.mrb[0].mxu0 %v234
  %v544 = vpop.f32.mrb[0].mxu0
  %v545 = vadd.f32 %v116, %v544
  %v546 = vpop.f32.mrb[0].mxu0
  %v547 = vpop.f32.mrb[0].mxu0
  %v548 = vadd.f32 %v116, %v547
  %v549 = vpop.f32.mrb[0].mxu0
  %550 = vmatprep.mubr.bf16.mxu0 %v239
  %551 = vmatmul.mubr.bf16.gmra.mrb[0].mxu0 %v238
  %v552 = vpop.f32.mrb[0].mxu0
  %v553 = vadd.f32 %v116, %v552
  %v554 = vpop.f32.mrb[0].mxu0
  %v555 = vpop.f32.mrb[0].mxu0
  %v556 = vadd.f32 %v116, %v555
  %v557 = vpop.f32.mrb[0].mxu0
  %558 = vmatprep.mubr.bf16.mxu0 %v243
  %559 = vmatmul.mubr.bf16.gmra.mrb[0].mxu0 %v242
  %v560 = vpop.f32.mrb[0].mxu0
  %v561 = vadd.f32 %v116, %v560
  %v562 = vpop.f32.mrb[0].mxu0
  %v563 = vpop.f32.mrb[0].mxu0
  %v564 = vadd.f32 %v116, %v563
  %v565 = vpop.f32.mrb[0].mxu0
  %566 = vdwg.mxu0
  %567 = vmatprep.subr.bf16.mxu0 0
  %568 = vmatpush1.bf16.msra.mxu0 %v422
  %569 = vmatprep.subr.bf16.mxu0 0
  %570 = vmatpush1.bf16.msra.mxu0 %v423
  %571 = vmatprep.subr.bf16.mxu0 0
  %572 = vmatpush1.bf16.msra.mxu0 %v424
  %573 = vmatprep.subr.bf16.mxu0 0
  %574 = vmatpush1.bf16.msra.mxu0 %v425
  %575 = vmatprep.subr.bf16.mxu0 0
  %576 = vmatpush1.bf16.msra.mxu0 %v426
  %577 = vmatprep.subr.bf16.mxu0 0
  %578 = vmatpush1.bf16.msra.mxu0 %v427
  %579 = vmatprep.subr.bf16.mxu0 0
  %580 = vmatpush1.bf16.msra.mxu0 %v428
  %581 = vmatprep.subr.bf16.mxu0 0
  %582 = vmatpush1.bf16.msra.mxu0 %v429
  %583 = vmatprep.subr.bf16.mxu0 0
  %584 = vmatpush1.bf16.msra.mxu0 %v430
  %585 = vmatprep.subr.bf16.mxu0 0
  %586 = vmatpush1.bf16.msra.mxu0 %v431
  %587 = vmatprep.subr.bf16.mxu0 0
  %588 = vmatpush1.bf16.msra.mxu0 %v432
  %589 = vmatprep.subr.bf16.mxu0 0
  %590 = vmatpush1.bf16.msra.mxu0 %v433
  %591 = vmatprep.subr.bf16.mxu0 0
  %592 = vmatpush1.bf16.msra.mxu0 %v434
  %593 = vmatprep.subr.bf16.mxu0 0
  %594 = vmatpush1.bf16.msra.mxu0 %v435
  %595 = vmatprep.subr.bf16.mxu0 0
  %596 = vmatpush1.bf16.msra.mxu0 %v436
  %597 = vmatprep.subr.bf16.mxu0 0
  %598 = vmatpush1.bf16.msra.mxu0 %v437
  %599 = vmatprep.mubr.bf16.mxu0 %v217
  %600 = vmatmul.mubr.bf16.gmra.mrb[0].mxu0 %v216
  %v601 = vpop.f32.mrb[0].mxu0
  %v602 = vadd.f32 %v505, %v601
  %v603 = vpop.f32.mrb[0].mxu0
  %v604 = vpop.f32.mrb[0].mxu0
  %v605 = vadd.f32 %v508, %v604
  %v606 = vpop.f32.mrb[0].mxu0
  %607 = vmatprep.mubr.bf16.mxu0 %v221
  %608 = vmatmul.mubr.bf16.gmra.mrb[0].mxu0 %v220
  %v609 = vpop.f32.mrb[0].mxu0
  %v610 = vadd.f32 %v513, %v609
  %v611 = vpop.f32.mrb[0].mxu0
  %v612 = vpop.f32.mrb[0].mxu0
  %v613 = vadd.f32 %v516, %v612
  %v614 = vpop.f32.mrb[0].mxu0
  %615 = vmatprep.mubr.bf16.mxu0 %v225
  %616 = vmatmul.mubr.bf16.gmra.mrb[0].mxu0 %v224
  %v617 = vpop.f32.mrb[0].mxu0
  %v618 = vadd.f32 %v521, %v617
  %v619 = vpop.f32.mrb[0].mxu0
  %v620 = vpop.f32.mrb[0].mxu0
  %v621 = vadd.f32 %v524, %v620
  %v622 = vpop.f32.mrb[0].mxu0
  %623 = vmatprep.mubr.bf16.mxu0 %v229
  %624 = vmatmul.mubr.bf16.gmra.mrb[0].mxu0 %v228
  %v625 = vpop.f32.mrb[0].mxu0
  %v626 = vadd.f32 %v529, %v625
  %v627 = vpop.f32.mrb[0].mxu0
  %v628 = vpop.f32.mrb[0].mxu0
  %v629 = vadd.f32 %v532, %v628
  %v630 = vpop.f32.mrb[0].mxu0
  %631 = vmatprep.mubr.bf16.mxu0 %v233
  %632 = vmatmul.mubr.bf16.gmra.mrb[0].mxu0 %v232
  %v633 = vpop.f32.mrb[0].mxu0
  %v634 = vadd.f32 %v537, %v633
  %v635 = vpop.f32.mrb[0].mxu0
  %v636 = vpop.f32.mrb[0].mxu0
  %v637 = vadd.f32 %v540, %v636
  %v638 = vpop.f32.mrb[0].mxu0
  %639 = vmatprep.mubr.bf16.mxu0 %v237
  %640 = vmatmul.mubr.bf16.gmra.mrb[0].mxu0 %v236
  %v641 = vpop.f32.mrb[0].mxu0
  %v642 = vadd.f32 %v545, %v641
  %v643 = vpop.f32.mrb[0].mxu0
  %v644 = vpop.f32.mrb[0].mxu0
  %v645 = vadd.f32 %v548, %v644
  %v646 = vpop.f32.mrb[0].mxu0
  %647 = vmatprep.mubr.bf16.mxu0 %v241
  %648 = vmatmul.mubr.bf16.gmra.mrb[0].mxu0 %v240
  %v649 = vpop.f32.mrb[0].mxu0
  %v650 = vadd.f32 %v553, %v649
  %v651 = vpop.f32.mrb[0].mxu0
  %v652 = vpop.f32.mrb[0].mxu0
  %v653 = vadd.f32 %v556, %v652
  %v654 = vpop.f32.mrb[0].mxu0
  %655 = vmatprep.mubr.bf16.mxu0 %v245
  %656 = vmatmul.mubr.bf16.gmra.mrb[0].mxu0 %v244
  %v657 = vpop.f32.mrb[0].mxu0
  %v658 = vadd.f32 %v561, %v657
  %v659 = vpop.f32.mrb[0].mxu0
  %v660 = vpop.f32.mrb[0].mxu0
  %v661 = vadd.f32 %v564, %v660
  %v662 = vpop.f32.mrb[0].mxu0
  %663 = vdwg.mxu0
  %v664 = vmax.f32 %v602, 0.0
  %v665 = vmax.f32 %v605, 0.0
  %v666 = vmax.f32 %v610, 0.0
  %v667 = vmax.f32 %v613, 0.0
  %v668 = vmax.f32 %v618, 0.0
  %v669 = vmax.f32 %v621, 0.0
  %v670 = vmax.f32 %v626, 0.0
  %v671 = vmax.f32 %v629, 0.0
  %v672 = vmax.f32 %v634, 0.0
  %v673 = vmax.f32 %v637, 0.0
  %v674 = vmax.f32 %v642, 0.0
  %v675 = vmax.f32 %v645, 0.0
  %v676 = vmax.f32 %v650, 0.0
  %v677 = vmax.f32 %v653, 0.0
  %v678 = vmax.f32 %v658, 0.0
  %v679 = vmax.f32 %v661, 0.0
  %680 = vst [vmem:[%s3] sm:$0xff] %v664
  %681 = vst [vmem:[%s3 + $0x8] sm:$0xff] %v665
  %682 = vst [vmem:[%s3 + $0x10] sm:$0xff] %v666
  %683 = vst [vmem:[%s3 + $0x18] sm:$0xff] %v667
  %684 = vst [vmem:[%s3 + $0x20] sm:$0xff] %v668
  %685 = vst [vmem:[%s3 + $0x28] sm:$0xff] %v669
  %686 = vst [vmem:[%s3 + $0x30] sm:$0xff] %v670
  %687 = vst [vmem:[%s3 + $0x38] sm:$0xff] %v671
  %688 = vst [vmem:[%s3 + $0x40] sm:$0xff] %v672
  %689 = vst [vmem:[%s3 + $0x48] sm:$0xff] %v673
  %690 = vst [vmem:[%s3 + $0x50] sm:$0xff] %v674
  %691 = vst [vmem:[%s3 + $0x58] sm:$0xff] %v675
  %692 = vst [vmem:[%s3 + $0x60] sm:$0xff] %v676
  %693 = vst [vmem:[%s3 + $0x68] sm:$0xff] %v677
  %694 = vst [vmem:[%s3 + $0x70] sm:$0xff] %v678
  %695 = vst [vmem:[%s3 + $0x78] sm:$0xff] %v679
  // Predicated region
  $region14: #{vae_forward.14} parent=0 // pred_check
    _
  $region15: #{vae_forward.14} parent=0 // pred_check_branch
    %697 = sbr.rel (0) target = $region17
  $region16: #{vae_forward.14} parent=0 // pred_region
    _
  $region17: #{vae_forward.14} parent=0 // pred_fallthru
    _
  // Predicated region
  $region18: #{vae_forward.14} parent=0 // pred_check
    _
  $region19: #{vae_forward.14} parent=0 // pred_check_branch
    %699 = sbr.rel (0) target = $region21
  $region20: #{vae_forward.14} parent=0 // pred_region
    _
  $region21: #{vae_forward.14} parent=0 // pred_fallthru
    _

// kernel: vae_forward.15
$region0: #{vae_forward.15}
  #allocation0 [shape = 'u32[]', space=smem, size = 0x4, offset = 0x4, fixed_abs, tag = 'smem constant byte address 0x4 - core index']
  #allocation1 [shape = 'u32[144,128]{1,0:T(1,128)}', space=vmem, size = 0x12000, scoped, tag = 'internal scratch']
  %s0 = inlined_call_operand.vmem [shape: bf16[32,1024], index: 0, kind: input, shape index: {}]
  %s1 = inlined_call_operand.vmem [shape: bf16[1024,128], index: 1, kind: input, shape index: {}]
  %s2 = inlined_call_operand.vmem [shape: f32[1,128], index: 2, kind: input, shape index: {}]
  %s3 = inlined_call_operand.vmem [shape: f32[32,128], index: 3, kind: output, shape index: {}]
  %s4 = sld [smem:[#allocation0]]
  $region22: #{vae_forward.15} parent=0
    _
  %s6 = ssub.s32 1, %s4
  %s7 = scalar_select 0, %s6, %s4
  // Predicated region
  $region2: #{vae_forward.15} parent=0 // pred_check
    _
  $region3: #{vae_forward.15} parent=0 // pred_check_branch
    %9 = sbr.rel (0) target = $region5
  $region4: #{vae_forward.15} parent=0 // pred_region
    _
  $region5: #{vae_forward.15} parent=0 // pred_fallthru
    _
  // Predicated region
  $region6: #{vae_forward.15} parent=0 // pred_check
    _
  $region7: #{vae_forward.15} parent=0 // pred_check_branch
    %11 = sbr.rel (0) target = $region9
  $region8: #{vae_forward.15} parent=0 // pred_region
    _
  $region9: #{vae_forward.15} parent=0 // pred_fallthru
    _
  // Predicated region
  $region10: #{vae_forward.15} parent=0 // pred_check
    _
  $region11: #{vae_forward.15} parent=0 // pred_check_branch
    %13 = sbr.rel (0) target = $region13
  $region12: #{vae_forward.15} parent=0 // pred_region
    _
  $region13: #{vae_forward.15} parent=0 // pred_fallthru
    _
  %v15 = vld [vmem:[%s0] sm:$0xff]
  %v16 = vld [vmem:[%s0 + $0x8] sm:$0xff]
  %v17 = vld [vmem:[%s0 + $0x10] sm:$0xff]
  %v18 = vld [vmem:[%s0 + $0x18] sm:$0xff]
  %v19 = vld [vmem:[%s0 + $0x20] sm:$0xff]
  %v20 = vld [vmem:[%s0 + $0x28] sm:$0xff]
  %v21 = vld [vmem:[%s0 + $0x30] sm:$0xff]
  %v22 = vld [vmem:[%s0 + $0x38] sm:$0xff]
  %v23 = vld [vmem:[%s0 + $0x40] sm:$0xff]
  %v24 = vld [vmem:[%s0 + $0x48] sm:$0xff]
  %v25 = vld [vmem:[%s0 + $0x50] sm:$0xff]
  %v26 = vld [vmem:[%s0 + $0x58] sm:$0xff]
  %v27 = vld [vmem:[%s0 + $0x60] sm:$0xff]
  %v28 = vld [vmem:[%s0 + $0x68] sm:$0xff]
  %v29 = vld [vmem:[%s0 + $0x70] sm:$0xff]
  %v30 = vld [vmem:[%s0 + $0x78] sm:$0xff]
  %v31 = vld [vmem:[%s1] sm:$0xf]
  %v32 = vld [vmem:[%s1 + $0x4] sm:$0xf]
  %v33 = vld [vmem:[%s1 + $0x8] sm:$0xf]
  %v34 = vld [vmem:[%s1 + $0xc] sm:$0xf]
  %v35 = vld [vmem:[%s1 + $0x10] sm:$0xf]
  %v36 = vld [vmem:[%s1 + $0x14] sm:$0xf]
  %v37 = vld [vmem:[%s1 + $0x18] sm:$0xf]
  %v38 = vld [vmem:[%s1 + $0x1c] sm:$0xf]
  %v39 = vld [vmem:[%s1 + $0x20] sm:$0xf]
  %v40 = vld [vmem:[%s1 + $0x24] sm:$0xf]
  %v41 = vld [vmem:[%s1 + $0x28] sm:$0xf]
  %v42 = vld [vmem:[%s1 + $0x2c] sm:$0xf]
  %v43 = vld [vmem:[%s1 + $0x30] sm:$0xf]
  %v44 = vld [vmem:[%s1 + $0x34] sm:$0xf]
  %v45 = vld [vmem:[%s1 + $0x38] sm:$0xf]
  %v46 = vld [vmem:[%s1 + $0x3c] sm:$0xf]
  %v47 = vld [vmem:[%s1 + $0x40] sm:$0xf]
  %v48 = vld [vmem:[%s1 + $0x44] sm:$0xf]
  %v49 = vld [vmem:[%s1 + $0x48] sm:$0xf]
  %v50 = vld [vmem:[%s1 + $0x4c] sm:$0xf]
  %v51 = vld [vmem:[%s1 + $0x50] sm:$0xf]
  %v52 = vld [vmem:[%s1 + $0x54] sm:$0xf]
  %v53 = vld [vmem:[%s1 + $0x58] sm:$0xf]
  %v54 = vld [vmem:[%s1 + $0x5c] sm:$0xf]
  %v55 = vld [vmem:[%s1 + $0x60] sm:$0xf]
  %v56 = vld [vmem:[%s1 + $0x64] sm:$0xf]
  %v57 = vld [vmem:[%s1 + $0x68] sm:$0xf]
  %v58 = vld [vmem:[%s1 + $0x6c] sm:$0xf]
  %v59 = vld [vmem:[%s1 + $0x70] sm:$0xf]
  %v60 = vld [vmem:[%s1 + $0x74] sm:$0xf]
  %v61 = vld [vmem:[%s1 + $0x78] sm:$0xf]
  %v62 = vld [vmem:[%s1 + $0x7c] sm:$0xf]
  %v63 = vld [vmem:[%s1 + $0x80] sm:$0xf]
  %v64 = vld [vmem:[%s1 + $0x84] sm:$0xf]
  %v65 = vld [vmem:[%s1 + $0x88] sm:$0xf]
  %v66 = vld [vmem:[%s1 + $0x8c] sm:$0xf]
  %v67 = vld [vmem:[%s1 + $0x90] sm:$0xf]
  %v68 = vld [vmem:[%s1 + $0x94] sm:$0xf]
  %v69 = vld [vmem:[%s1 + $0x98] sm:$0xf]
  %v70 = vld [vmem:[%s1 + $0x9c] sm:$0xf]
  %v71 = vld [vmem:[%s1 + $0xa0] sm:$0xf]
  %v72 = vld [vmem:[%s1 + $0xa4] sm:$0xf]
  %v73 = vld [vmem:[%s1 + $0xa8] sm:$0xf]
  %v74 = vld [vmem:[%s1 + $0xac] sm:$0xf]
  %v75 = vld [vmem:[%s1 + $0xb0] sm:$0xf]
  %v76 = vld [vmem:[%s1 + $0xb4] sm:$0xf]
  %v77 = vld [vmem:[%s1 + $0xb8] sm:$0xf]
  %v78 = vld [vmem:[%s1 + $0xbc] sm:$0xf]
  %v79 = vld [vmem:[%s1 + $0xc0] sm:$0xf]
  %v80 = vld [vmem:[%s1 + $0xc4] sm:$0xf]
  %v81 = vld [vmem:[%s1 + $0xc8] sm:$0xf]
  %v82 = vld [vmem:[%s1 + $0xcc] sm:$0xf]
  %v83 = vld [vmem:[%s1 + $0xd0] sm:$0xf]
  %v84 = vld [vmem:[%s1 + $0xd4] sm:$0xf]
  %v85 = vld [vmem:[%s1 + $0xd8] sm:$0xf]
  %v86 = vld [vmem:[%s1 + $0xdc] sm:$0xf]
  %v87 = vld [vmem:[%s1 + $0xe0] sm:$0xf]
  %v88 = vld [vmem:[%s1 + $0xe4] sm:$0xf]
  %v89 = vld [vmem:[%s1 + $0xe8] sm:$0xf]
  %v90 = vld [vmem:[%s1 + $0xec] sm:$0xf]
  %v91 = vld [vmem:[%s1 + $0xf0] sm:$0xf]
  %v92 = vld [vmem:[%s1 + $0xf4] sm:$0xf]
  %v93 = vld [vmem:[%s1 + $0xf8] sm:$0xf]
  %v94 = vld [vmem:[%s1 + $0xfc] sm:$0xf]
  %v95 = vld [vmem:[%s1 + $0x100] sm:$0xf]
  %v96 = vld [vmem:[%s1 + $0x104] sm:$0xf]
  %v97 = vld [vmem:[%s1 + $0x108] sm:$0xf]
  %v98 = vld [vmem:[%s1 + $0x10c] sm:$0xf]
  %v99 = vld [vmem:[%s1 + $0x110] sm:$0xf]
  %v100 = vld [vmem:[%s1 + $0x114] sm:$0xf]
  %v101 = vld [vmem:[%s1 + $0x118] sm:$0xf]
  %v102 = vld [vmem:[%s1 + $0x11c] sm:$0xf]
  %v103 = vld [vmem:[%s1 + $0x120] sm:$0xf]
  %v104 = vld [vmem:[%s1 + $0x124] sm:$0xf]
  %v105 = vld [vmem:[%s1 + $0x128] sm:$0xf]
  %v106 = vld [vmem:[%s1 + $0x12c] sm:$0xf]
  %v107 = vld [vmem:[%s1 + $0x130] sm:$0xf]
  %v108 = vld [vmem:[%s1 + $0x134] sm:$0xf]
  %v109 = vld [vmem:[%s1 + $0x138] sm:$0xf]
  %v110 = vld [vmem:[%s1 + $0x13c] sm:$0xf]
  %v111 = vld [vmem:[%s1 + $0x140] sm:$0xf]
  %v112 = vld [vmem:[%s1 + $0x144] sm:$0xf]
  %v113 = vld [vmem:[%s1 + $0x148] sm:$0xf]
  %v114 = vld [vmem:[%s1 + $0x14c] sm:$0xf]
  %v115 = vld [vmem:[%s1 + $0x150] sm:$0xf]
  %v116 = vld [vmem:[%s1 + $0x154] sm:$0xf]
  %v117 = vld [vmem:[%s1 + $0x158] sm:$0xf]
  %v118 = vld [vmem:[%s1 + $0x15c] sm:$0xf]
  %v119 = vld [vmem:[%s1 + $0x160] sm:$0xf]
  %v120 = vld [vmem:[%s1 + $0x164] sm:$0xf]
  %v121 = vld [vmem:[%s1 + $0x168] sm:$0xf]
  %v122 = vld [vmem:[%s1 + $0x16c] sm:$0xf]
  %v123 = vld [vmem:[%s1 + $0x170] sm:$0xf]
  %v124 = vld [vmem:[%s1 + $0x174] sm:$0xf]
  %v125 = vld [vmem:[%s1 + $0x178] sm:$0xf]
  %v126 = vld [vmem:[%s1 + $0x17c] sm:$0xf]
  %v127 = vld [vmem:[%s1 + $0x180] sm:$0xf]
  %v128 = vld [vmem:[%s1 + $0x184] sm:$0xf]
  %v129 = vld [vmem:[%s1 + $0x188] sm:$0xf]
  %v130 = vld [vmem:[%s1 + $0x18c] sm:$0xf]
  %v131 = vld [vmem:[%s1 + $0x190] sm:$0xf]
  %v132 = vld [vmem:[%s1 + $0x194] sm:$0xf]
  %v133 = vld [vmem:[%s1 + $0x198] sm:$0xf]
  %v134 = vld [vmem:[%s1 + $0x19c] sm:$0xf]
  %v135 = vld [vmem:[%s1 + $0x1a0] sm:$0xf]
  %v136 = vld [vmem:[%s1 + $0x1a4] sm:$0xf]
  %v137 = vld [vmem:[%s1 + $0x1a8] sm:$0xf]
  %v138 = vld [vmem:[%s1 + $0x1ac] sm:$0xf]
  %v139 = vld [vmem:[%s1 + $0x1b0] sm:$0xf]
  %v140 = vld [vmem:[%s1 + $0x1b4] sm:$0xf]
  %v141 = vld [vmem:[%s1 + $0x1b8] sm:$0xf]
  %v142 = vld [vmem:[%s1 + $0x1bc] sm:$0xf]
  %v143 = vld [vmem:[%s1 + $0x1c0] sm:$0xf]
  %v144 = vld [vmem:[%s1 + $0x1c4] sm:$0xf]
  %v145 = vld [vmem:[%s1 + $0x1c8] sm:$0xf]
  %v146 = vld [vmem:[%s1 + $0x1cc] sm:$0xf]
  %v147 = vld [vmem:[%s1 + $0x1d0] sm:$0xf]
  %v148 = vld [vmem:[%s1 + $0x1d4] sm:$0xf]
  %v149 = vld [vmem:[%s1 + $0x1d8] sm:$0xf]
  %v150 = vld [vmem:[%s1 + $0x1dc] sm:$0xf]
  %v151 = vld [vmem:[%s1 + $0x1e0] sm:$0xf]
  %v152 = vld [vmem:[%s1 + $0x1e4] sm:$0xf]
  %v153 = vld [vmem:[%s1 + $0x1e8] sm:$0xf]
  %v154 = vld [vmem:[%s1 + $0x1ec] sm:$0xf]
  %v155 = vld [vmem:[%s1 + $0x1f0] sm:$0xf]
  %v156 = vld [vmem:[%s1 + $0x1f4] sm:$0xf]
  %v157 = vld [vmem:[%s1 + $0x1f8] sm:$0xf]
  %v158 = vld [vmem:[%s1 + $0x1fc] sm:$0xf]
  %v159 = vld [vmem:[%s2] sm:$0x1]
  %v161 = vlaneseq
  %v162 = vshrl.u32 %v161, 7
  %v163 = vsub.s32 0, %v162
  %v164 = vrot.slane %v159, %v163
  %v182 = vunpack.c.l.b16 %v15
  %v183 = vunpack.c.h.b16 %v15
  %v184 = vunpack.c.l.b16 %v16
  %v185 = vunpack.c.h.b16 %v16
  %v186 = vunpack.c.l.b16 %v17
  %v187 = vunpack.c.h.b16 %v17
  %v188 = vunpack.c.l.b16 %v18
  %v189 = vunpack.c.h.b16 %v18
  %v190 = vunpack.c.l.b16 %v19
  %v191 = vunpack.c.h.b16 %v19
  %v192 = vunpack.c.l.b16 %v20
  %v193 = vunpack.c.h.b16 %v20
  %v194 = vunpack.c.l.b16 %v21
  %v195 = vunpack.c.h.b16 %v21
  %v196 = vunpack.c.l.b16 %v22
  %v197 = vunpack.c.h.b16 %v22
  %v198 = vunpack.c.l.b16 %v23
  %v199 = vunpack.c.h.b16 %v23
  %v200 = vunpack.c.l.b16 %v24
  %v201 = vunpack.c.h.b16 %v24
  %v202 = vunpack.c.l.b16 %v25
  %v203 = vunpack.c.h.b16 %v25
  %v204 = vunpack.c.l.b16 %v26
  %v205 = vunpack.c.h.b16 %v26
  %v206 = vunpack.c.l.b16 %v27
  %v207 = vunpack.c.h.b16 %v27
  %v208 = vunpack.c.l.b16 %v28
  %v209 = vunpack.c.h.b16 %v28
  %v210 = vunpack.c.l.b16 %v29
  %v211 = vunpack.c.h.b16 %v29
  %v212 = vunpack.c.l.b16 %v30
  %v213 = vunpack.c.h.b16 %v30
  %v214 = vpack.c.b16 %v190, %v182
  %v215 = vpack.c.b16 %v191, %v183
  %v216 = vpack.c.b16 %v192, %v184
  %v217 = vpack.c.b16 %v193, %v185
  %v218 = vpack.c.b16 %v194, %v186
  %v219 = vpack.c.b16 %v195, %v187
  %v220 = vpack.c.b16 %v196, %v188
  %v221 = vpack.c.b16 %v197, %v189
  %v222 = vpack.c.b16 %v206, %v198
  %v223 = vpack.c.b16 %v207, %v199
  %v224 = vpack.c.b16 %v208, %v200
  %v225 = vpack.c.b16 %v209, %v201
  %v226 = vpack.c.b16 %v210, %v202
  %v227 = vpack.c.b16 %v211, %v203
  %v228 = vpack.c.b16 %v212, %v204
  %v229 = vpack.c.b16 %v213, %v205
  %v374 = vunpack.c.l.b16 %v31
  %v375 = vunpack.c.l.b16 %v32
  %v376 = vunpack.c.l.b16 %v33
  %v377 = vunpack.c.l.b16 %v34
  %v378 = vunpack.c.l.b16 %v35
  %v379 = vunpack.c.l.b16 %v36
  %v380 = vunpack.c.l.b16 %v37
  %v381 = vunpack.c.l.b16 %v38
  %v382 = vunpack.c.l.b16 %v39
  %v383 = vunpack.c.l.b16 %v40
  %v384 = vunpack.c.l.b16 %v41
  %v385 = vunpack.c.l.b16 %v42
  %v386 = vunpack.c.l.b16 %v43
  %v387 = vunpack.c.l.b16 %v44
  %v388 = vunpack.c.l.b16 %v45
  %v389 = vunpack.c.l.b16 %v46
  %v390 = vunpack.c.l.b16 %v47
  %v391 = vunpack.c.l.b16 %v48
  %v392 = vunpack.c.l.b16 %v49
  %v393 = vunpack.c.l.b16 %v50
  %v394 = vunpack.c.l.b16 %v51
  %v395 = vunpack.c.l.b16 %v52
  %v396 = vunpack.c.l.b16 %v53
  %v397 = vunpack.c.l.b16 %v54
  %v398 = vunpack.c.l.b16 %v55
  %v399 = vunpack.c.l.b16 %v56
  %v400 = vunpack.c.l.b16 %v57
  %v401 = vunpack.c.l.b16 %v58
  %v402 = vunpack.c.l.b16 %v59
  %v403 = vunpack.c.l.b16 %v60
  %v404 = vunpack.c.l.b16 %v61
  %v405 = vunpack.c.l.b16 %v62
  %v406 = vunpack.c.l.b16 %v63
  %v407 = vunpack.c.l.b16 %v64
  %v408 = vunpack.c.l.b16 %v65
  %v409 = vunpack.c.l.b16 %v66
  %v410 = vunpack.c.l.b16 %v67
  %v411 = vunpack.c.l.b16 %v68
  %v412 = vunpack.c.l.b16 %v69
  %v413 = vunpack.c.l.b16 %v70
  %v414 = vunpack.c.l.b16 %v71
  %v415 = vunpack.c.l.b16 %v72
  %v416 = vunpack.c.l.b16 %v73
  %v417 = vunpack.c.l.b16 %v74
  %v418 = vunpack.c.l.b16 %v75
  %v419 = vunpack.c.l.b16 %v76
  %v420 = vunpack.c.l.b16 %v77
  %v421 = vunpack.c.l.b16 %v78
  %v422 = vunpack.c.l.b16 %v79
  %v423 = vunpack.c.l.b16 %v80
  %v424 = vunpack.c.l.b16 %v81
  %v425 = vunpack.c.l.b16 %v82
  %v426 = vunpack.c.l.b16 %v83
  %v427 = vunpack.c.l.b16 %v84
  %v428 = vunpack.c.l.b16 %v85
  %v429 = vunpack.c.l.b16 %v86
  %v430 = vunpack.c.l.b16 %v87
  %v431 = vunpack.c.l.b16 %v88
  %v432 = vunpack.c.l.b16 %v89
  %v433 = vunpack.c.l.b16 %v90
  %v434 = vunpack.c.l.b16 %v91
  %v435 = vunpack.c.l.b16 %v92
  %v436 = vunpack.c.l.b16 %v93
  %v437 = vunpack.c.l.b16 %v94
  %v438 = vunpack.c.l.b16 %v95
  %v439 = vunpack.c.l.b16 %v96
  %v440 = vunpack.c.l.b16 %v97
  %v441 = vunpack.c.l.b16 %v98
  %v442 = vunpack.c.l.b16 %v99
  %v443 = vunpack.c.l.b16 %v100
  %v444 = vunpack.c.l.b16 %v101
  %v445 = vunpack.c.l.b16 %v102
  %v446 = vunpack.c.l.b16 %v103
  %v447 = vunpack.c.l.b16 %v104
  %v448 = vunpack.c.l.b16 %v105
  %v449 = vunpack.c.l.b16 %v106
  %v450 = vunpack.c.l.b16 %v107
  %v451 = vunpack.c.l.b16 %v108
  %v452 = vunpack.c.l.b16 %v109
  %v453 = vunpack.c.l.b16 %v110
  %v454 = vunpack.c.l.b16 %v111
  %v455 = vunpack.c.l.b16 %v112
  %v456 = vunpack.c.l.b16 %v113
  %v457 = vunpack.c.l.b16 %v114
  %v458 = vunpack.c.l.b16 %v115
  %v459 = vunpack.c.l.b16 %v116
  %v460 = vunpack.c.l.b16 %v117
  %v461 = vunpack.c.l.b16 %v118
  %v462 = vunpack.c.l.b16 %v119
  %v463 = vunpack.c.l.b16 %v120
  %v464 = vunpack.c.l.b16 %v121
  %v465 = vunpack.c.l.b16 %v122
  %v466 = vunpack.c.l.b16 %v123
  %v467 = vunpack.c.l.b16 %v124
  %v468 = vunpack.c.l.b16 %v125
  %v469 = vunpack.c.l.b16 %v126
  %v470 = vunpack.c.l.b16 %v127
  %v471 = vunpack.c.l.b16 %v128
  %v472 = vunpack.c.l.b16 %v129
  %v473 = vunpack.c.l.b16 %v130
  %v474 = vunpack.c.l.b16 %v131
  %v475 = vunpack.c.l.b16 %v132
  %v476 = vunpack.c.l.b16 %v133
  %v477 = vunpack.c.l.b16 %v134
  %v478 = vunpack.c.l.b16 %v135
  %v479 = vunpack.c.l.b16 %v136
  %v480 = vunpack.c.l.b16 %v137
  %v481 = vunpack.c.l.b16 %v138
  %v482 = vunpack.c.l.b16 %v139
  %v483 = vunpack.c.l.b16 %v140
  %v484 = vunpack.c.l.b16 %v141
  %v485 = vunpack.c.l.b16 %v142
  %v486 = vunpack.c.l.b16 %v143
  %v487 = vunpack.c.l.b16 %v144
  %v488 = vunpack.c.l.b16 %v145
  %v489 = vunpack.c.l.b16 %v146
  %v490 = vunpack.c.l.b16 %v147
  %v491 = vunpack.c.l.b16 %v148
  %v492 = vunpack.c.l.b16 %v149
  %v493 = vunpack.c.l.b16 %v150
  %v494 = vunpack.c.l.b16 %v151
  %v495 = vunpack.c.l.b16 %v152
  %v496 = vunpack.c.l.b16 %v153
  %v497 = vunpack.c.l.b16 %v154
  %v498 = vunpack.c.l.b16 %v155
  %v499 = vunpack.c.l.b16 %v156
  %v500 = vunpack.c.l.b16 %v157
  %v501 = vunpack.c.l.b16 %v158
  %v502 = vpack.c.b16 %v375, %v374
  %v503 = vpack.c.b16 %v377, %v376
  %v504 = vpack.c.b16 %v379, %v378
  %v505 = vpack.c.b16 %v381, %v380
  %v506 = vpack.c.b16 %v383, %v382
  %v507 = vpack.c.b16 %v385, %v384
  %v508 = vpack.c.b16 %v387, %v386
  %v509 = vpack.c.b16 %v389, %v388
  %v510 = vpack.c.b16 %v391, %v390
  %v511 = vpack.c.b16 %v393, %v392
  %v512 = vpack.c.b16 %v395, %v394
  %v513 = vpack.c.b16 %v397, %v396
  %v514 = vpack.c.b16 %v399, %v398
  %v515 = vpack.c.b16 %v401, %v400
  %v516 = vpack.c.b16 %v403, %v402
  %v517 = vpack.c.b16 %v405, %v404
  %v518 = vpack.c.b16 %v407, %v406
  %v519 = vpack.c.b16 %v409, %v408
  %v520 = vpack.c.b16 %v411, %v410
  %v521 = vpack.c.b16 %v413, %v412
  %v522 = vpack.c.b16 %v415, %v414
  %v523 = vpack.c.b16 %v417, %v416
  %v524 = vpack.c.b16 %v419, %v418
  %v525 = vpack.c.b16 %v421, %v420
  %v526 = vpack.c.b16 %v423, %v422
  %v527 = vpack.c.b16 %v425, %v424
  %v528 = vpack.c.b16 %v427, %v426
  %v529 = vpack.c.b16 %v429, %v428
  %v530 = vpack.c.b16 %v431, %v430
  %v531 = vpack.c.b16 %v433, %v432
  %v532 = vpack.c.b16 %v435, %v434
  %v533 = vpack.c.b16 %v437, %v436
  %v534 = vpack.c.b16 %v439, %v438
  %v535 = vpack.c.b16 %v441, %v440
  %v536 = vpack.c.b16 %v443, %v442
  %v537 = vpack.c.b16 %v445, %v444
  %v538 = vpack.c.b16 %v447, %v446
  %v539 = vpack.c.b16 %v449, %v448
  %v540 = vpack.c.b16 %v451, %v450
  %v541 = vpack.c.b16 %v453, %v452
  %v542 = vpack.c.b16 %v455, %v454
  %v543 = vpack.c.b16 %v457, %v456
  %v544 = vpack.c.b16 %v459, %v458
  %v545 = vpack.c.b16 %v461, %v460
  %v546 = vpack.c.b16 %v463, %v462
  %v547 = vpack.c.b16 %v465, %v464
  %v548 = vpack.c.b16 %v467, %v466
  %v549 = vpack.c.b16 %v469, %v468
  %v550 = vpack.c.b16 %v471, %v470
  %v551 = vpack.c.b16 %v473, %v472
  %v552 = vpack.c.b16 %v475, %v474
  %v553 = vpack.c.b16 %v477, %v476
  %v554 = vpack.c.b16 %v479, %v478
  %v555 = vpack.c.b16 %v481, %v480
  %v556 = vpack.c.b16 %v483, %v482
  %v557 = vpack.c.b16 %v485, %v484
  %v558 = vpack.c.b16 %v487, %v486
  %v559 = vpack.c.b16 %v489, %v488
  %v560 = vpack.c.b16 %v491, %v490
  %v561 = vpack.c.b16 %v493, %v492
  %v562 = vpack.c.b16 %v495, %v494
  %v563 = vpack.c.b16 %v497, %v496
  %v564 = vpack.c.b16 %v499, %v498
  %v565 = vpack.c.b16 %v501, %v500
  %630 = vmatprep.subr.bf16.mxu0 0
  %631 = vmatpush1.bf16.msra.mxu0 %v502
  %632 = vmatprep.subr.bf16.mxu0 0
  %633 = vmatpush1.bf16.msra.mxu0 %v503
  %634 = vmatprep.subr.bf16.mxu0 0
  %635 = vmatpush1.bf16.msra.mxu0 %v504
  %636 = vmatprep.subr.bf16.mxu0 0
  %637 = vmatpush1.bf16.msra.mxu0 %v505
  %638 = vmatprep.subr.bf16.mxu0 0
  %639 = vmatpush1.bf16.msra.mxu0 %v506
  %640 = vmatprep.subr.bf16.mxu0 0
  %641 = vmatpush1.bf16.msra.mxu0 %v507
  %642 = vmatprep.subr.bf16.mxu0 0
  %643 = vmatpush1.bf16.msra.mxu0 %v508
  %644 = vmatprep.subr.bf16.mxu0 0
  %645 = vmatpush1.bf16.msra.mxu0 %v509
  %646 = vmatprep.subr.bf16.mxu0 0
  %647 = vmatpush1.bf16.msra.mxu0 %v510
  %648 = vmatprep.subr.bf16.mxu0 0
  %649 = vmatpush1.bf16.msra.mxu0 %v511
  %650 = vmatprep.subr.bf16.mxu0 0
  %651 = vmatpush1.bf16.msra.mxu0 %v512
  %652 = vmatprep.subr.bf16.mxu0 0
  %653 = vmatpush1.bf16.msra.mxu0 %v513
  %654 = vmatprep.subr.bf16.mxu0 0
  %655 = vmatpush1.bf16.msra.mxu0 %v514
  %656 = vmatprep.subr.bf16.mxu0 0
  %657 = vmatpush1.bf16.msra.mxu0 %v515
  %658 = vmatprep.subr.bf16.mxu0 0
  %659 = vmatpush1.bf16.msra.mxu0 %v516
  %660 = vmatprep.subr.bf16.mxu0 0
  %661 = vmatpush1.bf16.msra.mxu0 %v517
  %662 = vmatprep.mubr.bf16.mxu0 %v215
  %663 = vmatmul.mubr.bf16.gmra.mrb[0].mxu0 %v214
  %v664 = vpop.f32.mrb[0].mxu0
  %v665 = vadd.f32 %v164, %v664
  %v666 = vpop.f32.mrb[0].mxu0
  %v667 = vpop.f32.mrb[0].mxu0
  %v668 = vadd.f32 %v164, %v667
  %v669 = vpop.f32.mrb[0].mxu0
  %670 = vmatprep.mubr.bf16.mxu0 %v223
  %671 = vmatmul.mubr.bf16.gmra.mrb[0].mxu0 %v222
  %v672 = vpop.f32.mrb[0].mxu0
  %v673 = vadd.f32 %v164, %v672
  %v674 = vpop.f32.mrb[0].mxu0
  %v675 = vpop.f32.mrb[0].mxu0
  %v676 = vadd.f32 %v164, %v675
  %v677 = vpop.f32.mrb[0].mxu0
  %678 = vdwg.mxu0
  %679 = vmatprep.subr.bf16.mxu0 0
  %680 = vmatpush1.bf16.msra.mxu0 %v518
  %681 = vmatprep.subr.bf16.mxu0 0
  %682 = vmatpush1.bf16.msra.mxu0 %v519
  %683 = vmatprep.subr.bf16.mxu0 0
  %684 = vmatpush1.bf16.msra.mxu0 %v520
  %685 = vmatprep.subr.bf16.mxu0 0
  %686 = vmatpush1.bf16.msra.mxu0 %v521
  %687 = vmatprep.subr.bf16.mxu0 0
  %688 = vmatpush1.bf16.msra.mxu0 %v522
  %689 = vmatprep.subr.bf16.mxu0 0
  %690 = vmatpush1.bf16.msra.mxu0 %v523
  %691 = vmatprep.subr.bf16.mxu0 0
  %692 = vmatpush1.bf16.msra.mxu0 %v524
  %693 = vmatprep.subr.bf16.mxu0 0
  %694 = vmatpush1.bf16.msra.mxu0 %v525
  %695 = vmatprep.subr.bf16.mxu0 0
  %696 = vmatpush1.bf16.msra.mxu0 %v526
  %697 = vmatprep.subr.bf16.mxu0 0
  %698 = vmatpush1.bf16.msra.mxu0 %v527
  %699 = vmatprep.subr.bf16.mxu0 0
  %700 = vmatpush1.bf16.msra.mxu0 %v528
  %701 = vmatprep.subr.bf16.mxu0 0
  %702 = vmatpush1.bf16.msra.mxu0 %v529
  %703 = vmatprep.subr.bf16.mxu0 0
  %704 = vmatpush1.bf16.msra.mxu0 %v530
  %705 = vmatprep.subr.bf16.mxu0 0
  %706 = vmatpush1.bf16.msra.mxu0 %v531
  %707 = vmatprep.subr.bf16.mxu0 0
  %708 = vmatpush1.bf16.msra.mxu0 %v532
  %709 = vmatprep.subr.bf16.mxu0 0
  %710 = vmatpush1.bf16.msra.mxu0 %v533
  %711 = vmatprep.mubr.bf16.mxu0 %v217
  %712 = vmatmul.mubr.bf16.gmra.mrb[0].mxu0 %v216
  %v713 = vpop.f32.mrb[0].mxu0
  %v714 = vadd.f32 %v665, %v713
  %v715 = vpop.f32.mrb[0].mxu0
  %v716 = vpop.f32.mrb[0].mxu0
  %v717 = vadd.f32 %v668, %v716
  %v718 = vpop.f32.mrb[0].mxu0
  %719 = vmatprep.mubr.bf16.mxu0 %v225
  %720 = vmatmul.mubr.bf16.gmra.mrb[0].mxu0 %v224
  %v721 = vpop.f32.mrb[0].mxu0
  %v722 = vadd.f32 %v673, %v721
  %v723 = vpop.f32.mrb[0].mxu0
  %v724 = vpop.f32.mrb[0].mxu0
  %v725 = vadd.f32 %v676, %v724
  %v726 = vpop.f32.mrb[0].mxu0
  %727 = vdwg.mxu0
  %728 = vmatprep.subr.bf16.mxu0 0
  %729 = vmatpush1.bf16.msra.mxu0 %v534
  %730 = vmatprep.subr.bf16.mxu0 0
  %731 = vmatpush1.bf16.msra.mxu0 %v535
  %732 = vmatprep.subr.bf16.mxu0 0
  %733 = vmatpush1.bf16.msra.mxu0 %v536
  %734 = vmatprep.subr.bf16.mxu0 0
  %735 = vmatpush1.bf16.msra.mxu0 %v537
  %736 = vmatprep.subr.bf16.mxu0 0
  %737 = vmatpush1.bf16.msra.mxu0 %v538
  %738 = vmatprep.subr.bf16.mxu0 0
  %739 = vmatpush1.bf16.msra.mxu0 %v539
  %740 = vmatprep.subr.bf16.mxu0 0
  %741 = vmatpush1.bf16.msra.mxu0 %v540
  %742 = vmatprep.subr.bf16.mxu0 0
  %743 = vmatpush1.bf16.msra.mxu0 %v541
  %744 = vmatprep.subr.bf16.mxu0 0
  %745 = vmatpush1.bf16.msra.mxu0 %v542
  %746 = vmatprep.subr.bf16.mxu0 0
  %747 = vmatpush1.bf16.msra.mxu0 %v543
  %748 = vmatprep.subr.bf16.mxu0 0
  %749 = vmatpush1.bf16.msra.mxu0 %v544
  %750 = vmatprep.subr.bf16.mxu0 0
  %751 = vmatpush1.bf16.msra.mxu0 %v545
  %752 = vmatprep.subr.bf16.mxu0 0
  %753 = vmatpush1.bf16.msra.mxu0 %v546
  %754 = vmatprep.subr.bf16.mxu0 0
  %755 = vmatpush1.bf16.msra.mxu0 %v547
  %756 = vmatprep.subr.bf16.mxu0 0
  %757 = vmatpush1.bf16.msra.mxu0 %v548
  %758 = vmatprep.subr.bf16.mxu0 0
  %759 = vmatpush1.bf16.msra.mxu0 %v549
  %760 = vmatprep.mubr.bf16.mxu0 %v219
  %761 = vmatmul.mubr.bf16.gmra.mrb[0].mxu0 %v218
  %v762 = vpop.f32.mrb[0].mxu0
  %v763 = vadd.f32 %v714, %v762
  %v764 = vpop.f32.mrb[0].mxu0
  %v765 = vpop.f32.mrb[0].mxu0
  %v766 = vadd.f32 %v717, %v765
  %v767 = vpop.f32.mrb[0].mxu0
  %768 = vmatprep.mubr.bf16.mxu0 %v227
  %769 = vmatmul.mubr.bf16.gmra.mrb[0].mxu0 %v226
  %v770 = vpop.f32.mrb[0].mxu0
  %v771 = vadd.f32 %v722, %v770
  %v772 = vpop.f32.mrb[0].mxu0
  %v773 = vpop.f32.mrb[0].mxu0
  %v774 = vadd.f32 %v725, %v773
  %v775 = vpop.f32.mrb[0].mxu0
  %776 = vdwg.mxu0
  %777 = vmatprep.subr.bf16.mxu0 0
  %778 = vmatpush1.bf16.msra.mxu0 %v550
  %779 = vmatprep.subr.bf16.mxu0 0
  %780 = vmatpush1.bf16.msra.mxu0 %v551
  %781 = vmatprep.subr.bf16.mxu0 0
  %782 = vmatpush1.bf16.msra.mxu0 %v552
  %783 = vmatprep.subr.bf16.mxu0 0
  %784 = vmatpush1.bf16.msra.mxu0 %v553
  %785 = vmatprep.subr.bf16.mxu0 0
  %786 = vmatpush1.bf16.msra.mxu0 %v554
  %787 = vmatprep.subr.bf16.mxu0 0
  %788 = vmatpush1.bf16.msra.mxu0 %v555
  %789 = vmatprep.subr.bf16.mxu0 0
  %790 = vmatpush1.bf16.msra.mxu0 %v556
  %791 = vmatprep.subr.bf16.mxu0 0
  %792 = vmatpush1.bf16.msra.mxu0 %v557
  %793 = vmatprep.subr.bf16.mxu0 0
  %794 = vmatpush1.bf16.msra.mxu0 %v558
  %795 = vmatprep.subr.bf16.mxu0 0
  %796 = vmatpush1.bf16.msra.mxu0 %v559
  %797 = vmatprep.subr.bf16.mxu0 0
  %798 = vmatpush1.bf16.msra.mxu0 %v560
  %799 = vmatprep.subr.bf16.mxu0 0
  %800 = vmatpush1.bf16.msra.mxu0 %v561
  %801 = vmatprep.subr.bf16.mxu0 0
  %802 = vmatpush1.bf16.msra.mxu0 %v562
  %803 = vmatprep.subr.bf16.mxu0 0
  %804 = vmatpush1.bf16.msra.mxu0 %v563
  %805 = vmatprep.subr.bf16.mxu0 0
  %806 = vmatpush1.bf16.msra.mxu0 %v564
  %807 = vmatprep.subr.bf16.mxu0 0
  %808 = vmatpush1.bf16.msra.mxu0 %v565
  %809 = vmatprep.mubr.bf16.mxu0 %v221
  %810 = vmatmul.mubr.bf16.gmra.mrb[0].mxu0 %v220
  %v811 = vpop.f32.mrb[0].mxu0
  %v812 = vadd.f32 %v763, %v811
  %v813 = vpop.f32.mrb[0].mxu0
  %v814 = vpop.f32.mrb[0].mxu0
  %v815 = vadd.f32 %v766, %v814
  %v816 = vpop.f32.mrb[0].mxu0
  %817 = vmatprep.mubr.bf16.mxu0 %v229
  %818 = vmatmul.mubr.bf16.gmra.mrb[0].mxu0 %v228
  %v819 = vpop.f32.mrb[0].mxu0
  %v820 = vadd.f32 %v771, %v819
  %v821 = vpop.f32.mrb[0].mxu0
  %v822 = vpop.f32.mrb[0].mxu0
  %v823 = vadd.f32 %v774, %v822
  %v824 = vpop.f32.mrb[0].mxu0
  %825 = vdwg.mxu0
  %v826 = vmax.f32 %v812, 0.0
  %v827 = vmax.f32 %v815, 0.0
  %v828 = vmax.f32 %v820, 0.0
  %v829 = vmax.f32 %v823, 0.0
  %830 = vst [vmem:[%s3] sm:$0xff] %v826
  %831 = vst [vmem:[%s3 + $0x8] sm:$0xff] %v827
  %832 = vst [vmem:[%s3 + $0x10] sm:$0xff] %v828
  %833 = vst [vmem:[%s3 + $0x18] sm:$0xff] %v829
  // Predicated region
  $region14: #{vae_forward.15} parent=0 // pred_check
    _
  $region15: #{vae_forward.15} parent=0 // pred_check_branch
    %835 = sbr.rel (0) target = $region17
  $region16: #{vae_forward.15} parent=0 // pred_region
    _
  $region17: #{vae_forward.15} parent=0 // pred_fallthru
    _
  // Predicated region
  $region18: #{vae_forward.15} parent=0 // pred_check
    _
  $region19: #{vae_forward.15} parent=0 // pred_check_branch
    %837 = sbr.rel (0) target = $region21
  $region20: #{vae_forward.15} parent=0 // pred_region
    _
  $region21: #{vae_forward.15} parent=0 // pred_fallthru
    _

// kernel: vae_forward.16
$region0: #{vae_forward.16}
  #allocation0 [shape = 'u32[]', space=smem, size = 0x4, offset = 0x4, fixed_abs, tag = 'smem constant byte address 0x4 - core index']
  #allocation1 [shape = 'u32[144,128]{1,0:T(1,128)}', space=vmem, size = 0x12000, scoped, tag = 'internal scratch']
  %s0 = inlined_call_operand.vmem [shape: bf16[2,2048], index: 0, kind: input, shape index: {}]
  %s1 = inlined_call_operand.vmem [shape: bf16[2048,256], index: 1, kind: input, shape index: {}]
  %s2 = inlined_call_operand.vmem [shape: f32[1,256], index: 2, kind: input, shape index: {}]
  %s3 = inlined_call_operand.vmem [shape: f32[2,256], index: 3, kind: output, shape index: {}]
  %s4 = sld [smem:[#allocation0]]
  $region22: #{vae_forward.16} parent=0
    _
  %s6 = ssub.s32 1, %s4
  %s7 = scalar_select 0, %s6, %s4
  // Predicated region
  $region2: #{vae_forward.16} parent=0 // pred_check
    _
  $region3: #{vae_forward.16} parent=0 // pred_check_branch
    %9 = sbr.rel (0) target = $region5
  $region4: #{vae_forward.16} parent=0 // pred_region
    _
  $region5: #{vae_forward.16} parent=0 // pred_fallthru
    _
  // Predicated region
  $region6: #{vae_forward.16} parent=0 // pred_check
    _
  $region7: #{vae_forward.16} parent=0 // pred_check_branch
    %11 = sbr.rel (0) target = $region9
  $region8: #{vae_forward.16} parent=0 // pred_region
    _
  $region9: #{vae_forward.16} parent=0 // pred_fallthru
    _
  // Predicated region
  $region10: #{vae_forward.16} parent=0 // pred_check
    _
  $region11: #{vae_forward.16} parent=0 // pred_check_branch
    %13 = sbr.rel (0) target = $region13
  $region12: #{vae_forward.16} parent=0 // pred_region
    _
  $region13: #{vae_forward.16} parent=0 // pred_fallthru
    _
  %v14 = vld [vmem:[%s0] sm:$0xff]
  %v15 = vld [vmem:[%s0 + $0x8] sm:$0xff]
  %v16 = vld [vmem:[%s1] sm:$0xff]
  %v17 = vld [vmem:[%s1 + $0x8] sm:$0xff]
  %v18 = vld [vmem:[%s1 + $0x10] sm:$0xff]
  %v19 = vld [vmem:[%s1 + $0x18] sm:$0xff]
  %v20 = vld [vmem:[%s1 + $0x20] sm:$0xff]
  %v21 = vld [vmem:[%s1 + $0x28] sm:$0xff]
  %v22 = vld [vmem:[%s1 + $0x30] sm:$0xff]
  %v23 = vld [vmem:[%s1 + $0x38] sm:$0xff]
  %v24 = vld [vmem:[%s1 + $0x40] sm:$0xff]
  %v25 = vld [vmem:[%s1 + $0x48] sm:$0xff]
  %v26 = vld [vmem:[%s1 + $0x50] sm:$0xff]
  %v27 = vld [vmem:[%s1 + $0x58] sm:$0xff]
  %v28 = vld [vmem:[%s1 + $0x60] sm:$0xff]
  %v29 = vld [vmem:[%s1 + $0x68] sm:$0xff]
  %v30 = vld [vmem:[%s1 + $0x70] sm:$0xff]
  %v31 = vld [vmem:[%s1 + $0x78] sm:$0xff]
  %v32 = vld [vmem:[%s1 + $0x80] sm:$0xff]
  %v33 = vld [vmem:[%s1 + $0x88] sm:$0xff]
  %v34 = vld [vmem:[%s1 + $0x90] sm:$0xff]
  %v35 = vld [vmem:[%s1 + $0x98] sm:$0xff]
  %v36 = vld [vmem:[%s1 + $0xa0] sm:$0xff]
  %v37 = vld [vmem:[%s1 + $0xa8] sm:$0xff]
  %v38 = vld [vmem:[%s1 + $0xb0] sm:$0xff]
  %v39 = vld [vmem:[%s1 + $0xb8] sm:$0xff]
  %v40 = vld [vmem:[%s1 + $0xc0] sm:$0xff]
  %v41 = vld [vmem:[%s1 + $0xc8] sm:$0xff]
  %v42 = vld [vmem:[%s1 + $0xd0] sm:$0xff]
  %v43 = vld [vmem:[%s1 + $0xd8] sm:$0xff]
  %v44 = vld [vmem:[%s1 + $0xe0] sm:$0xff]
  %v45 = vld [vmem:[%s1 + $0xe8] sm:$0xff]
  %v46 = vld [vmem:[%s1 + $0xf0] sm:$0xff]
  %v47 = vld [vmem:[%s1 + $0xf8] sm:$0xff]
  %v48 = vld [vmem:[%s1 + $0x100] sm:$0xff]
  %v49 = vld [vmem:[%s1 + $0x108] sm:$0xff]
  %v50 = vld [vmem:[%s1 + $0x110] sm:$0xff]
  %v51 = vld [vmem:[%s1 + $0x118] sm:$0xff]
  %v52 = vld [vmem:[%s1 + $0x120] sm:$0xff]
  %v53 = vld [vmem:[%s1 + $0x128] sm:$0xff]
  %v54 = vld [vmem:[%s1 + $0x130] sm:$0xff]
  %v55 = vld [vmem:[%s1 + $0x138] sm:$0xff]
  %v56 = vld [vmem:[%s1 + $0x140] sm:$0xff]
  %v57 = vld [vmem:[%s1 + $0x148] sm:$0xff]
  %v58 = vld [vmem:[%s1 + $0x150] sm:$0xff]
  %v59 = vld [vmem:[%s1 + $0x158] sm:$0xff]
  %v60 = vld [vmem:[%s1 + $0x160] sm:$0xff]
  %v61 = vld [vmem:[%s1 + $0x168] sm:$0xff]
  %v62 = vld [vmem:[%s1 + $0x170] sm:$0xff]
  %v63 = vld [vmem:[%s1 + $0x178] sm:$0xff]
  %v64 = vld [vmem:[%s1 + $0x180] sm:$0xff]
  %v65 = vld [vmem:[%s1 + $0x188] sm:$0xff]
  %v66 = vld [vmem:[%s1 + $0x190] sm:$0xff]
  %v67 = vld [vmem:[%s1 + $0x198] sm:$0xff]
  %v68 = vld [vmem:[%s1 + $0x1a0] sm:$0xff]
  %v69 = vld [vmem:[%s1 + $0x1a8] sm:$0xff]
  %v70 = vld [vmem:[%s1 + $0x1b0] sm:$0xff]
  %v71 = vld [vmem:[%s1 + $0x1b8] sm:$0xff]
  %v72 = vld [vmem:[%s1 + $0x1c0] sm:$0xff]
  %v73 = vld [vmem:[%s1 + $0x1c8] sm:$0xff]
  %v74 = vld [vmem:[%s1 + $0x1d0] sm:$0xff]
  %v75 = vld [vmem:[%s1 + $0x1d8] sm:$0xff]
  %v76 = vld [vmem:[%s1 + $0x1e0] sm:$0xff]
  %v77 = vld [vmem:[%s1 + $0x1e8] sm:$0xff]
  %v78 = vld [vmem:[%s1 + $0x1f0] sm:$0xff]
  %v79 = vld [vmem:[%s1 + $0x1f8] sm:$0xff]
  %v80 = vld [vmem:[%s1 + $0x200] sm:$0xff]
  %v81 = vld [vmem:[%s1 + $0x208] sm:$0xff]
  %v82 = vld [vmem:[%s1 + $0x210] sm:$0xff]
  %v83 = vld [vmem:[%s1 + $0x218] sm:$0xff]
  %v84 = vld [vmem:[%s1 + $0x220] sm:$0xff]
  %v85 = vld [vmem:[%s1 + $0x228] sm:$0xff]
  %v86 = vld [vmem:[%s1 + $0x230] sm:$0xff]
  %v87 = vld [vmem:[%s1 + $0x238] sm:$0xff]
  %v88 = vld [vmem:[%s1 + $0x240] sm:$0xff]
  %v89 = vld [vmem:[%s1 + $0x248] sm:$0xff]
  %v90 = vld [vmem:[%s1 + $0x250] sm:$0xff]
  %v91 = vld [vmem:[%s1 + $0x258] sm:$0xff]
  %v92 = vld [vmem:[%s1 + $0x260] sm:$0xff]
  %v93 = vld [vmem:[%s1 + $0x268] sm:$0xff]
  %v94 = vld [vmem:[%s1 + $0x270] sm:$0xff]
  %v95 = vld [vmem:[%s1 + $0x278] sm:$0xff]
  %v96 = vld [vmem:[%s1 + $0x280] sm:$0xff]
  %v97 = vld [vmem:[%s1 + $0x288] sm:$0xff]
  %v98 = vld [vmem:[%s1 + $0x290] sm:$0xff]
  %v99 = vld [vmem:[%s1 + $0x298] sm:$0xff]
  %v100 = vld [vmem:[%s1 + $0x2a0] sm:$0xff]
  %v101 = vld [vmem:[%s1 + $0x2a8] sm:$0xff]
  %v102 = vld [vmem:[%s1 + $0x2b0] sm:$0xff]
  %v103 = vld [vmem:[%s1 + $0x2b8] sm:$0xff]
  %v104 = vld [vmem:[%s1 + $0x2c0] sm:$0xff]
  %v105 = vld [vmem:[%s1 + $0x2c8] sm:$0xff]
  %v106 = vld [vmem:[%s1 + $0x2d0] sm:$0xff]
  %v107 = vld [vmem:[%s1 + $0x2d8] sm:$0xff]
  %v108 = vld [vmem:[%s1 + $0x2e0] sm:$0xff]
  %v109 = vld [vmem:[%s1 + $0x2e8] sm:$0xff]
  %v110 = vld [vmem:[%s1 + $0x2f0] sm:$0xff]
  %v111 = vld [vmem:[%s1 + $0x2f8] sm:$0xff]
  %v112 = vld [vmem:[%s1 + $0x300] sm:$0xff]
  %v113 = vld [vmem:[%s1 + $0x308] sm:$0xff]
  %v114 = vld [vmem:[%s1 + $0x310] sm:$0xff]
  %v115 = vld [vmem:[%s1 + $0x318] sm:$0xff]
  %v116 = vld [vmem:[%s1 + $0x320] sm:$0xff]
  %v117 = vld [vmem:[%s1 + $0x328] sm:$0xff]
  %v118 = vld [vmem:[%s1 + $0x330] sm:$0xff]
  %v119 = vld [vmem:[%s1 + $0x338] sm:$0xff]
  %v120 = vld [vmem:[%s1 + $0x340] sm:$0xff]
  %v121 = vld [vmem:[%s1 + $0x348] sm:$0xff]
  %v122 = vld [vmem:[%s1 + $0x350] sm:$0xff]
  %v123 = vld [vmem:[%s1 + $0x358] sm:$0xff]
  %v124 = vld [vmem:[%s1 + $0x360] sm:$0xff]
  %v125 = vld [vmem:[%s1 + $0x368] sm:$0xff]
  %v126 = vld [vmem:[%s1 + $0x370] sm:$0xff]
  %v127 = vld [vmem:[%s1 + $0x378] sm:$0xff]
  %v128 = vld [vmem:[%s1 + $0x380] sm:$0xff]
  %v129 = vld [vmem:[%s1 + $0x388] sm:$0xff]
  %v130 = vld [vmem:[%s1 + $0x390] sm:$0xff]
  %v131 = vld [vmem:[%s1 + $0x398] sm:$0xff]
  %v132 = vld [vmem:[%s1 + $0x3a0] sm:$0xff]
  %v133 = vld [vmem:[%s1 + $0x3a8] sm:$0xff]
  %v134 = vld [vmem:[%s1 + $0x3b0] sm:$0xff]
  %v135 = vld [vmem:[%s1 + $0x3b8] sm:$0xff]
  %v136 = vld [vmem:[%s1 + $0x3c0] sm:$0xff]
  %v137 = vld [vmem:[%s1 + $0x3c8] sm:$0xff]
  %v138 = vld [vmem:[%s1 + $0x3d0] sm:$0xff]
  %v139 = vld [vmem:[%s1 + $0x3d8] sm:$0xff]
  %v140 = vld [vmem:[%s1 + $0x3e0] sm:$0xff]
  %v141 = vld [vmem:[%s1 + $0x3e8] sm:$0xff]
  %v142 = vld [vmem:[%s1 + $0x3f0] sm:$0xff]
  %v143 = vld [vmem:[%s1 + $0x3f8] sm:$0xff]
  %v144 = vld [vmem:[%s1 + $0x400] sm:$0xff]
  %v145 = vld [vmem:[%s1 + $0x408] sm:$0xff]
  %v146 = vld [vmem:[%s1 + $0x410] sm:$0xff]
  %v147 = vld [vmem:[%s1 + $0x418] sm:$0xff]
  %v148 = vld [vmem:[%s1 + $0x420] sm:$0xff]
  %v149 = vld [vmem:[%s1 + $0x428] sm:$0xff]
  %v150 = vld [vmem:[%s1 + $0x430] sm:$0xff]
  %v151 = vld [vmem:[%s1 + $0x438] sm:$0xff]
  %v152 = vld [vmem:[%s1 + $0x440] sm:$0xff]
  %v153 = vld [vmem:[%s1 + $0x448] sm:$0xff]
  %v154 = vld [vmem:[%s1 + $0x450] sm:$0xff]
  %v155 = vld [vmem:[%s1 + $0x458] sm:$0xff]
  %v156 = vld [vmem:[%s1 + $0x460] sm:$0xff]
  %v157 = vld [vmem:[%s1 + $0x468] sm:$0xff]
  %v158 = vld [vmem:[%s1 + $0x470] sm:$0xff]
  %v159 = vld [vmem:[%s1 + $0x478] sm:$0xff]
  %v160 = vld [vmem:[%s1 + $0x480] sm:$0xff]
  %v161 = vld [vmem:[%s1 + $0x488] sm:$0xff]
  %v162 = vld [vmem:[%s1 + $0x490] sm:$0xff]
  %v163 = vld [vmem:[%s1 + $0x498] sm:$0xff]
  %v164 = vld [vmem:[%s1 + $0x4a0] sm:$0xff]
  %v165 = vld [vmem:[%s1 + $0x4a8] sm:$0xff]
  %v166 = vld [vmem:[%s1 + $0x4b0] sm:$0xff]
  %v167 = vld [vmem:[%s1 + $0x4b8] sm:$0xff]
  %v168 = vld [vmem:[%s1 + $0x4c0] sm:$0xff]
  %v169 = vld [vmem:[%s1 + $0x4c8] sm:$0xff]
  %v170 = vld [vmem:[%s1 + $0x4d0] sm:$0xff]
  %v171 = vld [vmem:[%s1 + $0x4d8] sm:$0xff]
  %v172 = vld [vmem:[%s1 + $0x4e0] sm:$0xff]
  %v173 = vld [vmem:[%s1 + $0x4e8] sm:$0xff]
  %v174 = vld [vmem:[%s1 + $0x4f0] sm:$0xff]
  %v175 = vld [vmem:[%s1 + $0x4f8] sm:$0xff]
  %v176 = vld [vmem:[%s1 + $0x500] sm:$0xff]
  %v177 = vld [vmem:[%s1 + $0x508] sm:$0xff]
  %v178 = vld [vmem:[%s1 + $0x510] sm:$0xff]
  %v179 = vld [vmem:[%s1 + $0x518] sm:$0xff]
  %v180 = vld [vmem:[%s1 + $0x520] sm:$0xff]
  %v181 = vld [vmem:[%s1 + $0x528] sm:$0xff]
  %v182 = vld [vmem:[%s1 + $0x530] sm:$0xff]
  %v183 = vld [vmem:[%s1 + $0x538] sm:$0xff]
  %v184 = vld [vmem:[%s1 + $0x540] sm:$0xff]
  %v185 = vld [vmem:[%s1 + $0x548] sm:$0xff]
  %v186 = vld [vmem:[%s1 + $0x550] sm:$0xff]
  %v187 = vld [vmem:[%s1 + $0x558] sm:$0xff]
  %v188 = vld [vmem:[%s1 + $0x560] sm:$0xff]
  %v189 = vld [vmem:[%s1 + $0x568] sm:$0xff]
  %v190 = vld [vmem:[%s1 + $0x570] sm:$0xff]
  %v191 = vld [vmem:[%s1 + $0x578] sm:$0xff]
  %v192 = vld [vmem:[%s1 + $0x580] sm:$0xff]
  %v193 = vld [vmem:[%s1 + $0x588] sm:$0xff]
  %v194 = vld [vmem:[%s1 + $0x590] sm:$0xff]
  %v195 = vld [vmem:[%s1 + $0x598] sm:$0xff]
  %v196 = vld [vmem:[%s1 + $0x5a0] sm:$0xff]
  %v197 = vld [vmem:[%s1 + $0x5a8] sm:$0xff]
  %v198 = vld [vmem:[%s1 + $0x5b0] sm:$0xff]
  %v199 = vld [vmem:[%s1 + $0x5b8] sm:$0xff]
  %v200 = vld [vmem:[%s1 + $0x5c0] sm:$0xff]
  %v201 = vld [vmem:[%s1 + $0x5c8] sm:$0xff]
  %v202 = vld [vmem:[%s1 + $0x5d0] sm:$0xff]
  %v203 = vld [vmem:[%s1 + $0x5d8] sm:$0xff]
  %v204 = vld [vmem:[%s1 + $0x5e0] sm:$0xff]
  %v205 = vld [vmem:[%s1 + $0x5e8] sm:$0xff]
  %v206 = vld [vmem:[%s1 + $0x5f0] sm:$0xff]
  %v207 = vld [vmem:[%s1 + $0x5f8] sm:$0xff]
  %v208 = vld [vmem:[%s1 + $0x600] sm:$0xff]
  %v209 = vld [vmem:[%s1 + $0x608] sm:$0xff]
  %v210 = vld [vmem:[%s1 + $0x610] sm:$0xff]
  %v211 = vld [vmem:[%s1 + $0x618] sm:$0xff]
  %v212 = vld [vmem:[%s1 + $0x620] sm:$0xff]
  %v213 = vld [vmem:[%s1 + $0x628] sm:$0xff]
  %v214 = vld [vmem:[%s1 + $0x630] sm:$0xff]
  %v215 = vld [vmem:[%s1 + $0x638] sm:$0xff]
  %v216 = vld [vmem:[%s1 + $0x640] sm:$0xff]
  %v217 = vld [vmem:[%s1 + $0x648] sm:$0xff]
  %v218 = vld [vmem:[%s1 + $0x650] sm:$0xff]
  %v219 = vld [vmem:[%s1 + $0x658] sm:$0xff]
  %v220 = vld [vmem:[%s1 + $0x660] sm:$0xff]
  %v221 = vld [vmem:[%s1 + $0x668] sm:$0xff]
  %v222 = vld [vmem:[%s1 + $0x670] sm:$0xff]
  %v223 = vld [vmem:[%s1 + $0x678] sm:$0xff]
  %v224 = vld [vmem:[%s1 + $0x680] sm:$0xff]
  %v225 = vld [vmem:[%s1 + $0x688] sm:$0xff]
  %v226 = vld [vmem:[%s1 + $0x690] sm:$0xff]
  %v227 = vld [vmem:[%s1 + $0x698] sm:$0xff]
  %v228 = vld [vmem:[%s1 + $0x6a0] sm:$0xff]
  %v229 = vld [vmem:[%s1 + $0x6a8] sm:$0xff]
  %v230 = vld [vmem:[%s1 + $0x6b0] sm:$0xff]
  %v231 = vld [vmem:[%s1 + $0x6b8] sm:$0xff]
  %v232 = vld [vmem:[%s1 + $0x6c0] sm:$0xff]
  %v233 = vld [vmem:[%s1 + $0x6c8] sm:$0xff]
  %v234 = vld [vmem:[%s1 + $0x6d0] sm:$0xff]
  %v235 = vld [vmem:[%s1 + $0x6d8] sm:$0xff]
  %v236 = vld [vmem:[%s1 + $0x6e0] sm:$0xff]
  %v237 = vld [vmem:[%s1 + $0x6e8] sm:$0xff]
  %v238 = vld [vmem:[%s1 + $0x6f0] sm:$0xff]
  %v239 = vld [vmem:[%s1 + $0x6f8] sm:$0xff]
  %v240 = vld [vmem:[%s1 + $0x700] sm:$0xff]
  %v241 = vld [vmem:[%s1 + $0x708] sm:$0xff]
  %v242 = vld [vmem:[%s1 + $0x710] sm:$0xff]
  %v243 = vld [vmem:[%s1 + $0x718] sm:$0xff]
  %v244 = vld [vmem:[%s1 + $0x720] sm:$0xff]
  %v245 = vld [vmem:[%s1 + $0x728] sm:$0xff]
  %v246 = vld [vmem:[%s1 + $0x730] sm:$0xff]
  %v247 = vld [vmem:[%s1 + $0x738] sm:$0xff]
  %v248 = vld [vmem:[%s1 + $0x740] sm:$0xff]
  %v249 = vld [vmem:[%s1 + $0x748] sm:$0xff]
  %v250 = vld [vmem:[%s1 + $0x750] sm:$0xff]
  %v251 = vld [vmem:[%s1 + $0x758] sm:$0xff]
  %v252 = vld [vmem:[%s1 + $0x760] sm:$0xff]
  %v253 = vld [vmem:[%s1 + $0x768] sm:$0xff]
  %v254 = vld [vmem:[%s1 + $0x770] sm:$0xff]
  %v255 = vld [vmem:[%s1 + $0x778] sm:$0xff]
  %v256 = vld [vmem:[%s1 + $0x780] sm:$0xff]
  %v257 = vld [vmem:[%s1 + $0x788] sm:$0xff]
  %v258 = vld [vmem:[%s1 + $0x790] sm:$0xff]
  %v259 = vld [vmem:[%s1 + $0x798] sm:$0xff]
  %v260 = vld [vmem:[%s1 + $0x7a0] sm:$0xff]
  %v261 = vld [vmem:[%s1 + $0x7a8] sm:$0xff]
  %v262 = vld [vmem:[%s1 + $0x7b0] sm:$0xff]
  %v263 = vld [vmem:[%s1 + $0x7b8] sm:$0xff]
  %v264 = vld [vmem:[%s1 + $0x7c0] sm:$0xff]
  %v265 = vld [vmem:[%s1 + $0x7c8] sm:$0xff]
  %v266 = vld [vmem:[%s1 + $0x7d0] sm:$0xff]
  %v267 = vld [vmem:[%s1 + $0x7d8] sm:$0xff]
  %v268 = vld [vmem:[%s1 + $0x7e0] sm:$0xff]
  %v269 = vld [vmem:[%s1 + $0x7e8] sm:$0xff]
  %v270 = vld [vmem:[%s1 + $0x7f0] sm:$0xff]
  %v271 = vld [vmem:[%s1 + $0x7f8] sm:$0xff]
  %v272 = vld [vmem:[%s2] sm:$0x3]
  %v274 = vlaneseq
  %v275 = vshrl.u32 %v274, 7
  %v276 = vsub.s32 0, %v275
  %v277 = vrot.slane %v272, %v276
  %v278 = vlaneseq
  %v279 = vshrl.u32 %v278, 7
  %v280 = vsub.s32 1, %v279
  %v281 = vrot.slane %v272, %v280
  %v286 = vcombine.high %v14, %v14
  %v288 = vunpack.c.l.s4 1966171168
  %v289 = vunpack.c.0.s8 %v288
  %v290 = vlaneseq
  %v291 = vshrl.u32 %v290, 7
  %v292 = vsub.s32 %v289, %v291
  %v293 = vrot.slane %v14, %v292
  %v295 = vunpack.c.l.s4 1966171168
  %v296 = vunpack.c.0.s8 %v295
  %v297 = vlaneseq
  %v298 = vshrl.u32 %v297, 7
  %v299 = vsub.s32 %v296, %v298
  %v300 = vrot.slane %v286, %v299
  %v301 = vcombine.high %v293, %v293
  %v302 = vcombine.high %v300, %v300
  %v304 = vunpack.c.l.s4 1966171168
  %v305 = vunpack.c.0.s8 %v304
  %v306 = vlaneseq
  %v307 = vshrl.u32 %v306, 7
  %v308 = vsub.s32 %v305, %v307
  %v309 = vrot.slane %v293, %v308
  %v311 = vunpack.c.l.s4 1966171168
  %v312 = vunpack.c.0.s8 %v311
  %v313 = vlaneseq
  %v314 = vshrl.u32 %v313, 7
  %v315 = vsub.s32 %v312, %v314
  %v316 = vrot.slane %v300, %v315
  %v318 = vunpack.c.l.s4 1966171168
  %v319 = vunpack.c.0.s8 %v318
  %v320 = vlaneseq
  %v321 = vshrl.u32 %v320, 7
  %v322 = vsub.s32 %v319, %v321
  %v323 = vrot.slane %v301, %v322
  %v325 = vunpack.c.l.s4 1966171168
  %v326 = vunpack.c.0.s8 %v325
  %v327 = vlaneseq
  %v328 = vshrl.u32 %v327, 7
  %v329 = vsub.s32 %v326, %v328
  %v330 = vrot.slane %v302, %v329
  %v331 = vcombine.high %v309, %v309
  %v332 = vcombine.high %v316, %v316
  %v333 = vcombine.high %v323, %v323
  %v334 = vcombine.high %v330, %v330
  %v335 = vcombine.high %v15, %v15
  %v337 = vunpack.c.l.s4 1966171168
  %v338 = vunpack.c.0.s8 %v337
  %v339 = vlaneseq
  %v340 = vshrl.u32 %v339, 7
  %v341 = vsub.s32 %v338, %v340
  %v342 = vrot.slane %v15, %v341
  %v344 = vunpack.c.l.s4 1966171168
  %v345 = vunpack.c.0.s8 %v344
  %v346 = vlaneseq
  %v347 = vshrl.u32 %v346, 7
  %v348 = vsub.s32 %v345, %v347
  %v349 = vrot.slane %v335, %v348
  %v350 = vcombine.high %v342, %v342
  %v351 = vcombine.high %v349, %v349
  %v353 = vunpack.c.l.s4 1966171168
  %v354 = vunpack.c.0.s8 %v353
  %v355 = vlaneseq
  %v356 = vshrl.u32 %v355, 7
  %v357 = vsub.s32 %v354, %v356
  %v358 = vrot.slane %v342, %v357
  %v360 = vunpack.c.l.s4 1966171168
  %v361 = vunpack.c.0.s8 %v360
  %v362 = vlaneseq
  %v363 = vshrl.u32 %v362, 7
  %v364 = vsub.s32 %v361, %v363
  %v365 = vrot.slane %v349, %v364
  %v367 = vunpack.c.l.s4 1966171168
  %v368 = vunpack.c.0.s8 %v367
  %v369 = vlaneseq
  %v370 = vshrl.u32 %v369, 7
  %v371 = vsub.s32 %v368, %v370
  %v372 = vrot.slane %v350, %v371
  %v374 = vunpack.c.l.s4 1966171168
  %v375 = vunpack.c.0.s8 %v374
  %v376 = vlaneseq
  %v377 = vshrl.u32 %v376, 7
  %v378 = vsub.s32 %v375, %v377
  %v379 = vrot.slane %v351, %v378
  %v380 = vcombine.high %v358, %v358
  %v381 = vcombine.high %v365, %v365
  %v382 = vcombine.high %v372, %v372
  %v383 = vcombine.high %v379, %v379
  %v656 = vunpack.c.l.b16 %v16
  %v657 = vunpack.c.h.b16 %v16
  %v658 = vunpack.c.l.b16 %v17
  %v659 = vunpack.c.h.b16 %v17
  %v660 = vunpack.c.l.b16 %v18
  %v661 = vunpack.c.h.b16 %v18
  %v662 = vunpack.c.l.b16 %v19
  %v663 = vunpack.c.h.b16 %v19
  %v664 = vunpack.c.l.b16 %v20
  %v665 = vunpack.c.h.b16 %v20
  %v666 = vunpack.c.l.b16 %v21
  %v667 = vunpack.c.h.b16 %v21
  %v668 = vunpack.c.l.b16 %v22
  %v669 = vunpack.c.h.b16 %v22
  %v670 = vunpack.c.l.b16 %v23
  %v671 = vunpack.c.h.b16 %v23
  %v672 = vunpack.c.l.b16 %v24
  %v673 = vunpack.c.h.b16 %v24
  %v674 = vunpack.c.l.b16 %v25
  %v675 = vunpack.c.h.b16 %v25
  %v676 = vunpack.c.l.b16 %v26
  %v677 = vunpack.c.h.b16 %v26
  %v678 = vunpack.c.l.b16 %v27
  %v679 = vunpack.c.h.b16 %v27
  %v680 = vunpack.c.l.b16 %v28
  %v681 = vunpack.c.h.b16 %v28
  %v682 = vunpack.c.l.b16 %v29
  %v683 = vunpack.c.h.b16 %v29
  %v684 = vunpack.c.l.b16 %v30
  %v685 = vunpack.c.h.b16 %v30
  %v686 = vunpack.c.l.b16 %v31
  %v687 = vunpack.c.h.b16 %v31
  %v688 = vunpack.c.l.b16 %v32
  %v689 = vunpack.c.h.b16 %v32
  %v690 = vunpack.c.l.b16 %v33
  %v691 = vunpack.c.h.b16 %v33
  %v692 = vunpack.c.l.b16 %v34
  %v693 = vunpack.c.h.b16 %v34
  %v694 = vunpack.c.l.b16 %v35
  %v695 = vunpack.c.h.b16 %v35
  %v696 = vunpack.c.l.b16 %v36
  %v697 = vunpack.c.h.b16 %v36
  %v698 = vunpack.c.l.b16 %v37
  %v699 = vunpack.c.h.b16 %v37
  %v700 = vunpack.c.l.b16 %v38
  %v701 = vunpack.c.h.b16 %v38
  %v702 = vunpack.c.l.b16 %v39
  %v703 = vunpack.c.h.b16 %v39
  %v704 = vunpack.c.l.b16 %v40
  %v705 = vunpack.c.h.b16 %v40
  %v706 = vunpack.c.l.b16 %v41
  %v707 = vunpack.c.h.b16 %v41
  %v708 = vunpack.c.l.b16 %v42
  %v709 = vunpack.c.h.b16 %v42
  %v710 = vunpack.c.l.b16 %v43
  %v711 = vunpack.c.h.b16 %v43
  %v712 = vunpack.c.l.b16 %v44
  %v713 = vunpack.c.h.b16 %v44
  %v714 = vunpack.c.l.b16 %v45
  %v715 = vunpack.c.h.b16 %v45
  %v716 = vunpack.c.l.b16 %v46
  %v717 = vunpack.c.h.b16 %v46
  %v718 = vunpack.c.l.b16 %v47
  %v719 = vunpack.c.h.b16 %v47
  %v720 = vunpack.c.l.b16 %v48
  %v721 = vunpack.c.h.b16 %v48
  %v722 = vunpack.c.l.b16 %v49
  %v723 = vunpack.c.h.b16 %v49
  %v724 = vunpack.c.l.b16 %v50
  %v725 = vunpack.c.h.b16 %v50
  %v726 = vunpack.c.l.b16 %v51
  %v727 = vunpack.c.h.b16 %v51
  %v728 = vunpack.c.l.b16 %v52
  %v729 = vunpack.c.h.b16 %v52
  %v730 = vunpack.c.l.b16 %v53
  %v731 = vunpack.c.h.b16 %v53
  %v732 = vunpack.c.l.b16 %v54
  %v733 = vunpack.c.h.b16 %v54
  %v734 = vunpack.c.l.b16 %v55
  %v735 = vunpack.c.h.b16 %v55
  %v736 = vunpack.c.l.b16 %v56
  %v737 = vunpack.c.h.b16 %v56
  %v738 = vunpack.c.l.b16 %v57
  %v739 = vunpack.c.h.b16 %v57
  %v740 = vunpack.c.l.b16 %v58
  %v741 = vunpack.c.h.b16 %v58
  %v742 = vunpack.c.l.b16 %v59
  %v743 = vunpack.c.h.b16 %v59
  %v744 = vunpack.c.l.b16 %v60
  %v745 = vunpack.c.h.b16 %v60
  %v746 = vunpack.c.l.b16 %v61
  %v747 = vunpack.c.h.b16 %v61
  %v748 = vunpack.c.l.b16 %v62
  %v749 = vunpack.c.h.b16 %v62
  %v750 = vunpack.c.l.b16 %v63
  %v751 = vunpack.c.h.b16 %v63
  %v752 = vunpack.c.l.b16 %v64
  %v753 = vunpack.c.h.b16 %v64
  %v754 = vunpack.c.l.b16 %v65
  %v755 = vunpack.c.h.b16 %v65
  %v756 = vunpack.c.l.b16 %v66
  %v757 = vunpack.c.h.b16 %v66
  %v758 = vunpack.c.l.b16 %v67
  %v759 = vunpack.c.h.b16 %v67
  %v760 = vunpack.c.l.b16 %v68
  %v761 = vunpack.c.h.b16 %v68
  %v762 = vunpack.c.l.b16 %v69
  %v763 = vunpack.c.h.b16 %v69
  %v764 = vunpack.c.l.b16 %v70
  %v765 = vunpack.c.h.b16 %v70
  %v766 = vunpack.c.l.b16 %v71
  %v767 = vunpack.c.h.b16 %v71
  %v768 = vunpack.c.l.b16 %v72
  %v769 = vunpack.c.h.b16 %v72
  %v770 = vunpack.c.l.b16 %v73
  %v771 = vunpack.c.h.b16 %v73
  %v772 = vunpack.c.l.b16 %v74
  %v773 = vunpack.c.h.b16 %v74
  %v774 = vunpack.c.l.b16 %v75
  %v775 = vunpack.c.h.b16 %v75
  %v776 = vunpack.c.l.b16 %v76
  %v777 = vunpack.c.h.b16 %v76
  %v778 = vunpack.c.l.b16 %v77
  %v779 = vunpack.c.h.b16 %v77
  %v780 = vunpack.c.l.b16 %v78
  %v781 = vunpack.c.h.b16 %v78
  %v782 = vunpack.c.l.b16 %v79
  %v783 = vunpack.c.h.b16 %v79
  %v784 = vunpack.c.l.b16 %v80
  %v785 = vunpack.c.h.b16 %v80
  %v786 = vunpack.c.l.b16 %v81
  %v787 = vunpack.c.h.b16 %v81
  %v788 = vunpack.c.l.b16 %v82
  %v789 = vunpack.c.h.b16 %v82
  %v790 = vunpack.c.l.b16 %v83
  %v791 = vunpack.c.h.b16 %v83
  %v792 = vunpack.c.l.b16 %v84
  %v793 = vunpack.c.h.b16 %v84
  %v794 = vunpack.c.l.b16 %v85
  %v795 = vunpack.c.h.b16 %v85
  %v796 = vunpack.c.l.b16 %v86
  %v797 = vunpack.c.h.b16 %v86
  %v798 = vunpack.c.l.b16 %v87
  %v799 = vunpack.c.h.b16 %v87
  %v800 = vunpack.c.l.b16 %v88
  %v801 = vunpack.c.h.b16 %v88
  %v802 = vunpack.c.l.b16 %v89
  %v803 = vunpack.c.h.b16 %v89
  %v804 = vunpack.c.l.b16 %v90
  %v805 = vunpack.c.h.b16 %v90
  %v806 = vunpack.c.l.b16 %v91
  %v807 = vunpack.c.h.b16 %v91
  %v808 = vunpack.c.l.b16 %v92
  %v809 = vunpack.c.h.b16 %v92
  %v810 = vunpack.c.l.b16 %v93
  %v811 = vunpack.c.h.b16 %v93
  %v812 = vunpack.c.l.b16 %v94
  %v813 = vunpack.c.h.b16 %v94
  %v814 = vunpack.c.l.b16 %v95
  %v815 = vunpack.c.h.b16 %v95
  %v816 = vunpack.c.l.b16 %v96
  %v817 = vunpack.c.h.b16 %v96
  %v818 = vunpack.c.l.b16 %v97
  %v819 = vunpack.c.h.b16 %v97
  %v820 = vunpack.c.l.b16 %v98
  %v821 = vunpack.c.h.b16 %v98
  %v822 = vunpack.c.l.b16 %v99
  %v823 = vunpack.c.h.b16 %v99
  %v824 = vunpack.c.l.b16 %v100
  %v825 = vunpack.c.h.b16 %v100
  %v826 = vunpack.c.l.b16 %v101
  %v827 = vunpack.c.h.b16 %v101
  %v828 = vunpack.c.l.b16 %v102
  %v829 = vunpack.c.h.b16 %v102
  %v830 = vunpack.c.l.b16 %v103
  %v831 = vunpack.c.h.b16 %v103
  %v832 = vunpack.c.l.b16 %v104
  %v833 = vunpack.c.h.b16 %v104
  %v834 = vunpack.c.l.b16 %v105
  %v835 = vunpack.c.h.b16 %v105
  %v836 = vunpack.c.l.b16 %v106
  %v837 = vunpack.c.h.b16 %v106
  %v838 = vunpack.c.l.b16 %v107
  %v839 = vunpack.c.h.b16 %v107
  %v840 = vunpack.c.l.b16 %v108
  %v841 = vunpack.c.h.b16 %v108
  %v842 = vunpack.c.l.b16 %v109
  %v843 = vunpack.c.h.b16 %v109
  %v844 = vunpack.c.l.b16 %v110
  %v845 = vunpack.c.h.b16 %v110
  %v846 = vunpack.c.l.b16 %v111
  %v847 = vunpack.c.h.b16 %v111
  %v848 = vunpack.c.l.b16 %v112
  %v849 = vunpack.c.h.b16 %v112
  %v850 = vunpack.c.l.b16 %v113
  %v851 = vunpack.c.h.b16 %v113
  %v852 = vunpack.c.l.b16 %v114
  %v853 = vunpack.c.h.b16 %v114
  %v854 = vunpack.c.l.b16 %v115
  %v855 = vunpack.c.h.b16 %v115
  %v856 = vunpack.c.l.b16 %v116
  %v857 = vunpack.c.h.b16 %v116
  %v858 = vunpack.c.l.b16 %v117
  %v859 = vunpack.c.h.b16 %v117
  %v860 = vunpack.c.l.b16 %v118
  %v861 = vunpack.c.h.b16 %v118
  %v862 = vunpack.c.l.b16 %v119
  %v863 = vunpack.c.h.b16 %v119
  %v864 = vunpack.c.l.b16 %v120
  %v865 = vunpack.c.h.b16 %v120
  %v866 = vunpack.c.l.b16 %v121
  %v867 = vunpack.c.h.b16 %v121
  %v868 = vunpack.c.l.b16 %v122
  %v869 = vunpack.c.h.b16 %v122
  %v870 = vunpack.c.l.b16 %v123
  %v871 = vunpack.c.h.b16 %v123
  %v872 = vunpack.c.l.b16 %v124
  %v873 = vunpack.c.h.b16 %v124
  %v874 = vunpack.c.l.b16 %v125
  %v875 = vunpack.c.h.b16 %v125
  %v876 = vunpack.c.l.b16 %v126
  %v877 = vunpack.c.h.b16 %v126
  %v878 = vunpack.c.l.b16 %v127
  %v879 = vunpack.c.h.b16 %v127
  %v880 = vunpack.c.l.b16 %v128
  %v881 = vunpack.c.h.b16 %v128
  %v882 = vunpack.c.l.b16 %v129
  %v883 = vunpack.c.h.b16 %v129
  %v884 = vunpack.c.l.b16 %v130
  %v885 = vunpack.c.h.b16 %v130
  %v886 = vunpack.c.l.b16 %v131
  %v887 = vunpack.c.h.b16 %v131
  %v888 = vunpack.c.l.b16 %v132
  %v889 = vunpack.c.h.b16 %v132
  %v890 = vunpack.c.l.b16 %v133
  %v891 = vunpack.c.h.b16 %v133
  %v892 = vunpack.c.l.b16 %v134
  %v893 = vunpack.c.h.b16 %v134
  %v894 = vunpack.c.l.b16 %v135
  %v895 = vunpack.c.h.b16 %v135
  %v896 = vunpack.c.l.b16 %v136
  %v897 = vunpack.c.h.b16 %v136
  %v898 = vunpack.c.l.b16 %v137
  %v899 = vunpack.c.h.b16 %v137
  %v900 = vunpack.c.l.b16 %v138
  %v901 = vunpack.c.h.b16 %v138
  %v902 = vunpack.c.l.b16 %v139
  %v903 = vunpack.c.h.b16 %v139
  %v904 = vunpack.c.l.b16 %v140
  %v905 = vunpack.c.h.b16 %v140
  %v906 = vunpack.c.l.b16 %v141
  %v907 = vunpack.c.h.b16 %v141
  %v908 = vunpack.c.l.b16 %v142
  %v909 = vunpack.c.h.b16 %v142
  %v910 = vunpack.c.l.b16 %v143
  %v911 = vunpack.c.h.b16 %v143
  %v912 = vunpack.c.l.b16 %v144
  %v913 = vunpack.c.h.b16 %v144
  %v914 = vunpack.c.l.b16 %v145
  %v915 = vunpack.c.h.b16 %v145
  %v916 = vunpack.c.l.b16 %v146
  %v917 = vunpack.c.h.b16 %v146
  %v918 = vunpack.c.l.b16 %v147
  %v919 = vunpack.c.h.b16 %v147
  %v920 = vunpack.c.l.b16 %v148
  %v921 = vunpack.c.h.b16 %v148
  %v922 = vunpack.c.l.b16 %v149
  %v923 = vunpack.c.h.b16 %v149
  %v924 = vunpack.c.l.b16 %v150
  %v925 = vunpack.c.h.b16 %v150
  %v926 = vunpack.c.l.b16 %v151
  %v927 = vunpack.c.h.b16 %v151
  %v928 = vunpack.c.l.b16 %v152
  %v929 = vunpack.c.h.b16 %v152
  %v930 = vunpack.c.l.b16 %v153
  %v931 = vunpack.c.h.b16 %v153
  %v932 = vunpack.c.l.b16 %v154
  %v933 = vunpack.c.h.b16 %v154
  %v934 = vunpack.c.l.b16 %v155
  %v935 = vunpack.c.h.b16 %v155
  %v936 = vunpack.c.l.b16 %v156
  %v937 = vunpack.c.h.b16 %v156
  %v938 = vunpack.c.l.b16 %v157
  %v939 = vunpack.c.h.b16 %v157
  %v940 = vunpack.c.l.b16 %v158
  %v941 = vunpack.c.h.b16 %v158
  %v942 = vunpack.c.l.b16 %v159
  %v943 = vunpack.c.h.b16 %v159
  %v944 = vunpack.c.l.b16 %v160
  %v945 = vunpack.c.h.b16 %v160
  %v946 = vunpack.c.l.b16 %v161
  %v947 = vunpack.c.h.b16 %v161
  %v948 = vunpack.c.l.b16 %v162
  %v949 = vunpack.c.h.b16 %v162
  %v950 = vunpack.c.l.b16 %v163
  %v951 = vunpack.c.h.b16 %v163
  %v952 = vunpack.c.l.b16 %v164
  %v953 = vunpack.c.h.b16 %v164
  %v954 = vunpack.c.l.b16 %v165
  %v955 = vunpack.c.h.b16 %v165
  %v956 = vunpack.c.l.b16 %v166
  %v957 = vunpack.c.h.b16 %v166
  %v958 = vunpack.c.l.b16 %v167
  %v959 = vunpack.c.h.b16 %v167
  %v960 = vunpack.c.l.b16 %v168
  %v961 = vunpack.c.h.b16 %v168
  %v962 = vunpack.c.l.b16 %v169
  %v963 = vunpack.c.h.b16 %v169
  %v964 = vunpack.c.l.b16 %v170
  %v965 = vunpack.c.h.b16 %v170
  %v966 = vunpack.c.l.b16 %v171
  %v967 = vunpack.c.h.b16 %v171
  %v968 = vunpack.c.l.b16 %v172
  %v969 = vunpack.c.h.b16 %v172
  %v970 = vunpack.c.l.b16 %v173
  %v971 = vunpack.c.h.b16 %v173
  %v972 = vunpack.c.l.b16 %v174
  %v973 = vunpack.c.h.b16 %v174
  %v974 = vunpack.c.l.b16 %v175
  %v975 = vunpack.c.h.b16 %v175
  %v976 = vunpack.c.l.b16 %v176
  %v977 = vunpack.c.h.b16 %v176
  %v978 = vunpack.c.l.b16 %v177
  %v979 = vunpack.c.h.b16 %v177
  %v980 = vunpack.c.l.b16 %v178
  %v981 = vunpack.c.h.b16 %v178
  %v982 = vunpack.c.l.b16 %v179
  %v983 = vunpack.c.h.b16 %v179
  %v984 = vunpack.c.l.b16 %v180
  %v985 = vunpack.c.h.b16 %v180
  %v986 = vunpack.c.l.b16 %v181
  %v987 = vunpack.c.h.b16 %v181
  %v988 = vunpack.c.l.b16 %v182
  %v989 = vunpack.c.h.b16 %v182
  %v990 = vunpack.c.l.b16 %v183
  %v991 = vunpack.c.h.b16 %v183
  %v992 = vunpack.c.l.b16 %v184
  %v993 = vunpack.c.h.b16 %v184
  %v994 = vunpack.c.l.b16 %v185
  %v995 = vunpack.c.h.b16 %v185
  %v996 = vunpack.c.l.b16 %v186
  %v997 = vunpack.c.h.b16 %v186
  %v998 = vunpack.c.l.b16 %v187
  %v999 = vunpack.c.h.b16 %v187
  %v1000 = vunpack.c.l.b16 %v188
  %v1001 = vunpack.c.h.b16 %v188
  %v1002 = vunpack.c.l.b16 %v189
  %v1003 = vunpack.c.h.b16 %v189
  %v1004 = vunpack.c.l.b16 %v190
  %v1005 = vunpack.c.h.b16 %v190
  %v1006 = vunpack.c.l.b16 %v191
  %v1007 = vunpack.c.h.b16 %v191
  %v1008 = vunpack.c.l.b16 %v192
  %v1009 = vunpack.c.h.b16 %v192
  %v1010 = vunpack.c.l.b16 %v193
  %v1011 = vunpack.c.h.b16 %v193
  %v1012 = vunpack.c.l.b16 %v194
  %v1013 = vunpack.c.h.b16 %v194
  %v1014 = vunpack.c.l.b16 %v195
  %v1015 = vunpack.c.h.b16 %v195
  %v1016 = vunpack.c.l.b16 %v196
  %v1017 = vunpack.c.h.b16 %v196
  %v1018 = vunpack.c.l.b16 %v197
  %v1019 = vunpack.c.h.b16 %v197
  %v1020 = vunpack.c.l.b16 %v198
  %v1021 = vunpack.c.h.b16 %v198
  %v1022 = vunpack.c.l.b16 %v199
  %v1023 = vunpack.c.h.b16 %v199
  %v1024 = vunpack.c.l.b16 %v200
  %v1025 = vunpack.c.h.b16 %v200
  %v1026 = vunpack.c.l.b16 %v201
  %v1027 = vunpack.c.h.b16 %v201
  %v1028 = vunpack.c.l.b16 %v202
  %v1029 = vunpack.c.h.b16 %v202
  %v1030 = vunpack.c.l.b16 %v203
  %v1031 = vunpack.c.h.b16 %v203
  %v1032 = vunpack.c.l.b16 %v204
  %v1033 = vunpack.c.h.b16 %v204
  %v1034 = vunpack.c.l.b16 %v205
  %v1035 = vunpack.c.h.b16 %v205
  %v1036 = vunpack.c.l.b16 %v206
  %v1037 = vunpack.c.h.b16 %v206
  %v1038 = vunpack.c.l.b16 %v207
  %v1039 = vunpack.c.h.b16 %v207
  %v1040 = vunpack.c.l.b16 %v208
  %v1041 = vunpack.c.h.b16 %v208
  %v1042 = vunpack.c.l.b16 %v209
  %v1043 = vunpack.c.h.b16 %v209
  %v1044 = vunpack.c.l.b16 %v210
  %v1045 = vunpack.c.h.b16 %v210
  %v1046 = vunpack.c.l.b16 %v211
  %v1047 = vunpack.c.h.b16 %v211
  %v1048 = vunpack.c.l.b16 %v212
  %v1049 = vunpack.c.h.b16 %v212
  %v1050 = vunpack.c.l.b16 %v213
  %v1051 = vunpack.c.h.b16 %v213
  %v1052 = vunpack.c.l.b16 %v214
  %v1053 = vunpack.c.h.b16 %v214
  %v1054 = vunpack.c.l.b16 %v215
  %v1055 = vunpack.c.h.b16 %v215
  %v1056 = vunpack.c.l.b16 %v216
  %v1057 = vunpack.c.h.b16 %v216
  %v1058 = vunpack.c.l.b16 %v217
  %v1059 = vunpack.c.h.b16 %v217
  %v1060 = vunpack.c.l.b16 %v218
  %v1061 = vunpack.c.h.b16 %v218
  %v1062 = vunpack.c.l.b16 %v219
  %v1063 = vunpack.c.h.b16 %v219
  %v1064 = vunpack.c.l.b16 %v220
  %v1065 = vunpack.c.h.b16 %v220
  %v1066 = vunpack.c.l.b16 %v221
  %v1067 = vunpack.c.h.b16 %v221
  %v1068 = vunpack.c.l.b16 %v222
  %v1069 = vunpack.c.h.b16 %v222
  %v1070 = vunpack.c.l.b16 %v223
  %v1071 = vunpack.c.h.b16 %v223
  %v1072 = vunpack.c.l.b16 %v224
  %v1073 = vunpack.c.h.b16 %v224
  %v1074 = vunpack.c.l.b16 %v225
  %v1075 = vunpack.c.h.b16 %v225
  %v1076 = vunpack.c.l.b16 %v226
  %v1077 = vunpack.c.h.b16 %v226
  %v1078 = vunpack.c.l.b16 %v227
  %v1079 = vunpack.c.h.b16 %v227
  %v1080 = vunpack.c.l.b16 %v228
  %v1081 = vunpack.c.h.b16 %v228
  %v1082 = vunpack.c.l.b16 %v229
  %v1083 = vunpack.c.h.b16 %v229
  %v1084 = vunpack.c.l.b16 %v230
  %v1085 = vunpack.c.h.b16 %v230
  %v1086 = vunpack.c.l.b16 %v231
  %v1087 = vunpack.c.h.b16 %v231
  %v1088 = vunpack.c.l.b16 %v232
  %v1089 = vunpack.c.h.b16 %v232
  %v1090 = vunpack.c.l.b16 %v233
  %v1091 = vunpack.c.h.b16 %v233
  %v1092 = vunpack.c.l.b16 %v234
  %v1093 = vunpack.c.h.b16 %v234
  %v1094 = vunpack.c.l.b16 %v235
  %v1095 = vunpack.c.h.b16 %v235
  %v1096 = vunpack.c.l.b16 %v236
  %v1097 = vunpack.c.h.b16 %v236
  %v1098 = vunpack.c.l.b16 %v237
  %v1099 = vunpack.c.h.b16 %v237
  %v1100 = vunpack.c.l.b16 %v238
  %v1101 = vunpack.c.h.b16 %v238
  %v1102 = vunpack.c.l.b16 %v239
  %v1103 = vunpack.c.h.b16 %v239
  %v1104 = vunpack.c.l.b16 %v240
  %v1105 = vunpack.c.h.b16 %v240
  %v1106 = vunpack.c.l.b16 %v241
  %v1107 = vunpack.c.h.b16 %v241
  %v1108 = vunpack.c.l.b16 %v242
  %v1109 = vunpack.c.h.b16 %v242
  %v1110 = vunpack.c.l.b16 %v243
  %v1111 = vunpack.c.h.b16 %v243
  %v1112 = vunpack.c.l.b16 %v244
  %v1113 = vunpack.c.h.b16 %v244
  %v1114 = vunpack.c.l.b16 %v245
  %v1115 = vunpack.c.h.b16 %v245
  %v1116 = vunpack.c.l.b16 %v246
  %v1117 = vunpack.c.h.b16 %v246
  %v1118 = vunpack.c.l.b16 %v247
  %v1119 = vunpack.c.h.b16 %v247
  %v1120 = vunpack.c.l.b16 %v248
  %v1121 = vunpack.c.h.b16 %v248
  %v1122 = vunpack.c.l.b16 %v249
  %v1123 = vunpack.c.h.b16 %v249
  %v1124 = vunpack.c.l.b16 %v250
  %v1125 = vunpack.c.h.b16 %v250
  %v1126 = vunpack.c.l.b16 %v251
  %v1127 = vunpack.c.h.b16 %v251
  %v1128 = vunpack.c.l.b16 %v252
  %v1129 = vunpack.c.h.b16 %v252
  %v1130 = vunpack.c.l.b16 %v253
  %v1131 = vunpack.c.h.b16 %v253
  %v1132 = vunpack.c.l.b16 %v254
  %v1133 = vunpack.c.h.b16 %v254
  %v1134 = vunpack.c.l.b16 %v255
  %v1135 = vunpack.c.h.b16 %v255
  %v1136 = vunpack.c.l.b16 %v256
  %v1137 = vunpack.c.h.b16 %v256
  %v1138 = vunpack.c.l.b16 %v257
  %v1139 = vunpack.c.h.b16 %v257
  %v1140 = vunpack.c.l.b16 %v258
  %v1141 = vunpack.c.h.b16 %v258
  %v1142 = vunpack.c.l.b16 %v259
  %v1143 = vunpack.c.h.b16 %v259
  %v1144 = vunpack.c.l.b16 %v260
  %v1145 = vunpack.c.h.b16 %v260
  %v1146 = vunpack.c.l.b16 %v261
  %v1147 = vunpack.c.h.b16 %v261
  %v1148 = vunpack.c.l.b16 %v262
  %v1149 = vunpack.c.h.b16 %v262
  %v1150 = vunpack.c.l.b16 %v263
  %v1151 = vunpack.c.h.b16 %v263
  %v1152 = vunpack.c.l.b16 %v264
  %v1153 = vunpack.c.h.b16 %v264
  %v1154 = vunpack.c.l.b16 %v265
  %v1155 = vunpack.c.h.b16 %v265
  %v1156 = vunpack.c.l.b16 %v266
  %v1157 = vunpack.c.h.b16 %v266
  %v1158 = vunpack.c.l.b16 %v267
  %v1159 = vunpack.c.h.b16 %v267
  %v1160 = vunpack.c.l.b16 %v268
  %v1161 = vunpack.c.h.b16 %v268
  %v1162 = vunpack.c.l.b16 %v269
  %v1163 = vunpack.c.h.b16 %v269
  %v1164 = vunpack.c.l.b16 %v270
  %v1165 = vunpack.c.h.b16 %v270
  %v1166 = vunpack.c.l.b16 %v271
  %v1167 = vunpack.c.h.b16 %v271
  %v1168 = vpack.c.b16 %v658, %v656
  %v1169 = vpack.c.b16 %v659, %v657
  %v1170 = vpack.c.b16 %v662, %v660
  %v1171 = vpack.c.b16 %v663, %v661
  %v1172 = vpack.c.b16 %v666, %v664
  %v1173 = vpack.c.b16 %v667, %v665
  %v1174 = vpack.c.b16 %v670, %v668
  %v1175 = vpack.c.b16 %v671, %v669
  %v1176 = vpack.c.b16 %v674, %v672
  %v1177 = vpack.c.b16 %v675, %v673
  %v1178 = vpack.c.b16 %v678, %v676
  %v1179 = vpack.c.b16 %v679, %v677
  %v1180 = vpack.c.b16 %v682, %v680
  %v1181 = vpack.c.b16 %v683, %v681
  %v1182 = vpack.c.b16 %v686, %v684
  %v1183 = vpack.c.b16 %v687, %v685
  %v1184 = vpack.c.b16 %v690, %v688
  %v1185 = vpack.c.b16 %v691, %v689
  %v1186 = vpack.c.b16 %v694, %v692
  %v1187 = vpack.c.b16 %v695, %v693
  %v1188 = vpack.c.b16 %v698, %v696
  %v1189 = vpack.c.b16 %v699, %v697
  %v1190 = vpack.c.b16 %v702, %v700
  %v1191 = vpack.c.b16 %v703, %v701
  %v1192 = vpack.c.b16 %v706, %v704
  %v1193 = vpack.c.b16 %v707, %v705
  %v1194 = vpack.c.b16 %v710, %v708
  %v1195 = vpack.c.b16 %v711, %v709
  %v1196 = vpack.c.b16 %v714, %v712
  %v1197 = vpack.c.b16 %v715, %v713
  %v1198 = vpack.c.b16 %v718, %v716
  %v1199 = vpack.c.b16 %v719, %v717
  %v1200 = vpack.c.b16 %v722, %v720
  %v1201 = vpack.c.b16 %v723, %v721
  %v1202 = vpack.c.b16 %v726, %v724
  %v1203 = vpack.c.b16 %v727, %v725
  %v1204 = vpack.c.b16 %v730, %v728
  %v1205 = vpack.c.b16 %v731, %v729
  %v1206 = vpack.c.b16 %v734, %v732
  %v1207 = vpack.c.b16 %v735, %v733
  %v1208 = vpack.c.b16 %v738, %v736
  %v1209 = vpack.c.b16 %v739, %v737
  %v1210 = vpack.c.b16 %v742, %v740
  %v1211 = vpack.c.b16 %v743, %v741
  %v1212 = vpack.c.b16 %v746, %v744
  %v1213 = vpack.c.b16 %v747, %v745
  %v1214 = vpack.c.b16 %v750, %v748
  %v1215 = vpack.c.b16 %v751, %v749
  %v1216 = vpack.c.b16 %v754, %v752
  %v1217 = vpack.c.b16 %v755, %v753
  %v1218 = vpack.c.b16 %v758, %v756
  %v1219 = vpack.c.b16 %v759, %v757
  %v1220 = vpack.c.b16 %v762, %v760
  %v1221 = vpack.c.b16 %v763, %v761
  %v1222 = vpack.c.b16 %v766, %v764
  %v1223 = vpack.c.b16 %v767, %v765
  %v1224 = vpack.c.b16 %v770, %v768
  %v1225 = vpack.c.b16 %v771, %v769
  %v1226 = vpack.c.b16 %v774, %v772
  %v1227 = vpack.c.b16 %v775, %v773
  %v1228 = vpack.c.b16 %v778, %v776
  %v1229 = vpack.c.b16 %v779, %v777
  %v1230 = vpack.c.b16 %v782, %v780
  %v1231 = vpack.c.b16 %v783, %v781
  %v1232 = vpack.c.b16 %v786, %v784
  %v1233 = vpack.c.b16 %v787, %v785
  %v1234 = vpack.c.b16 %v790, %v788
  %v1235 = vpack.c.b16 %v791, %v789
  %v1236 = vpack.c.b16 %v794, %v792
  %v1237 = vpack.c.b16 %v795, %v793
  %v1238 = vpack.c.b16 %v798, %v796
  %v1239 = vpack.c.b16 %v799, %v797
  %v1240 = vpack.c.b16 %v802, %v800
  %v1241 = vpack.c.b16 %v803, %v801
  %v1242 = vpack.c.b16 %v806, %v804
  %v1243 = vpack.c.b16 %v807, %v805
  %v1244 = vpack.c.b16 %v810, %v808
  %v1245 = vpack.c.b16 %v811, %v809
  %v1246 = vpack.c.b16 %v814, %v812
  %v1247 = vpack.c.b16 %v815, %v813
  %v1248 = vpack.c.b16 %v818, %v816
  %v1249 = vpack.c.b16 %v819, %v817
  %v1250 = vpack.c.b16 %v822, %v820
  %v1251 = vpack.c.b16 %v823, %v821
  %v1252 = vpack.c.b16 %v826, %v824
  %v1253 = vpack.c.b16 %v827, %v825
  %v1254 = vpack.c.b16 %v830, %v828
  %v1255 = vpack.c.b16 %v831, %v829
  %v1256 = vpack.c.b16 %v834, %v832
  %v1257 = vpack.c.b16 %v835, %v833
  %v1258 = vpack.c.b16 %v838, %v836
  %v1259 = vpack.c.b16 %v839, %v837
  %v1260 = vpack.c.b16 %v842, %v840
  %v1261 = vpack.c.b16 %v843, %v841
  %v1262 = vpack.c.b16 %v846, %v844
  %v1263 = vpack.c.b16 %v847, %v845
  %v1264 = vpack.c.b16 %v850, %v848
  %v1265 = vpack.c.b16 %v851, %v849
  %v1266 = vpack.c.b16 %v854, %v852
  %v1267 = vpack.c.b16 %v855, %v853
  %v1268 = vpack.c.b16 %v858, %v856
  %v1269 = vpack.c.b16 %v859, %v857
  %v1270 = vpack.c.b16 %v862, %v860
  %v1271 = vpack.c.b16 %v863, %v861
  %v1272 = vpack.c.b16 %v866, %v864
  %v1273 = vpack.c.b16 %v867, %v865
  %v1274 = vpack.c.b16 %v870, %v868
  %v1275 = vpack.c.b16 %v871, %v869
  %v1276 = vpack.c.b16 %v874, %v872
  %v1277 = vpack.c.b16 %v875, %v873
  %v1278 = vpack.c.b16 %v878, %v876
  %v1279 = vpack.c.b16 %v879, %v877
  %v1280 = vpack.c.b16 %v882, %v880
  %v1281 = vpack.c.b16 %v883, %v881
  %v1282 = vpack.c.b16 %v886, %v884
  %v1283 = vpack.c.b16 %v887, %v885
  %v1284 = vpack.c.b16 %v890, %v888
  %v1285 = vpack.c.b16 %v891, %v889
  %v1286 = vpack.c.b16 %v894, %v892
  %v1287 = vpack.c.b16 %v895, %v893
  %v1288 = vpack.c.b16 %v898, %v896
  %v1289 = vpack.c.b16 %v899, %v897
  %v1290 = vpack.c.b16 %v902, %v900
  %v1291 = vpack.c.b16 %v903, %v901
  %v1292 = vpack.c.b16 %v906, %v904
  %v1293 = vpack.c.b16 %v907, %v905
  %v1294 = vpack.c.b16 %v910, %v908
  %v1295 = vpack.c.b16 %v911, %v909
  %v1296 = vpack.c.b16 %v914, %v912
  %v1297 = vpack.c.b16 %v915, %v913
  %v1298 = vpack.c.b16 %v918, %v916
  %v1299 = vpack.c.b16 %v919, %v917
  %v1300 = vpack.c.b16 %v922, %v920
  %v1301 = vpack.c.b16 %v923, %v921
  %v1302 = vpack.c.b16 %v926, %v924
  %v1303 = vpack.c.b16 %v927, %v925
  %v1304 = vpack.c.b16 %v930, %v928
  %v1305 = vpack.c.b16 %v931, %v929
  %v1306 = vpack.c.b16 %v934, %v932
  %v1307 = vpack.c.b16 %v935, %v933
  %v1308 = vpack.c.b16 %v938, %v936
  %v1309 = vpack.c.b16 %v939, %v937
  %v1310 = vpack.c.b16 %v942, %v940
  %v1311 = vpack.c.b16 %v943, %v941
  %v1312 = vpack.c.b16 %v946, %v944
  %v1313 = vpack.c.b16 %v947, %v945
  %v1314 = vpack.c.b16 %v950, %v948
  %v1315 = vpack.c.b16 %v951, %v949
  %v1316 = vpack.c.b16 %v954, %v952
  %v1317 = vpack.c.b16 %v955, %v953
  %v1318 = vpack.c.b16 %v958, %v956
  %v1319 = vpack.c.b16 %v959, %v957
  %v1320 = vpack.c.b16 %v962, %v960
  %v1321 = vpack.c.b16 %v963, %v961
  %v1322 = vpack.c.b16 %v966, %v964
  %v1323 = vpack.c.b16 %v967, %v965
  %v1324 = vpack.c.b16 %v970, %v968
  %v1325 = vpack.c.b16 %v971, %v969
  %v1326 = vpack.c.b16 %v974, %v972
  %v1327 = vpack.c.b16 %v975, %v973
  %v1328 = vpack.c.b16 %v978, %v976
  %v1329 = vpack.c.b16 %v979, %v977
  %v1330 = vpack.c.b16 %v982, %v980
  %v1331 = vpack.c.b16 %v983, %v981
  %v1332 = vpack.c.b16 %v986, %v984
  %v1333 = vpack.c.b16 %v987, %v985
  %v1334 = vpack.c.b16 %v990, %v988
  %v1335 = vpack.c.b16 %v991, %v989
  %v1336 = vpack.c.b16 %v994, %v992
  %v1337 = vpack.c.b16 %v995, %v993
  %v1338 = vpack.c.b16 %v998, %v996
  %v1339 = vpack.c.b16 %v999, %v997
  %v1340 = vpack.c.b16 %v1002, %v1000
  %v1341 = vpack.c.b16 %v1003, %v1001
  %v1342 = vpack.c.b16 %v1006, %v1004
  %v1343 = vpack.c.b16 %v1007, %v1005
  %v1344 = vpack.c.b16 %v1010, %v1008
  %v1345 = vpack.c.b16 %v1011, %v1009
  %v1346 = vpack.c.b16 %v1014, %v1012
  %v1347 = vpack.c.b16 %v1015, %v1013
  %v1348 = vpack.c.b16 %v1018, %v1016
  %v1349 = vpack.c.b16 %v1019, %v1017
  %v1350 = vpack.c.b16 %v1022, %v1020
  %v1351 = vpack.c.b16 %v1023, %v1021
  %v1352 = vpack.c.b16 %v1026, %v1024
  %v1353 = vpack.c.b16 %v1027, %v1025
  %v1354 = vpack.c.b16 %v1030, %v1028
  %v1355 = vpack.c.b16 %v1031, %v1029
  %v1356 = vpack.c.b16 %v1034, %v1032
  %v1357 = vpack.c.b16 %v1035, %v1033
  %v1358 = vpack.c.b16 %v1038, %v1036
  %v1359 = vpack.c.b16 %v1039, %v1037
  %v1360 = vpack.c.b16 %v1042, %v1040
  %v1361 = vpack.c.b16 %v1043, %v1041
  %v1362 = vpack.c.b16 %v1046, %v1044
  %v1363 = vpack.c.b16 %v1047, %v1045
  %v1364 = vpack.c.b16 %v1050, %v1048
  %v1365 = vpack.c.b16 %v1051, %v1049
  %v1366 = vpack.c.b16 %v1054, %v1052
  %v1367 = vpack.c.b16 %v1055, %v1053
  %v1368 = vpack.c.b16 %v1058, %v1056
  %v1369 = vpack.c.b16 %v1059, %v1057
  %v1370 = vpack.c.b16 %v1062, %v1060
  %v1371 = vpack.c.b16 %v1063, %v1061
  %v1372 = vpack.c.b16 %v1066, %v1064
  %v1373 = vpack.c.b16 %v1067, %v1065
  %v1374 = vpack.c.b16 %v1070, %v1068
  %v1375 = vpack.c.b16 %v1071, %v1069
  %v1376 = vpack.c.b16 %v1074, %v1072
  %v1377 = vpack.c.b16 %v1075, %v1073
  %v1378 = vpack.c.b16 %v1078, %v1076
  %v1379 = vpack.c.b16 %v1079, %v1077
  %v1380 = vpack.c.b16 %v1082, %v1080
  %v1381 = vpack.c.b16 %v1083, %v1081
  %v1382 = vpack.c.b16 %v1086, %v1084
  %v1383 = vpack.c.b16 %v1087, %v1085
  %v1384 = vpack.c.b16 %v1090, %v1088
  %v1385 = vpack.c.b16 %v1091, %v1089
  %v1386 = vpack.c.b16 %v1094, %v1092
  %v1387 = vpack.c.b16 %v1095, %v1093
  %v1388 = vpack.c.b16 %v1098, %v1096
  %v1389 = vpack.c.b16 %v1099, %v1097
  %v1390 = vpack.c.b16 %v1102, %v1100
  %v1391 = vpack.c.b16 %v1103, %v1101
  %v1392 = vpack.c.b16 %v1106, %v1104
  %v1393 = vpack.c.b16 %v1107, %v1105
  %v1394 = vpack.c.b16 %v1110, %v1108
  %v1395 = vpack.c.b16 %v1111, %v1109
  %v1396 = vpack.c.b16 %v1114, %v1112
  %v1397 = vpack.c.b16 %v1115, %v1113
  %v1398 = vpack.c.b16 %v1118, %v1116
  %v1399 = vpack.c.b16 %v1119, %v1117
  %v1400 = vpack.c.b16 %v1122, %v1120
  %v1401 = vpack.c.b16 %v1123, %v1121
  %v1402 = vpack.c.b16 %v1126, %v1124
  %v1403 = vpack.c.b16 %v1127, %v1125
  %v1404 = vpack.c.b16 %v1130, %v1128
  %v1405 = vpack.c.b16 %v1131, %v1129
  %v1406 = vpack.c.b16 %v1134, %v1132
  %v1407 = vpack.c.b16 %v1135, %v1133
  %v1408 = vpack.c.b16 %v1138, %v1136
  %v1409 = vpack.c.b16 %v1139, %v1137
  %v1410 = vpack.c.b16 %v1142, %v1140
  %v1411 = vpack.c.b16 %v1143, %v1141
  %v1412 = vpack.c.b16 %v1146, %v1144
  %v1413 = vpack.c.b16 %v1147, %v1145
  %v1414 = vpack.c.b16 %v1150, %v1148
  %v1415 = vpack.c.b16 %v1151, %v1149
  %v1416 = vpack.c.b16 %v1154, %v1152
  %v1417 = vpack.c.b16 %v1155, %v1153
  %v1418 = vpack.c.b16 %v1158, %v1156
  %v1419 = vpack.c.b16 %v1159, %v1157
  %v1420 = vpack.c.b16 %v1162, %v1160
  %v1421 = vpack.c.b16 %v1163, %v1161
  %v1422 = vpack.c.b16 %v1166, %v1164
  %v1423 = vpack.c.b16 %v1167, %v1165
  %1680 = vmatprep.subr.bf16.mxu0 %v1169
  %1681 = vmatpush1.bf16.msra.mxu0 %v1168
  %1682 = vmatprep.subr.bf16.mxu0 %v1171
  %1683 = vmatpush1.bf16.msra.mxu0 %v1170
  %1684 = vmatprep.subr.bf16.mxu0 %v1173
  %1685 = vmatpush1.bf16.msra.mxu0 %v1172
  %1686 = vmatprep.subr.bf16.mxu0 %v1175
  %1687 = vmatpush1.bf16.msra.mxu0 %v1174
  %1688 = vmatprep.subr.bf16.mxu0 %v1177
  %1689 = vmatpush1.bf16.msra.mxu0 %v1176
  %1690 = vmatprep.subr.bf16.mxu0 %v1179
  %1691 = vmatpush1.bf16.msra.mxu0 %v1178
  %1692 = vmatprep.subr.bf16.mxu0 %v1181
  %1693 = vmatpush1.bf16.msra.mxu0 %v1180
  %1694 = vmatprep.subr.bf16.mxu0 %v1183
  %1695 = vmatpush1.bf16.msra.mxu0 %v1182
  %1696 = vmatprep.subr.bf16.mxu0 %v1185
  %1697 = vmatpush1.bf16.msra.mxu0 %v1184
  %1698 = vmatprep.subr.bf16.mxu0 %v1187
  %1699 = vmatpush1.bf16.msra.mxu0 %v1186
  %1700 = vmatprep.subr.bf16.mxu0 %v1189
  %1701 = vmatpush1.bf16.msra.mxu0 %v1188
  %1702 = vmatprep.subr.bf16.mxu0 %v1191
  %1703 = vmatpush1.bf16.msra.mxu0 %v1190
  %1704 = vmatprep.subr.bf16.mxu0 %v1193
  %1705 = vmatpush1.bf16.msra.mxu0 %v1192
  %1706 = vmatprep.subr.bf16.mxu0 %v1195
  %1707 = vmatpush1.bf16.msra.mxu0 %v1194
  %1708 = vmatprep.subr.bf16.mxu0 %v1197
  %1709 = vmatpush1.bf16.msra.mxu0 %v1196
  %1710 = vmatprep.subr.bf16.mxu0 %v1199
  %1711 = vmatpush1.bf16.msra.mxu0 %v1198
  %1712 = vmatprep.mubr.bf16.mxu0 %v323
  %1713 = vmatmul.mubr.bf16.gmra.mrb[0].mxu0 %v309
  %v1714 = vpop.f32.mrb[0].mxu0
  %v1715 = vadd.f32 %v277, %v1714
  %v1716 = vpop.f32.mrb[0].mxu0
  %v1717 = vadd.f32 %v281, %v1716
  %v1718 = vpop.f32.mrb[0].mxu0
  %v1719 = vpop.f32.mrb[0].mxu0
  %1720 = vdwg.mxu0
  %1721 = vmatprep.subr.bf16.mxu0 %v1201
  %1722 = vmatpush1.bf16.msra.mxu0 %v1200
  %1723 = vmatprep.subr.bf16.mxu0 %v1203
  %1724 = vmatpush1.bf16.msra.mxu0 %v1202
  %1725 = vmatprep.subr.bf16.mxu0 %v1205
  %1726 = vmatpush1.bf16.msra.mxu0 %v1204
  %1727 = vmatprep.subr.bf16.mxu0 %v1207
  %1728 = vmatpush1.bf16.msra.mxu0 %v1206
  %1729 = vmatprep.subr.bf16.mxu0 %v1209
  %1730 = vmatpush1.bf16.msra.mxu0 %v1208
  %1731 = vmatprep.subr.bf16.mxu0 %v1211
  %1732 = vmatpush1.bf16.msra.mxu0 %v1210
  %1733 = vmatprep.subr.bf16.mxu0 %v1213
  %1734 = vmatpush1.bf16.msra.mxu0 %v1212
  %1735 = vmatprep.subr.bf16.mxu0 %v1215
  %1736 = vmatpush1.bf16.msra.mxu0 %v1214
  %1737 = vmatprep.subr.bf16.mxu0 %v1217
  %1738 = vmatpush1.bf16.msra.mxu0 %v1216
  %1739 = vmatprep.subr.bf16.mxu0 %v1219
  %1740 = vmatpush1.bf16.msra.mxu0 %v1218
  %1741 = vmatprep.subr.bf16.mxu0 %v1221
  %1742 = vmatpush1.bf16.msra.mxu0 %v1220
  %1743 = vmatprep.subr.bf16.mxu0 %v1223
  %1744 = vmatpush1.bf16.msra.mxu0 %v1222
  %1745 = vmatprep.subr.bf16.mxu0 %v1225
  %1746 = vmatpush1.bf16.msra.mxu0 %v1224
  %1747 = vmatprep.subr.bf16.mxu0 %v1227
  %1748 = vmatpush1.bf16.msra.mxu0 %v1226
  %1749 = vmatprep.subr.bf16.mxu0 %v1229
  %1750 = vmatpush1.bf16.msra.mxu0 %v1228
  %1751 = vmatprep.subr.bf16.mxu0 %v1231
  %1752 = vmatpush1.bf16.msra.mxu0 %v1230
  %1753 = vmatprep.mubr.bf16.mxu0 %v333
  %1754 = vmatmul.mubr.bf16.gmra.mrb[0].mxu0 %v331
  %v1755 = vpop.f32.mrb[0].mxu0
  %v1756 = vadd.f32 %v1715, %v1755
  %v1757 = vpop.f32.mrb[0].mxu0
  %v1758 = vadd.f32 %v1717, %v1757
  %v1759 = vpop.f32.mrb[0].mxu0
  %v1760 = vpop.f32.mrb[0].mxu0
  %1761 = vdwg.mxu0
  %1762 = vmatprep.subr.bf16.mxu0 %v1233
  %1763 = vmatpush1.bf16.msra.mxu0 %v1232
  %1764 = vmatprep.subr.bf16.mxu0 %v1235
  %1765 = vmatpush1.bf16.msra.mxu0 %v1234
  %1766 = vmatprep.subr.bf16.mxu0 %v1237
  %1767 = vmatpush1.bf16.msra.mxu0 %v1236
  %1768 = vmatprep.subr.bf16.mxu0 %v1239
  %1769 = vmatpush1.bf16.msra.mxu0 %v1238
  %1770 = vmatprep.subr.bf16.mxu0 %v1241
  %1771 = vmatpush1.bf16.msra.mxu0 %v1240
  %1772 = vmatprep.subr.bf16.mxu0 %v1243
  %1773 = vmatpush1.bf16.msra.mxu0 %v1242
  %1774 = vmatprep.subr.bf16.mxu0 %v1245
  %1775 = vmatpush1.bf16.msra.mxu0 %v1244
  %1776 = vmatprep.subr.bf16.mxu0 %v1247
  %1777 = vmatpush1.bf16.msra.mxu0 %v1246
  %1778 = vmatprep.subr.bf16.mxu0 %v1249
  %1779 = vmatpush1.bf16.msra.mxu0 %v1248
  %1780 = vmatprep.subr.bf16.mxu0 %v1251
  %1781 = vmatpush1.bf16.msra.mxu0 %v1250
  %1782 = vmatprep.subr.bf16.mxu0 %v1253
  %1783 = vmatpush1.bf16.msra.mxu0 %v1252
  %1784 = vmatprep.subr.bf16.mxu0 %v1255
  %1785 = vmatpush1.bf16.msra.mxu0 %v1254
  %1786 = vmatprep.subr.bf16.mxu0 %v1257
  %1787 = vmatpush1.bf16.msra.mxu0 %v1256
  %1788 = vmatprep.subr.bf16.mxu0 %v1259
  %1789 = vmatpush1.bf16.msra.mxu0 %v1258
  %1790 = vmatprep.subr.bf16.mxu0 %v1261
  %1791 = vmatpush1.bf16.msra.mxu0 %v1260
  %1792 = vmatprep.subr.bf16.mxu0 %v1263
  %1793 = vmatpush1.bf16.msra.mxu0 %v1262
  %1794 = vmatprep.mubr.bf16.mxu0 %v330
  %1795 = vmatmul.mubr.bf16.gmra.mrb[0].mxu0 %v316
  %v1796 = vpop.f32.mrb[0].mxu0
  %v1797 = vadd.f32 %v1756, %v1796
  %v1798 = vpop.f32.mrb[0].mxu0
  %v1799 = vadd.f32 %v1758, %v1798
  %v1800 = vpop.f32.mrb[0].mxu0
  %v1801 = vpop.f32.mrb[0].mxu0
  %1802 = vdwg.mxu0
  %1803 = vmatprep.subr.bf16.mxu0 %v1265
  %1804 = vmatpush1.bf16.msra.mxu0 %v1264
  %1805 = vmatprep.subr.bf16.mxu0 %v1267
  %1806 = vmatpush1.bf16.msra.mxu0 %v1266
  %1807 = vmatprep.subr.bf16.mxu0 %v1269
  %1808 = vmatpush1.bf16.msra.mxu0 %v1268
  %1809 = vmatprep.subr.bf16.mxu0 %v1271
  %1810 = vmatpush1.bf16.msra.mxu0 %v1270
  %1811 = vmatprep.subr.bf16.mxu0 %v1273
  %1812 = vmatpush1.bf16.msra.mxu0 %v1272
  %1813 = vmatprep.subr.bf16.mxu0 %v1275
  %1814 = vmatpush1.bf16.msra.mxu0 %v1274
  %1815 = vmatprep.subr.bf16.mxu0 %v1277
  %1816 = vmatpush1.bf16.msra.mxu0 %v1276
  %1817 = vmatprep.subr.bf16.mxu0 %v1279
  %1818 = vmatpush1.bf16.msra.mxu0 %v1278
  %1819 = vmatprep.subr.bf16.mxu0 %v1281
  %1820 = vmatpush1.bf16.msra.mxu0 %v1280
  %1821 = vmatprep.subr.bf16.mxu0 %v1283
  %1822 = vmatpush1.bf16.msra.mxu0 %v1282
  %1823 = vmatprep.subr.bf16.mxu0 %v1285
  %1824 = vmatpush1.bf16.msra.mxu0 %v1284
  %1825 = vmatprep.subr.bf16.mxu0 %v1287
  %1826 = vmatpush1.bf16.msra.mxu0 %v1286
  %1827 = vmatprep.subr.bf16.mxu0 %v1289
  %1828 = vmatpush1.bf16.msra.mxu0 %v1288
  %1829 = vmatprep.subr.bf16.mxu0 %v1291
  %1830 = vmatpush1.bf16.msra.mxu0 %v1290
  %1831 = vmatprep.subr.bf16.mxu0 %v1293
  %1832 = vmatpush1.bf16.msra.mxu0 %v1292
  %1833 = vmatprep.subr.bf16.mxu0 %v1295
  %1834 = vmatpush1.bf16.msra.mxu0 %v1294
  %1835 = vmatprep.mubr.bf16.mxu0 %v334
  %1836 = vmatmul.mubr.bf16.gmra.mrb[0].mxu0 %v332
  %v1837 = vpop.f32.mrb[0].mxu0
  %v1838 = vadd.f32 %v1797, %v1837
  %v1839 = vpop.f32.mrb[0].mxu0
  %v1840 = vadd.f32 %v1799, %v1839
  %v1841 = vpop.f32.mrb[0].mxu0
  %v1842 = vpop.f32.mrb[0].mxu0
  %1843 = vdwg.mxu0
  %1844 = vmatprep.subr.bf16.mxu0 %v1297
  %1845 = vmatpush1.bf16.msra.mxu0 %v1296
  %1846 = vmatprep.subr.bf16.mxu0 %v1299
  %1847 = vmatpush1.bf16.msra.mxu0 %v1298
  %1848 = vmatprep.subr.bf16.mxu0 %v1301
  %1849 = vmatpush1.bf16.msra.mxu0 %v1300
  %1850 = vmatprep.subr.bf16.mxu0 %v1303
  %1851 = vmatpush1.bf16.msra.mxu0 %v1302
  %1852 = vmatprep.subr.bf16.mxu0 %v1305
  %1853 = vmatpush1.bf16.msra.mxu0 %v1304
  %1854 = vmatprep.subr.bf16.mxu0 %v1307
  %1855 = vmatpush1.bf16.msra.mxu0 %v1306
  %1856 = vmatprep.subr.bf16.mxu0 %v1309
  %1857 = vmatpush1.bf16.msra.mxu0 %v1308
  %1858 = vmatprep.subr.bf16.mxu0 %v1311
  %1859 = vmatpush1.bf16.msra.mxu0 %v1310
  %1860 = vmatprep.subr.bf16.mxu0 %v1313
  %1861 = vmatpush1.bf16.msra.mxu0 %v1312
  %1862 = vmatprep.subr.bf16.mxu0 %v1315
  %1863 = vmatpush1.bf16.msra.mxu0 %v1314
  %1864 = vmatprep.subr.bf16.mxu0 %v1317
  %1865 = vmatpush1.bf16.msra.mxu0 %v1316
  %1866 = vmatprep.subr.bf16.mxu0 %v1319
  %1867 = vmatpush1.bf16.msra.mxu0 %v1318
  %1868 = vmatprep.subr.bf16.mxu0 %v1321
  %1869 = vmatpush1.bf16.msra.mxu0 %v1320
  %1870 = vmatprep.subr.bf16.mxu0 %v1323
  %1871 = vmatpush1.bf16.msra.mxu0 %v1322
  %1872 = vmatprep.subr.bf16.mxu0 %v1325
  %1873 = vmatpush1.bf16.msra.mxu0 %v1324
  %1874 = vmatprep.subr.bf16.mxu0 %v1327
  %1875 = vmatpush1.bf16.msra.mxu0 %v1326
  %1876 = vmatprep.mubr.bf16.mxu0 %v372
  %1877 = vmatmul.mubr.bf16.gmra.mrb[0].mxu0 %v358
  %v1878 = vpop.f32.mrb[0].mxu0
  %v1879 = vadd.f32 %v1838, %v1878
  %v1880 = vpop.f32.mrb[0].mxu0
  %v1881 = vadd.f32 %v1840, %v1880
  %v1882 = vpop.f32.mrb[0].mxu0
  %v1883 = vpop.f32.mrb[0].mxu0
  %1884 = vdwg.mxu0
  %1885 = vmatprep.subr.bf16.mxu0 %v1329
  %1886 = vmatpush1.bf16.msra.mxu0 %v1328
  %1887 = vmatprep.subr.bf16.mxu0 %v1331
  %1888 = vmatpush1.bf16.msra.mxu0 %v1330
  %1889 = vmatprep.subr.bf16.mxu0 %v1333
  %1890 = vmatpush1.bf16.msra.mxu0 %v1332
  %1891 = vmatprep.subr.bf16.mxu0 %v1335
  %1892 = vmatpush1.bf16.msra.mxu0 %v1334
  %1893 = vmatprep.subr.bf16.mxu0 %v1337
  %1894 = vmatpush1.bf16.msra.mxu0 %v1336
  %1895 = vmatprep.subr.bf16.mxu0 %v1339
  %1896 = vmatpush1.bf16.msra.mxu0 %v1338
  %1897 = vmatprep.subr.bf16.mxu0 %v1341
  %1898 = vmatpush1.bf16.msra.mxu0 %v1340
  %1899 = vmatprep.subr.bf16.mxu0 %v1343
  %1900 = vmatpush1.bf16.msra.mxu0 %v1342
  %1901 = vmatprep.subr.bf16.mxu0 %v1345
  %1902 = vmatpush1.bf16.msra.mxu0 %v1344
  %1903 = vmatprep.subr.bf16.mxu0 %v1347
  %1904 = vmatpush1.bf16.msra.mxu0 %v1346
  %1905 = vmatprep.subr.bf16.mxu0 %v1349
  %1906 = vmatpush1.bf16.msra.mxu0 %v1348
  %1907 = vmatprep.subr.bf16.mxu0 %v1351
  %1908 = vmatpush1.bf16.msra.mxu0 %v1350
  %1909 = vmatprep.subr.bf16.mxu0 %v1353
  %1910 = vmatpush1.bf16.msra.mxu0 %v1352
  %1911 = vmatprep.subr.bf16.mxu0 %v1355
  %1912 = vmatpush1.bf16.msra.mxu0 %v1354
  %1913 = vmatprep.subr.bf16.mxu0 %v1357
  %1914 = vmatpush1.bf16.msra.mxu0 %v1356
  %1915 = vmatprep.subr.bf16.mxu0 %v1359
  %1916 = vmatpush1.bf16.msra.mxu0 %v1358
  %1917 = vmatprep.mubr.bf16.mxu0 %v382
  %1918 = vmatmul.mubr.bf16.gmra.mrb[0].mxu0 %v380
  %v1919 = vpop.f32.mrb[0].mxu0
  %v1920 = vadd.f32 %v1879, %v1919
  %v1921 = vpop.f32.mrb[0].mxu0
  %v1922 = vadd.f32 %v1881, %v1921
  %v1923 = vpop.f32.mrb[0].mxu0
  %v1924 = vpop.f32.mrb[0].mxu0
  %1925 = vdwg.mxu0
  %1926 = vmatprep.subr.bf16.mxu0 %v1361
  %1927 = vmatpush1.bf16.msra.mxu0 %v1360
  %1928 = vmatprep.subr.bf16.mxu0 %v1363
  %1929 = vmatpush1.bf16.msra.mxu0 %v1362
  %1930 = vmatprep.subr.bf16.mxu0 %v1365
  %1931 = vmatpush1.bf16.msra.mxu0 %v1364
  %1932 = vmatprep.subr.bf16.mxu0 %v1367
  %1933 = vmatpush1.bf16.msra.mxu0 %v1366
  %1934 = vmatprep.subr.bf16.mxu0 %v1369
  %1935 = vmatpush1.bf16.msra.mxu0 %v1368
  %1936 = vmatprep.subr.bf16.mxu0 %v1371
  %1937 = vmatpush1.bf16.msra.mxu0 %v1370
  %1938 = vmatprep.subr.bf16.mxu0 %v1373
  %1939 = vmatpush1.bf16.msra.mxu0 %v1372
  %1940 = vmatprep.subr.bf16.mxu0 %v1375
  %1941 = vmatpush1.bf16.msra.mxu0 %v1374
  %1942 = vmatprep.subr.bf16.mxu0 %v1377
  %1943 = vmatpush1.bf16.msra.mxu0 %v1376
  %1944 = vmatprep.subr.bf16.mxu0 %v1379
  %1945 = vmatpush1.bf16.msra.mxu0 %v1378
  %1946 = vmatprep.subr.bf16.mxu0 %v1381
  %1947 = vmatpush1.bf16.msra.mxu0 %v1380
  %1948 = vmatprep.subr.bf16.mxu0 %v1383
  %1949 = vmatpush1.bf16.msra.mxu0 %v1382
  %1950 = vmatprep.subr.bf16.mxu0 %v1385
  %1951 = vmatpush1.bf16.msra.mxu0 %v1384
  %1952 = vmatprep.subr.bf16.mxu0 %v1387
  %1953 = vmatpush1.bf16.msra.mxu0 %v1386
  %1954 = vmatprep.subr.bf16.mxu0 %v1389
  %1955 = vmatpush1.bf16.msra.mxu0 %v1388
  %1956 = vmatprep.subr.bf16.mxu0 %v1391
  %1957 = vmatpush1.bf16.msra.mxu0 %v1390
  %1958 = vmatprep.mubr.bf16.mxu0 %v379
  %1959 = vmatmul.mubr.bf16.gmra.mrb[0].mxu0 %v365
  %v1960 = vpop.f32.mrb[0].mxu0
  %v1961 = vadd.f32 %v1920, %v1960
  %v1962 = vpop.f32.mrb[0].mxu0
  %v1963 = vadd.f32 %v1922, %v1962
  %v1964 = vpop.f32.mrb[0].mxu0
  %v1965 = vpop.f32.mrb[0].mxu0
  %1966 = vdwg.mxu0
  %1967 = vmatprep.subr.bf16.mxu0 %v1393
  %1968 = vmatpush1.bf16.msra.mxu0 %v1392
  %1969 = vmatprep.subr.bf16.mxu0 %v1395
  %1970 = vmatpush1.bf16.msra.mxu0 %v1394
  %1971 = vmatprep.subr.bf16.mxu0 %v1397
  %1972 = vmatpush1.bf16.msra.mxu0 %v1396
  %1973 = vmatprep.subr.bf16.mxu0 %v1399
  %1974 = vmatpush1.bf16.msra.mxu0 %v1398
  %1975 = vmatprep.subr.bf16.mxu0 %v1401
  %1976 = vmatpush1.bf16.msra.mxu0 %v1400
  %1977 = vmatprep.subr.bf16.mxu0 %v1403
  %1978 = vmatpush1.bf16.msra.mxu0 %v1402
  %1979 = vmatprep.subr.bf16.mxu0 %v1405
  %1980 = vmatpush1.bf16.msra.mxu0 %v1404
  %1981 = vmatprep.subr.bf16.mxu0 %v1407
  %1982 = vmatpush1.bf16.msra.mxu0 %v1406
  %1983 = vmatprep.subr.bf16.mxu0 %v1409
  %1984 = vmatpush1.bf16.msra.mxu0 %v1408
  %1985 = vmatprep.subr.bf16.mxu0 %v1411
  %1986 = vmatpush1.bf16.msra.mxu0 %v1410
  %1987 = vmatprep.subr.bf16.mxu0 %v1413
  %1988 = vmatpush1.bf16.msra.mxu0 %v1412
  %1989 = vmatprep.subr.bf16.mxu0 %v1415
  %1990 = vmatpush1.bf16.msra.mxu0 %v1414
  %1991 = vmatprep.subr.bf16.mxu0 %v1417
  %1992 = vmatpush1.bf16.msra.mxu0 %v1416
  %1993 = vmatprep.subr.bf16.mxu0 %v1419
  %1994 = vmatpush1.bf16.msra.mxu0 %v1418
  %1995 = vmatprep.subr.bf16.mxu0 %v1421
  %1996 = vmatpush1.bf16.msra.mxu0 %v1420
  %1997 = vmatprep.subr.bf16.mxu0 %v1423
  %1998 = vmatpush1.bf16.msra.mxu0 %v1422
  %1999 = vmatprep.mubr.bf16.mxu0 %v383
  %2000 = vmatmul.mubr.bf16.gmra.mrb[0].mxu0 %v381
  %v2001 = vpop.f32.mrb[0].mxu0
  %v2002 = vadd.f32 %v1961, %v2001
  %v2003 = vpop.f32.mrb[0].mxu0
  %v2004 = vadd.f32 %v1963, %v2003
  %v2005 = vpop.f32.mrb[0].mxu0
  %v2006 = vpop.f32.mrb[0].mxu0
  %2007 = vdwg.mxu0
  %v2008 = vmax.f32 %v2002, 0.0
  %v2009 = vmax.f32 %v2004, 0.0
  %v2012 = vcombine.low %v2008, %v2009
  %v2014 = vunpack.c.l.s4 1983009808
  %v2015 = vunpack.c.0.s8 %v2014
  %v2016 = vlaneseq
  %v2017 = vshrl.u32 %v2016, 7
  %v2018 = vsub.s32 %v2015, %v2017
  %v2019 = vrot.slane %v2012, %v2018
  %2021 = vst [vmem:[%s3] sm:$0xf] %v2019
  // Predicated region
  $region14: #{vae_forward.16} parent=0 // pred_check
    _
  $region15: #{vae_forward.16} parent=0 // pred_check_branch
    %2023 = sbr.rel (0) target = $region17
  $region16: #{vae_forward.16} parent=0 // pred_region
    _
  $region17: #{vae_forward.16} parent=0 // pred_fallthru
    _
  // Predicated region
  $region18: #{vae_forward.16} parent=0 // pred_check
    _
  $region19: #{vae_forward.16} parent=0 // pred_check_branch
    %2025 = sbr.rel (0) target = $region21
  $region20: #{vae_forward.16} parent=0 // pred_region
    _
  $region21: #{vae_forward.16} parent=0 // pred_fallthru
    _

// kernel: vae_forward.17
$region0: #{vae_forward.17}
  #allocation0 [shape = 'u32[]', space=smem, size = 0x4, offset = 0x4, fixed_abs, tag = 'smem constant byte address 0x4 - core index']
  #allocation1 [shape = 'u32[144,128]{1,0:T(1,128)}', space=vmem, size = 0x12000, scoped, tag = 'internal scratch']
  %s0 = inlined_call_operand.vmem [shape: bf16[2,256], index: 0, kind: input, shape index: {}]
  %s1 = inlined_call_operand.vmem [shape: bf16[256,128], index: 1, kind: input, shape index: {}]
  %s2 = inlined_call_operand.vmem [shape: f32[1,128], index: 2, kind: input, shape index: {}]
  %s3 = inlined_call_operand.vmem [shape: f32[2,128], index: 3, kind: output, shape index: {}]
  %s4 = sld [smem:[#allocation0]]
  $region22: #{vae_forward.17} parent=0
    _
  %s6 = ssub.s32 1, %s4
  %s7 = scalar_select 0, %s6, %s4
  // Predicated region
  $region2: #{vae_forward.17} parent=0 // pred_check
    _
  $region3: #{vae_forward.17} parent=0 // pred_check_branch
    %9 = sbr.rel (0) target = $region5
  $region4: #{vae_forward.17} parent=0 // pred_region
    _
  $region5: #{vae_forward.17} parent=0 // pred_fallthru
    _
  // Predicated region
  $region6: #{vae_forward.17} parent=0 // pred_check
    _
  $region7: #{vae_forward.17} parent=0 // pred_check_branch
    %11 = sbr.rel (0) target = $region9
  $region8: #{vae_forward.17} parent=0 // pred_region
    _
  $region9: #{vae_forward.17} parent=0 // pred_fallthru
    _
  // Predicated region
  $region10: #{vae_forward.17} parent=0 // pred_check
    _
  $region11: #{vae_forward.17} parent=0 // pred_check_branch
    %13 = sbr.rel (0) target = $region13
  $region12: #{vae_forward.17} parent=0 // pred_region
    _
  $region13: #{vae_forward.17} parent=0 // pred_fallthru
    _
  %v15 = vld [vmem:[%s0] sm:$0x3]
  %v16 = vld [vmem:[%s1] sm:$0xf]
  %v17 = vld [vmem:[%s1 + $0x4] sm:$0xf]
  %v18 = vld [vmem:[%s1 + $0x8] sm:$0xf]
  %v19 = vld [vmem:[%s1 + $0xc] sm:$0xf]
  %v20 = vld [vmem:[%s1 + $0x10] sm:$0xf]
  %v21 = vld [vmem:[%s1 + $0x14] sm:$0xf]
  %v22 = vld [vmem:[%s1 + $0x18] sm:$0xf]
  %v23 = vld [vmem:[%s1 + $0x1c] sm:$0xf]
  %v24 = vld [vmem:[%s1 + $0x20] sm:$0xf]
  %v25 = vld [vmem:[%s1 + $0x24] sm:$0xf]
  %v26 = vld [vmem:[%s1 + $0x28] sm:$0xf]
  %v27 = vld [vmem:[%s1 + $0x2c] sm:$0xf]
  %v28 = vld [vmem:[%s1 + $0x30] sm:$0xf]
  %v29 = vld [vmem:[%s1 + $0x34] sm:$0xf]
  %v30 = vld [vmem:[%s1 + $0x38] sm:$0xf]
  %v31 = vld [vmem:[%s1 + $0x3c] sm:$0xf]
  %v32 = vld [vmem:[%s1 + $0x40] sm:$0xf]
  %v33 = vld [vmem:[%s1 + $0x44] sm:$0xf]
  %v34 = vld [vmem:[%s1 + $0x48] sm:$0xf]
  %v35 = vld [vmem:[%s1 + $0x4c] sm:$0xf]
  %v36 = vld [vmem:[%s1 + $0x50] sm:$0xf]
  %v37 = vld [vmem:[%s1 + $0x54] sm:$0xf]
  %v38 = vld [vmem:[%s1 + $0x58] sm:$0xf]
  %v39 = vld [vmem:[%s1 + $0x5c] sm:$0xf]
  %v40 = vld [vmem:[%s1 + $0x60] sm:$0xf]
  %v41 = vld [vmem:[%s1 + $0x64] sm:$0xf]
  %v42 = vld [vmem:[%s1 + $0x68] sm:$0xf]
  %v43 = vld [vmem:[%s1 + $0x6c] sm:$0xf]
  %v44 = vld [vmem:[%s1 + $0x70] sm:$0xf]
  %v45 = vld [vmem:[%s1 + $0x74] sm:$0xf]
  %v46 = vld [vmem:[%s1 + $0x78] sm:$0xf]
  %v47 = vld [vmem:[%s1 + $0x7c] sm:$0xf]
  %v48 = vld [vmem:[%s2] sm:$0x1]
  %v50 = vlaneseq
  %v51 = vshrl.u32 %v50, 7
  %v52 = vsub.s32 0, %v51
  %v53 = vrot.slane %v48, %v52
  %v57 = vunpack.c.l.s4 1966171168
  %v58 = vunpack.c.0.s8 %v57
  %v59 = vlaneseq
  %v60 = vshrl.u32 %v59, 7
  %v61 = vsub.s32 %v58, %v60
  %v62 = vrot.slane %v15, %v61
  %v63 = vcombine.high %v62, %v62
  %v65 = vunpack.c.l.s4 1966171168
  %v66 = vunpack.c.0.s8 %v65
  %v67 = vlaneseq
  %v68 = vshrl.u32 %v67, 7
  %v69 = vsub.s32 %v66, %v68
  %v70 = vrot.slane %v62, %v69
  %v72 = vunpack.c.l.s4 1966171168
  %v73 = vunpack.c.0.s8 %v72
  %v74 = vlaneseq
  %v75 = vshrl.u32 %v74, 7
  %v76 = vsub.s32 %v73, %v75
  %v77 = vrot.slane %v63, %v76
  %v112 = vunpack.c.l.b16 %v16
  %v113 = vunpack.c.l.b16 %v17
  %v114 = vunpack.c.l.b16 %v18
  %v115 = vunpack.c.l.b16 %v19
  %v116 = vunpack.c.l.b16 %v20
  %v117 = vunpack.c.l.b16 %v21
  %v118 = vunpack.c.l.b16 %v22
  %v119 = vunpack.c.l.b16 %v23
  %v120 = vunpack.c.l.b16 %v24
  %v121 = vunpack.c.l.b16 %v25
  %v122 = vunpack.c.l.b16 %v26
  %v123 = vunpack.c.l.b16 %v27
  %v124 = vunpack.c.l.b16 %v28
  %v125 = vunpack.c.l.b16 %v29
  %v126 = vunpack.c.l.b16 %v30
  %v127 = vunpack.c.l.b16 %v31
  %v128 = vunpack.c.l.b16 %v32
  %v129 = vunpack.c.l.b16 %v33
  %v130 = vunpack.c.l.b16 %v34
  %v131 = vunpack.c.l.b16 %v35
  %v132 = vunpack.c.l.b16 %v36
  %v133 = vunpack.c.l.b16 %v37
  %v134 = vunpack.c.l.b16 %v38
  %v135 = vunpack.c.l.b16 %v39
  %v136 = vunpack.c.l.b16 %v40
  %v137 = vunpack.c.l.b16 %v41
  %v138 = vunpack.c.l.b16 %v42
  %v139 = vunpack.c.l.b16 %v43
  %v140 = vunpack.c.l.b16 %v44
  %v141 = vunpack.c.l.b16 %v45
  %v142 = vunpack.c.l.b16 %v46
  %v143 = vunpack.c.l.b16 %v47
  %v144 = vpack.c.b16 %v113, %v112
  %v145 = vpack.c.b16 %v115, %v114
  %v146 = vpack.c.b16 %v117, %v116
  %v147 = vpack.c.b16 %v119, %v118
  %v148 = vpack.c.b16 %v121, %v120
  %v149 = vpack.c.b16 %v123, %v122
  %v150 = vpack.c.b16 %v125, %v124
  %v151 = vpack.c.b16 %v127, %v126
  %v152 = vpack.c.b16 %v129, %v128
  %v153 = vpack.c.b16 %v131, %v130
  %v154 = vpack.c.b16 %v133, %v132
  %v155 = vpack.c.b16 %v135, %v134
  %v156 = vpack.c.b16 %v137, %v136
  %v157 = vpack.c.b16 %v139, %v138
  %v158 = vpack.c.b16 %v141, %v140
  %v159 = vpack.c.b16 %v143, %v142
  %176 = vmatprep.subr.bf16.mxu0 0
  %177 = vmatpush1.bf16.msra.mxu0 %v144
  %178 = vmatprep.subr.bf16.mxu0 0
  %179 = vmatpush1.bf16.msra.mxu0 %v145
  %180 = vmatprep.subr.bf16.mxu0 0
  %181 = vmatpush1.bf16.msra.mxu0 %v146
  %182 = vmatprep.subr.bf16.mxu0 0
  %183 = vmatpush1.bf16.msra.mxu0 %v147
  %184 = vmatprep.subr.bf16.mxu0 0
  %185 = vmatpush1.bf16.msra.mxu0 %v148
  %186 = vmatprep.subr.bf16.mxu0 0
  %187 = vmatpush1.bf16.msra.mxu0 %v149
  %188 = vmatprep.subr.bf16.mxu0 0
  %189 = vmatpush1.bf16.msra.mxu0 %v150
  %190 = vmatprep.subr.bf16.mxu0 0
  %191 = vmatpush1.bf16.msra.mxu0 %v151
  %192 = vmatprep.subr.bf16.mxu0 0
  %193 = vmatpush1.bf16.msra.mxu0 %v152
  %194 = vmatprep.subr.bf16.mxu0 0
  %195 = vmatpush1.bf16.msra.mxu0 %v153
  %196 = vmatprep.subr.bf16.mxu0 0
  %197 = vmatpush1.bf16.msra.mxu0 %v154
  %198 = vmatprep.subr.bf16.mxu0 0
  %199 = vmatpush1.bf16.msra.mxu0 %v155
  %200 = vmatprep.subr.bf16.mxu0 0
  %201 = vmatpush1.bf16.msra.mxu0 %v156
  %202 = vmatprep.subr.bf16.mxu0 0
  %203 = vmatpush1.bf16.msra.mxu0 %v157
  %204 = vmatprep.subr.bf16.mxu0 0
  %205 = vmatpush1.bf16.msra.mxu0 %v158
  %206 = vmatprep.subr.bf16.mxu0 0
  %207 = vmatpush1.bf16.msra.mxu0 %v159
  %208 = vmatprep.mubr.bf16.mxu0 %v77
  %209 = vmatmul.mubr.bf16.gmra.mrb[0].mxu0 %v70
  %v210 = vpop.f32.mrb[0].mxu0
  %v211 = vadd.f32 %v53, %v210
  %v212 = vpop.f32.mrb[0].mxu0
  %v213 = vpop.f32.mrb[0].mxu0
  %v214 = vpop.f32.mrb[0].mxu0
  %215 = vdwg.mxu0
  %216 = vst [vmem:[%s3] sm:$0x3] %v211
  // Predicated region
  $region14: #{vae_forward.17} parent=0 // pred_check
    _
  $region15: #{vae_forward.17} parent=0 // pred_check_branch
    %218 = sbr.rel (0) target = $region17
  $region16: #{vae_forward.17} parent=0 // pred_region
    _
  $region17: #{vae_forward.17} parent=0 // pred_fallthru
    _
  // Predicated region
  $region18: #{vae_forward.17} parent=0 // pred_check
    _
  $region19: #{vae_forward.17} parent=0 // pred_check_branch
    %220 = sbr.rel (0) target = $region21
  $region20: #{vae_forward.17} parent=0 // pred_region
    _
  $region21: #{vae_forward.17} parent=0 // pred_fallthru
    _

// kernel: vae_forward.18
$region0: #{vae_forward.18}
  #allocation0 [shape = 'u32[]', space=smem, size = 0x4, offset = 0x4, fixed_abs, tag = 'smem constant byte address 0x4 - core index']
  #allocation1 [shape = 'u32[144,128]{1,0:T(1,128)}', space=vmem, size = 0x12000, scoped, tag = 'internal scratch']
  %s0 = inlined_call_operand.vmem [shape: bf16[2,32], index: 0, kind: input, shape index: {}]
  %s1 = inlined_call_operand.vmem [shape: bf16[32,256], index: 1, kind: input, shape index: {}]
  %s2 = inlined_call_operand.vmem [shape: f32[1,256], index: 2, kind: input, shape index: {}]
  %s3 = inlined_call_operand.vmem [shape: f32[2,256], index: 3, kind: output, shape index: {}]
  %s4 = sld [smem:[#allocation0]]
  $region22: #{vae_forward.18} parent=0
    _
  %s6 = ssub.s32 1, %s4
  %s7 = scalar_select 0, %s6, %s4
  // Predicated region
  $region2: #{vae_forward.18} parent=0 // pred_check
    _
  $region3: #{vae_forward.18} parent=0 // pred_check_branch
    %9 = sbr.rel (0) target = $region5
  $region4: #{vae_forward.18} parent=0 // pred_region
    _
  $region5: #{vae_forward.18} parent=0 // pred_fallthru
    _
  // Predicated region
  $region6: #{vae_forward.18} parent=0 // pred_check
    _
  $region7: #{vae_forward.18} parent=0 // pred_check_branch
    %11 = sbr.rel (0) target = $region9
  $region8: #{vae_forward.18} parent=0 // pred_region
    _
  $region9: #{vae_forward.18} parent=0 // pred_fallthru
    _
  // Predicated region
  $region10: #{vae_forward.18} parent=0 // pred_check
    _
  $region11: #{vae_forward.18} parent=0 // pred_check_branch
    %13 = sbr.rel (0) target = $region13
  $region12: #{vae_forward.18} parent=0 // pred_region
    _
  $region13: #{vae_forward.18} parent=0 // pred_fallthru
    _
  %v15 = vld [vmem:[%s0] sm:$0x1]
  %v16 = vld [vmem:[%s1] sm:$0xff]
  %v17 = vld [vmem:[%s1 + $0x8] sm:$0xff]
  %v18 = vld [vmem:[%s1 + $0x10] sm:$0xff]
  %v19 = vld [vmem:[%s1 + $0x18] sm:$0xff]
  %v20 = vld [vmem:[%s2] sm:$0x3]
  %v22 = vlaneseq
  %v23 = vshrl.u32 %v22, 7
  %v24 = vsub.s32 0, %v23
  %v25 = vrot.slane %v20, %v24
  %v26 = vlaneseq
  %v27 = vshrl.u32 %v26, 7
  %v28 = vsub.s32 1, %v27
  %v29 = vrot.slane %v20, %v28
  %v36 = vunpack.c.l.b16 %v16
  %v37 = vunpack.c.h.b16 %v16
  %v38 = vunpack.c.l.b16 %v17
  %v39 = vunpack.c.h.b16 %v17
  %v40 = vunpack.c.l.b16 %v18
  %v41 = vunpack.c.h.b16 %v18
  %v42 = vunpack.c.l.b16 %v19
  %v43 = vunpack.c.h.b16 %v19
  %v44 = vpack.c.b16 %v38, %v36
  %v45 = vpack.c.b16 %v39, %v37
  %v46 = vpack.c.b16 %v42, %v40
  %v47 = vpack.c.b16 %v43, %v41
  %vm52 = vcmask 261120
  %v54 = vsel %vm52, %v15, 0
  %56 = vmatprep.subr.bf16.mxu0 %v45
  %57 = vmatpush1.bf16.msra.mxu0 %v44
  %58 = vmatprep.subr.bf16.mxu0 %v47
  %59 = vmatpush1.bf16.msra.mxu0 %v46
  %60 = vmatprep.subr.bf16.mxu0 0
  %61 = vmatpush1.bf16.msra.mxu0 0
  %62 = vmatprep.subr.bf16.mxu0 0
  %63 = vmatpush1.bf16.msra.mxu0 0
  %64 = vmatprep.subr.bf16.mxu0 0
  %65 = vmatpush1.bf16.msra.mxu0 0
  %66 = vmatprep.subr.bf16.mxu0 0
  %67 = vmatpush1.bf16.msra.mxu0 0
  %68 = vmatprep.subr.bf16.mxu0 0
  %69 = vmatpush1.bf16.msra.mxu0 0
  %70 = vmatprep.subr.bf16.mxu0 0
  %71 = vmatpush1.bf16.msra.mxu0 0
  %72 = vmatprep.subr.bf16.mxu0 0
  %73 = vmatpush1.bf16.msra.mxu0 0
  %74 = vmatprep.subr.bf16.mxu0 0
  %75 = vmatpush1.bf16.msra.mxu0 0
  %76 = vmatprep.subr.bf16.mxu0 0
  %77 = vmatpush1.bf16.msra.mxu0 0
  %78 = vmatprep.subr.bf16.mxu0 0
  %79 = vmatpush1.bf16.msra.mxu0 0
  %80 = vmatprep.subr.bf16.mxu0 0
  %81 = vmatpush1.bf16.msra.mxu0 0
  %82 = vmatprep.subr.bf16.mxu0 0
  %83 = vmatpush1.bf16.msra.mxu0 0
  %84 = vmatprep.subr.bf16.mxu0 0
  %85 = vmatpush1.bf16.msra.mxu0 0
  %86 = vmatprep.subr.bf16.mxu0 0
  %87 = vmatpush1.bf16.msra.mxu0 0
  %88 = vmatprep.mubr.bf16.mxu0 0
  %89 = vmatmul.mubr.bf16.gmra.mrb[0].mxu0 %v54
  %v90 = vpop.f32.mrb[0].mxu0
  %v91 = vadd.f32 %v25, %v90
  %v92 = vpop.f32.mrb[0].mxu0
  %v93 = vadd.f32 %v29, %v92
  %v94 = vpop.f32.mrb[0].mxu0
  %v95 = vpop.f32.mrb[0].mxu0
  %96 = vdwg.mxu0
  %v97 = vmax.f32 %v91, 0.0
  %v98 = vmax.f32 %v93, 0.0
  %v101 = vcombine.low %v97, %v98
  %v103 = vunpack.c.l.s4 1983009808
  %v104 = vunpack.c.0.s8 %v103
  %v105 = vlaneseq
  %v106 = vshrl.u32 %v105, 7
  %v107 = vsub.s32 %v104, %v106
  %v108 = vrot.slane %v101, %v107
  %110 = vst [vmem:[%s3] sm:$0xf] %v108
  // Predicated region
  $region14: #{vae_forward.18} parent=0 // pred_check
    _
  $region15: #{vae_forward.18} parent=0 // pred_check_branch
    %112 = sbr.rel (0) target = $region17
  $region16: #{vae_forward.18} parent=0 // pred_region
    _
  $region17: #{vae_forward.18} parent=0 // pred_fallthru
    _
  // Predicated region
  $region18: #{vae_forward.18} parent=0 // pred_check
    _
  $region19: #{vae_forward.18} parent=0 // pred_check_branch
    %114 = sbr.rel (0) target = $region21
  $region20: #{vae_forward.18} parent=0 // pred_region
    _
  $region21: #{vae_forward.18} parent=0 // pred_fallthru
    _

// kernel: tile.28
$region0: #{tile.28}
  #allocation0 [shape = 's32[1]{0}', space=sflag, size = 0x4, scoped, tag = 'scoped memory for tile.28']
  %s0 = inlined_call_operand.vmem [shape: f32[128], index: 0, kind: input, shape index: {}]
  %s1 = inlined_call_operand.vmem [shape: f32[16,128], index: 1, kind: output, shape index: {}]
  // Predicated region
  $region2: #{tile.28} parent=0 // pred_check
    _
  $region3: #{tile.28} parent=0 // pred_check_branch
    %3 = sbr.rel (0) target = $region5
  $region4: #{tile.28} parent=0 // pred_region
    _
  $region5: #{tile.28} parent=0 // pred_fallthru
    _
  %v4 = vld [vmem:[%s0] ss:$0 sm:$0xff]
  %5 = vst [vmem:[%s1] sm:$0xff] %v4
  %s6 = scalar_lea.vmem %s1, 8
  %7 = vst [vmem:[%s6] sm:$0xff] %v4

// kernel: vae_forward.19
$region0: #{vae_forward.19}
  #allocation0 [shape = 'u32[]', space=smem, size = 0x4, offset = 0x4, fixed_abs, tag = 'smem constant byte address 0x4 - core index']
  #allocation1 [shape = 'u32[144,128]{1,0:T(1,128)}', space=vmem, size = 0x12000, scoped, tag = 'internal scratch']
  %s0 = inlined_call_operand.vmem [shape: bf16[2,256], index: 0, kind: input, shape index: {}]
  %s1 = inlined_call_operand.vmem [shape: bf16[256,2048], index: 1, kind: input, shape index: {}]
  %s2 = inlined_call_operand.vmem [shape: f32[1,2048], index: 2, kind: input, shape index: {}]
  %s3 = inlined_call_operand.vmem [shape: f32[2,2048], index: 3, kind: output, shape index: {}]
  %s4 = sld [smem:[#allocation0]]
  $region22: #{vae_forward.19} parent=0
    _
  %s6 = ssub.s32 1, %s4
  %s7 = scalar_select 0, %s6, %s4
  // Predicated region
  $region2: #{vae_forward.19} parent=0 // pred_check
    _
  $region3: #{vae_forward.19} parent=0 // pred_check_branch
    %9 = sbr.rel (0) target = $region5
  $region4: #{vae_forward.19} parent=0 // pred_region
    _
  $region5: #{vae_forward.19} parent=0 // pred_fallthru
    _
  // Predicated region
  $region6: #{vae_forward.19} parent=0 // pred_check
    _
  $region7: #{vae_forward.19} parent=0 // pred_check_branch
    %11 = sbr.rel (0) target = $region9
  $region8: #{vae_forward.19} parent=0 // pred_region
    _
  $region9: #{vae_forward.19} parent=0 // pred_fallthru
    _
  // Predicated region
  $region10: #{vae_forward.19} parent=0 // pred_check
    _
  $region11: #{vae_forward.19} parent=0 // pred_check_branch
    %13 = sbr.rel (0) target = $region13
  $region12: #{vae_forward.19} parent=0 // pred_region
    _
  $region13: #{vae_forward.19} parent=0 // pred_fallthru
    _
  %v14 = vld [vmem:[%s0] sm:$0x3]
  %v15 = vld [vmem:[%s1] sm:$0xff]
  %v16 = vld [vmem:[%s1 + $0x8] sm:$0xff]
  %v17 = vld [vmem:[%s1 + $0x10] sm:$0xff]
  %v18 = vld [vmem:[%s1 + $0x18] sm:$0xff]
  %v19 = vld [vmem:[%s1 + $0x20] sm:$0xff]
  %v20 = vld [vmem:[%s1 + $0x28] sm:$0xff]
  %v21 = vld [vmem:[%s1 + $0x30] sm:$0xff]
  %v22 = vld [vmem:[%s1 + $0x38] sm:$0xff]
  %v23 = vld [vmem:[%s1 + $0x40] sm:$0xff]
  %v24 = vld [vmem:[%s1 + $0x48] sm:$0xff]
  %v25 = vld [vmem:[%s1 + $0x50] sm:$0xff]
  %v26 = vld [vmem:[%s1 + $0x58] sm:$0xff]
  %v27 = vld [vmem:[%s1 + $0x60] sm:$0xff]
  %v28 = vld [vmem:[%s1 + $0x68] sm:$0xff]
  %v29 = vld [vmem:[%s1 + $0x70] sm:$0xff]
  %v30 = vld [vmem:[%s1 + $0x78] sm:$0xff]
  %v31 = vld [vmem:[%s1 + $0x80] sm:$0xff]
  %v32 = vld [vmem:[%s1 + $0x88] sm:$0xff]
  %v33 = vld [vmem:[%s1 + $0x90] sm:$0xff]
  %v34 = vld [vmem:[%s1 + $0x98] sm:$0xff]
  %v35 = vld [vmem:[%s1 + $0xa0] sm:$0xff]
  %v36 = vld [vmem:[%s1 + $0xa8] sm:$0xff]
  %v37 = vld [vmem:[%s1 + $0xb0] sm:$0xff]
  %v38 = vld [vmem:[%s1 + $0xb8] sm:$0xff]
  %v39 = vld [vmem:[%s1 + $0xc0] sm:$0xff]
  %v40 = vld [vmem:[%s1 + $0xc8] sm:$0xff]
  %v41 = vld [vmem:[%s1 + $0xd0] sm:$0xff]
  %v42 = vld [vmem:[%s1 + $0xd8] sm:$0xff]
  %v43 = vld [vmem:[%s1 + $0xe0] sm:$0xff]
  %v44 = vld [vmem:[%s1 + $0xe8] sm:$0xff]
  %v45 = vld [vmem:[%s1 + $0xf0] sm:$0xff]
  %v46 = vld [vmem:[%s1 + $0xf8] sm:$0xff]
  %v47 = vld [vmem:[%s1 + $0x100] sm:$0xff]
  %v48 = vld [vmem:[%s1 + $0x108] sm:$0xff]
  %v49 = vld [vmem:[%s1 + $0x110] sm:$0xff]
  %v50 = vld [vmem:[%s1 + $0x118] sm:$0xff]
  %v51 = vld [vmem:[%s1 + $0x120] sm:$0xff]
  %v52 = vld [vmem:[%s1 + $0x128] sm:$0xff]
  %v53 = vld [vmem:[%s1 + $0x130] sm:$0xff]
  %v54 = vld [vmem:[%s1 + $0x138] sm:$0xff]
  %v55 = vld [vmem:[%s1 + $0x140] sm:$0xff]
  %v56 = vld [vmem:[%s1 + $0x148] sm:$0xff]
  %v57 = vld [vmem:[%s1 + $0x150] sm:$0xff]
  %v58 = vld [vmem:[%s1 + $0x158] sm:$0xff]
  %v59 = vld [vmem:[%s1 + $0x160] sm:$0xff]
  %v60 = vld [vmem:[%s1 + $0x168] sm:$0xff]
  %v61 = vld [vmem:[%s1 + $0x170] sm:$0xff]
  %v62 = vld [vmem:[%s1 + $0x178] sm:$0xff]
  %v63 = vld [vmem:[%s1 + $0x180] sm:$0xff]
  %v64 = vld [vmem:[%s1 + $0x188] sm:$0xff]
  %v65 = vld [vmem:[%s1 + $0x190] sm:$0xff]
  %v66 = vld [vmem:[%s1 + $0x198] sm:$0xff]
  %v67 = vld [vmem:[%s1 + $0x1a0] sm:$0xff]
  %v68 = vld [vmem:[%s1 + $0x1a8] sm:$0xff]
  %v69 = vld [vmem:[%s1 + $0x1b0] sm:$0xff]
  %v70 = vld [vmem:[%s1 + $0x1b8] sm:$0xff]
  %v71 = vld [vmem:[%s1 + $0x1c0] sm:$0xff]
  %v72 = vld [vmem:[%s1 + $0x1c8] sm:$0xff]
  %v73 = vld [vmem:[%s1 + $0x1d0] sm:$0xff]
  %v74 = vld [vmem:[%s1 + $0x1d8] sm:$0xff]
  %v75 = vld [vmem:[%s1 + $0x1e0] sm:$0xff]
  %v76 = vld [vmem:[%s1 + $0x1e8] sm:$0xff]
  %v77 = vld [vmem:[%s1 + $0x1f0] sm:$0xff]
  %v78 = vld [vmem:[%s1 + $0x1f8] sm:$0xff]
  %v79 = vld [vmem:[%s1 + $0x200] sm:$0xff]
  %v80 = vld [vmem:[%s1 + $0x208] sm:$0xff]
  %v81 = vld [vmem:[%s1 + $0x210] sm:$0xff]
  %v82 = vld [vmem:[%s1 + $0x218] sm:$0xff]
  %v83 = vld [vmem:[%s1 + $0x220] sm:$0xff]
  %v84 = vld [vmem:[%s1 + $0x228] sm:$0xff]
  %v85 = vld [vmem:[%s1 + $0x230] sm:$0xff]
  %v86 = vld [vmem:[%s1 + $0x238] sm:$0xff]
  %v87 = vld [vmem:[%s1 + $0x240] sm:$0xff]
  %v88 = vld [vmem:[%s1 + $0x248] sm:$0xff]
  %v89 = vld [vmem:[%s1 + $0x250] sm:$0xff]
  %v90 = vld [vmem:[%s1 + $0x258] sm:$0xff]
  %v91 = vld [vmem:[%s1 + $0x260] sm:$0xff]
  %v92 = vld [vmem:[%s1 + $0x268] sm:$0xff]
  %v93 = vld [vmem:[%s1 + $0x270] sm:$0xff]
  %v94 = vld [vmem:[%s1 + $0x278] sm:$0xff]
  %v95 = vld [vmem:[%s1 + $0x280] sm:$0xff]
  %v96 = vld [vmem:[%s1 + $0x288] sm:$0xff]
  %v97 = vld [vmem:[%s1 + $0x290] sm:$0xff]
  %v98 = vld [vmem:[%s1 + $0x298] sm:$0xff]
  %v99 = vld [vmem:[%s1 + $0x2a0] sm:$0xff]
  %v100 = vld [vmem:[%s1 + $0x2a8] sm:$0xff]
  %v101 = vld [vmem:[%s1 + $0x2b0] sm:$0xff]
  %v102 = vld [vmem:[%s1 + $0x2b8] sm:$0xff]
  %v103 = vld [vmem:[%s1 + $0x2c0] sm:$0xff]
  %v104 = vld [vmem:[%s1 + $0x2c8] sm:$0xff]
  %v105 = vld [vmem:[%s1 + $0x2d0] sm:$0xff]
  %v106 = vld [vmem:[%s1 + $0x2d8] sm:$0xff]
  %v107 = vld [vmem:[%s1 + $0x2e0] sm:$0xff]
  %v108 = vld [vmem:[%s1 + $0x2e8] sm:$0xff]
  %v109 = vld [vmem:[%s1 + $0x2f0] sm:$0xff]
  %v110 = vld [vmem:[%s1 + $0x2f8] sm:$0xff]
  %v111 = vld [vmem:[%s1 + $0x300] sm:$0xff]
  %v112 = vld [vmem:[%s1 + $0x308] sm:$0xff]
  %v113 = vld [vmem:[%s1 + $0x310] sm:$0xff]
  %v114 = vld [vmem:[%s1 + $0x318] sm:$0xff]
  %v115 = vld [vmem:[%s1 + $0x320] sm:$0xff]
  %v116 = vld [vmem:[%s1 + $0x328] sm:$0xff]
  %v117 = vld [vmem:[%s1 + $0x330] sm:$0xff]
  %v118 = vld [vmem:[%s1 + $0x338] sm:$0xff]
  %v119 = vld [vmem:[%s1 + $0x340] sm:$0xff]
  %v120 = vld [vmem:[%s1 + $0x348] sm:$0xff]
  %v121 = vld [vmem:[%s1 + $0x350] sm:$0xff]
  %v122 = vld [vmem:[%s1 + $0x358] sm:$0xff]
  %v123 = vld [vmem:[%s1 + $0x360] sm:$0xff]
  %v124 = vld [vmem:[%s1 + $0x368] sm:$0xff]
  %v125 = vld [vmem:[%s1 + $0x370] sm:$0xff]
  %v126 = vld [vmem:[%s1 + $0x378] sm:$0xff]
  %v127 = vld [vmem:[%s1 + $0x380] sm:$0xff]
  %v128 = vld [vmem:[%s1 + $0x388] sm:$0xff]
  %v129 = vld [vmem:[%s1 + $0x390] sm:$0xff]
  %v130 = vld [vmem:[%s1 + $0x398] sm:$0xff]
  %v131 = vld [vmem:[%s1 + $0x3a0] sm:$0xff]
  %v132 = vld [vmem:[%s1 + $0x3a8] sm:$0xff]
  %v133 = vld [vmem:[%s1 + $0x3b0] sm:$0xff]
  %v134 = vld [vmem:[%s1 + $0x3b8] sm:$0xff]
  %v135 = vld [vmem:[%s1 + $0x3c0] sm:$0xff]
  %v136 = vld [vmem:[%s1 + $0x3c8] sm:$0xff]
  %v137 = vld [vmem:[%s1 + $0x3d0] sm:$0xff]
  %v138 = vld [vmem:[%s1 + $0x3d8] sm:$0xff]
  %v139 = vld [vmem:[%s1 + $0x3e0] sm:$0xff]
  %v140 = vld [vmem:[%s1 + $0x3e8] sm:$0xff]
  %v141 = vld [vmem:[%s1 + $0x3f0] sm:$0xff]
  %v142 = vld [vmem:[%s1 + $0x3f8] sm:$0xff]
  %v143 = vld [vmem:[%s1 + $0x400] sm:$0xff]
  %v144 = vld [vmem:[%s1 + $0x408] sm:$0xff]
  %v145 = vld [vmem:[%s1 + $0x410] sm:$0xff]
  %v146 = vld [vmem:[%s1 + $0x418] sm:$0xff]
  %v147 = vld [vmem:[%s1 + $0x420] sm:$0xff]
  %v148 = vld [vmem:[%s1 + $0x428] sm:$0xff]
  %v149 = vld [vmem:[%s1 + $0x430] sm:$0xff]
  %v150 = vld [vmem:[%s1 + $0x438] sm:$0xff]
  %v151 = vld [vmem:[%s1 + $0x440] sm:$0xff]
  %v152 = vld [vmem:[%s1 + $0x448] sm:$0xff]
  %v153 = vld [vmem:[%s1 + $0x450] sm:$0xff]
  %v154 = vld [vmem:[%s1 + $0x458] sm:$0xff]
  %v155 = vld [vmem:[%s1 + $0x460] sm:$0xff]
  %v156 = vld [vmem:[%s1 + $0x468] sm:$0xff]
  %v157 = vld [vmem:[%s1 + $0x470] sm:$0xff]
  %v158 = vld [vmem:[%s1 + $0x478] sm:$0xff]
  %v159 = vld [vmem:[%s1 + $0x480] sm:$0xff]
  %v160 = vld [vmem:[%s1 + $0x488] sm:$0xff]
  %v161 = vld [vmem:[%s1 + $0x490] sm:$0xff]
  %v162 = vld [vmem:[%s1 + $0x498] sm:$0xff]
  %v163 = vld [vmem:[%s1 + $0x4a0] sm:$0xff]
  %v164 = vld [vmem:[%s1 + $0x4a8] sm:$0xff]
  %v165 = vld [vmem:[%s1 + $0x4b0] sm:$0xff]
  %v166 = vld [vmem:[%s1 + $0x4b8] sm:$0xff]
  %v167 = vld [vmem:[%s1 + $0x4c0] sm:$0xff]
  %v168 = vld [vmem:[%s1 + $0x4c8] sm:$0xff]
  %v169 = vld [vmem:[%s1 + $0x4d0] sm:$0xff]
  %v170 = vld [vmem:[%s1 + $0x4d8] sm:$0xff]
  %v171 = vld [vmem:[%s1 + $0x4e0] sm:$0xff]
  %v172 = vld [vmem:[%s1 + $0x4e8] sm:$0xff]
  %v173 = vld [vmem:[%s1 + $0x4f0] sm:$0xff]
  %v174 = vld [vmem:[%s1 + $0x4f8] sm:$0xff]
  %v175 = vld [vmem:[%s1 + $0x500] sm:$0xff]
  %v176 = vld [vmem:[%s1 + $0x508] sm:$0xff]
  %v177 = vld [vmem:[%s1 + $0x510] sm:$0xff]
  %v178 = vld [vmem:[%s1 + $0x518] sm:$0xff]
  %v179 = vld [vmem:[%s1 + $0x520] sm:$0xff]
  %v180 = vld [vmem:[%s1 + $0x528] sm:$0xff]
  %v181 = vld [vmem:[%s1 + $0x530] sm:$0xff]
  %v182 = vld [vmem:[%s1 + $0x538] sm:$0xff]
  %v183 = vld [vmem:[%s1 + $0x540] sm:$0xff]
  %v184 = vld [vmem:[%s1 + $0x548] sm:$0xff]
  %v185 = vld [vmem:[%s1 + $0x550] sm:$0xff]
  %v186 = vld [vmem:[%s1 + $0x558] sm:$0xff]
  %v187 = vld [vmem:[%s1 + $0x560] sm:$0xff]
  %v188 = vld [vmem:[%s1 + $0x568] sm:$0xff]
  %v189 = vld [vmem:[%s1 + $0x570] sm:$0xff]
  %v190 = vld [vmem:[%s1 + $0x578] sm:$0xff]
  %v191 = vld [vmem:[%s1 + $0x580] sm:$0xff]
  %v192 = vld [vmem:[%s1 + $0x588] sm:$0xff]
  %v193 = vld [vmem:[%s1 + $0x590] sm:$0xff]
  %v194 = vld [vmem:[%s1 + $0x598] sm:$0xff]
  %v195 = vld [vmem:[%s1 + $0x5a0] sm:$0xff]
  %v196 = vld [vmem:[%s1 + $0x5a8] sm:$0xff]
  %v197 = vld [vmem:[%s1 + $0x5b0] sm:$0xff]
  %v198 = vld [vmem:[%s1 + $0x5b8] sm:$0xff]
  %v199 = vld [vmem:[%s1 + $0x5c0] sm:$0xff]
  %v200 = vld [vmem:[%s1 + $0x5c8] sm:$0xff]
  %v201 = vld [vmem:[%s1 + $0x5d0] sm:$0xff]
  %v202 = vld [vmem:[%s1 + $0x5d8] sm:$0xff]
  %v203 = vld [vmem:[%s1 + $0x5e0] sm:$0xff]
  %v204 = vld [vmem:[%s1 + $0x5e8] sm:$0xff]
  %v205 = vld [vmem:[%s1 + $0x5f0] sm:$0xff]
  %v206 = vld [vmem:[%s1 + $0x5f8] sm:$0xff]
  %v207 = vld [vmem:[%s1 + $0x600] sm:$0xff]
  %v208 = vld [vmem:[%s1 + $0x608] sm:$0xff]
  %v209 = vld [vmem:[%s1 + $0x610] sm:$0xff]
  %v210 = vld [vmem:[%s1 + $0x618] sm:$0xff]
  %v211 = vld [vmem:[%s1 + $0x620] sm:$0xff]
  %v212 = vld [vmem:[%s1 + $0x628] sm:$0xff]
  %v213 = vld [vmem:[%s1 + $0x630] sm:$0xff]
  %v214 = vld [vmem:[%s1 + $0x638] sm:$0xff]
  %v215 = vld [vmem:[%s1 + $0x640] sm:$0xff]
  %v216 = vld [vmem:[%s1 + $0x648] sm:$0xff]
  %v217 = vld [vmem:[%s1 + $0x650] sm:$0xff]
  %v218 = vld [vmem:[%s1 + $0x658] sm:$0xff]
  %v219 = vld [vmem:[%s1 + $0x660] sm:$0xff]
  %v220 = vld [vmem:[%s1 + $0x668] sm:$0xff]
  %v221 = vld [vmem:[%s1 + $0x670] sm:$0xff]
  %v222 = vld [vmem:[%s1 + $0x678] sm:$0xff]
  %v223 = vld [vmem:[%s1 + $0x680] sm:$0xff]
  %v224 = vld [vmem:[%s1 + $0x688] sm:$0xff]
  %v225 = vld [vmem:[%s1 + $0x690] sm:$0xff]
  %v226 = vld [vmem:[%s1 + $0x698] sm:$0xff]
  %v227 = vld [vmem:[%s1 + $0x6a0] sm:$0xff]
  %v228 = vld [vmem:[%s1 + $0x6a8] sm:$0xff]
  %v229 = vld [vmem:[%s1 + $0x6b0] sm:$0xff]
  %v230 = vld [vmem:[%s1 + $0x6b8] sm:$0xff]
  %v231 = vld [vmem:[%s1 + $0x6c0] sm:$0xff]
  %v232 = vld [vmem:[%s1 + $0x6c8] sm:$0xff]
  %v233 = vld [vmem:[%s1 + $0x6d0] sm:$0xff]
  %v234 = vld [vmem:[%s1 + $0x6d8] sm:$0xff]
  %v235 = vld [vmem:[%s1 + $0x6e0] sm:$0xff]
  %v236 = vld [vmem:[%s1 + $0x6e8] sm:$0xff]
  %v237 = vld [vmem:[%s1 + $0x6f0] sm:$0xff]
  %v238 = vld [vmem:[%s1 + $0x6f8] sm:$0xff]
  %v239 = vld [vmem:[%s1 + $0x700] sm:$0xff]
  %v240 = vld [vmem:[%s1 + $0x708] sm:$0xff]
  %v241 = vld [vmem:[%s1 + $0x710] sm:$0xff]
  %v242 = vld [vmem:[%s1 + $0x718] sm:$0xff]
  %v243 = vld [vmem:[%s1 + $0x720] sm:$0xff]
  %v244 = vld [vmem:[%s1 + $0x728] sm:$0xff]
  %v245 = vld [vmem:[%s1 + $0x730] sm:$0xff]
  %v246 = vld [vmem:[%s1 + $0x738] sm:$0xff]
  %v247 = vld [vmem:[%s1 + $0x740] sm:$0xff]
  %v248 = vld [vmem:[%s1 + $0x748] sm:$0xff]
  %v249 = vld [vmem:[%s1 + $0x750] sm:$0xff]
  %v250 = vld [vmem:[%s1 + $0x758] sm:$0xff]
  %v251 = vld [vmem:[%s1 + $0x760] sm:$0xff]
  %v252 = vld [vmem:[%s1 + $0x768] sm:$0xff]
  %v253 = vld [vmem:[%s1 + $0x770] sm:$0xff]
  %v254 = vld [vmem:[%s1 + $0x778] sm:$0xff]
  %v255 = vld [vmem:[%s1 + $0x780] sm:$0xff]
  %v256 = vld [vmem:[%s1 + $0x788] sm:$0xff]
  %v257 = vld [vmem:[%s1 + $0x790] sm:$0xff]
  %v258 = vld [vmem:[%s1 + $0x798] sm:$0xff]
  %v259 = vld [vmem:[%s1 + $0x7a0] sm:$0xff]
  %v260 = vld [vmem:[%s1 + $0x7a8] sm:$0xff]
  %v261 = vld [vmem:[%s1 + $0x7b0] sm:$0xff]
  %v262 = vld [vmem:[%s1 + $0x7b8] sm:$0xff]
  %v263 = vld [vmem:[%s1 + $0x7c0] sm:$0xff]
  %v264 = vld [vmem:[%s1 + $0x7c8] sm:$0xff]
  %v265 = vld [vmem:[%s1 + $0x7d0] sm:$0xff]
  %v266 = vld [vmem:[%s1 + $0x7d8] sm:$0xff]
  %v267 = vld [vmem:[%s1 + $0x7e0] sm:$0xff]
  %v268 = vld [vmem:[%s1 + $0x7e8] sm:$0xff]
  %v269 = vld [vmem:[%s1 + $0x7f0] sm:$0xff]
  %v270 = vld [vmem:[%s1 + $0x7f8] sm:$0xff]
  %v271 = vld [vmem:[%s2] sm:$0xff]
  %v272 = vld [vmem:[%s2 + $0x8] sm:$0xff]
  %v275 = vlaneseq
  %v276 = vshrl.u32 %v275, 7
  %v277 = vsub.s32 0, %v276
  %v278 = vrot.slane %v271, %v277
  %v279 = vlaneseq
  %v280 = vshrl.u32 %v279, 7
  %v281 = vsub.s32 1, %v280
  %v282 = vrot.slane %v271, %v281
  %v283 = vlaneseq
  %v284 = vshrl.u32 %v283, 7
  %v285 = vsub.s32 2, %v284
  %v286 = vrot.slane %v271, %v285
  %v287 = vlaneseq
  %v288 = vshrl.u32 %v287, 7
  %v289 = vsub.s32 3, %v288
  %v290 = vrot.slane %v271, %v289
  %v291 = vlaneseq
  %v292 = vshrl.u32 %v291, 7
  %v293 = vsub.s32 4, %v292
  %v294 = vrot.slane %v271, %v293
  %v295 = vlaneseq
  %v296 = vshrl.u32 %v295, 7
  %v297 = vsub.s32 5, %v296
  %v298 = vrot.slane %v271, %v297
  %v299 = vlaneseq
  %v300 = vshrl.u32 %v299, 7
  %v301 = vsub.s32 6, %v300
  %v302 = vrot.slane %v271, %v301
  %v303 = vlaneseq
  %v304 = vshrl.u32 %v303, 7
  %v305 = vsub.s32 7, %v304
  %v306 = vrot.slane %v271, %v305
  %v307 = vlaneseq
  %v308 = vshrl.u32 %v307, 7
  %v309 = vsub.s32 0, %v308
  %v310 = vrot.slane %v272, %v309
  %v311 = vlaneseq
  %v312 = vshrl.u32 %v311, 7
  %v313 = vsub.s32 1, %v312
  %v314 = vrot.slane %v272, %v313
  %v315 = vlaneseq
  %v316 = vshrl.u32 %v315, 7
  %v317 = vsub.s32 2, %v316
  %v318 = vrot.slane %v272, %v317
  %v319 = vlaneseq
  %v320 = vshrl.u32 %v319, 7
  %v321 = vsub.s32 3, %v320
  %v322 = vrot.slane %v272, %v321
  %v323 = vlaneseq
  %v324 = vshrl.u32 %v323, 7
  %v325 = vsub.s32 4, %v324
  %v326 = vrot.slane %v272, %v325
  %v327 = vlaneseq
  %v328 = vshrl.u32 %v327, 7
  %v329 = vsub.s32 5, %v328
  %v330 = vrot.slane %v272, %v329
  %v331 = vlaneseq
  %v332 = vshrl.u32 %v331, 7
  %v333 = vsub.s32 6, %v332
  %v334 = vrot.slane %v272, %v333
  %v335 = vlaneseq
  %v336 = vshrl.u32 %v335, 7
  %v337 = vsub.s32 7, %v336
  %v338 = vrot.slane %v272, %v337
  %v357 = vunpack.c.l.s4 1966171168
  %v358 = vunpack.c.0.s8 %v357
  %v359 = vlaneseq
  %v360 = vshrl.u32 %v359, 7
  %v361 = vsub.s32 %v358, %v360
  %v362 = vrot.slane %v14, %v361
  %v363 = vcombine.high %v362, %v362
  %v365 = vunpack.c.l.s4 1966171168
  %v366 = vunpack.c.0.s8 %v365
  %v367 = vlaneseq
  %v368 = vshrl.u32 %v367, 7
  %v369 = vsub.s32 %v366, %v368
  %v370 = vrot.slane %v362, %v369
  %v372 = vunpack.c.l.s4 1966171168
  %v373 = vunpack.c.0.s8 %v372
  %v374 = vlaneseq
  %v375 = vshrl.u32 %v374, 7
  %v376 = vsub.s32 %v373, %v375
  %v377 = vrot.slane %v363, %v376
  %v636 = vunpack.c.l.b16 %v15
  %v637 = vunpack.c.h.b16 %v15
  %v638 = vunpack.c.l.b16 %v16
  %v639 = vunpack.c.h.b16 %v16
  %v640 = vunpack.c.l.b16 %v17
  %v641 = vunpack.c.h.b16 %v17
  %v642 = vunpack.c.l.b16 %v18
  %v643 = vunpack.c.h.b16 %v18
  %v644 = vunpack.c.l.b16 %v19
  %v645 = vunpack.c.h.b16 %v19
  %v646 = vunpack.c.l.b16 %v20
  %v647 = vunpack.c.h.b16 %v20
  %v648 = vunpack.c.l.b16 %v21
  %v649 = vunpack.c.h.b16 %v21
  %v650 = vunpack.c.l.b16 %v22
  %v651 = vunpack.c.h.b16 %v22
  %v652 = vunpack.c.l.b16 %v23
  %v653 = vunpack.c.h.b16 %v23
  %v654 = vunpack.c.l.b16 %v24
  %v655 = vunpack.c.h.b16 %v24
  %v656 = vunpack.c.l.b16 %v25
  %v657 = vunpack.c.h.b16 %v25
  %v658 = vunpack.c.l.b16 %v26
  %v659 = vunpack.c.h.b16 %v26
  %v660 = vunpack.c.l.b16 %v27
  %v661 = vunpack.c.h.b16 %v27
  %v662 = vunpack.c.l.b16 %v28
  %v663 = vunpack.c.h.b16 %v28
  %v664 = vunpack.c.l.b16 %v29
  %v665 = vunpack.c.h.b16 %v29
  %v666 = vunpack.c.l.b16 %v30
  %v667 = vunpack.c.h.b16 %v30
  %v668 = vunpack.c.l.b16 %v31
  %v669 = vunpack.c.h.b16 %v31
  %v670 = vunpack.c.l.b16 %v32
  %v671 = vunpack.c.h.b16 %v32
  %v672 = vunpack.c.l.b16 %v33
  %v673 = vunpack.c.h.b16 %v33
  %v674 = vunpack.c.l.b16 %v34
  %v675 = vunpack.c.h.b16 %v34
  %v676 = vunpack.c.l.b16 %v35
  %v677 = vunpack.c.h.b16 %v35
  %v678 = vunpack.c.l.b16 %v36
  %v679 = vunpack.c.h.b16 %v36
  %v680 = vunpack.c.l.b16 %v37
  %v681 = vunpack.c.h.b16 %v37
  %v682 = vunpack.c.l.b16 %v38
  %v683 = vunpack.c.h.b16 %v38
  %v684 = vunpack.c.l.b16 %v39
  %v685 = vunpack.c.h.b16 %v39
  %v686 = vunpack.c.l.b16 %v40
  %v687 = vunpack.c.h.b16 %v40
  %v688 = vunpack.c.l.b16 %v41
  %v689 = vunpack.c.h.b16 %v41
  %v690 = vunpack.c.l.b16 %v42
  %v691 = vunpack.c.h.b16 %v42
  %v692 = vunpack.c.l.b16 %v43
  %v693 = vunpack.c.h.b16 %v43
  %v694 = vunpack.c.l.b16 %v44
  %v695 = vunpack.c.h.b16 %v44
  %v696 = vunpack.c.l.b16 %v45
  %v697 = vunpack.c.h.b16 %v45
  %v698 = vunpack.c.l.b16 %v46
  %v699 = vunpack.c.h.b16 %v46
  %v700 = vunpack.c.l.b16 %v47
  %v701 = vunpack.c.h.b16 %v47
  %v702 = vunpack.c.l.b16 %v48
  %v703 = vunpack.c.h.b16 %v48
  %v704 = vunpack.c.l.b16 %v49
  %v705 = vunpack.c.h.b16 %v49
  %v706 = vunpack.c.l.b16 %v50
  %v707 = vunpack.c.h.b16 %v50
  %v708 = vunpack.c.l.b16 %v51
  %v709 = vunpack.c.h.b16 %v51
  %v710 = vunpack.c.l.b16 %v52
  %v711 = vunpack.c.h.b16 %v52
  %v712 = vunpack.c.l.b16 %v53
  %v713 = vunpack.c.h.b16 %v53
  %v714 = vunpack.c.l.b16 %v54
  %v715 = vunpack.c.h.b16 %v54
  %v716 = vunpack.c.l.b16 %v55
  %v717 = vunpack.c.h.b16 %v55
  %v718 = vunpack.c.l.b16 %v56
  %v719 = vunpack.c.h.b16 %v56
  %v720 = vunpack.c.l.b16 %v57
  %v721 = vunpack.c.h.b16 %v57
  %v722 = vunpack.c.l.b16 %v58
  %v723 = vunpack.c.h.b16 %v58
  %v724 = vunpack.c.l.b16 %v59
  %v725 = vunpack.c.h.b16 %v59
  %v726 = vunpack.c.l.b16 %v60
  %v727 = vunpack.c.h.b16 %v60
  %v728 = vunpack.c.l.b16 %v61
  %v729 = vunpack.c.h.b16 %v61
  %v730 = vunpack.c.l.b16 %v62
  %v731 = vunpack.c.h.b16 %v62
  %v732 = vunpack.c.l.b16 %v63
  %v733 = vunpack.c.h.b16 %v63
  %v734 = vunpack.c.l.b16 %v64
  %v735 = vunpack.c.h.b16 %v64
  %v736 = vunpack.c.l.b16 %v65
  %v737 = vunpack.c.h.b16 %v65
  %v738 = vunpack.c.l.b16 %v66
  %v739 = vunpack.c.h.b16 %v66
  %v740 = vunpack.c.l.b16 %v67
  %v741 = vunpack.c.h.b16 %v67
  %v742 = vunpack.c.l.b16 %v68
  %v743 = vunpack.c.h.b16 %v68
  %v744 = vunpack.c.l.b16 %v69
  %v745 = vunpack.c.h.b16 %v69
  %v746 = vunpack.c.l.b16 %v70
  %v747 = vunpack.c.h.b16 %v70
  %v748 = vunpack.c.l.b16 %v71
  %v749 = vunpack.c.h.b16 %v71
  %v750 = vunpack.c.l.b16 %v72
  %v751 = vunpack.c.h.b16 %v72
  %v752 = vunpack.c.l.b16 %v73
  %v753 = vunpack.c.h.b16 %v73
  %v754 = vunpack.c.l.b16 %v74
  %v755 = vunpack.c.h.b16 %v74
  %v756 = vunpack.c.l.b16 %v75
  %v757 = vunpack.c.h.b16 %v75
  %v758 = vunpack.c.l.b16 %v76
  %v759 = vunpack.c.h.b16 %v76
  %v760 = vunpack.c.l.b16 %v77
  %v761 = vunpack.c.h.b16 %v77
  %v762 = vunpack.c.l.b16 %v78
  %v763 = vunpack.c.h.b16 %v78
  %v764 = vunpack.c.l.b16 %v79
  %v765 = vunpack.c.h.b16 %v79
  %v766 = vunpack.c.l.b16 %v80
  %v767 = vunpack.c.h.b16 %v80
  %v768 = vunpack.c.l.b16 %v81
  %v769 = vunpack.c.h.b16 %v81
  %v770 = vunpack.c.l.b16 %v82
  %v771 = vunpack.c.h.b16 %v82
  %v772 = vunpack.c.l.b16 %v83
  %v773 = vunpack.c.h.b16 %v83
  %v774 = vunpack.c.l.b16 %v84
  %v775 = vunpack.c.h.b16 %v84
  %v776 = vunpack.c.l.b16 %v85
  %v777 = vunpack.c.h.b16 %v85
  %v778 = vunpack.c.l.b16 %v86
  %v779 = vunpack.c.h.b16 %v86
  %v780 = vunpack.c.l.b16 %v87
  %v781 = vunpack.c.h.b16 %v87
  %v782 = vunpack.c.l.b16 %v88
  %v783 = vunpack.c.h.b16 %v88
  %v784 = vunpack.c.l.b16 %v89
  %v785 = vunpack.c.h.b16 %v89
  %v786 = vunpack.c.l.b16 %v90
  %v787 = vunpack.c.h.b16 %v90
  %v788 = vunpack.c.l.b16 %v91
  %v789 = vunpack.c.h.b16 %v91
  %v790 = vunpack.c.l.b16 %v92
  %v791 = vunpack.c.h.b16 %v92
  %v792 = vunpack.c.l.b16 %v93
  %v793 = vunpack.c.h.b16 %v93
  %v794 = vunpack.c.l.b16 %v94
  %v795 = vunpack.c.h.b16 %v94
  %v796 = vunpack.c.l.b16 %v95
  %v797 = vunpack.c.h.b16 %v95
  %v798 = vunpack.c.l.b16 %v96
  %v799 = vunpack.c.h.b16 %v96
  %v800 = vunpack.c.l.b16 %v97
  %v801 = vunpack.c.h.b16 %v97
  %v802 = vunpack.c.l.b16 %v98
  %v803 = vunpack.c.h.b16 %v98
  %v804 = vunpack.c.l.b16 %v99
  %v805 = vunpack.c.h.b16 %v99
  %v806 = vunpack.c.l.b16 %v100
  %v807 = vunpack.c.h.b16 %v100
  %v808 = vunpack.c.l.b16 %v101
  %v809 = vunpack.c.h.b16 %v101
  %v810 = vunpack.c.l.b16 %v102
  %v811 = vunpack.c.h.b16 %v102
  %v812 = vunpack.c.l.b16 %v103
  %v813 = vunpack.c.h.b16 %v103
  %v814 = vunpack.c.l.b16 %v104
  %v815 = vunpack.c.h.b16 %v104
  %v816 = vunpack.c.l.b16 %v105
  %v817 = vunpack.c.h.b16 %v105
  %v818 = vunpack.c.l.b16 %v106
  %v819 = vunpack.c.h.b16 %v106
  %v820 = vunpack.c.l.b16 %v107
  %v821 = vunpack.c.h.b16 %v107
  %v822 = vunpack.c.l.b16 %v108
  %v823 = vunpack.c.h.b16 %v108
  %v824 = vunpack.c.l.b16 %v109
  %v825 = vunpack.c.h.b16 %v109
  %v826 = vunpack.c.l.b16 %v110
  %v827 = vunpack.c.h.b16 %v110
  %v828 = vunpack.c.l.b16 %v111
  %v829 = vunpack.c.h.b16 %v111
  %v830 = vunpack.c.l.b16 %v112
  %v831 = vunpack.c.h.b16 %v112
  %v832 = vunpack.c.l.b16 %v113
  %v833 = vunpack.c.h.b16 %v113
  %v834 = vunpack.c.l.b16 %v114
  %v835 = vunpack.c.h.b16 %v114
  %v836 = vunpack.c.l.b16 %v115
  %v837 = vunpack.c.h.b16 %v115
  %v838 = vunpack.c.l.b16 %v116
  %v839 = vunpack.c.h.b16 %v116
  %v840 = vunpack.c.l.b16 %v117
  %v841 = vunpack.c.h.b16 %v117
  %v842 = vunpack.c.l.b16 %v118
  %v843 = vunpack.c.h.b16 %v118
  %v844 = vunpack.c.l.b16 %v119
  %v845 = vunpack.c.h.b16 %v119
  %v846 = vunpack.c.l.b16 %v120
  %v847 = vunpack.c.h.b16 %v120
  %v848 = vunpack.c.l.b16 %v121
  %v849 = vunpack.c.h.b16 %v121
  %v850 = vunpack.c.l.b16 %v122
  %v851 = vunpack.c.h.b16 %v122
  %v852 = vunpack.c.l.b16 %v123
  %v853 = vunpack.c.h.b16 %v123
  %v854 = vunpack.c.l.b16 %v124
  %v855 = vunpack.c.h.b16 %v124
  %v856 = vunpack.c.l.b16 %v125
  %v857 = vunpack.c.h.b16 %v125
  %v858 = vunpack.c.l.b16 %v126
  %v859 = vunpack.c.h.b16 %v126
  %v860 = vunpack.c.l.b16 %v127
  %v861 = vunpack.c.h.b16 %v127
  %v862 = vunpack.c.l.b16 %v128
  %v863 = vunpack.c.h.b16 %v128
  %v864 = vunpack.c.l.b16 %v129
  %v865 = vunpack.c.h.b16 %v129
  %v866 = vunpack.c.l.b16 %v130
  %v867 = vunpack.c.h.b16 %v130
  %v868 = vunpack.c.l.b16 %v131
  %v869 = vunpack.c.h.b16 %v131
  %v870 = vunpack.c.l.b16 %v132
  %v871 = vunpack.c.h.b16 %v132
  %v872 = vunpack.c.l.b16 %v133
  %v873 = vunpack.c.h.b16 %v133
  %v874 = vunpack.c.l.b16 %v134
  %v875 = vunpack.c.h.b16 %v134
  %v876 = vunpack.c.l.b16 %v135
  %v877 = vunpack.c.h.b16 %v135
  %v878 = vunpack.c.l.b16 %v136
  %v879 = vunpack.c.h.b16 %v136
  %v880 = vunpack.c.l.b16 %v137
  %v881 = vunpack.c.h.b16 %v137
  %v882 = vunpack.c.l.b16 %v138
  %v883 = vunpack.c.h.b16 %v138
  %v884 = vunpack.c.l.b16 %v139
  %v885 = vunpack.c.h.b16 %v139
  %v886 = vunpack.c.l.b16 %v140
  %v887 = vunpack.c.h.b16 %v140
  %v888 = vunpack.c.l.b16 %v141
  %v889 = vunpack.c.h.b16 %v141
  %v890 = vunpack.c.l.b16 %v142
  %v891 = vunpack.c.h.b16 %v142
  %v892 = vunpack.c.l.b16 %v143
  %v893 = vunpack.c.h.b16 %v143
  %v894 = vunpack.c.l.b16 %v144
  %v895 = vunpack.c.h.b16 %v144
  %v896 = vunpack.c.l.b16 %v145
  %v897 = vunpack.c.h.b16 %v145
  %v898 = vunpack.c.l.b16 %v146
  %v899 = vunpack.c.h.b16 %v146
  %v900 = vunpack.c.l.b16 %v147
  %v901 = vunpack.c.h.b16 %v147
  %v902 = vunpack.c.l.b16 %v148
  %v903 = vunpack.c.h.b16 %v148
  %v904 = vunpack.c.l.b16 %v149
  %v905 = vunpack.c.h.b16 %v149
  %v906 = vunpack.c.l.b16 %v150
  %v907 = vunpack.c.h.b16 %v150
  %v908 = vunpack.c.l.b16 %v151
  %v909 = vunpack.c.h.b16 %v151
  %v910 = vunpack.c.l.b16 %v152
  %v911 = vunpack.c.h.b16 %v152
  %v912 = vunpack.c.l.b16 %v153
  %v913 = vunpack.c.h.b16 %v153
  %v914 = vunpack.c.l.b16 %v154
  %v915 = vunpack.c.h.b16 %v154
  %v916 = vunpack.c.l.b16 %v155
  %v917 = vunpack.c.h.b16 %v155
  %v918 = vunpack.c.l.b16 %v156
  %v919 = vunpack.c.h.b16 %v156
  %v920 = vunpack.c.l.b16 %v157
  %v921 = vunpack.c.h.b16 %v157
  %v922 = vunpack.c.l.b16 %v158
  %v923 = vunpack.c.h.b16 %v158
  %v924 = vunpack.c.l.b16 %v159
  %v925 = vunpack.c.h.b16 %v159
  %v926 = vunpack.c.l.b16 %v160
  %v927 = vunpack.c.h.b16 %v160
  %v928 = vunpack.c.l.b16 %v161
  %v929 = vunpack.c.h.b16 %v161
  %v930 = vunpack.c.l.b16 %v162
  %v931 = vunpack.c.h.b16 %v162
  %v932 = vunpack.c.l.b16 %v163
  %v933 = vunpack.c.h.b16 %v163
  %v934 = vunpack.c.l.b16 %v164
  %v935 = vunpack.c.h.b16 %v164
  %v936 = vunpack.c.l.b16 %v165
  %v937 = vunpack.c.h.b16 %v165
  %v938 = vunpack.c.l.b16 %v166
  %v939 = vunpack.c.h.b16 %v166
  %v940 = vunpack.c.l.b16 %v167
  %v941 = vunpack.c.h.b16 %v167
  %v942 = vunpack.c.l.b16 %v168
  %v943 = vunpack.c.h.b16 %v168
  %v944 = vunpack.c.l.b16 %v169
  %v945 = vunpack.c.h.b16 %v169
  %v946 = vunpack.c.l.b16 %v170
  %v947 = vunpack.c.h.b16 %v170
  %v948 = vunpack.c.l.b16 %v171
  %v949 = vunpack.c.h.b16 %v171
  %v950 = vunpack.c.l.b16 %v172
  %v951 = vunpack.c.h.b16 %v172
  %v952 = vunpack.c.l.b16 %v173
  %v953 = vunpack.c.h.b16 %v173
  %v954 = vunpack.c.l.b16 %v174
  %v955 = vunpack.c.h.b16 %v174
  %v956 = vunpack.c.l.b16 %v175
  %v957 = vunpack.c.h.b16 %v175
  %v958 = vunpack.c.l.b16 %v176
  %v959 = vunpack.c.h.b16 %v176
  %v960 = vunpack.c.l.b16 %v177
  %v961 = vunpack.c.h.b16 %v177
  %v962 = vunpack.c.l.b16 %v178
  %v963 = vunpack.c.h.b16 %v178
  %v964 = vunpack.c.l.b16 %v179
  %v965 = vunpack.c.h.b16 %v179
  %v966 = vunpack.c.l.b16 %v180
  %v967 = vunpack.c.h.b16 %v180
  %v968 = vunpack.c.l.b16 %v181
  %v969 = vunpack.c.h.b16 %v181
  %v970 = vunpack.c.l.b16 %v182
  %v971 = vunpack.c.h.b16 %v182
  %v972 = vunpack.c.l.b16 %v183
  %v973 = vunpack.c.h.b16 %v183
  %v974 = vunpack.c.l.b16 %v184
  %v975 = vunpack.c.h.b16 %v184
  %v976 = vunpack.c.l.b16 %v185
  %v977 = vunpack.c.h.b16 %v185
  %v978 = vunpack.c.l.b16 %v186
  %v979 = vunpack.c.h.b16 %v186
  %v980 = vunpack.c.l.b16 %v187
  %v981 = vunpack.c.h.b16 %v187
  %v982 = vunpack.c.l.b16 %v188
  %v983 = vunpack.c.h.b16 %v188
  %v984 = vunpack.c.l.b16 %v189
  %v985 = vunpack.c.h.b16 %v189
  %v986 = vunpack.c.l.b16 %v190
  %v987 = vunpack.c.h.b16 %v190
  %v988 = vunpack.c.l.b16 %v191
  %v989 = vunpack.c.h.b16 %v191
  %v990 = vunpack.c.l.b16 %v192
  %v991 = vunpack.c.h.b16 %v192
  %v992 = vunpack.c.l.b16 %v193
  %v993 = vunpack.c.h.b16 %v193
  %v994 = vunpack.c.l.b16 %v194
  %v995 = vunpack.c.h.b16 %v194
  %v996 = vunpack.c.l.b16 %v195
  %v997 = vunpack.c.h.b16 %v195
  %v998 = vunpack.c.l.b16 %v196
  %v999 = vunpack.c.h.b16 %v196
  %v1000 = vunpack.c.l.b16 %v197
  %v1001 = vunpack.c.h.b16 %v197
  %v1002 = vunpack.c.l.b16 %v198
  %v1003 = vunpack.c.h.b16 %v198
  %v1004 = vunpack.c.l.b16 %v199
  %v1005 = vunpack.c.h.b16 %v199
  %v1006 = vunpack.c.l.b16 %v200
  %v1007 = vunpack.c.h.b16 %v200
  %v1008 = vunpack.c.l.b16 %v201
  %v1009 = vunpack.c.h.b16 %v201
  %v1010 = vunpack.c.l.b16 %v202
  %v1011 = vunpack.c.h.b16 %v202
  %v1012 = vunpack.c.l.b16 %v203
  %v1013 = vunpack.c.h.b16 %v203
  %v1014 = vunpack.c.l.b16 %v204
  %v1015 = vunpack.c.h.b16 %v204
  %v1016 = vunpack.c.l.b16 %v205
  %v1017 = vunpack.c.h.b16 %v205
  %v1018 = vunpack.c.l.b16 %v206
  %v1019 = vunpack.c.h.b16 %v206
  %v1020 = vunpack.c.l.b16 %v207
  %v1021 = vunpack.c.h.b16 %v207
  %v1022 = vunpack.c.l.b16 %v208
  %v1023 = vunpack.c.h.b16 %v208
  %v1024 = vunpack.c.l.b16 %v209
  %v1025 = vunpack.c.h.b16 %v209
  %v1026 = vunpack.c.l.b16 %v210
  %v1027 = vunpack.c.h.b16 %v210
  %v1028 = vunpack.c.l.b16 %v211
  %v1029 = vunpack.c.h.b16 %v211
  %v1030 = vunpack.c.l.b16 %v212
  %v1031 = vunpack.c.h.b16 %v212
  %v1032 = vunpack.c.l.b16 %v213
  %v1033 = vunpack.c.h.b16 %v213
  %v1034 = vunpack.c.l.b16 %v214
  %v1035 = vunpack.c.h.b16 %v214
  %v1036 = vunpack.c.l.b16 %v215
  %v1037 = vunpack.c.h.b16 %v215
  %v1038 = vunpack.c.l.b16 %v216
  %v1039 = vunpack.c.h.b16 %v216
  %v1040 = vunpack.c.l.b16 %v217
  %v1041 = vunpack.c.h.b16 %v217
  %v1042 = vunpack.c.l.b16 %v218
  %v1043 = vunpack.c.h.b16 %v218
  %v1044 = vunpack.c.l.b16 %v219
  %v1045 = vunpack.c.h.b16 %v219
  %v1046 = vunpack.c.l.b16 %v220
  %v1047 = vunpack.c.h.b16 %v220
  %v1048 = vunpack.c.l.b16 %v221
  %v1049 = vunpack.c.h.b16 %v221
  %v1050 = vunpack.c.l.b16 %v222
  %v1051 = vunpack.c.h.b16 %v222
  %v1052 = vunpack.c.l.b16 %v223
  %v1053 = vunpack.c.h.b16 %v223
  %v1054 = vunpack.c.l.b16 %v224
  %v1055 = vunpack.c.h.b16 %v224
  %v1056 = vunpack.c.l.b16 %v225
  %v1057 = vunpack.c.h.b16 %v225
  %v1058 = vunpack.c.l.b16 %v226
  %v1059 = vunpack.c.h.b16 %v226
  %v1060 = vunpack.c.l.b16 %v227
  %v1061 = vunpack.c.h.b16 %v227
  %v1062 = vunpack.c.l.b16 %v228
  %v1063 = vunpack.c.h.b16 %v228
  %v1064 = vunpack.c.l.b16 %v229
  %v1065 = vunpack.c.h.b16 %v229
  %v1066 = vunpack.c.l.b16 %v230
  %v1067 = vunpack.c.h.b16 %v230
  %v1068 = vunpack.c.l.b16 %v231
  %v1069 = vunpack.c.h.b16 %v231
  %v1070 = vunpack.c.l.b16 %v232
  %v1071 = vunpack.c.h.b16 %v232
  %v1072 = vunpack.c.l.b16 %v233
  %v1073 = vunpack.c.h.b16 %v233
  %v1074 = vunpack.c.l.b16 %v234
  %v1075 = vunpack.c.h.b16 %v234
  %v1076 = vunpack.c.l.b16 %v235
  %v1077 = vunpack.c.h.b16 %v235
  %v1078 = vunpack.c.l.b16 %v236
  %v1079 = vunpack.c.h.b16 %v236
  %v1080 = vunpack.c.l.b16 %v237
  %v1081 = vunpack.c.h.b16 %v237
  %v1082 = vunpack.c.l.b16 %v238
  %v1083 = vunpack.c.h.b16 %v238
  %v1084 = vunpack.c.l.b16 %v239
  %v1085 = vunpack.c.h.b16 %v239
  %v1086 = vunpack.c.l.b16 %v240
  %v1087 = vunpack.c.h.b16 %v240
  %v1088 = vunpack.c.l.b16 %v241
  %v1089 = vunpack.c.h.b16 %v241
  %v1090 = vunpack.c.l.b16 %v242
  %v1091 = vunpack.c.h.b16 %v242
  %v1092 = vunpack.c.l.b16 %v243
  %v1093 = vunpack.c.h.b16 %v243
  %v1094 = vunpack.c.l.b16 %v244
  %v1095 = vunpack.c.h.b16 %v244
  %v1096 = vunpack.c.l.b16 %v245
  %v1097 = vunpack.c.h.b16 %v245
  %v1098 = vunpack.c.l.b16 %v246
  %v1099 = vunpack.c.h.b16 %v246
  %v1100 = vunpack.c.l.b16 %v247
  %v1101 = vunpack.c.h.b16 %v247
  %v1102 = vunpack.c.l.b16 %v248
  %v1103 = vunpack.c.h.b16 %v248
  %v1104 = vunpack.c.l.b16 %v249
  %v1105 = vunpack.c.h.b16 %v249
  %v1106 = vunpack.c.l.b16 %v250
  %v1107 = vunpack.c.h.b16 %v250
  %v1108 = vunpack.c.l.b16 %v251
  %v1109 = vunpack.c.h.b16 %v251
  %v1110 = vunpack.c.l.b16 %v252
  %v1111 = vunpack.c.h.b16 %v252
  %v1112 = vunpack.c.l.b16 %v253
  %v1113 = vunpack.c.h.b16 %v253
  %v1114 = vunpack.c.l.b16 %v254
  %v1115 = vunpack.c.h.b16 %v254
  %v1116 = vunpack.c.l.b16 %v255
  %v1117 = vunpack.c.h.b16 %v255
  %v1118 = vunpack.c.l.b16 %v256
  %v1119 = vunpack.c.h.b16 %v256
  %v1120 = vunpack.c.l.b16 %v257
  %v1121 = vunpack.c.h.b16 %v257
  %v1122 = vunpack.c.l.b16 %v258
  %v1123 = vunpack.c.h.b16 %v258
  %v1124 = vunpack.c.l.b16 %v259
  %v1125 = vunpack.c.h.b16 %v259
  %v1126 = vunpack.c.l.b16 %v260
  %v1127 = vunpack.c.h.b16 %v260
  %v1128 = vunpack.c.l.b16 %v261
  %v1129 = vunpack.c.h.b16 %v261
  %v1130 = vunpack.c.l.b16 %v262
  %v1131 = vunpack.c.h.b16 %v262
  %v1132 = vunpack.c.l.b16 %v263
  %v1133 = vunpack.c.h.b16 %v263
  %v1134 = vunpack.c.l.b16 %v264
  %v1135 = vunpack.c.h.b16 %v264
  %v1136 = vunpack.c.l.b16 %v265
  %v1137 = vunpack.c.h.b16 %v265
  %v1138 = vunpack.c.l.b16 %v266
  %v1139 = vunpack.c.h.b16 %v266
  %v1140 = vunpack.c.l.b16 %v267
  %v1141 = vunpack.c.h.b16 %v267
  %v1142 = vunpack.c.l.b16 %v268
  %v1143 = vunpack.c.h.b16 %v268
  %v1144 = vunpack.c.l.b16 %v269
  %v1145 = vunpack.c.h.b16 %v269
  %v1146 = vunpack.c.l.b16 %v270
  %v1147 = vunpack.c.h.b16 %v270
  %v1148 = vpack.c.b16 %v652, %v636
  %v1149 = vpack.c.b16 %v653, %v637
  %v1150 = vpack.c.b16 %v654, %v638
  %v1151 = vpack.c.b16 %v655, %v639
  %v1152 = vpack.c.b16 %v656, %v640
  %v1153 = vpack.c.b16 %v657, %v641
  %v1154 = vpack.c.b16 %v658, %v642
  %v1155 = vpack.c.b16 %v659, %v643
  %v1156 = vpack.c.b16 %v660, %v644
  %v1157 = vpack.c.b16 %v661, %v645
  %v1158 = vpack.c.b16 %v662, %v646
  %v1159 = vpack.c.b16 %v663, %v647
  %v1160 = vpack.c.b16 %v664, %v648
  %v1161 = vpack.c.b16 %v665, %v649
  %v1162 = vpack.c.b16 %v666, %v650
  %v1163 = vpack.c.b16 %v667, %v651
  %v1164 = vpack.c.b16 %v684, %v668
  %v1165 = vpack.c.b16 %v685, %v669
  %v1166 = vpack.c.b16 %v686, %v670
  %v1167 = vpack.c.b16 %v687, %v671
  %v1168 = vpack.c.b16 %v688, %v672
  %v1169 = vpack.c.b16 %v689, %v673
  %v1170 = vpack.c.b16 %v690, %v674
  %v1171 = vpack.c.b16 %v691, %v675
  %v1172 = vpack.c.b16 %v692, %v676
  %v1173 = vpack.c.b16 %v693, %v677
  %v1174 = vpack.c.b16 %v694, %v678
  %v1175 = vpack.c.b16 %v695, %v679
  %v1176 = vpack.c.b16 %v696, %v680
  %v1177 = vpack.c.b16 %v697, %v681
  %v1178 = vpack.c.b16 %v698, %v682
  %v1179 = vpack.c.b16 %v699, %v683
  %v1180 = vpack.c.b16 %v716, %v700
  %v1181 = vpack.c.b16 %v717, %v701
  %v1182 = vpack.c.b16 %v718, %v702
  %v1183 = vpack.c.b16 %v719, %v703
  %v1184 = vpack.c.b16 %v720, %v704
  %v1185 = vpack.c.b16 %v721, %v705
  %v1186 = vpack.c.b16 %v722, %v706
  %v1187 = vpack.c.b16 %v723, %v707
  %v1188 = vpack.c.b16 %v724, %v708
  %v1189 = vpack.c.b16 %v725, %v709
  %v1190 = vpack.c.b16 %v726, %v710
  %v1191 = vpack.c.b16 %v727, %v711
  %v1192 = vpack.c.b16 %v728, %v712
  %v1193 = vpack.c.b16 %v729, %v713
  %v1194 = vpack.c.b16 %v730, %v714
  %v1195 = vpack.c.b16 %v731, %v715
  %v1196 = vpack.c.b16 %v748, %v732
  %v1197 = vpack.c.b16 %v749, %v733
  %v1198 = vpack.c.b16 %v750, %v734
  %v1199 = vpack.c.b16 %v751, %v735
  %v1200 = vpack.c.b16 %v752, %v736
  %v1201 = vpack.c.b16 %v753, %v737
  %v1202 = vpack.c.b16 %v754, %v738
  %v1203 = vpack.c.b16 %v755, %v739
  %v1204 = vpack.c.b16 %v756, %v740
  %v1205 = vpack.c.b16 %v757, %v741
  %v1206 = vpack.c.b16 %v758, %v742
  %v1207 = vpack.c.b16 %v759, %v743
  %v1208 = vpack.c.b16 %v760, %v744
  %v1209 = vpack.c.b16 %v761, %v745
  %v1210 = vpack.c.b16 %v762, %v746
  %v1211 = vpack.c.b16 %v763, %v747
  %v1212 = vpack.c.b16 %v780, %v764
  %v1213 = vpack.c.b16 %v781, %v765
  %v1214 = vpack.c.b16 %v782, %v766
  %v1215 = vpack.c.b16 %v783, %v767
  %v1216 = vpack.c.b16 %v784, %v768
  %v1217 = vpack.c.b16 %v785, %v769
  %v1218 = vpack.c.b16 %v786, %v770
  %v1219 = vpack.c.b16 %v787, %v771
  %v1220 = vpack.c.b16 %v788, %v772
  %v1221 = vpack.c.b16 %v789, %v773
  %v1222 = vpack.c.b16 %v790, %v774
  %v1223 = vpack.c.b16 %v791, %v775
  %v1224 = vpack.c.b16 %v792, %v776
  %v1225 = vpack.c.b16 %v793, %v777
  %v1226 = vpack.c.b16 %v794, %v778
  %v1227 = vpack.c.b16 %v795, %v779
  %v1228 = vpack.c.b16 %v812, %v796
  %v1229 = vpack.c.b16 %v813, %v797
  %v1230 = vpack.c.b16 %v814, %v798
  %v1231 = vpack.c.b16 %v815, %v799
  %v1232 = vpack.c.b16 %v816, %v800
  %v1233 = vpack.c.b16 %v817, %v801
  %v1234 = vpack.c.b16 %v818, %v802
  %v1235 = vpack.c.b16 %v819, %v803
  %v1236 = vpack.c.b16 %v820, %v804
  %v1237 = vpack.c.b16 %v821, %v805
  %v1238 = vpack.c.b16 %v822, %v806
  %v1239 = vpack.c.b16 %v823, %v807
  %v1240 = vpack.c.b16 %v824, %v808
  %v1241 = vpack.c.b16 %v825, %v809
  %v1242 = vpack.c.b16 %v826, %v810
  %v1243 = vpack.c.b16 %v827, %v811
  %v1244 = vpack.c.b16 %v844, %v828
  %v1245 = vpack.c.b16 %v845, %v829
  %v1246 = vpack.c.b16 %v846, %v830
  %v1247 = vpack.c.b16 %v847, %v831
  %v1248 = vpack.c.b16 %v848, %v832
  %v1249 = vpack.c.b16 %v849, %v833
  %v1250 = vpack.c.b16 %v850, %v834
  %v1251 = vpack.c.b16 %v851, %v835
  %v1252 = vpack.c.b16 %v852, %v836
  %v1253 = vpack.c.b16 %v853, %v837
  %v1254 = vpack.c.b16 %v854, %v838
  %v1255 = vpack.c.b16 %v855, %v839
  %v1256 = vpack.c.b16 %v856, %v840
  %v1257 = vpack.c.b16 %v857, %v841
  %v1258 = vpack.c.b16 %v858, %v842
  %v1259 = vpack.c.b16 %v859, %v843
  %v1260 = vpack.c.b16 %v876, %v860
  %v1261 = vpack.c.b16 %v877, %v861
  %v1262 = vpack.c.b16 %v878, %v862
  %v1263 = vpack.c.b16 %v879, %v863
  %v1264 = vpack.c.b16 %v880, %v864
  %v1265 = vpack.c.b16 %v881, %v865
  %v1266 = vpack.c.b16 %v882, %v866
  %v1267 = vpack.c.b16 %v883, %v867
  %v1268 = vpack.c.b16 %v884, %v868
  %v1269 = vpack.c.b16 %v885, %v869
  %v1270 = vpack.c.b16 %v886, %v870
  %v1271 = vpack.c.b16 %v887, %v871
  %v1272 = vpack.c.b16 %v888, %v872
  %v1273 = vpack.c.b16 %v889, %v873
  %v1274 = vpack.c.b16 %v890, %v874
  %v1275 = vpack.c.b16 %v891, %v875
  %v1276 = vpack.c.b16 %v908, %v892
  %v1277 = vpack.c.b16 %v909, %v893
  %v1278 = vpack.c.b16 %v910, %v894
  %v1279 = vpack.c.b16 %v911, %v895
  %v1280 = vpack.c.b16 %v912, %v896
  %v1281 = vpack.c.b16 %v913, %v897
  %v1282 = vpack.c.b16 %v914, %v898
  %v1283 = vpack.c.b16 %v915, %v899
  %v1284 = vpack.c.b16 %v916, %v900
  %v1285 = vpack.c.b16 %v917, %v901
  %v1286 = vpack.c.b16 %v918, %v902
  %v1287 = vpack.c.b16 %v919, %v903
  %v1288 = vpack.c.b16 %v920, %v904
  %v1289 = vpack.c.b16 %v921, %v905
  %v1290 = vpack.c.b16 %v922, %v906
  %v1291 = vpack.c.b16 %v923, %v907
  %v1292 = vpack.c.b16 %v940, %v924
  %v1293 = vpack.c.b16 %v941, %v925
  %v1294 = vpack.c.b16 %v942, %v926
  %v1295 = vpack.c.b16 %v943, %v927
  %v1296 = vpack.c.b16 %v944, %v928
  %v1297 = vpack.c.b16 %v945, %v929
  %v1298 = vpack.c.b16 %v946, %v930
  %v1299 = vpack.c.b16 %v947, %v931
  %v1300 = vpack.c.b16 %v948, %v932
  %v1301 = vpack.c.b16 %v949, %v933
  %v1302 = vpack.c.b16 %v950, %v934
  %v1303 = vpack.c.b16 %v951, %v935
  %v1304 = vpack.c.b16 %v952, %v936
  %v1305 = vpack.c.b16 %v953, %v937
  %v1306 = vpack.c.b16 %v954, %v938
  %v1307 = vpack.c.b16 %v955, %v939
  %v1308 = vpack.c.b16 %v972, %v956
  %v1309 = vpack.c.b16 %v973, %v957
  %v1310 = vpack.c.b16 %v974, %v958
  %v1311 = vpack.c.b16 %v975, %v959
  %v1312 = vpack.c.b16 %v976, %v960
  %v1313 = vpack.c.b16 %v977, %v961
  %v1314 = vpack.c.b16 %v978, %v962
  %v1315 = vpack.c.b16 %v979, %v963
  %v1316 = vpack.c.b16 %v980, %v964
  %v1317 = vpack.c.b16 %v981, %v965
  %v1318 = vpack.c.b16 %v982, %v966
  %v1319 = vpack.c.b16 %v983, %v967
  %v1320 = vpack.c.b16 %v984, %v968
  %v1321 = vpack.c.b16 %v985, %v969
  %v1322 = vpack.c.b16 %v986, %v970
  %v1323 = vpack.c.b16 %v987, %v971
  %v1324 = vpack.c.b16 %v1004, %v988
  %v1325 = vpack.c.b16 %v1005, %v989
  %v1326 = vpack.c.b16 %v1006, %v990
  %v1327 = vpack.c.b16 %v1007, %v991
  %v1328 = vpack.c.b16 %v1008, %v992
  %v1329 = vpack.c.b16 %v1009, %v993
  %v1330 = vpack.c.b16 %v1010, %v994
  %v1331 = vpack.c.b16 %v1011, %v995
  %v1332 = vpack.c.b16 %v1012, %v996
  %v1333 = vpack.c.b16 %v1013, %v997
  %v1334 = vpack.c.b16 %v1014, %v998
  %v1335 = vpack.c.b16 %v1015, %v999
  %v1336 = vpack.c.b16 %v1016, %v1000
  %v1337 = vpack.c.b16 %v1017, %v1001
  %v1338 = vpack.c.b16 %v1018, %v1002
  %v1339 = vpack.c.b16 %v1019, %v1003
  %v1340 = vpack.c.b16 %v1036, %v1020
  %v1341 = vpack.c.b16 %v1037, %v1021
  %v1342 = vpack.c.b16 %v1038, %v1022
  %v1343 = vpack.c.b16 %v1039, %v1023
  %v1344 = vpack.c.b16 %v1040, %v1024
  %v1345 = vpack.c.b16 %v1041, %v1025
  %v1346 = vpack.c.b16 %v1042, %v1026
  %v1347 = vpack.c.b16 %v1043, %v1027
  %v1348 = vpack.c.b16 %v1044, %v1028
  %v1349 = vpack.c.b16 %v1045, %v1029
  %v1350 = vpack.c.b16 %v1046, %v1030
  %v1351 = vpack.c.b16 %v1047, %v1031
  %v1352 = vpack.c.b16 %v1048, %v1032
  %v1353 = vpack.c.b16 %v1049, %v1033
  %v1354 = vpack.c.b16 %v1050, %v1034
  %v1355 = vpack.c.b16 %v1051, %v1035
  %v1356 = vpack.c.b16 %v1068, %v1052
  %v1357 = vpack.c.b16 %v1069, %v1053
  %v1358 = vpack.c.b16 %v1070, %v1054
  %v1359 = vpack.c.b16 %v1071, %v1055
  %v1360 = vpack.c.b16 %v1072, %v1056
  %v1361 = vpack.c.b16 %v1073, %v1057
  %v1362 = vpack.c.b16 %v1074, %v1058
  %v1363 = vpack.c.b16 %v1075, %v1059
  %v1364 = vpack.c.b16 %v1076, %v1060
  %v1365 = vpack.c.b16 %v1077, %v1061
  %v1366 = vpack.c.b16 %v1078, %v1062
  %v1367 = vpack.c.b16 %v1079, %v1063
  %v1368 = vpack.c.b16 %v1080, %v1064
  %v1369 = vpack.c.b16 %v1081, %v1065
  %v1370 = vpack.c.b16 %v1082, %v1066
  %v1371 = vpack.c.b16 %v1083, %v1067
  %v1372 = vpack.c.b16 %v1100, %v1084
  %v1373 = vpack.c.b16 %v1101, %v1085
  %v1374 = vpack.c.b16 %v1102, %v1086
  %v1375 = vpack.c.b16 %v1103, %v1087
  %v1376 = vpack.c.b16 %v1104, %v1088
  %v1377 = vpack.c.b16 %v1105, %v1089
  %v1378 = vpack.c.b16 %v1106, %v1090
  %v1379 = vpack.c.b16 %v1107, %v1091
  %v1380 = vpack.c.b16 %v1108, %v1092
  %v1381 = vpack.c.b16 %v1109, %v1093
  %v1382 = vpack.c.b16 %v1110, %v1094
  %v1383 = vpack.c.b16 %v1111, %v1095
  %v1384 = vpack.c.b16 %v1112, %v1096
  %v1385 = vpack.c.b16 %v1113, %v1097
  %v1386 = vpack.c.b16 %v1114, %v1098
  %v1387 = vpack.c.b16 %v1115, %v1099
  %v1388 = vpack.c.b16 %v1132, %v1116
  %v1389 = vpack.c.b16 %v1133, %v1117
  %v1390 = vpack.c.b16 %v1134, %v1118
  %v1391 = vpack.c.b16 %v1135, %v1119
  %v1392 = vpack.c.b16 %v1136, %v1120
  %v1393 = vpack.c.b16 %v1137, %v1121
  %v1394 = vpack.c.b16 %v1138, %v1122
  %v1395 = vpack.c.b16 %v1139, %v1123
  %v1396 = vpack.c.b16 %v1140, %v1124
  %v1397 = vpack.c.b16 %v1141, %v1125
  %v1398 = vpack.c.b16 %v1142, %v1126
  %v1399 = vpack.c.b16 %v1143, %v1127
  %v1400 = vpack.c.b16 %v1144, %v1128
  %v1401 = vpack.c.b16 %v1145, %v1129
  %v1402 = vpack.c.b16 %v1146, %v1130
  %v1403 = vpack.c.b16 %v1147, %v1131
  %1660 = vmatprep.subr.bf16.mxu0 %v1149
  %1661 = vmatpush1.bf16.msra.mxu0 %v1148
  %1662 = vmatprep.subr.bf16.mxu0 %v1165
  %1663 = vmatpush1.bf16.msra.mxu0 %v1164
  %1664 = vmatprep.subr.bf16.mxu0 %v1181
  %1665 = vmatpush1.bf16.msra.mxu0 %v1180
  %1666 = vmatprep.subr.bf16.mxu0 %v1197
  %1667 = vmatpush1.bf16.msra.mxu0 %v1196
  %1668 = vmatprep.subr.bf16.mxu0 %v1213
  %1669 = vmatpush1.bf16.msra.mxu0 %v1212
  %1670 = vmatprep.subr.bf16.mxu0 %v1229
  %1671 = vmatpush1.bf16.msra.mxu0 %v1228
  %1672 = vmatprep.subr.bf16.mxu0 %v1245
  %1673 = vmatpush1.bf16.msra.mxu0 %v1244
  %1674 = vmatprep.subr.bf16.mxu0 %v1261
  %1675 = vmatpush1.bf16.msra.mxu0 %v1260
  %1676 = vmatprep.subr.bf16.mxu0 %v1277
  %1677 = vmatpush1.bf16.msra.mxu0 %v1276
  %1678 = vmatprep.subr.bf16.mxu0 %v1293
  %1679 = vmatpush1.bf16.msra.mxu0 %v1292
  %1680 = vmatprep.subr.bf16.mxu0 %v1309
  %1681 = vmatpush1.bf16.msra.mxu0 %v1308
  %1682 = vmatprep.subr.bf16.mxu0 %v1325
  %1683 = vmatpush1.bf16.msra.mxu0 %v1324
  %1684 = vmatprep.subr.bf16.mxu0 %v1341
  %1685 = vmatpush1.bf16.msra.mxu0 %v1340
  %1686 = vmatprep.subr.bf16.mxu0 %v1357
  %1687 = vmatpush1.bf16.msra.mxu0 %v1356
  %1688 = vmatprep.subr.bf16.mxu0 %v1373
  %1689 = vmatpush1.bf16.msra.mxu0 %v1372
  %1690 = vmatprep.subr.bf16.mxu0 %v1389
  %1691 = vmatpush1.bf16.msra.mxu0 %v1388
  %1692 = vmatprep.mubr.bf16.mxu0 %v377
  %1693 = vmatmul.mubr.bf16.gmra.mrb[0].mxu0 %v370
  %v1694 = vpop.f32.mrb[0].mxu0
  %v1695 = vadd.f32 %v278, %v1694
  %v1696 = vpop.f32.mrb[0].mxu0
  %v1697 = vadd.f32 %v282, %v1696
  %v1698 = vpop.f32.mrb[0].mxu0
  %v1699 = vpop.f32.mrb[0].mxu0
  %1700 = vdwg.mxu0
  %1701 = vmatprep.subr.bf16.mxu0 %v1151
  %1702 = vmatpush1.bf16.msra.mxu0 %v1150
  %1703 = vmatprep.subr.bf16.mxu0 %v1167
  %1704 = vmatpush1.bf16.msra.mxu0 %v1166
  %1705 = vmatprep.subr.bf16.mxu0 %v1183
  %1706 = vmatpush1.bf16.msra.mxu0 %v1182
  %1707 = vmatprep.subr.bf16.mxu0 %v1199
  %1708 = vmatpush1.bf16.msra.mxu0 %v1198
  %1709 = vmatprep.subr.bf16.mxu0 %v1215
  %1710 = vmatpush1.bf16.msra.mxu0 %v1214
  %1711 = vmatprep.subr.bf16.mxu0 %v1231
  %1712 = vmatpush1.bf16.msra.mxu0 %v1230
  %1713 = vmatprep.subr.bf16.mxu0 %v1247
  %1714 = vmatpush1.bf16.msra.mxu0 %v1246
  %1715 = vmatprep.subr.bf16.mxu0 %v1263
  %1716 = vmatpush1.bf16.msra.mxu0 %v1262
  %1717 = vmatprep.subr.bf16.mxu0 %v1279
  %1718 = vmatpush1.bf16.msra.mxu0 %v1278
  %1719 = vmatprep.subr.bf16.mxu0 %v1295
  %1720 = vmatpush1.bf16.msra.mxu0 %v1294
  %1721 = vmatprep.subr.bf16.mxu0 %v1311
  %1722 = vmatpush1.bf16.msra.mxu0 %v1310
  %1723 = vmatprep.subr.bf16.mxu0 %v1327
  %1724 = vmatpush1.bf16.msra.mxu0 %v1326
  %1725 = vmatprep.subr.bf16.mxu0 %v1343
  %1726 = vmatpush1.bf16.msra.mxu0 %v1342
  %1727 = vmatprep.subr.bf16.mxu0 %v1359
  %1728 = vmatpush1.bf16.msra.mxu0 %v1358
  %1729 = vmatprep.subr.bf16.mxu0 %v1375
  %1730 = vmatpush1.bf16.msra.mxu0 %v1374
  %1731 = vmatprep.subr.bf16.mxu0 %v1391
  %1732 = vmatpush1.bf16.msra.mxu0 %v1390
  %1733 = vmatprep.mubr.bf16.mxu0 %v377
  %1734 = vmatmul.mubr.bf16.gmra.mrb[0].mxu0 %v370
  %v1735 = vpop.f32.mrb[0].mxu0
  %v1736 = vadd.f32 %v286, %v1735
  %v1737 = vpop.f32.mrb[0].mxu0
  %v1738 = vadd.f32 %v290, %v1737
  %v1739 = vpop.f32.mrb[0].mxu0
  %v1740 = vpop.f32.mrb[0].mxu0
  %1741 = vdwg.mxu0
  %1742 = vmatprep.subr.bf16.mxu0 %v1153
  %1743 = vmatpush1.bf16.msra.mxu0 %v1152
  %1744 = vmatprep.subr.bf16.mxu0 %v1169
  %1745 = vmatpush1.bf16.msra.mxu0 %v1168
  %1746 = vmatprep.subr.bf16.mxu0 %v1185
  %1747 = vmatpush1.bf16.msra.mxu0 %v1184
  %1748 = vmatprep.subr.bf16.mxu0 %v1201
  %1749 = vmatpush1.bf16.msra.mxu0 %v1200
  %1750 = vmatprep.subr.bf16.mxu0 %v1217
  %1751 = vmatpush1.bf16.msra.mxu0 %v1216
  %1752 = vmatprep.subr.bf16.mxu0 %v1233
  %1753 = vmatpush1.bf16.msra.mxu0 %v1232
  %1754 = vmatprep.subr.bf16.mxu0 %v1249
  %1755 = vmatpush1.bf16.msra.mxu0 %v1248
  %1756 = vmatprep.subr.bf16.mxu0 %v1265
  %1757 = vmatpush1.bf16.msra.mxu0 %v1264
  %1758 = vmatprep.subr.bf16.mxu0 %v1281
  %1759 = vmatpush1.bf16.msra.mxu0 %v1280
  %1760 = vmatprep.subr.bf16.mxu0 %v1297
  %1761 = vmatpush1.bf16.msra.mxu0 %v1296
  %1762 = vmatprep.subr.bf16.mxu0 %v1313
  %1763 = vmatpush1.bf16.msra.mxu0 %v1312
  %1764 = vmatprep.subr.bf16.mxu0 %v1329
  %1765 = vmatpush1.bf16.msra.mxu0 %v1328
  %1766 = vmatprep.subr.bf16.mxu0 %v1345
  %1767 = vmatpush1.bf16.msra.mxu0 %v1344
  %1768 = vmatprep.subr.bf16.mxu0 %v1361
  %1769 = vmatpush1.bf16.msra.mxu0 %v1360
  %1770 = vmatprep.subr.bf16.mxu0 %v1377
  %1771 = vmatpush1.bf16.msra.mxu0 %v1376
  %1772 = vmatprep.subr.bf16.mxu0 %v1393
  %1773 = vmatpush1.bf16.msra.mxu0 %v1392
  %1774 = vmatprep.mubr.bf16.mxu0 %v377
  %1775 = vmatmul.mubr.bf16.gmra.mrb[0].mxu0 %v370
  %v1776 = vpop.f32.mrb[0].mxu0
  %v1777 = vadd.f32 %v294, %v1776
  %v1778 = vpop.f32.mrb[0].mxu0
  %v1779 = vadd.f32 %v298, %v1778
  %v1780 = vpop.f32.mrb[0].mxu0
  %v1781 = vpop.f32.mrb[0].mxu0
  %1782 = vdwg.mxu0
  %1783 = vmatprep.subr.bf16.mxu0 %v1155
  %1784 = vmatpush1.bf16.msra.mxu0 %v1154
  %1785 = vmatprep.subr.bf16.mxu0 %v1171
  %1786 = vmatpush1.bf16.msra.mxu0 %v1170
  %1787 = vmatprep.subr.bf16.mxu0 %v1187
  %1788 = vmatpush1.bf16.msra.mxu0 %v1186
  %1789 = vmatprep.subr.bf16.mxu0 %v1203
  %1790 = vmatpush1.bf16.msra.mxu0 %v1202
  %1791 = vmatprep.subr.bf16.mxu0 %v1219
  %1792 = vmatpush1.bf16.msra.mxu0 %v1218
  %1793 = vmatprep.subr.bf16.mxu0 %v1235
  %1794 = vmatpush1.bf16.msra.mxu0 %v1234
  %1795 = vmatprep.subr.bf16.mxu0 %v1251
  %1796 = vmatpush1.bf16.msra.mxu0 %v1250
  %1797 = vmatprep.subr.bf16.mxu0 %v1267
  %1798 = vmatpush1.bf16.msra.mxu0 %v1266
  %1799 = vmatprep.subr.bf16.mxu0 %v1283
  %1800 = vmatpush1.bf16.msra.mxu0 %v1282
  %1801 = vmatprep.subr.bf16.mxu0 %v1299
  %1802 = vmatpush1.bf16.msra.mxu0 %v1298
  %1803 = vmatprep.subr.bf16.mxu0 %v1315
  %1804 = vmatpush1.bf16.msra.mxu0 %v1314
  %1805 = vmatprep.subr.bf16.mxu0 %v1331
  %1806 = vmatpush1.bf16.msra.mxu0 %v1330
  %1807 = vmatprep.subr.bf16.mxu0 %v1347
  %1808 = vmatpush1.bf16.msra.mxu0 %v1346
  %1809 = vmatprep.subr.bf16.mxu0 %v1363
  %1810 = vmatpush1.bf16.msra.mxu0 %v1362
  %1811 = vmatprep.subr.bf16.mxu0 %v1379
  %1812 = vmatpush1.bf16.msra.mxu0 %v1378
  %1813 = vmatprep.subr.bf16.mxu0 %v1395
  %1814 = vmatpush1.bf16.msra.mxu0 %v1394
  %1815 = vmatprep.mubr.bf16.mxu0 %v377
  %1816 = vmatmul.mubr.bf16.gmra.mrb[0].mxu0 %v370
  %v1817 = vpop.f32.mrb[0].mxu0
  %v1818 = vadd.f32 %v302, %v1817
  %v1819 = vpop.f32.mrb[0].mxu0
  %v1820 = vadd.f32 %v306, %v1819
  %v1821 = vpop.f32.mrb[0].mxu0
  %v1822 = vpop.f32.mrb[0].mxu0
  %1823 = vdwg.mxu0
  %1824 = vmatprep.subr.bf16.mxu0 %v1157
  %1825 = vmatpush1.bf16.msra.mxu0 %v1156
  %1826 = vmatprep.subr.bf16.mxu0 %v1173
  %1827 = vmatpush1.bf16.msra.mxu0 %v1172
  %1828 = vmatprep.subr.bf16.mxu0 %v1189
  %1829 = vmatpush1.bf16.msra.mxu0 %v1188
  %1830 = vmatprep.subr.bf16.mxu0 %v1205
  %1831 = vmatpush1.bf16.msra.mxu0 %v1204
  %1832 = vmatprep.subr.bf16.mxu0 %v1221
  %1833 = vmatpush1.bf16.msra.mxu0 %v1220
  %1834 = vmatprep.subr.bf16.mxu0 %v1237
  %1835 = vmatpush1.bf16.msra.mxu0 %v1236
  %1836 = vmatprep.subr.bf16.mxu0 %v1253
  %1837 = vmatpush1.bf16.msra.mxu0 %v1252
  %1838 = vmatprep.subr.bf16.mxu0 %v1269
  %1839 = vmatpush1.bf16.msra.mxu0 %v1268
  %1840 = vmatprep.subr.bf16.mxu0 %v1285
  %1841 = vmatpush1.bf16.msra.mxu0 %v1284
  %1842 = vmatprep.subr.bf16.mxu0 %v1301
  %1843 = vmatpush1.bf16.msra.mxu0 %v1300
  %1844 = vmatprep.subr.bf16.mxu0 %v1317
  %1845 = vmatpush1.bf16.msra.mxu0 %v1316
  %1846 = vmatprep.subr.bf16.mxu0 %v1333
  %1847 = vmatpush1.bf16.msra.mxu0 %v1332
  %1848 = vmatprep.subr.bf16.mxu0 %v1349
  %1849 = vmatpush1.bf16.msra.mxu0 %v1348
  %1850 = vmatprep.subr.bf16.mxu0 %v1365
  %1851 = vmatpush1.bf16.msra.mxu0 %v1364
  %1852 = vmatprep.subr.bf16.mxu0 %v1381
  %1853 = vmatpush1.bf16.msra.mxu0 %v1380
  %1854 = vmatprep.subr.bf16.mxu0 %v1397
  %1855 = vmatpush1.bf16.msra.mxu0 %v1396
  %1856 = vmatprep.mubr.bf16.mxu0 %v377
  %1857 = vmatmul.mubr.bf16.gmra.mrb[0].mxu0 %v370
  %v1858 = vpop.f32.mrb[0].mxu0
  %v1859 = vadd.f32 %v310, %v1858
  %v1860 = vpop.f32.mrb[0].mxu0
  %v1861 = vadd.f32 %v314, %v1860
  %v1862 = vpop.f32.mrb[0].mxu0
  %v1863 = vpop.f32.mrb[0].mxu0
  %1864 = vdwg.mxu0
  %1865 = vmatprep.subr.bf16.mxu0 %v1159
  %1866 = vmatpush1.bf16.msra.mxu0 %v1158
  %1867 = vmatprep.subr.bf16.mxu0 %v1175
  %1868 = vmatpush1.bf16.msra.mxu0 %v1174
  %1869 = vmatprep.subr.bf16.mxu0 %v1191
  %1870 = vmatpush1.bf16.msra.mxu0 %v1190
  %1871 = vmatprep.subr.bf16.mxu0 %v1207
  %1872 = vmatpush1.bf16.msra.mxu0 %v1206
  %1873 = vmatprep.subr.bf16.mxu0 %v1223
  %1874 = vmatpush1.bf16.msra.mxu0 %v1222
  %1875 = vmatprep.subr.bf16.mxu0 %v1239
  %1876 = vmatpush1.bf16.msra.mxu0 %v1238
  %1877 = vmatprep.subr.bf16.mxu0 %v1255
  %1878 = vmatpush1.bf16.msra.mxu0 %v1254
  %1879 = vmatprep.subr.bf16.mxu0 %v1271
  %1880 = vmatpush1.bf16.msra.mxu0 %v1270
  %1881 = vmatprep.subr.bf16.mxu0 %v1287
  %1882 = vmatpush1.bf16.msra.mxu0 %v1286
  %1883 = vmatprep.subr.bf16.mxu0 %v1303
  %1884 = vmatpush1.bf16.msra.mxu0 %v1302
  %1885 = vmatprep.subr.bf16.mxu0 %v1319
  %1886 = vmatpush1.bf16.msra.mxu0 %v1318
  %1887 = vmatprep.subr.bf16.mxu0 %v1335
  %1888 = vmatpush1.bf16.msra.mxu0 %v1334
  %1889 = vmatprep.subr.bf16.mxu0 %v1351
  %1890 = vmatpush1.bf16.msra.mxu0 %v1350
  %1891 = vmatprep.subr.bf16.mxu0 %v1367
  %1892 = vmatpush1.bf16.msra.mxu0 %v1366
  %1893 = vmatprep.subr.bf16.mxu0 %v1383
  %1894 = vmatpush1.bf16.msra.mxu0 %v1382
  %1895 = vmatprep.subr.bf16.mxu0 %v1399
  %1896 = vmatpush1.bf16.msra.mxu0 %v1398
  %1897 = vmatprep.mubr.bf16.mxu0 %v377
  %1898 = vmatmul.mubr.bf16.gmra.mrb[0].mxu0 %v370
  %v1899 = vpop.f32.mrb[0].mxu0
  %v1900 = vadd.f32 %v318, %v1899
  %v1901 = vpop.f32.mrb[0].mxu0
  %v1902 = vadd.f32 %v322, %v1901
  %v1903 = vpop.f32.mrb[0].mxu0
  %v1904 = vpop.f32.mrb[0].mxu0
  %1905 = vdwg.mxu0
  %1906 = vmatprep.subr.bf16.mxu0 %v1161
  %1907 = vmatpush1.bf16.msra.mxu0 %v1160
  %1908 = vmatprep.subr.bf16.mxu0 %v1177
  %1909 = vmatpush1.bf16.msra.mxu0 %v1176
  %1910 = vmatprep.subr.bf16.mxu0 %v1193
  %1911 = vmatpush1.bf16.msra.mxu0 %v1192
  %1912 = vmatprep.subr.bf16.mxu0 %v1209
  %1913 = vmatpush1.bf16.msra.mxu0 %v1208
  %1914 = vmatprep.subr.bf16.mxu0 %v1225
  %1915 = vmatpush1.bf16.msra.mxu0 %v1224
  %1916 = vmatprep.subr.bf16.mxu0 %v1241
  %1917 = vmatpush1.bf16.msra.mxu0 %v1240
  %1918 = vmatprep.subr.bf16.mxu0 %v1257
  %1919 = vmatpush1.bf16.msra.mxu0 %v1256
  %1920 = vmatprep.subr.bf16.mxu0 %v1273
  %1921 = vmatpush1.bf16.msra.mxu0 %v1272
  %1922 = vmatprep.subr.bf16.mxu0 %v1289
  %1923 = vmatpush1.bf16.msra.mxu0 %v1288
  %1924 = vmatprep.subr.bf16.mxu0 %v1305
  %1925 = vmatpush1.bf16.msra.mxu0 %v1304
  %1926 = vmatprep.subr.bf16.mxu0 %v1321
  %1927 = vmatpush1.bf16.msra.mxu0 %v1320
  %1928 = vmatprep.subr.bf16.mxu0 %v1337
  %1929 = vmatpush1.bf16.msra.mxu0 %v1336
  %1930 = vmatprep.subr.bf16.mxu0 %v1353
  %1931 = vmatpush1.bf16.msra.mxu0 %v1352
  %1932 = vmatprep.subr.bf16.mxu0 %v1369
  %1933 = vmatpush1.bf16.msra.mxu0 %v1368
  %1934 = vmatprep.subr.bf16.mxu0 %v1385
  %1935 = vmatpush1.bf16.msra.mxu0 %v1384
  %1936 = vmatprep.subr.bf16.mxu0 %v1401
  %1937 = vmatpush1.bf16.msra.mxu0 %v1400
  %1938 = vmatprep.mubr.bf16.mxu0 %v377
  %1939 = vmatmul.mubr.bf16.gmra.mrb[0].mxu0 %v370
  %v1940 = vpop.f32.mrb[0].mxu0
  %v1941 = vadd.f32 %v326, %v1940
  %v1942 = vpop.f32.mrb[0].mxu0
  %v1943 = vadd.f32 %v330, %v1942
  %v1944 = vpop.f32.mrb[0].mxu0
  %v1945 = vpop.f32.mrb[0].mxu0
  %1946 = vdwg.mxu0
  %1947 = vmatprep.subr.bf16.mxu0 %v1163
  %1948 = vmatpush1.bf16.msra.mxu0 %v1162
  %1949 = vmatprep.subr.bf16.mxu0 %v1179
  %1950 = vmatpush1.bf16.msra.mxu0 %v1178
  %1951 = vmatprep.subr.bf16.mxu0 %v1195
  %1952 = vmatpush1.bf16.msra.mxu0 %v1194
  %1953 = vmatprep.subr.bf16.mxu0 %v1211
  %1954 = vmatpush1.bf16.msra.mxu0 %v1210
  %1955 = vmatprep.subr.bf16.mxu0 %v1227
  %1956 = vmatpush1.bf16.msra.mxu0 %v1226
  %1957 = vmatprep.subr.bf16.mxu0 %v1243
  %1958 = vmatpush1.bf16.msra.mxu0 %v1242
  %1959 = vmatprep.subr.bf16.mxu0 %v1259
  %1960 = vmatpush1.bf16.msra.mxu0 %v1258
  %1961 = vmatprep.subr.bf16.mxu0 %v1275
  %1962 = vmatpush1.bf16.msra.mxu0 %v1274
  %1963 = vmatprep.subr.bf16.mxu0 %v1291
  %1964 = vmatpush1.bf16.msra.mxu0 %v1290
  %1965 = vmatprep.subr.bf16.mxu0 %v1307
  %1966 = vmatpush1.bf16.msra.mxu0 %v1306
  %1967 = vmatprep.subr.bf16.mxu0 %v1323
  %1968 = vmatpush1.bf16.msra.mxu0 %v1322
  %1969 = vmatprep.subr.bf16.mxu0 %v1339
  %1970 = vmatpush1.bf16.msra.mxu0 %v1338
  %1971 = vmatprep.subr.bf16.mxu0 %v1355
  %1972 = vmatpush1.bf16.msra.mxu0 %v1354
  %1973 = vmatprep.subr.bf16.mxu0 %v1371
  %1974 = vmatpush1.bf16.msra.mxu0 %v1370
  %1975 = vmatprep.subr.bf16.mxu0 %v1387
  %1976 = vmatpush1.bf16.msra.mxu0 %v1386
  %1977 = vmatprep.subr.bf16.mxu0 %v1403
  %1978 = vmatpush1.bf16.msra.mxu0 %v1402
  %1979 = vmatprep.mubr.bf16.mxu0 %v377
  %1980 = vmatmul.mubr.bf16.gmra.mrb[0].mxu0 %v370
  %v1981 = vpop.f32.mrb[0].mxu0
  %v1982 = vadd.f32 %v334, %v1981
  %v1983 = vpop.f32.mrb[0].mxu0
  %v1984 = vadd.f32 %v338, %v1983
  %v1985 = vpop.f32.mrb[0].mxu0
  %v1986 = vpop.f32.mrb[0].mxu0
  %1987 = vdwg.mxu0
  %v1988 = vmax.f32 %v1695, 0.0
  %v1989 = vmax.f32 %v1697, 0.0
  %v1990 = vmax.f32 %v1736, 0.0
  %v1991 = vmax.f32 %v1738, 0.0
  %v1992 = vmax.f32 %v1777, 0.0
  %v1993 = vmax.f32 %v1779, 0.0
  %v1994 = vmax.f32 %v1818, 0.0
  %v1995 = vmax.f32 %v1820, 0.0
  %v1996 = vmax.f32 %v1859, 0.0
  %v1997 = vmax.f32 %v1861, 0.0
  %v1998 = vmax.f32 %v1900, 0.0
  %v1999 = vmax.f32 %v1902, 0.0
  %v2000 = vmax.f32 %v1941, 0.0
  %v2001 = vmax.f32 %v1943, 0.0
  %v2002 = vmax.f32 %v1982, 0.0
  %v2003 = vmax.f32 %v1984, 0.0
  %v2020 = vcombine.low %v1988, %v1989
  %v2021 = vcombine.low %v1990, %v1991
  %v2023 = vunpack.c.l.s4 1983009808
  %v2024 = vunpack.c.0.s8 %v2023
  %v2025 = vlaneseq
  %v2026 = vshrl.u32 %v2025, 7
  %v2027 = vsub.s32 %v2024, %v2026
  %v2028 = vrot.slane %v2020, %v2027
  %v2030 = vunpack.c.l.s4 1983009808
  %v2031 = vunpack.c.0.s8 %v2030
  %v2032 = vlaneseq
  %v2033 = vshrl.u32 %v2032, 7
  %v2034 = vsub.s32 %v2031, %v2033
  %v2035 = vrot.slane %v2021, %v2034
  %v2036 = vcombine.low %v2028, %v2035
  %v2037 = vcombine.low %v1992, %v1993
  %v2038 = vcombine.low %v1994, %v1995
  %v2040 = vunpack.c.l.s4 1983009808
  %v2041 = vunpack.c.0.s8 %v2040
  %v2042 = vlaneseq
  %v2043 = vshrl.u32 %v2042, 7
  %v2044 = vsub.s32 %v2041, %v2043
  %v2045 = vrot.slane %v2037, %v2044
  %v2047 = vunpack.c.l.s4 1983009808
  %v2048 = vunpack.c.0.s8 %v2047
  %v2049 = vlaneseq
  %v2050 = vshrl.u32 %v2049, 7
  %v2051 = vsub.s32 %v2048, %v2050
  %v2052 = vrot.slane %v2038, %v2051
  %v2053 = vcombine.low %v2045, %v2052
  %v2054 = vcombine.low %v1996, %v1997
  %v2055 = vcombine.low %v1998, %v1999
  %v2057 = vunpack.c.l.s4 1983009808
  %v2058 = vunpack.c.0.s8 %v2057
  %v2059 = vlaneseq
  %v2060 = vshrl.u32 %v2059, 7
  %v2061 = vsub.s32 %v2058, %v2060
  %v2062 = vrot.slane %v2054, %v2061
  %v2064 = vunpack.c.l.s4 1983009808
  %v2065 = vunpack.c.0.s8 %v2064
  %v2066 = vlaneseq
  %v2067 = vshrl.u32 %v2066, 7
  %v2068 = vsub.s32 %v2065, %v2067
  %v2069 = vrot.slane %v2055, %v2068
  %v2070 = vcombine.low %v2062, %v2069
  %v2071 = vcombine.low %v2000, %v2001
  %v2072 = vcombine.low %v2002, %v2003
  %v2074 = vunpack.c.l.s4 1983009808
  %v2075 = vunpack.c.0.s8 %v2074
  %v2076 = vlaneseq
  %v2077 = vshrl.u32 %v2076, 7
  %v2078 = vsub.s32 %v2075, %v2077
  %v2079 = vrot.slane %v2071, %v2078
  %v2081 = vunpack.c.l.s4 1983009808
  %v2082 = vunpack.c.0.s8 %v2081
  %v2083 = vlaneseq
  %v2084 = vshrl.u32 %v2083, 7
  %v2085 = vsub.s32 %v2082, %v2084
  %v2086 = vrot.slane %v2072, %v2085
  %v2087 = vcombine.low %v2079, %v2086
  %2092 = vst [vmem:[%s3] sm:$0xff] %v2036
  %2093 = vst [vmem:[%s3 + $0x8] sm:$0xff] %v2053
  %2094 = vst [vmem:[%s3 + $0x10] sm:$0xff] %v2070
  %2095 = vst [vmem:[%s3 + $0x18] sm:$0xff] %v2087
  // Predicated region
  $region14: #{vae_forward.19} parent=0 // pred_check
    _
  $region15: #{vae_forward.19} parent=0 // pred_check_branch
    %2097 = sbr.rel (0) target = $region17
  $region16: #{vae_forward.19} parent=0 // pred_region
    _
  $region17: #{vae_forward.19} parent=0 // pred_fallthru
    _
  // Predicated region
  $region18: #{vae_forward.19} parent=0 // pred_check
    _
  $region19: #{vae_forward.19} parent=0 // pred_check_branch
    %2099 = sbr.rel (0) target = $region21
  $region20: #{vae_forward.19} parent=0 // pred_region
    _
  $region21: #{vae_forward.19} parent=0 // pred_fallthru
    _

// kernel: tile.33
$region0: #{tile.33}
  #allocation0 [shape = 's32[1]{0}', space=sflag, size = 0x4, scoped, tag = 'scoped memory for tile.33']
  %s0 = inlined_call_operand.vmem [shape: f32[64], index: 0, kind: input, shape index: {}]
  %s1 = inlined_call_operand.vmem [shape: f32[4,64], index: 1, kind: output, shape index: {}]
  // Predicated region
  $region2: #{tile.33} parent=0 // pred_check
    _
  $region3: #{tile.33} parent=0 // pred_check_branch
    %3 = sbr.rel (0) target = $region5
  $region4: #{tile.33} parent=0 // pred_region
    _
  $region5: #{tile.33} parent=0 // pred_fallthru
    _
  %v4 = vld [vmem:[%s0] ss:$0 sm:$0xff]
  %5 = vst [vmem:[%s1] sm:$0xf] %v4

// kernel: tile.34
$region0: #{tile.34}
  %s0 = inlined_call_operand.vmem [shape: f32[4,64], index: 0, kind: input, shape index: {}]
  %s1 = inlined_call_operand.vmem [shape: f32[1,256], index: 1, kind: output, shape index: {}]
  $region1: #{tile.34} parent=0
    #allocation0 [shape = 'u8[8192]{0}', space=vmem, size = 0x2000, scoped, tag = 'scoped mem for output reshape']
    #allocation1 [shape = 'u8[4096]{0}', space=vmem, size = 0x1000, scoped, tag = 'scoped mem for input reshape']
    %s3 = sshllo.u32 0, 4
    %v4 = vld [vmem:[%s0] sm:%s3]
    %5 = vst [vmem:[#allocation1] sm:%s3] %v4
    %s6 = smov 3
    %v7 = vld [vmem:[#allocation1] ss:$2 sm:%s6]
    %vm8 = vcmask 523264
    %9 = vst.msk [vmem:[#allocation0] ss:$8 sm:$0x3] %vm8, %v7
    %s10 = scalar_lea.vmem [#allocation1], 1
    %s11 = smov 3
    %v12 = vld [vmem:[%s10] ss:$2 sm:%s11]
    %13 = vrot.lane.b32.xlu0 %v12, 64
    %v14 = vpop.permute.xlu0 %13
    %vm15 = vcmask 1048064
    %16 = vst.msk [vmem:[#allocation0] ss:$8 sm:$0x3] %vm15, %v14
    %s18 = sshllo.u32 0, 1
    %v20 = vld [vmem:[#allocation0] sm:%s18]
    %s21 = sshllo.u32 0, 1
    %22 = vst [vmem:[%s1] sm:%s21] %v20
    %s23 = scalar_lea.vmem [#allocation0], 8
    %v24 = vld [vmem:[%s23] sm:%s18]
    %s25 = sshllo.u32 0, 1
    %s26 = scalar_lea.vmem %s1, 1
    %27 = vst [vmem:[%s26] sm:%s25] %v24

// kernel: vae_forward.20
$region0: #{vae_forward.20}
  #allocation0 [shape = 'u32[]', space=smem, size = 0x4, offset = 0x4, fixed_abs, tag = 'smem constant byte address 0x4 - core index']
  #allocation1 [shape = 'u32[144,128]{1,0:T(1,128)}', space=vmem, size = 0x12000, scoped, tag = 'internal scratch']
  %s0 = inlined_call_operand.vmem [shape: bf16[50,512], index: 0, kind: input, shape index: {}]
  %s1 = inlined_call_operand.vmem [shape: bf16[512,256], index: 1, kind: input, shape index: {}]
  %s2 = inlined_call_operand.vmem [shape: f32[1,256], index: 2, kind: input, shape index: {}]
  %s3 = inlined_call_operand.vmem [shape: f32[50,256], index: 3, kind: output, shape index: {}]
  %s4 = sld [smem:[#allocation0]]
  $region22: #{vae_forward.20} parent=0
    _
  %s6 = ssub.s32 1, %s4
  %s7 = scalar_select 0, %s6, %s4
  // Predicated region
  $region2: #{vae_forward.20} parent=0 // pred_check
    _
  $region3: #{vae_forward.20} parent=0 // pred_check_branch
    %9 = sbr.rel (0) target = $region5
  $region4: #{vae_forward.20} parent=0 // pred_region
    _
  $region5: #{vae_forward.20} parent=0 // pred_fallthru
    _
  // Predicated region
  $region6: #{vae_forward.20} parent=0 // pred_check
    _
  $region7: #{vae_forward.20} parent=0 // pred_check_branch
    %11 = sbr.rel (0) target = $region9
  $region8: #{vae_forward.20} parent=0 // pred_region
    _
  $region9: #{vae_forward.20} parent=0 // pred_fallthru
    _
  // Predicated region
  $region10: #{vae_forward.20} parent=0 // pred_check
    _
  $region11: #{vae_forward.20} parent=0 // pred_check_branch
    %13 = sbr.rel (0) target = $region13
  $region12: #{vae_forward.20} parent=0 // pred_region
    _
  $region13: #{vae_forward.20} parent=0 // pred_fallthru
    _
  %v14 = vld [vmem:[%s0] sm:$0xff]
  %v15 = vld [vmem:[%s0 + $0x8] sm:$0xff]
  %v16 = vld [vmem:[%s0 + $0x10] sm:$0xff]
  %v17 = vld [vmem:[%s0 + $0x18] sm:$0xff]
  %v18 = vld [vmem:[%s0 + $0x20] sm:$0xff]
  %v19 = vld [vmem:[%s0 + $0x28] sm:$0xff]
  %v20 = vld [vmem:[%s0 + $0x30] sm:$0xff]
  %v21 = vld [vmem:[%s0 + $0x38] sm:$0xff]
  %v22 = vld [vmem:[%s0 + $0x40] sm:$0xff]
  %v23 = vld [vmem:[%s0 + $0x48] sm:$0xff]
  %v24 = vld [vmem:[%s0 + $0x50] sm:$0xff]
  %v25 = vld [vmem:[%s0 + $0x58] sm:$0xff]
  %v26 = vld [vmem:[%s0 + $0x60] sm:$0x11]
  %v27 = vld [vmem:[%s0 + $0x68] sm:$0x11]
  %v28 = vld [vmem:[%s1] sm:$0xff]
  %v29 = vld [vmem:[%s1 + $0x8] sm:$0xff]
  %v30 = vld [vmem:[%s1 + $0x10] sm:$0xff]
  %v31 = vld [vmem:[%s1 + $0x18] sm:$0xff]
  %v32 = vld [vmem:[%s1 + $0x20] sm:$0xff]
  %v33 = vld [vmem:[%s1 + $0x28] sm:$0xff]
  %v34 = vld [vmem:[%s1 + $0x30] sm:$0xff]
  %v35 = vld [vmem:[%s1 + $0x38] sm:$0xff]
  %v36 = vld [vmem:[%s1 + $0x40] sm:$0xff]
  %v37 = vld [vmem:[%s1 + $0x48] sm:$0xff]
  %v38 = vld [vmem:[%s1 + $0x50] sm:$0xff]
  %v39 = vld [vmem:[%s1 + $0x58] sm:$0xff]
  %v40 = vld [vmem:[%s1 + $0x60] sm:$0xff]
  %v41 = vld [vmem:[%s1 + $0x68] sm:$0xff]
  %v42 = vld [vmem:[%s1 + $0x70] sm:$0xff]
  %v43 = vld [vmem:[%s1 + $0x78] sm:$0xff]
  %v44 = vld [vmem:[%s1 + $0x80] sm:$0xff]
  %v45 = vld [vmem:[%s1 + $0x88] sm:$0xff]
  %v46 = vld [vmem:[%s1 + $0x90] sm:$0xff]
  %v47 = vld [vmem:[%s1 + $0x98] sm:$0xff]
  %v48 = vld [vmem:[%s1 + $0xa0] sm:$0xff]
  %v49 = vld [vmem:[%s1 + $0xa8] sm:$0xff]
  %v50 = vld [vmem:[%s1 + $0xb0] sm:$0xff]
  %v51 = vld [vmem:[%s1 + $0xb8] sm:$0xff]
  %v52 = vld [vmem:[%s1 + $0xc0] sm:$0xff]
  %v53 = vld [vmem:[%s1 + $0xc8] sm:$0xff]
  %v54 = vld [vmem:[%s1 + $0xd0] sm:$0xff]
  %v55 = vld [vmem:[%s1 + $0xd8] sm:$0xff]
  %v56 = vld [vmem:[%s1 + $0xe0] sm:$0xff]
  %v57 = vld [vmem:[%s1 + $0xe8] sm:$0xff]
  %v58 = vld [vmem:[%s1 + $0xf0] sm:$0xff]
  %v59 = vld [vmem:[%s1 + $0xf8] sm:$0xff]
  %v60 = vld [vmem:[%s1 + $0x100] sm:$0xff]
  %v61 = vld [vmem:[%s1 + $0x108] sm:$0xff]
  %v62 = vld [vmem:[%s1 + $0x110] sm:$0xff]
  %v63 = vld [vmem:[%s1 + $0x118] sm:$0xff]
  %v64 = vld [vmem:[%s1 + $0x120] sm:$0xff]
  %v65 = vld [vmem:[%s1 + $0x128] sm:$0xff]
  %v66 = vld [vmem:[%s1 + $0x130] sm:$0xff]
  %v67 = vld [vmem:[%s1 + $0x138] sm:$0xff]
  %v68 = vld [vmem:[%s1 + $0x140] sm:$0xff]
  %v69 = vld [vmem:[%s1 + $0x148] sm:$0xff]
  %v70 = vld [vmem:[%s1 + $0x150] sm:$0xff]
  %v71 = vld [vmem:[%s1 + $0x158] sm:$0xff]
  %v72 = vld [vmem:[%s1 + $0x160] sm:$0xff]
  %v73 = vld [vmem:[%s1 + $0x168] sm:$0xff]
  %v74 = vld [vmem:[%s1 + $0x170] sm:$0xff]
  %v75 = vld [vmem:[%s1 + $0x178] sm:$0xff]
  %v76 = vld [vmem:[%s1 + $0x180] sm:$0xff]
  %v77 = vld [vmem:[%s1 + $0x188] sm:$0xff]
  %v78 = vld [vmem:[%s1 + $0x190] sm:$0xff]
  %v79 = vld [vmem:[%s1 + $0x198] sm:$0xff]
  %v80 = vld [vmem:[%s1 + $0x1a0] sm:$0xff]
  %v81 = vld [vmem:[%s1 + $0x1a8] sm:$0xff]
  %v82 = vld [vmem:[%s1 + $0x1b0] sm:$0xff]
  %v83 = vld [vmem:[%s1 + $0x1b8] sm:$0xff]
  %v84 = vld [vmem:[%s1 + $0x1c0] sm:$0xff]
  %v85 = vld [vmem:[%s1 + $0x1c8] sm:$0xff]
  %v86 = vld [vmem:[%s1 + $0x1d0] sm:$0xff]
  %v87 = vld [vmem:[%s1 + $0x1d8] sm:$0xff]
  %v88 = vld [vmem:[%s1 + $0x1e0] sm:$0xff]
  %v89 = vld [vmem:[%s1 + $0x1e8] sm:$0xff]
  %v90 = vld [vmem:[%s1 + $0x1f0] sm:$0xff]
  %v91 = vld [vmem:[%s1 + $0x1f8] sm:$0xff]
  %v92 = vld [vmem:[%s2] sm:$0x3]
  %v94 = vlaneseq
  %v95 = vshrl.u32 %v94, 7
  %v96 = vsub.s32 0, %v95
  %v97 = vrot.slane %v92, %v96
  %v98 = vlaneseq
  %v99 = vshrl.u32 %v98, 7
  %v100 = vsub.s32 1, %v99
  %v101 = vrot.slane %v92, %v100
  %v118 = vunpack.c.l.b16 %v14
  %v119 = vunpack.c.h.b16 %v14
  %v120 = vunpack.c.l.b16 %v15
  %v121 = vunpack.c.h.b16 %v15
  %v122 = vunpack.c.l.b16 %v16
  %v123 = vunpack.c.h.b16 %v16
  %v124 = vunpack.c.l.b16 %v17
  %v125 = vunpack.c.h.b16 %v17
  %v126 = vunpack.c.l.b16 %v18
  %v127 = vunpack.c.h.b16 %v18
  %v128 = vunpack.c.l.b16 %v19
  %v129 = vunpack.c.h.b16 %v19
  %v130 = vunpack.c.l.b16 %v20
  %v131 = vunpack.c.h.b16 %v20
  %v132 = vunpack.c.l.b16 %v21
  %v133 = vunpack.c.h.b16 %v21
  %v134 = vunpack.c.l.b16 %v22
  %v135 = vunpack.c.h.b16 %v22
  %v136 = vunpack.c.l.b16 %v23
  %v137 = vunpack.c.h.b16 %v23
  %v138 = vunpack.c.l.b16 %v24
  %v139 = vunpack.c.h.b16 %v24
  %v140 = vunpack.c.l.b16 %v25
  %v141 = vunpack.c.h.b16 %v25
  %v142 = vunpack.c.l.b16 %v26
  %v143 = vunpack.c.h.b16 %v26
  %v144 = vunpack.c.l.b16 %v27
  %v145 = vunpack.c.h.b16 %v27
  %v146 = vpack.c.b16 %v122, %v118
  %v147 = vpack.c.b16 %v123, %v119
  %v148 = vpack.c.b16 %v124, %v120
  %v149 = vpack.c.b16 %v125, %v121
  %v150 = vpack.c.b16 %v130, %v126
  %v151 = vpack.c.b16 %v131, %v127
  %v152 = vpack.c.b16 %v132, %v128
  %v153 = vpack.c.b16 %v133, %v129
  %v154 = vpack.c.b16 %v138, %v134
  %v155 = vpack.c.b16 %v139, %v135
  %v156 = vpack.c.b16 %v140, %v136
  %v157 = vpack.c.b16 %v141, %v137
  %v158 = vpack.c.b16 %v142, %v142
  %v159 = vpack.c.b16 %v143, %v143
  %v160 = vpack.c.b16 %v144, %v144
  %v161 = vpack.c.b16 %v145, %v145
  %v242 = vunpack.c.l.b16 %v28
  %v243 = vunpack.c.h.b16 %v28
  %v244 = vunpack.c.l.b16 %v29
  %v245 = vunpack.c.h.b16 %v29
  %v246 = vunpack.c.l.b16 %v30
  %v247 = vunpack.c.h.b16 %v30
  %v248 = vunpack.c.l.b16 %v31
  %v249 = vunpack.c.h.b16 %v31
  %v250 = vunpack.c.l.b16 %v32
  %v251 = vunpack.c.h.b16 %v32
  %v252 = vunpack.c.l.b16 %v33
  %v253 = vunpack.c.h.b16 %v33
  %v254 = vunpack.c.l.b16 %v34
  %v255 = vunpack.c.h.b16 %v34
  %v256 = vunpack.c.l.b16 %v35
  %v257 = vunpack.c.h.b16 %v35
  %v258 = vunpack.c.l.b16 %v36
  %v259 = vunpack.c.h.b16 %v36
  %v260 = vunpack.c.l.b16 %v37
  %v261 = vunpack.c.h.b16 %v37
  %v262 = vunpack.c.l.b16 %v38
  %v263 = vunpack.c.h.b16 %v38
  %v264 = vunpack.c.l.b16 %v39
  %v265 = vunpack.c.h.b16 %v39
  %v266 = vunpack.c.l.b16 %v40
  %v267 = vunpack.c.h.b16 %v40
  %v268 = vunpack.c.l.b16 %v41
  %v269 = vunpack.c.h.b16 %v41
  %v270 = vunpack.c.l.b16 %v42
  %v271 = vunpack.c.h.b16 %v42
  %v272 = vunpack.c.l.b16 %v43
  %v273 = vunpack.c.h.b16 %v43
  %v274 = vunpack.c.l.b16 %v44
  %v275 = vunpack.c.h.b16 %v44
  %v276 = vunpack.c.l.b16 %v45
  %v277 = vunpack.c.h.b16 %v45
  %v278 = vunpack.c.l.b16 %v46
  %v279 = vunpack.c.h.b16 %v46
  %v280 = vunpack.c.l.b16 %v47
  %v281 = vunpack.c.h.b16 %v47
  %v282 = vunpack.c.l.b16 %v48
  %v283 = vunpack.c.h.b16 %v48
  %v284 = vunpack.c.l.b16 %v49
  %v285 = vunpack.c.h.b16 %v49
  %v286 = vunpack.c.l.b16 %v50
  %v287 = vunpack.c.h.b16 %v50
  %v288 = vunpack.c.l.b16 %v51
  %v289 = vunpack.c.h.b16 %v51
  %v290 = vunpack.c.l.b16 %v52
  %v291 = vunpack.c.h.b16 %v52
  %v292 = vunpack.c.l.b16 %v53
  %v293 = vunpack.c.h.b16 %v53
  %v294 = vunpack.c.l.b16 %v54
  %v295 = vunpack.c.h.b16 %v54
  %v296 = vunpack.c.l.b16 %v55
  %v297 = vunpack.c.h.b16 %v55
  %v298 = vunpack.c.l.b16 %v56
  %v299 = vunpack.c.h.b16 %v56
  %v300 = vunpack.c.l.b16 %v57
  %v301 = vunpack.c.h.b16 %v57
  %v302 = vunpack.c.l.b16 %v58
  %v303 = vunpack.c.h.b16 %v58
  %v304 = vunpack.c.l.b16 %v59
  %v305 = vunpack.c.h.b16 %v59
  %v306 = vunpack.c.l.b16 %v60
  %v307 = vunpack.c.h.b16 %v60
  %v308 = vunpack.c.l.b16 %v61
  %v309 = vunpack.c.h.b16 %v61
  %v310 = vunpack.c.l.b16 %v62
  %v311 = vunpack.c.h.b16 %v62
  %v312 = vunpack.c.l.b16 %v63
  %v313 = vunpack.c.h.b16 %v63
  %v314 = vunpack.c.l.b16 %v64
  %v315 = vunpack.c.h.b16 %v64
  %v316 = vunpack.c.l.b16 %v65
  %v317 = vunpack.c.h.b16 %v65
  %v318 = vunpack.c.l.b16 %v66
  %v319 = vunpack.c.h.b16 %v66
  %v320 = vunpack.c.l.b16 %v67
  %v321 = vunpack.c.h.b16 %v67
  %v322 = vunpack.c.l.b16 %v68
  %v323 = vunpack.c.h.b16 %v68
  %v324 = vunpack.c.l.b16 %v69
  %v325 = vunpack.c.h.b16 %v69
  %v326 = vunpack.c.l.b16 %v70
  %v327 = vunpack.c.h.b16 %v70
  %v328 = vunpack.c.l.b16 %v71
  %v329 = vunpack.c.h.b16 %v71
  %v330 = vunpack.c.l.b16 %v72
  %v331 = vunpack.c.h.b16 %v72
  %v332 = vunpack.c.l.b16 %v73
  %v333 = vunpack.c.h.b16 %v73
  %v334 = vunpack.c.l.b16 %v74
  %v335 = vunpack.c.h.b16 %v74
  %v336 = vunpack.c.l.b16 %v75
  %v337 = vunpack.c.h.b16 %v75
  %v338 = vunpack.c.l.b16 %v76
  %v339 = vunpack.c.h.b16 %v76
  %v340 = vunpack.c.l.b16 %v77
  %v341 = vunpack.c.h.b16 %v77
  %v342 = vunpack.c.l.b16 %v78
  %v343 = vunpack.c.h.b16 %v78
  %v344 = vunpack.c.l.b16 %v79
  %v345 = vunpack.c.h.b16 %v79
  %v346 = vunpack.c.l.b16 %v80
  %v347 = vunpack.c.h.b16 %v80
  %v348 = vunpack.c.l.b16 %v81
  %v349 = vunpack.c.h.b16 %v81
  %v350 = vunpack.c.l.b16 %v82
  %v351 = vunpack.c.h.b16 %v82
  %v352 = vunpack.c.l.b16 %v83
  %v353 = vunpack.c.h.b16 %v83
  %v354 = vunpack.c.l.b16 %v84
  %v355 = vunpack.c.h.b16 %v84
  %v356 = vunpack.c.l.b16 %v85
  %v357 = vunpack.c.h.b16 %v85
  %v358 = vunpack.c.l.b16 %v86
  %v359 = vunpack.c.h.b16 %v86
  %v360 = vunpack.c.l.b16 %v87
  %v361 = vunpack.c.h.b16 %v87
  %v362 = vunpack.c.l.b16 %v88
  %v363 = vunpack.c.h.b16 %v88
  %v364 = vunpack.c.l.b16 %v89
  %v365 = vunpack.c.h.b16 %v89
  %v366 = vunpack.c.l.b16 %v90
  %v367 = vunpack.c.h.b16 %v90
  %v368 = vunpack.c.l.b16 %v91
  %v369 = vunpack.c.h.b16 %v91
  %v370 = vpack.c.b16 %v244, %v242
  %v371 = vpack.c.b16 %v245, %v243
  %v372 = vpack.c.b16 %v248, %v246
  %v373 = vpack.c.b16 %v249, %v247
  %v374 = vpack.c.b16 %v252, %v250
  %v375 = vpack.c.b16 %v253, %v251
  %v376 = vpack.c.b16 %v256, %v254
  %v377 = vpack.c.b16 %v257, %v255
  %v378 = vpack.c.b16 %v260, %v258
  %v379 = vpack.c.b16 %v261, %v259
  %v380 = vpack.c.b16 %v264, %v262
  %v381 = vpack.c.b16 %v265, %v263
  %v382 = vpack.c.b16 %v268, %v266
  %v383 = vpack.c.b16 %v269, %v267
  %v384 = vpack.c.b16 %v272, %v270
  %v385 = vpack.c.b16 %v273, %v271
  %v386 = vpack.c.b16 %v276, %v274
  %v387 = vpack.c.b16 %v277, %v275
  %v388 = vpack.c.b16 %v280, %v278
  %v389 = vpack.c.b16 %v281, %v279
  %v390 = vpack.c.b16 %v284, %v282
  %v391 = vpack.c.b16 %v285, %v283
  %v392 = vpack.c.b16 %v288, %v286
  %v393 = vpack.c.b16 %v289, %v287
  %v394 = vpack.c.b16 %v292, %v290
  %v395 = vpack.c.b16 %v293, %v291
  %v396 = vpack.c.b16 %v296, %v294
  %v397 = vpack.c.b16 %v297, %v295
  %v398 = vpack.c.b16 %v300, %v298
  %v399 = vpack.c.b16 %v301, %v299
  %v400 = vpack.c.b16 %v304, %v302
  %v401 = vpack.c.b16 %v305, %v303
  %v402 = vpack.c.b16 %v308, %v306
  %v403 = vpack.c.b16 %v309, %v307
  %v404 = vpack.c.b16 %v312, %v310
  %v405 = vpack.c.b16 %v313, %v311
  %v406 = vpack.c.b16 %v316, %v314
  %v407 = vpack.c.b16 %v317, %v315
  %v408 = vpack.c.b16 %v320, %v318
  %v409 = vpack.c.b16 %v321, %v319
  %v410 = vpack.c.b16 %v324, %v322
  %v411 = vpack.c.b16 %v325, %v323
  %v412 = vpack.c.b16 %v328, %v326
  %v413 = vpack.c.b16 %v329, %v327
  %v414 = vpack.c.b16 %v332, %v330
  %v415 = vpack.c.b16 %v333, %v331
  %v416 = vpack.c.b16 %v336, %v334
  %v417 = vpack.c.b16 %v337, %v335
  %v418 = vpack.c.b16 %v340, %v338
  %v419 = vpack.c.b16 %v341, %v339
  %v420 = vpack.c.b16 %v344, %v342
  %v421 = vpack.c.b16 %v345, %v343
  %v422 = vpack.c.b16 %v348, %v346
  %v423 = vpack.c.b16 %v349, %v347
  %v424 = vpack.c.b16 %v352, %v350
  %v425 = vpack.c.b16 %v353, %v351
  %v426 = vpack.c.b16 %v356, %v354
  %v427 = vpack.c.b16 %v357, %v355
  %v428 = vpack.c.b16 %v360, %v358
  %v429 = vpack.c.b16 %v361, %v359
  %v430 = vpack.c.b16 %v364, %v362
  %v431 = vpack.c.b16 %v365, %v363
  %v432 = vpack.c.b16 %v368, %v366
  %v433 = vpack.c.b16 %v369, %v367
  %498 = vmatprep.subr.bf16.mxu0 %v371
  %499 = vmatpush1.bf16.msra.mxu0 %v370
  %500 = vmatprep.subr.bf16.mxu0 %v373
  %501 = vmatpush1.bf16.msra.mxu0 %v372
  %502 = vmatprep.subr.bf16.mxu0 %v375
  %503 = vmatpush1.bf16.msra.mxu0 %v374
  %504 = vmatprep.subr.bf16.mxu0 %v377
  %505 = vmatpush1.bf16.msra.mxu0 %v376
  %506 = vmatprep.subr.bf16.mxu0 %v379
  %507 = vmatpush1.bf16.msra.mxu0 %v378
  %508 = vmatprep.subr.bf16.mxu0 %v381
  %509 = vmatpush1.bf16.msra.mxu0 %v380
  %510 = vmatprep.subr.bf16.mxu0 %v383
  %511 = vmatpush1.bf16.msra.mxu0 %v382
  %512 = vmatprep.subr.bf16.mxu0 %v385
  %513 = vmatpush1.bf16.msra.mxu0 %v384
  %514 = vmatprep.subr.bf16.mxu0 %v387
  %515 = vmatpush1.bf16.msra.mxu0 %v386
  %516 = vmatprep.subr.bf16.mxu0 %v389
  %517 = vmatpush1.bf16.msra.mxu0 %v388
  %518 = vmatprep.subr.bf16.mxu0 %v391
  %519 = vmatpush1.bf16.msra.mxu0 %v390
  %520 = vmatprep.subr.bf16.mxu0 %v393
  %521 = vmatpush1.bf16.msra.mxu0 %v392
  %522 = vmatprep.subr.bf16.mxu0 %v395
  %523 = vmatpush1.bf16.msra.mxu0 %v394
  %524 = vmatprep.subr.bf16.mxu0 %v397
  %525 = vmatpush1.bf16.msra.mxu0 %v396
  %526 = vmatprep.subr.bf16.mxu0 %v399
  %527 = vmatpush1.bf16.msra.mxu0 %v398
  %528 = vmatprep.subr.bf16.mxu0 %v401
  %529 = vmatpush1.bf16.msra.mxu0 %v400
  %530 = vmatprep.mubr.bf16.mxu0 %v147
  %531 = vmatmul.mubr.bf16.gmra.mrb[0].mxu0 %v146
  %v532 = vpop.f32.mrb[0].mxu0
  %v533 = vadd.f32 %v97, %v532
  %v534 = vpop.f32.mrb[0].mxu0
  %v535 = vadd.f32 %v101, %v534
  %v536 = vpop.f32.mrb[0].mxu0
  %v537 = vadd.f32 %v97, %v536
  %v538 = vpop.f32.mrb[0].mxu0
  %v539 = vadd.f32 %v101, %v538
  %540 = vmatprep.mubr.bf16.mxu0 %v151
  %541 = vmatmul.mubr.bf16.gmra.mrb[0].mxu0 %v150
  %v542 = vpop.f32.mrb[0].mxu0
  %v543 = vadd.f32 %v97, %v542
  %v544 = vpop.f32.mrb[0].mxu0
  %v545 = vadd.f32 %v101, %v544
  %v546 = vpop.f32.mrb[0].mxu0
  %v547 = vadd.f32 %v97, %v546
  %v548 = vpop.f32.mrb[0].mxu0
  %v549 = vadd.f32 %v101, %v548
  %550 = vmatprep.mubr.bf16.mxu0 %v155
  %551 = vmatmul.mubr.bf16.gmra.mrb[0].mxu0 %v154
  %v552 = vpop.f32.mrb[0].mxu0
  %v553 = vadd.f32 %v97, %v552
  %v554 = vpop.f32.mrb[0].mxu0
  %v555 = vadd.f32 %v101, %v554
  %v556 = vpop.f32.mrb[0].mxu0
  %v557 = vadd.f32 %v97, %v556
  %v558 = vpop.f32.mrb[0].mxu0
  %v559 = vadd.f32 %v101, %v558
  %560 = vmatprep.mubr.bf16.mxu0 %v159
  %561 = vmatmul.mubr.bf16.gmra.mrb[0].mxu0 %v158
  %v562 = vpop.f32.mrb[0].mxu0
  %v563 = vadd.f32 %v97, %v562
  %v564 = vpop.f32.mrb[0].mxu0
  %v565 = vadd.f32 %v101, %v564
  %v566 = vpop.f32.mrb[0].mxu0
  %v567 = vpop.f32.mrb[0].mxu0
  %568 = vdwg.mxu0
  %569 = vmatprep.subr.bf16.mxu0 %v403
  %570 = vmatpush1.bf16.msra.mxu0 %v402
  %571 = vmatprep.subr.bf16.mxu0 %v405
  %572 = vmatpush1.bf16.msra.mxu0 %v404
  %573 = vmatprep.subr.bf16.mxu0 %v407
  %574 = vmatpush1.bf16.msra.mxu0 %v406
  %575 = vmatprep.subr.bf16.mxu0 %v409
  %576 = vmatpush1.bf16.msra.mxu0 %v408
  %577 = vmatprep.subr.bf16.mxu0 %v411
  %578 = vmatpush1.bf16.msra.mxu0 %v410
  %579 = vmatprep.subr.bf16.mxu0 %v413
  %580 = vmatpush1.bf16.msra.mxu0 %v412
  %581 = vmatprep.subr.bf16.mxu0 %v415
  %582 = vmatpush1.bf16.msra.mxu0 %v414
  %583 = vmatprep.subr.bf16.mxu0 %v417
  %584 = vmatpush1.bf16.msra.mxu0 %v416
  %585 = vmatprep.subr.bf16.mxu0 %v419
  %586 = vmatpush1.bf16.msra.mxu0 %v418
  %587 = vmatprep.subr.bf16.mxu0 %v421
  %588 = vmatpush1.bf16.msra.mxu0 %v420
  %589 = vmatprep.subr.bf16.mxu0 %v423
  %590 = vmatpush1.bf16.msra.mxu0 %v422
  %591 = vmatprep.subr.bf16.mxu0 %v425
  %592 = vmatpush1.bf16.msra.mxu0 %v424
  %593 = vmatprep.subr.bf16.mxu0 %v427
  %594 = vmatpush1.bf16.msra.mxu0 %v426
  %595 = vmatprep.subr.bf16.mxu0 %v429
  %596 = vmatpush1.bf16.msra.mxu0 %v428
  %597 = vmatprep.subr.bf16.mxu0 %v431
  %598 = vmatpush1.bf16.msra.mxu0 %v430
  %599 = vmatprep.subr.bf16.mxu0 %v433
  %600 = vmatpush1.bf16.msra.mxu0 %v432
  %601 = vmatprep.mubr.bf16.mxu0 %v149
  %602 = vmatmul.mubr.bf16.gmra.mrb[0].mxu0 %v148
  %v603 = vpop.f32.mrb[0].mxu0
  %v604 = vadd.f32 %v533, %v603
  %v605 = vpop.f32.mrb[0].mxu0
  %v606 = vadd.f32 %v535, %v605
  %v607 = vpop.f32.mrb[0].mxu0
  %v608 = vadd.f32 %v537, %v607
  %v609 = vpop.f32.mrb[0].mxu0
  %v610 = vadd.f32 %v539, %v609
  %611 = vmatprep.mubr.bf16.mxu0 %v153
  %612 = vmatmul.mubr.bf16.gmra.mrb[0].mxu0 %v152
  %v613 = vpop.f32.mrb[0].mxu0
  %v614 = vadd.f32 %v543, %v613
  %v615 = vpop.f32.mrb[0].mxu0
  %v616 = vadd.f32 %v545, %v615
  %v617 = vpop.f32.mrb[0].mxu0
  %v618 = vadd.f32 %v547, %v617
  %v619 = vpop.f32.mrb[0].mxu0
  %v620 = vadd.f32 %v549, %v619
  %621 = vmatprep.mubr.bf16.mxu0 %v157
  %622 = vmatmul.mubr.bf16.gmra.mrb[0].mxu0 %v156
  %v623 = vpop.f32.mrb[0].mxu0
  %v624 = vadd.f32 %v553, %v623
  %v625 = vpop.f32.mrb[0].mxu0
  %v626 = vadd.f32 %v555, %v625
  %v627 = vpop.f32.mrb[0].mxu0
  %v628 = vadd.f32 %v557, %v627
  %v629 = vpop.f32.mrb[0].mxu0
  %v630 = vadd.f32 %v559, %v629
  %631 = vmatprep.mubr.bf16.mxu0 %v161
  %632 = vmatmul.mubr.bf16.gmra.mrb[0].mxu0 %v160
  %v633 = vpop.f32.mrb[0].mxu0
  %v634 = vadd.f32 %v563, %v633
  %v635 = vpop.f32.mrb[0].mxu0
  %v636 = vadd.f32 %v565, %v635
  %v637 = vpop.f32.mrb[0].mxu0
  %v638 = vpop.f32.mrb[0].mxu0
  %639 = vdwg.mxu0
  %v640 = vmax.f32 %v604, 0.0
  %v641 = vmax.f32 %v606, 0.0
  %v642 = vmax.f32 %v608, 0.0
  %v643 = vmax.f32 %v610, 0.0
  %v644 = vmax.f32 %v614, 0.0
  %v645 = vmax.f32 %v616, 0.0
  %v646 = vmax.f32 %v618, 0.0
  %v647 = vmax.f32 %v620, 0.0
  %v648 = vmax.f32 %v624, 0.0
  %v649 = vmax.f32 %v626, 0.0
  %v650 = vmax.f32 %v628, 0.0
  %v651 = vmax.f32 %v630, 0.0
  %v652 = vmax.f32 %v634, 0.0
  %v653 = vmax.f32 %v636, 0.0
  %654 = vst [vmem:[%s3] sm:$0xff] %v640
  %655 = vst [vmem:[%s3 + $0x8] sm:$0xff] %v641
  %656 = vst [vmem:[%s3 + $0x10] sm:$0xff] %v642
  %657 = vst [vmem:[%s3 + $0x18] sm:$0xff] %v643
  %658 = vst [vmem:[%s3 + $0x20] sm:$0xff] %v644
  %659 = vst [vmem:[%s3 + $0x28] sm:$0xff] %v645
  %660 = vst [vmem:[%s3 + $0x30] sm:$0xff] %v646
  %661 = vst [vmem:[%s3 + $0x38] sm:$0xff] %v647
  %662 = vst [vmem:[%s3 + $0x40] sm:$0xff] %v648
  %663 = vst [vmem:[%s3 + $0x48] sm:$0xff] %v649
  %664 = vst [vmem:[%s3 + $0x50] sm:$0xff] %v650
  %665 = vst [vmem:[%s3 + $0x58] sm:$0xff] %v651
  %666 = vst [vmem:[%s3 + $0x60] sm:$0x3] %v652
  %667 = vst [vmem:[%s3 + $0x68] sm:$0x3] %v653
  // Predicated region
  $region14: #{vae_forward.20} parent=0 // pred_check
    _
  $region15: #{vae_forward.20} parent=0 // pred_check_branch
    %669 = sbr.rel (0) target = $region17
  $region16: #{vae_forward.20} parent=0 // pred_region
    _
  $region17: #{vae_forward.20} parent=0 // pred_fallthru
    _
  // Predicated region
  $region18: #{vae_forward.20} parent=0 // pred_check
    _
  $region19: #{vae_forward.20} parent=0 // pred_check_branch
    %671 = sbr.rel (0) target = $region21
  $region20: #{vae_forward.20} parent=0 // pred_region
    _
  $region21: #{vae_forward.20} parent=0 // pred_fallthru
    _

// kernel: tile.38
$region0: #{tile.38}
  #allocation0 [shape = 's32[1]{0}', space=sflag, size = 0x4, scoped, tag = 'scoped memory for tile.38']
  %s0 = inlined_call_operand.vmem [shape: f32[32], index: 0, kind: input, shape index: {}]
  %s1 = inlined_call_operand.vmem [shape: f32[4,32], index: 1, kind: output, shape index: {}]
  // Predicated region
  $region2: #{tile.38} parent=0 // pred_check
    _
  $region3: #{tile.38} parent=0 // pred_check_branch
    %3 = sbr.rel (0) target = $region5
  $region4: #{tile.38} parent=0 // pred_region
    _
  $region5: #{tile.38} parent=0 // pred_fallthru
    _
  %v4 = vld [vmem:[%s0] ss:$0 sm:$0xff]
  %5 = vst [vmem:[%s1] sm:$0xf] %v4

// kernel: tile.39
$region0: #{tile.39}
  %s0 = inlined_call_operand.vmem [shape: f32[4,32], index: 0, kind: input, shape index: {}]
  %s1 = inlined_call_operand.vmem [shape: f32[1,128], index: 1, kind: output, shape index: {}]
  $region1: #{tile.39} parent=0
    #allocation0 [shape = 'u8[4096]{0}', space=vmem, size = 0x1000, scoped, tag = 'scoped mem for output reshape']
    #allocation1 [shape = 'u8[4096]{0}', space=vmem, size = 0x1000, scoped, tag = 'scoped mem for input reshape']
    %s3 = sshllo.u32 0, 4
    %v4 = vld [vmem:[%s0] sm:%s3]
    %5 = vst [vmem:[#allocation1] sm:%s3] %v4
    %v6 = vld [vmem:[#allocation1] sm:$0x1]
    %vm7 = vcmask 261120
    %8 = vst.msk [vmem:[#allocation0] sm:$0x1] %vm7, %v6
    %s9 = scalar_lea.vmem [#allocation1], 3
    %v10 = vld [vmem:[%s9] sm:$0x1]
    %11 = vrot.lane.b32.xlu0 %v10, 96
    %v12 = vpop.permute.xlu0 %11
    %vm13 = vcmask 1048320
    %14 = vst.msk [vmem:[#allocation0] sm:$0x1] %vm13, %v12
    %s15 = scalar_lea.vmem [#allocation1], 2
    %v16 = vld [vmem:[%s15] sm:$0x1]
    %17 = vrot.lane.b32.xlu0 %v16, 64
    %v18 = vpop.permute.xlu0 %17
    %vm19 = vcmask 785920
    %20 = vst.msk [vmem:[#allocation0] sm:$0x1] %vm19, %v18
    %s21 = scalar_lea.vmem [#allocation1], 1
    %v22 = vld [vmem:[%s21] sm:$0x1]
    %23 = vrot.lane.b32.xlu0 %v22, 32
    %v24 = vpop.permute.xlu0 %23
    %vm25 = vcmask 523520
    %26 = vst.msk [vmem:[#allocation0] sm:$0x1] %vm25, %v24
    %s28 = sshllo.u32 0, 1
    %v30 = vld [vmem:[#allocation0] sm:%s28]
    %s31 = sshllo.u32 0, 1
    %32 = vst [vmem:[%s1] sm:%s31] %v30

// kernel: vae_forward.21
$region0: #{vae_forward.21}
  #allocation0 [shape = 'u32[]', space=smem, size = 0x4, offset = 0x4, fixed_abs, tag = 'smem constant byte address 0x4 - core index']
  #allocation1 [shape = 'u32[144,128]{1,0:T(1,128)}', space=vmem, size = 0x12000, scoped, tag = 'internal scratch']
  %s0 = inlined_call_operand.vmem [shape: bf16[162,256], index: 0, kind: input, shape index: {}]
  %s1 = inlined_call_operand.vmem [shape: bf16[256,128], index: 1, kind: input, shape index: {}]
  %s2 = inlined_call_operand.vmem [shape: f32[1,128], index: 2, kind: input, shape index: {}]
  %s3 = inlined_call_operand.vmem [shape: f32[162,128], index: 3, kind: output, shape index: {}]
  %s4 = sld [smem:[#allocation0]]
  $region22: #{vae_forward.21} parent=0
    _
  %s6 = ssub.s32 1, %s4
  %s7 = scalar_select 0, %s6, %s4
  // Predicated region
  $region2: #{vae_forward.21} parent=0 // pred_check
    _
  $region3: #{vae_forward.21} parent=0 // pred_check_branch
    %9 = sbr.rel (0) target = $region5
  $region4: #{vae_forward.21} parent=0 // pred_region
    _
  $region5: #{vae_forward.21} parent=0 // pred_fallthru
    _
  // Predicated region
  $region6: #{vae_forward.21} parent=0 // pred_check
    _
  $region7: #{vae_forward.21} parent=0 // pred_check_branch
    %11 = sbr.rel (0) target = $region9
  $region8: #{vae_forward.21} parent=0 // pred_region
    _
  $region9: #{vae_forward.21} parent=0 // pred_fallthru
    _
  // Predicated region
  $region10: #{vae_forward.21} parent=0 // pred_check
    _
  $region11: #{vae_forward.21} parent=0 // pred_check_branch
    %13 = sbr.rel (0) target = $region13
  $region12: #{vae_forward.21} parent=0 // pred_region
    _
  $region13: #{vae_forward.21} parent=0 // pred_fallthru
    _
  %v15 = vld [vmem:[%s0] sm:$0xff]
  %v16 = vld [vmem:[%s0 + $0x8] sm:$0xff]
  %v17 = vld [vmem:[%s0 + $0x10] sm:$0xff]
  %v18 = vld [vmem:[%s0 + $0x18] sm:$0xff]
  %v19 = vld [vmem:[%s0 + $0x20] sm:$0xff]
  %v20 = vld [vmem:[%s0 + $0x28] sm:$0xff]
  %v21 = vld [vmem:[%s0 + $0x30] sm:$0xff]
  %v22 = vld [vmem:[%s0 + $0x38] sm:$0xff]
  %v23 = vld [vmem:[%s0 + $0x40] sm:$0xff]
  %v24 = vld [vmem:[%s0 + $0x48] sm:$0xff]
  %v25 = vld [vmem:[%s0 + $0x50] sm:$0xff]
  %v26 = vld [vmem:[%s0 + $0x58] sm:$0xff]
  %v27 = vld [vmem:[%s0 + $0x60] sm:$0xff]
  %v28 = vld [vmem:[%s0 + $0x68] sm:$0xff]
  %v29 = vld [vmem:[%s0 + $0x70] sm:$0xff]
  %v30 = vld [vmem:[%s0 + $0x78] sm:$0xff]
  %v31 = vld [vmem:[%s0 + $0x80] sm:$0xff]
  %v32 = vld [vmem:[%s0 + $0x88] sm:$0xff]
  %v33 = vld [vmem:[%s0 + $0x90] sm:$0xff]
  %v34 = vld [vmem:[%s0 + $0x98] sm:$0xff]
  %v35 = vld [vmem:[%s0 + $0xa0] sm:$0x11]
  %v36 = vld [vmem:[%s1] sm:$0xf]
  %v37 = vld [vmem:[%s1 + $0x4] sm:$0xf]
  %v38 = vld [vmem:[%s1 + $0x8] sm:$0xf]
  %v39 = vld [vmem:[%s1 + $0xc] sm:$0xf]
  %v40 = vld [vmem:[%s1 + $0x10] sm:$0xf]
  %v41 = vld [vmem:[%s1 + $0x14] sm:$0xf]
  %v42 = vld [vmem:[%s1 + $0x18] sm:$0xf]
  %v43 = vld [vmem:[%s1 + $0x1c] sm:$0xf]
  %v44 = vld [vmem:[%s1 + $0x20] sm:$0xf]
  %v45 = vld [vmem:[%s1 + $0x24] sm:$0xf]
  %v46 = vld [vmem:[%s1 + $0x28] sm:$0xf]
  %v47 = vld [vmem:[%s1 + $0x2c] sm:$0xf]
  %v48 = vld [vmem:[%s1 + $0x30] sm:$0xf]
  %v49 = vld [vmem:[%s1 + $0x34] sm:$0xf]
  %v50 = vld [vmem:[%s1 + $0x38] sm:$0xf]
  %v51 = vld [vmem:[%s1 + $0x3c] sm:$0xf]
  %v52 = vld [vmem:[%s1 + $0x40] sm:$0xf]
  %v53 = vld [vmem:[%s1 + $0x44] sm:$0xf]
  %v54 = vld [vmem:[%s1 + $0x48] sm:$0xf]
  %v55 = vld [vmem:[%s1 + $0x4c] sm:$0xf]
  %v56 = vld [vmem:[%s1 + $0x50] sm:$0xf]
  %v57 = vld [vmem:[%s1 + $0x54] sm:$0xf]
  %v58 = vld [vmem:[%s1 + $0x58] sm:$0xf]
  %v59 = vld [vmem:[%s1 + $0x5c] sm:$0xf]
  %v60 = vld [vmem:[%s1 + $0x60] sm:$0xf]
  %v61 = vld [vmem:[%s1 + $0x64] sm:$0xf]
  %v62 = vld [vmem:[%s1 + $0x68] sm:$0xf]
  %v63 = vld [vmem:[%s1 + $0x6c] sm:$0xf]
  %v64 = vld [vmem:[%s1 + $0x70] sm:$0xf]
  %v65 = vld [vmem:[%s1 + $0x74] sm:$0xf]
  %v66 = vld [vmem:[%s1 + $0x78] sm:$0xf]
  %v67 = vld [vmem:[%s1 + $0x7c] sm:$0xf]
  %v68 = vld [vmem:[%s2] sm:$0x1]
  %v70 = vlaneseq
  %v71 = vshrl.u32 %v70, 7
  %v72 = vsub.s32 0, %v71
  %v73 = vrot.slane %v68, %v72
  %v96 = vunpack.c.l.b16 %v15
  %v97 = vunpack.c.h.b16 %v15
  %v98 = vunpack.c.l.b16 %v16
  %v99 = vunpack.c.h.b16 %v16
  %v100 = vunpack.c.l.b16 %v17
  %v101 = vunpack.c.h.b16 %v17
  %v102 = vunpack.c.l.b16 %v18
  %v103 = vunpack.c.h.b16 %v18
  %v104 = vunpack.c.l.b16 %v19
  %v105 = vunpack.c.h.b16 %v19
  %v106 = vunpack.c.l.b16 %v20
  %v107 = vunpack.c.h.b16 %v20
  %v108 = vunpack.c.l.b16 %v21
  %v109 = vunpack.c.h.b16 %v21
  %v110 = vunpack.c.l.b16 %v22
  %v111 = vunpack.c.h.b16 %v22
  %v112 = vunpack.c.l.b16 %v23
  %v113 = vunpack.c.h.b16 %v23
  %v114 = vunpack.c.l.b16 %v24
  %v115 = vunpack.c.h.b16 %v24
  %v116 = vunpack.c.l.b16 %v25
  %v117 = vunpack.c.h.b16 %v25
  %v118 = vunpack.c.l.b16 %v26
  %v119 = vunpack.c.h.b16 %v26
  %v120 = vunpack.c.l.b16 %v27
  %v121 = vunpack.c.h.b16 %v27
  %v122 = vunpack.c.l.b16 %v28
  %v123 = vunpack.c.h.b16 %v28
  %v124 = vunpack.c.l.b16 %v29
  %v125 = vunpack.c.h.b16 %v29
  %v126 = vunpack.c.l.b16 %v30
  %v127 = vunpack.c.h.b16 %v30
  %v128 = vunpack.c.l.b16 %v31
  %v129 = vunpack.c.h.b16 %v31
  %v130 = vunpack.c.l.b16 %v32
  %v131 = vunpack.c.h.b16 %v32
  %v132 = vunpack.c.l.b16 %v33
  %v133 = vunpack.c.h.b16 %v33
  %v134 = vunpack.c.l.b16 %v34
  %v135 = vunpack.c.h.b16 %v34
  %v136 = vunpack.c.l.b16 %v35
  %v137 = vunpack.c.h.b16 %v35
  %v138 = vpack.c.b16 %v98, %v96
  %v139 = vpack.c.b16 %v99, %v97
  %v140 = vpack.c.b16 %v102, %v100
  %v141 = vpack.c.b16 %v103, %v101
  %v142 = vpack.c.b16 %v106, %v104
  %v143 = vpack.c.b16 %v107, %v105
  %v144 = vpack.c.b16 %v110, %v108
  %v145 = vpack.c.b16 %v111, %v109
  %v146 = vpack.c.b16 %v114, %v112
  %v147 = vpack.c.b16 %v115, %v113
  %v148 = vpack.c.b16 %v118, %v116
  %v149 = vpack.c.b16 %v119, %v117
  %v150 = vpack.c.b16 %v122, %v120
  %v151 = vpack.c.b16 %v123, %v121
  %v152 = vpack.c.b16 %v126, %v124
  %v153 = vpack.c.b16 %v127, %v125
  %v154 = vpack.c.b16 %v130, %v128
  %v155 = vpack.c.b16 %v131, %v129
  %v156 = vpack.c.b16 %v134, %v132
  %v157 = vpack.c.b16 %v135, %v133
  %v158 = vpack.c.b16 %v136, %v136
  %v159 = vpack.c.b16 %v137, %v137
  %v214 = vunpack.c.l.b16 %v36
  %v215 = vunpack.c.l.b16 %v37
  %v216 = vunpack.c.l.b16 %v38
  %v217 = vunpack.c.l.b16 %v39
  %v218 = vunpack.c.l.b16 %v40
  %v219 = vunpack.c.l.b16 %v41
  %v220 = vunpack.c.l.b16 %v42
  %v221 = vunpack.c.l.b16 %v43
  %v222 = vunpack.c.l.b16 %v44
  %v223 = vunpack.c.l.b16 %v45
  %v224 = vunpack.c.l.b16 %v46
  %v225 = vunpack.c.l.b16 %v47
  %v226 = vunpack.c.l.b16 %v48
  %v227 = vunpack.c.l.b16 %v49
  %v228 = vunpack.c.l.b16 %v50
  %v229 = vunpack.c.l.b16 %v51
  %v230 = vunpack.c.l.b16 %v52
  %v231 = vunpack.c.l.b16 %v53
  %v232 = vunpack.c.l.b16 %v54
  %v233 = vunpack.c.l.b16 %v55
  %v234 = vunpack.c.l.b16 %v56
  %v235 = vunpack.c.l.b16 %v57
  %v236 = vunpack.c.l.b16 %v58
  %v237 = vunpack.c.l.b16 %v59
  %v238 = vunpack.c.l.b16 %v60
  %v239 = vunpack.c.l.b16 %v61
  %v240 = vunpack.c.l.b16 %v62
  %v241 = vunpack.c.l.b16 %v63
  %v242 = vunpack.c.l.b16 %v64
  %v243 = vunpack.c.l.b16 %v65
  %v244 = vunpack.c.l.b16 %v66
  %v245 = vunpack.c.l.b16 %v67
  %v246 = vpack.c.b16 %v215, %v214
  %v247 = vpack.c.b16 %v217, %v216
  %v248 = vpack.c.b16 %v219, %v218
  %v249 = vpack.c.b16 %v221, %v220
  %v250 = vpack.c.b16 %v223, %v222
  %v251 = vpack.c.b16 %v225, %v224
  %v252 = vpack.c.b16 %v227, %v226
  %v253 = vpack.c.b16 %v229, %v228
  %v254 = vpack.c.b16 %v231, %v230
  %v255 = vpack.c.b16 %v233, %v232
  %v256 = vpack.c.b16 %v235, %v234
  %v257 = vpack.c.b16 %v237, %v236
  %v258 = vpack.c.b16 %v239, %v238
  %v259 = vpack.c.b16 %v241, %v240
  %v260 = vpack.c.b16 %v243, %v242
  %v261 = vpack.c.b16 %v245, %v244
  %278 = vmatprep.subr.bf16.mxu0 0
  %279 = vmatpush1.bf16.msra.mxu0 %v246
  %280 = vmatprep.subr.bf16.mxu0 0
  %281 = vmatpush1.bf16.msra.mxu0 %v247
  %282 = vmatprep.subr.bf16.mxu0 0
  %283 = vmatpush1.bf16.msra.mxu0 %v248
  %284 = vmatprep.subr.bf16.mxu0 0
  %285 = vmatpush1.bf16.msra.mxu0 %v249
  %286 = vmatprep.subr.bf16.mxu0 0
  %287 = vmatpush1.bf16.msra.mxu0 %v250
  %288 = vmatprep.subr.bf16.mxu0 0
  %289 = vmatpush1.bf16.msra.mxu0 %v251
  %290 = vmatprep.subr.bf16.mxu0 0
  %291 = vmatpush1.bf16.msra.mxu0 %v252
  %292 = vmatprep.subr.bf16.mxu0 0
  %293 = vmatpush1.bf16.msra.mxu0 %v253
  %294 = vmatprep.subr.bf16.mxu0 0
  %295 = vmatpush1.bf16.msra.mxu0 %v254
  %296 = vmatprep.subr.bf16.mxu0 0
  %297 = vmatpush1.bf16.msra.mxu0 %v255
  %298 = vmatprep.subr.bf16.mxu0 0
  %299 = vmatpush1.bf16.msra.mxu0 %v256
  %300 = vmatprep.subr.bf16.mxu0 0
  %301 = vmatpush1.bf16.msra.mxu0 %v257
  %302 = vmatprep.subr.bf16.mxu0 0
  %303 = vmatpush1.bf16.msra.mxu0 %v258
  %304 = vmatprep.subr.bf16.mxu0 0
  %305 = vmatpush1.bf16.msra.mxu0 %v259
  %306 = vmatprep.subr.bf16.mxu0 0
  %307 = vmatpush1.bf16.msra.mxu0 %v260
  %308 = vmatprep.subr.bf16.mxu0 0
  %309 = vmatpush1.bf16.msra.mxu0 %v261
  %310 = vmatprep.mubr.bf16.mxu0 %v139
  %311 = vmatmul.mubr.bf16.gmra.mrb[0].mxu0 %v138
  %v312 = vpop.f32.mrb[0].mxu0
  %v313 = vadd.f32 %v73, %v312
  %v314 = vpop.f32.mrb[0].mxu0
  %v315 = vpop.f32.mrb[0].mxu0
  %v316 = vadd.f32 %v73, %v315
  %v317 = vpop.f32.mrb[0].mxu0
  %318 = vmatprep.mubr.bf16.mxu0 %v141
  %319 = vmatmul.mubr.bf16.gmra.mrb[0].mxu0 %v140
  %v320 = vpop.f32.mrb[0].mxu0
  %v321 = vadd.f32 %v73, %v320
  %v322 = vpop.f32.mrb[0].mxu0
  %v323 = vpop.f32.mrb[0].mxu0
  %v324 = vadd.f32 %v73, %v323
  %v325 = vpop.f32.mrb[0].mxu0
  %326 = vmatprep.mubr.bf16.mxu0 %v143
  %327 = vmatmul.mubr.bf16.gmra.mrb[0].mxu0 %v142
  %v328 = vpop.f32.mrb[0].mxu0
  %v329 = vadd.f32 %v73, %v328
  %v330 = vpop.f32.mrb[0].mxu0
  %v331 = vpop.f32.mrb[0].mxu0
  %v332 = vadd.f32 %v73, %v331
  %v333 = vpop.f32.mrb[0].mxu0
  %334 = vmatprep.mubr.bf16.mxu0 %v145
  %335 = vmatmul.mubr.bf16.gmra.mrb[0].mxu0 %v144
  %v336 = vpop.f32.mrb[0].mxu0
  %v337 = vadd.f32 %v73, %v336
  %v338 = vpop.f32.mrb[0].mxu0
  %v339 = vpop.f32.mrb[0].mxu0
  %v340 = vadd.f32 %v73, %v339
  %v341 = vpop.f32.mrb[0].mxu0
  %342 = vmatprep.mubr.bf16.mxu0 %v147
  %343 = vmatmul.mubr.bf16.gmra.mrb[0].mxu0 %v146
  %v344 = vpop.f32.mrb[0].mxu0
  %v345 = vadd.f32 %v73, %v344
  %v346 = vpop.f32.mrb[0].mxu0
  %v347 = vpop.f32.mrb[0].mxu0
  %v348 = vadd.f32 %v73, %v347
  %v349 = vpop.f32.mrb[0].mxu0
  %350 = vmatprep.mubr.bf16.mxu0 %v149
  %351 = vmatmul.mubr.bf16.gmra.mrb[0].mxu0 %v148
  %v352 = vpop.f32.mrb[0].mxu0
  %v353 = vadd.f32 %v73, %v352
  %v354 = vpop.f32.mrb[0].mxu0
  %v355 = vpop.f32.mrb[0].mxu0
  %v356 = vadd.f32 %v73, %v355
  %v357 = vpop.f32.mrb[0].mxu0
  %358 = vmatprep.mubr.bf16.mxu0 %v151
  %359 = vmatmul.mubr.bf16.gmra.mrb[0].mxu0 %v150
  %v360 = vpop.f32.mrb[0].mxu0
  %v361 = vadd.f32 %v73, %v360
  %v362 = vpop.f32.mrb[0].mxu0
  %v363 = vpop.f32.mrb[0].mxu0
  %v364 = vadd.f32 %v73, %v363
  %v365 = vpop.f32.mrb[0].mxu0
  %366 = vmatprep.mubr.bf16.mxu0 %v153
  %367 = vmatmul.mubr.bf16.gmra.mrb[0].mxu0 %v152
  %v368 = vpop.f32.mrb[0].mxu0
  %v369 = vadd.f32 %v73, %v368
  %v370 = vpop.f32.mrb[0].mxu0
  %v371 = vpop.f32.mrb[0].mxu0
  %v372 = vadd.f32 %v73, %v371
  %v373 = vpop.f32.mrb[0].mxu0
  %374 = vmatprep.mubr.bf16.mxu0 %v155
  %375 = vmatmul.mubr.bf16.gmra.mrb[0].mxu0 %v154
  %v376 = vpop.f32.mrb[0].mxu0
  %v377 = vadd.f32 %v73, %v376
  %v378 = vpop.f32.mrb[0].mxu0
  %v379 = vpop.f32.mrb[0].mxu0
  %v380 = vadd.f32 %v73, %v379
  %v381 = vpop.f32.mrb[0].mxu0
  %382 = vmatprep.mubr.bf16.mxu0 %v157
  %383 = vmatmul.mubr.bf16.gmra.mrb[0].mxu0 %v156
  %v384 = vpop.f32.mrb[0].mxu0
  %v385 = vadd.f32 %v73, %v384
  %v386 = vpop.f32.mrb[0].mxu0
  %v387 = vpop.f32.mrb[0].mxu0
  %v388 = vadd.f32 %v73, %v387
  %v389 = vpop.f32.mrb[0].mxu0
  %390 = vmatprep.mubr.bf16.mxu0 %v159
  %391 = vmatmul.mubr.bf16.gmra.mrb[0].mxu0 %v158
  %v392 = vpop.f32.mrb[0].mxu0
  %v393 = vadd.f32 %v73, %v392
  %v394 = vpop.f32.mrb[0].mxu0
  %v395 = vpop.f32.mrb[0].mxu0
  %v396 = vpop.f32.mrb[0].mxu0
  %397 = vdwg.mxu0
  %v398 = vmax.f32 %v313, 0.0
  %v399 = vmax.f32 %v316, 0.0
  %v400 = vmax.f32 %v321, 0.0
  %v401 = vmax.f32 %v324, 0.0
  %v402 = vmax.f32 %v329, 0.0
  %v403 = vmax.f32 %v332, 0.0
  %v404 = vmax.f32 %v337, 0.0
  %v405 = vmax.f32 %v340, 0.0
  %v406 = vmax.f32 %v345, 0.0
  %v407 = vmax.f32 %v348, 0.0
  %v408 = vmax.f32 %v353, 0.0
  %v409 = vmax.f32 %v356, 0.0
  %v410 = vmax.f32 %v361, 0.0
  %v411 = vmax.f32 %v364, 0.0
  %v412 = vmax.f32 %v369, 0.0
  %v413 = vmax.f32 %v372, 0.0
  %v414 = vmax.f32 %v377, 0.0
  %v415 = vmax.f32 %v380, 0.0
  %v416 = vmax.f32 %v385, 0.0
  %v417 = vmax.f32 %v388, 0.0
  %v418 = vmax.f32 %v393, 0.0
  %419 = vst [vmem:[%s3] sm:$0xff] %v398
  %420 = vst [vmem:[%s3 + $0x8] sm:$0xff] %v399
  %421 = vst [vmem:[%s3 + $0x10] sm:$0xff] %v400
  %422 = vst [vmem:[%s3 + $0x18] sm:$0xff] %v401
  %423 = vst [vmem:[%s3 + $0x20] sm:$0xff] %v402
  %424 = vst [vmem:[%s3 + $0x28] sm:$0xff] %v403
  %425 = vst [vmem:[%s3 + $0x30] sm:$0xff] %v404
  %426 = vst [vmem:[%s3 + $0x38] sm:$0xff] %v405
  %427 = vst [vmem:[%s3 + $0x40] sm:$0xff] %v406
  %428 = vst [vmem:[%s3 + $0x48] sm:$0xff] %v407
  %429 = vst [vmem:[%s3 + $0x50] sm:$0xff] %v408
  %430 = vst [vmem:[%s3 + $0x58] sm:$0xff] %v409
  %431 = vst [vmem:[%s3 + $0x60] sm:$0xff] %v410
  %432 = vst [vmem:[%s3 + $0x68] sm:$0xff] %v411
  %433 = vst [vmem:[%s3 + $0x70] sm:$0xff] %v412
  %434 = vst [vmem:[%s3 + $0x78] sm:$0xff] %v413
  %435 = vst [vmem:[%s3 + $0x80] sm:$0xff] %v414
  %436 = vst [vmem:[%s3 + $0x88] sm:$0xff] %v415
  %437 = vst [vmem:[%s3 + $0x90] sm:$0xff] %v416
  %438 = vst [vmem:[%s3 + $0x98] sm:$0xff] %v417
  %439 = vst [vmem:[%s3 + $0xa0] sm:$0x3] %v418
  // Predicated region
  $region14: #{vae_forward.21} parent=0 // pred_check
    _
  $region15: #{vae_forward.21} parent=0 // pred_check_branch
    %441 = sbr.rel (0) target = $region17
  $region16: #{vae_forward.21} parent=0 // pred_region
    _
  $region17: #{vae_forward.21} parent=0 // pred_fallthru
    _
  // Predicated region
  $region18: #{vae_forward.21} parent=0 // pred_check
    _
  $region19: #{vae_forward.21} parent=0 // pred_check_branch
    %443 = sbr.rel (0) target = $region21
  $region20: #{vae_forward.21} parent=0 // pred_region
    _
  $region21: #{vae_forward.21} parent=0 // pred_fallthru
    _

// kernel: vae_forward.22
$region0: #{vae_forward.22}
  #allocation0 [shape = 'u32[]', space=smem, size = 0x4, offset = 0x4, fixed_abs, tag = 'smem constant byte address 0x4 - core index']
  #allocation1 [shape = 'u32[144,128]{1,0:T(1,128)}', space=vmem, size = 0x12000, scoped, tag = 'internal scratch']
  %s0 = inlined_call_operand.vmem [shape: bf16[768,128], index: 0, kind: input, shape index: {}]
  %s1 = inlined_call_operand.vmem [shape: bf16[128,128], index: 1, kind: input, shape index: {}]
  %s2 = inlined_call_operand.vmem [shape: f32[1,128], index: 2, kind: input, shape index: {}]
  %s3 = inlined_call_operand.vmem [shape: f32[768,128], index: 3, kind: output, shape index: {}]
  %s4 = sld [smem:[#allocation0]]
  $region45: #{vae_forward.22} parent=0
    _
  %s6 = ssub.s32 1, %s4
  %s7 = scalar_select 0, %s6, %s4
  loop: start=0, step=1, limit=5
  $region2: #{vae_forward.22} parent=0 // loop_pre_header
    _
  $region3: #{vae_forward.22} parent=0 // loop_header
    %s9 = sphi 0, %s13
    %p10 = scmp.ge.s32.totalorder %s9, 5
    %s19 = sphi 0, %s21
    %s22 = sphi 0, %s19
    %s23 = sphi 0, %s22
    %s39 = sphi 0, %s23
    %s43 = sphi 0, %s43
    %s45 = sphi 0, %s43
    %s46 = sphi 0, %s45
    %s60 = sphi 0, %s46
    %s64 = sphi 0, %s64
    %s66 = sphi 0, %s64
    %s67 = sphi 0, %s66
    %s81 = sphi 0, %s67
    %s87 = sphi 0, %s89
    %s90 = sphi 0, %s87
    %s91 = sphi 0, %s90
    %s107 = sphi 0, %s91
  $region4: #{vae_forward.22} parent=0 // loop_header_branch
    %12 = sbr.rel (%p10) target = $region8
  $region5: #{vae_forward.22} parent=0 // loop_body
    %s14 = ssub.s32 %s9, 1
    %s15 = ssub.s32 %s9, 2
    %s16 = sadd.s32 %s9, 1
    %s17 = ssub.s32 %s9, %s16
    %p18 = scmp.eq.s32.totalorder %s17, 0
    %s20 = sadd.s32 %s19, 1
    %s21 = scalar_select %p18, %s19, %s20
    %p24 = pneg %p18
    %p25 = scmp.eq.s32.totalorder %s9, 2
    %p26 = por %p24, %p25
    %p27 = scmp.ne.s32.totalorder %s19, %s22
    %p28 = scmp.eq.s32.totalorder %s9, 0
    %p29 = por %p27, %p28
    %p30 = scmp.ne.s32.totalorder %s19, %s22
    %p31 = scmp.eq.s32.totalorder %s14, 2
    %p32 = por %p30, %p31
    %p33 = scmp.ne.s32.totalorder %s22, %s23
    %p34 = scmp.eq.s32.totalorder %s14, 0
    %p35 = por %p33, %p34
    %p36 = scmp.ne.s32.totalorder %s22, %s23
    %p37 = scmp.eq.s32.totalorder %s15, 2
    %p38 = por %p36, %p37
    %p40 = scmp.ne.s32.totalorder %s23, %s39
    %p41 = scmp.eq.s32.totalorder %s15, 0
    %p42 = por %p40, %p41
    %s44 = sadd.s32 %s43, 1
    %p47 = scmp.eq.s32.totalorder %s9, 2
    %p48 = scmp.ne.s32.totalorder %s43, %s45
    %p49 = scmp.eq.s32.totalorder %s9, 0
    %p50 = por %p48, %p49
    %p51 = scmp.ne.s32.totalorder %s43, %s45
    %p52 = scmp.eq.s32.totalorder %s14, 2
    %p53 = por %p51, %p52
    %p54 = scmp.ne.s32.totalorder %s45, %s46
    %p55 = scmp.eq.s32.totalorder %s14, 0
    %p56 = por %p54, %p55
    %p57 = scmp.ne.s32.totalorder %s45, %s46
    %p58 = scmp.eq.s32.totalorder %s15, 2
    %p59 = por %p57, %p58
    %p61 = scmp.ne.s32.totalorder %s46, %s60
    %p62 = scmp.eq.s32.totalorder %s15, 0
    %p63 = por %p61, %p62
    %s65 = sadd.s32 %s64, 1
    %p68 = scmp.eq.s32.totalorder %s9, 2
    %p69 = scmp.ne.s32.totalorder %s64, %s66
    %p70 = scmp.eq.s32.totalorder %s9, 0
    %p71 = por %p69, %p70
    %p72 = scmp.ne.s32.totalorder %s64, %s66
    %p73 = scmp.eq.s32.totalorder %s14, 2
    %p74 = por %p72, %p73
    %p75 = scmp.ne.s32.totalorder %s66, %s67
    %p76 = scmp.eq.s32.totalorder %s14, 0
    %p77 = por %p75, %p76
    %p78 = scmp.ne.s32.totalorder %s66, %s67
    %p79 = scmp.eq.s32.totalorder %s15, 2
    %p80 = por %p78, %p79
    %p82 = scmp.ne.s32.totalorder %s67, %s81
    %p83 = scmp.eq.s32.totalorder %s15, 0
    %p84 = por %p82, %p83
    %s85 = ssub.s32 %s9, %s16
    %p86 = scmp.eq.s32.totalorder %s85, 0
    %s88 = sadd.s32 %s87, 1
    %s89 = scalar_select %p86, %s87, %s88
    %p92 = pneg %p86
    %p93 = scmp.eq.s32.totalorder %s9, 2
    %p94 = por %p92, %p93
    %p95 = scmp.ne.s32.totalorder %s87, %s90
    %p96 = scmp.eq.s32.totalorder %s9, 0
    %p97 = por %p95, %p96
    %p98 = scmp.ne.s32.totalorder %s87, %s90
    %p99 = scmp.eq.s32.totalorder %s14, 2
    %p100 = por %p98, %p99
    %p101 = scmp.ne.s32.totalorder %s90, %s91
    %p102 = scmp.eq.s32.totalorder %s14, 0
    %p103 = por %p101, %p102
    %p104 = scmp.ne.s32.totalorder %s90, %s91
    %p105 = scmp.eq.s32.totalorder %s15, 2
    %p106 = por %p104, %p105
    %p108 = scmp.ne.s32.totalorder %s91, %s107
    %p109 = scmp.eq.s32.totalorder %s15, 0
    %p110 = por %p108, %p109
    %p111 = scmp.le.s32.totalorder 1, %s9
    %p112 = scmp.lt.s32.totalorder %s9, 4
    %p113 = pnand %p111, %p112
    %p114 = pneg %p113
    // Predicated region
    $region9: #{vae_forward.22} parent=5 // pred_check
      _
    $region10: #{vae_forward.22} parent=5 // pred_check_branch
      %116 = sbr.rel (%p113) target = $region12
    $region11: #{vae_forward.22} parent=5 // pred_region
      %s117 = ssub.s32 %s9, 1
      // Predicated region
      $region13: #{vae_forward.22} parent=11 // pred_check
        %p118 = pneg %p56
      $region14: #{vae_forward.22} parent=11 // pred_check_branch
        %120 = sbr.rel (%p118) target = $region16
      $region15: #{vae_forward.22} parent=11 // pred_region
        _
      $region16: #{vae_forward.22} parent=11 // pred_fallthru
        _
      // Predicated region
      $region17: #{vae_forward.22} parent=11 // pred_check
        %p121 = pneg %p77
      $region18: #{vae_forward.22} parent=11 // pred_check_branch
        %123 = sbr.rel (%p121) target = $region20
      $region19: #{vae_forward.22} parent=11 // pred_region
        _
      $region20: #{vae_forward.22} parent=11 // pred_fallthru
        _
    $region12: #{vae_forward.22} parent=5 // pred_fallthru
      _
    %p124 = scmp.lt.s32.totalorder %s9, 3
    // Predicated region
    $region21: #{vae_forward.22} parent=5 // pred_check
      %p125 = pneg %p124
    $region22: #{vae_forward.22} parent=5 // pred_check_branch
      %127 = sbr.rel (%p125) target = $region24
    $region23: #{vae_forward.22} parent=5 // pred_region
      // Predicated region
      $region25: #{vae_forward.22} parent=23 // pred_check
        %p128 = pneg %p29
      $region26: #{vae_forward.22} parent=23 // pred_check_branch
        %130 = sbr.rel (%p128) target = $region28
      $region27: #{vae_forward.22} parent=23 // pred_region
        %s131 = smul.u32 32, %s9
        %p132 = scmp.lt.s32.totalorder %s131, 95
        %s133 = scalar_select %p132, %s131, 95
        %s134 = smul.addr %s133, 4
        %s135 = scalar_lea.vmem %s0, %s134
        %s136 = smul.u32 32, %s9
      $region28: #{vae_forward.22} parent=23 // pred_fallthru
        _
    $region24: #{vae_forward.22} parent=5 // pred_fallthru
      _
    %p137 = scmp.le.s32.totalorder 1, %s9
    %p138 = scmp.lt.s32.totalorder %s9, 4
    %p139 = pnand %p137, %p138
    %p140 = pneg %p139
    // Predicated region
    $region29: #{vae_forward.22} parent=5 // pred_check
      _
    $region30: #{vae_forward.22} parent=5 // pred_check_branch
      %142 = sbr.rel (%p139) target = $region32
    $region31: #{vae_forward.22} parent=5 // pred_region
      %s143 = ssub.s32 %s9, 1
      %s144 = smul.u32 32, %s14
      %p145 = scmp.lt.s32.totalorder %s144, 95
      %s146 = scalar_select %p145, %s144, 95
      %s147 = smul.addr %s146, 4
      %s148 = scalar_lea.vmem %s0, %s147
      %p149 = pneg %p35
      %p150 = pneg %p32
      %p151 = pneg %p56
      %p152 = pneg %p53
      %p153 = pneg %p77
      %p154 = pneg %p74
      %p155 = pneg %p103
      %p156 = pneg %p100
      %s157 = smul.u32 32, %s14
      %p158 = scmp.lt.s32.totalorder %s157, 95
      %s159 = scalar_select %p158, %s157, 95
      %s160 = smul.addr %s159, 8
      %s161 = scalar_lea.vmem %s3, %s160
      %s162 = smul.u32 32, %s14
      %p163 = scmp.lt.s32.totalorder %s162, 95
      %s164 = scalar_select %p163, %s162, 95
      %s165 = smul.addr %s164, 4
      %s166 = scalar_lea.vmem %s0, %s165
      %s167 = smul.u32 32, %s14
      %s168 = smul.u32 32, %s14
      %p169 = scmp.lt.s32.totalorder %s168, 95
      %s170 = scalar_select %p169, %s168, 95
      %s171 = smul.addr %s170, 8
      %s172 = scalar_lea.vmem %s3, %s171
      %s173 = smul.u32 32, %s14
      %v175 = vld [vmem:[%s166] sm:$0xf]
      %v176 = vld [vmem:[%s166 + $0x4] sm:$0xf]
      %v177 = vld [vmem:[%s166 + $0x8] sm:$0xf]
      %v178 = vld [vmem:[%s166 + $0xc] sm:$0xf]
      %v179 = vld [vmem:[%s166 + $0x10] sm:$0xf]
      %v180 = vld [vmem:[%s166 + $0x14] sm:$0xf]
      %v181 = vld [vmem:[%s166 + $0x18] sm:$0xf]
      %v182 = vld [vmem:[%s166 + $0x1c] sm:$0xf]
      %v183 = vld [vmem:[%s166 + $0x20] sm:$0xf]
      %v184 = vld [vmem:[%s166 + $0x24] sm:$0xf]
      %v185 = vld [vmem:[%s166 + $0x28] sm:$0xf]
      %v186 = vld [vmem:[%s166 + $0x2c] sm:$0xf]
      %v187 = vld [vmem:[%s166 + $0x30] sm:$0xf]
      %v188 = vld [vmem:[%s166 + $0x34] sm:$0xf]
      %v189 = vld [vmem:[%s166 + $0x38] sm:$0xf]
      %v190 = vld [vmem:[%s166 + $0x3c] sm:$0xf]
      %v191 = vld [vmem:[%s166 + $0x40] sm:$0xf]
      %v192 = vld [vmem:[%s166 + $0x44] sm:$0xf]
      %v193 = vld [vmem:[%s166 + $0x48] sm:$0xf]
      %v194 = vld [vmem:[%s166 + $0x4c] sm:$0xf]
      %v195 = vld [vmem:[%s166 + $0x50] sm:$0xf]
      %v196 = vld [vmem:[%s166 + $0x54] sm:$0xf]
      %v197 = vld [vmem:[%s166 + $0x58] sm:$0xf]
      %v198 = vld [vmem:[%s166 + $0x5c] sm:$0xf]
      %v199 = vld [vmem:[%s166 + $0x60] sm:$0xf]
      %v200 = vld [vmem:[%s166 + $0x64] sm:$0xf]
      %v201 = vld [vmem:[%s166 + $0x68] sm:$0xf]
      %v202 = vld [vmem:[%s166 + $0x6c] sm:$0xf]
      %v203 = vld [vmem:[%s166 + $0x70] sm:$0xf]
      %v204 = vld [vmem:[%s166 + $0x74] sm:$0xf]
      %v205 = vld [vmem:[%s166 + $0x78] sm:$0xf]
      %v206 = vld [vmem:[%s166 + $0x7c] sm:$0xf]
      %v207 = vld [vmem:[%s1] sm:$0xf]
      %v208 = vld [vmem:[%s1 + $0x4] sm:$0xf]
      %v209 = vld [vmem:[%s1 + $0x8] sm:$0xf]
      %v210 = vld [vmem:[%s1 + $0xc] sm:$0xf]
      %v211 = vld [vmem:[%s1 + $0x10] sm:$0xf]
      %v212 = vld [vmem:[%s1 + $0x14] sm:$0xf]
      %v213 = vld [vmem:[%s1 + $0x18] sm:$0xf]
      %v214 = vld [vmem:[%s1 + $0x1c] sm:$0xf]
      %v215 = vld [vmem:[%s1 + $0x20] sm:$0xf]
      %v216 = vld [vmem:[%s1 + $0x24] sm:$0xf]
      %v217 = vld [vmem:[%s1 + $0x28] sm:$0xf]
      %v218 = vld [vmem:[%s1 + $0x2c] sm:$0xf]
      %v219 = vld [vmem:[%s1 + $0x30] sm:$0xf]
      %v220 = vld [vmem:[%s1 + $0x34] sm:$0xf]
      %v221 = vld [vmem:[%s1 + $0x38] sm:$0xf]
      %v222 = vld [vmem:[%s1 + $0x3c] sm:$0xf]
      %v223 = vld [vmem:[%s2] sm:$0x1]
      %v225 = vlaneseq
      %v226 = vshrl.u32 %v225, 7
      %v227 = vsub.s32 0, %v226
      %v228 = vrot.slane %v223, %v227
      %v262 = vunpack.c.l.b16 %v175
      %v263 = vunpack.c.l.b16 %v176
      %v264 = vunpack.c.l.b16 %v177
      %v265 = vunpack.c.l.b16 %v178
      %v266 = vunpack.c.l.b16 %v179
      %v267 = vunpack.c.l.b16 %v180
      %v268 = vunpack.c.l.b16 %v181
      %v269 = vunpack.c.l.b16 %v182
      %v270 = vunpack.c.l.b16 %v183
      %v271 = vunpack.c.l.b16 %v184
      %v272 = vunpack.c.l.b16 %v185
      %v273 = vunpack.c.l.b16 %v186
      %v274 = vunpack.c.l.b16 %v187
      %v275 = vunpack.c.l.b16 %v188
      %v276 = vunpack.c.l.b16 %v189
      %v277 = vunpack.c.l.b16 %v190
      %v278 = vunpack.c.l.b16 %v191
      %v279 = vunpack.c.l.b16 %v192
      %v280 = vunpack.c.l.b16 %v193
      %v281 = vunpack.c.l.b16 %v194
      %v282 = vunpack.c.l.b16 %v195
      %v283 = vunpack.c.l.b16 %v196
      %v284 = vunpack.c.l.b16 %v197
      %v285 = vunpack.c.l.b16 %v198
      %v286 = vunpack.c.l.b16 %v199
      %v287 = vunpack.c.l.b16 %v200
      %v288 = vunpack.c.l.b16 %v201
      %v289 = vunpack.c.l.b16 %v202
      %v290 = vunpack.c.l.b16 %v203
      %v291 = vunpack.c.l.b16 %v204
      %v292 = vunpack.c.l.b16 %v205
      %v293 = vunpack.c.l.b16 %v206
      %v294 = vpack.c.b16 %v263, %v262
      %v295 = vpack.c.b16 %v265, %v264
      %v296 = vpack.c.b16 %v267, %v266
      %v297 = vpack.c.b16 %v269, %v268
      %v298 = vpack.c.b16 %v271, %v270
      %v299 = vpack.c.b16 %v273, %v272
      %v300 = vpack.c.b16 %v275, %v274
      %v301 = vpack.c.b16 %v277, %v276
      %v302 = vpack.c.b16 %v279, %v278
      %v303 = vpack.c.b16 %v281, %v280
      %v304 = vpack.c.b16 %v283, %v282
      %v305 = vpack.c.b16 %v285, %v284
      %v306 = vpack.c.b16 %v287, %v286
      %v307 = vpack.c.b16 %v289, %v288
      %v308 = vpack.c.b16 %v291, %v290
      %v309 = vpack.c.b16 %v293, %v292
      %v342 = vunpack.c.l.b16 %v207
      %v343 = vunpack.c.l.b16 %v208
      %v344 = vunpack.c.l.b16 %v209
      %v345 = vunpack.c.l.b16 %v210
      %v346 = vunpack.c.l.b16 %v211
      %v347 = vunpack.c.l.b16 %v212
      %v348 = vunpack.c.l.b16 %v213
      %v349 = vunpack.c.l.b16 %v214
      %v350 = vunpack.c.l.b16 %v215
      %v351 = vunpack.c.l.b16 %v216
      %v352 = vunpack.c.l.b16 %v217
      %v353 = vunpack.c.l.b16 %v218
      %v354 = vunpack.c.l.b16 %v219
      %v355 = vunpack.c.l.b16 %v220
      %v356 = vunpack.c.l.b16 %v221
      %v357 = vunpack.c.l.b16 %v222
      %v358 = vpack.c.b16 %v343, %v342
      %v359 = vpack.c.b16 %v345, %v344
      %v360 = vpack.c.b16 %v347, %v346
      %v361 = vpack.c.b16 %v349, %v348
      %v362 = vpack.c.b16 %v351, %v350
      %v363 = vpack.c.b16 %v353, %v352
      %v364 = vpack.c.b16 %v355, %v354
      %v365 = vpack.c.b16 %v357, %v356
      %374 = vmatprep.subr.bf16.mxu0 0
      %375 = vmatpush1.bf16.msra.mxu0 %v358
      %376 = vmatprep.subr.bf16.mxu0 0
      %377 = vmatpush1.bf16.msra.mxu0 %v359
      %378 = vmatprep.subr.bf16.mxu0 0
      %379 = vmatpush1.bf16.msra.mxu0 %v360
      %380 = vmatprep.subr.bf16.mxu0 0
      %381 = vmatpush1.bf16.msra.mxu0 %v361
      %382 = vmatprep.subr.bf16.mxu0 0
      %383 = vmatpush1.bf16.msra.mxu0 %v362
      %384 = vmatprep.subr.bf16.mxu0 0
      %385 = vmatpush1.bf16.msra.mxu0 %v363
      %386 = vmatprep.subr.bf16.mxu0 0
      %387 = vmatpush1.bf16.msra.mxu0 %v364
      %388 = vmatprep.subr.bf16.mxu0 0
      %389 = vmatpush1.bf16.msra.mxu0 %v365
      %390 = vmatprep.subr.bf16.mxu0 0
      %391 = vmatpush1.bf16.msra.mxu0 0
      %392 = vmatprep.subr.bf16.mxu0 0
      %393 = vmatpush1.bf16.msra.mxu0 0
      %394 = vmatprep.subr.bf16.mxu0 0
      %395 = vmatpush1.bf16.msra.mxu0 0
      %396 = vmatprep.subr.bf16.mxu0 0
      %397 = vmatpush1.bf16.msra.mxu0 0
      %398 = vmatprep.subr.bf16.mxu0 0
      %399 = vmatpush1.bf16.msra.mxu0 0
      %400 = vmatprep.subr.bf16.mxu0 0
      %401 = vmatpush1.bf16.msra.mxu0 0
      %402 = vmatprep.subr.bf16.mxu0 0
      %403 = vmatpush1.bf16.msra.mxu0 0
      %404 = vmatprep.subr.bf16.mxu0 0
      %405 = vmatpush1.bf16.msra.mxu0 0
      %406 = vmatprep.mubr.bf16.mxu0 0
      %407 = vmatmul.mubr.bf16.gmra.mrb[0].mxu0 %v294
      %v408 = vpop.f32.mrb[0].mxu0
      %v409 = vadd.f32 %v228, %v408
      %v410 = vpop.f32.mrb[0].mxu0
      %v411 = vpop.f32.mrb[0].mxu0
      %v412 = vadd.f32 %v228, %v411
      %v413 = vpop.f32.mrb[0].mxu0
      %414 = vmatprep.mubr.bf16.mxu0 0
      %415 = vmatmul.mubr.bf16.gmra.mrb[0].mxu0 %v295
      %v416 = vpop.f32.mrb[0].mxu0
      %v417 = vadd.f32 %v228, %v416
      %v418 = vpop.f32.mrb[0].mxu0
      %v419 = vpop.f32.mrb[0].mxu0
      %v420 = vadd.f32 %v228, %v419
      %v421 = vpop.f32.mrb[0].mxu0
      %422 = vmatprep.mubr.bf16.mxu0 0
      %423 = vmatmul.mubr.bf16.gmra.mrb[0].mxu0 %v296
      %v424 = vpop.f32.mrb[0].mxu0
      %v425 = vadd.f32 %v228, %v424
      %v426 = vpop.f32.mrb[0].mxu0
      %v427 = vpop.f32.mrb[0].mxu0
      %v428 = vadd.f32 %v228, %v427
      %v429 = vpop.f32.mrb[0].mxu0
      %430 = vmatprep.mubr.bf16.mxu0 0
      %431 = vmatmul.mubr.bf16.gmra.mrb[0].mxu0 %v297
      %v432 = vpop.f32.mrb[0].mxu0
      %v433 = vadd.f32 %v228, %v432
      %v434 = vpop.f32.mrb[0].mxu0
      %v435 = vpop.f32.mrb[0].mxu0
      %v436 = vadd.f32 %v228, %v435
      %v437 = vpop.f32.mrb[0].mxu0
      %438 = vmatprep.mubr.bf16.mxu0 0
      %439 = vmatmul.mubr.bf16.gmra.mrb[0].mxu0 %v298
      %v440 = vpop.f32.mrb[0].mxu0
      %v441 = vadd.f32 %v228, %v440
      %v442 = vpop.f32.mrb[0].mxu0
      %v443 = vpop.f32.mrb[0].mxu0
      %v444 = vadd.f32 %v228, %v443
      %v445 = vpop.f32.mrb[0].mxu0
      %446 = vmatprep.mubr.bf16.mxu0 0
      %447 = vmatmul.mubr.bf16.gmra.mrb[0].mxu0 %v299
      %v448 = vpop.f32.mrb[0].mxu0
      %v449 = vadd.f32 %v228, %v448
      %v450 = vpop.f32.mrb[0].mxu0
      %v451 = vpop.f32.mrb[0].mxu0
      %v452 = vadd.f32 %v228, %v451
      %v453 = vpop.f32.mrb[0].mxu0
      %454 = vmatprep.mubr.bf16.mxu0 0
      %455 = vmatmul.mubr.bf16.gmra.mrb[0].mxu0 %v300
      %v456 = vpop.f32.mrb[0].mxu0
      %v457 = vadd.f32 %v228, %v456
      %v458 = vpop.f32.mrb[0].mxu0
      %v459 = vpop.f32.mrb[0].mxu0
      %v460 = vadd.f32 %v228, %v459
      %v461 = vpop.f32.mrb[0].mxu0
      %462 = vmatprep.mubr.bf16.mxu0 0
      %463 = vmatmul.mubr.bf16.gmra.mrb[0].mxu0 %v301
      %v464 = vpop.f32.mrb[0].mxu0
      %v465 = vadd.f32 %v228, %v464
      %v466 = vpop.f32.mrb[0].mxu0
      %v467 = vpop.f32.mrb[0].mxu0
      %v468 = vadd.f32 %v228, %v467
      %v469 = vpop.f32.mrb[0].mxu0
      %470 = vmatprep.mubr.bf16.mxu0 0
      %471 = vmatmul.mubr.bf16.gmra.mrb[0].mxu0 %v302
      %v472 = vpop.f32.mrb[0].mxu0
      %v473 = vadd.f32 %v228, %v472
      %v474 = vpop.f32.mrb[0].mxu0
      %v475 = vpop.f32.mrb[0].mxu0
      %v476 = vadd.f32 %v228, %v475
      %v477 = vpop.f32.mrb[0].mxu0
      %478 = vmatprep.mubr.bf16.mxu0 0
      %479 = vmatmul.mubr.bf16.gmra.mrb[0].mxu0 %v303
      %v480 = vpop.f32.mrb[0].mxu0
      %v481 = vadd.f32 %v228, %v480
      %v482 = vpop.f32.mrb[0].mxu0
      %v483 = vpop.f32.mrb[0].mxu0
      %v484 = vadd.f32 %v228, %v483
      %v485 = vpop.f32.mrb[0].mxu0
      %486 = vmatprep.mubr.bf16.mxu0 0
      %487 = vmatmul.mubr.bf16.gmra.mrb[0].mxu0 %v304
      %v488 = vpop.f32.mrb[0].mxu0
      %v489 = vadd.f32 %v228, %v488
      %v490 = vpop.f32.mrb[0].mxu0
      %v491 = vpop.f32.mrb[0].mxu0
      %v492 = vadd.f32 %v228, %v491
      %v493 = vpop.f32.mrb[0].mxu0
      %494 = vmatprep.mubr.bf16.mxu0 0
      %495 = vmatmul.mubr.bf16.gmra.mrb[0].mxu0 %v305
      %v496 = vpop.f32.mrb[0].mxu0
      %v497 = vadd.f32 %v228, %v496
      %v498 = vpop.f32.mrb[0].mxu0
      %v499 = vpop.f32.mrb[0].mxu0
      %v500 = vadd.f32 %v228, %v499
      %v501 = vpop.f32.mrb[0].mxu0
      %502 = vmatprep.mubr.bf16.mxu0 0
      %503 = vmatmul.mubr.bf16.gmra.mrb[0].mxu0 %v306
      %v504 = vpop.f32.mrb[0].mxu0
      %v505 = vadd.f32 %v228, %v504
      %v506 = vpop.f32.mrb[0].mxu0
      %v507 = vpop.f32.mrb[0].mxu0
      %v508 = vadd.f32 %v228, %v507
      %v509 = vpop.f32.mrb[0].mxu0
      %510 = vmatprep.mubr.bf16.mxu0 0
      %511 = vmatmul.mubr.bf16.gmra.mrb[0].mxu0 %v307
      %v512 = vpop.f32.mrb[0].mxu0
      %v513 = vadd.f32 %v228, %v512
      %v514 = vpop.f32.mrb[0].mxu0
      %v515 = vpop.f32.mrb[0].mxu0
      %v516 = vadd.f32 %v228, %v515
      %v517 = vpop.f32.mrb[0].mxu0
      %518 = vmatprep.mubr.bf16.mxu0 0
      %519 = vmatmul.mubr.bf16.gmra.mrb[0].mxu0 %v308
      %v520 = vpop.f32.mrb[0].mxu0
      %v521 = vadd.f32 %v228, %v520
      %v522 = vpop.f32.mrb[0].mxu0
      %v523 = vpop.f32.mrb[0].mxu0
      %v524 = vadd.f32 %v228, %v523
      %v525 = vpop.f32.mrb[0].mxu0
      %526 = vmatprep.mubr.bf16.mxu0 0
      %527 = vmatmul.mubr.bf16.gmra.mrb[0].mxu0 %v309
      %v528 = vpop.f32.mrb[0].mxu0
      %v529 = vadd.f32 %v228, %v528
      %v530 = vpop.f32.mrb[0].mxu0
      %v531 = vpop.f32.mrb[0].mxu0
      %v532 = vadd.f32 %v228, %v531
      %v533 = vpop.f32.mrb[0].mxu0
      %534 = vdwg.mxu0
      %v535 = vmax.f32 %v409, 0.0
      %v536 = vmax.f32 %v412, 0.0
      %v537 = vmax.f32 %v417, 0.0
      %v538 = vmax.f32 %v420, 0.0
      %v539 = vmax.f32 %v425, 0.0
      %v540 = vmax.f32 %v428, 0.0
      %v541 = vmax.f32 %v433, 0.0
      %v542 = vmax.f32 %v436, 0.0
      %v543 = vmax.f32 %v441, 0.0
      %v544 = vmax.f32 %v444, 0.0
      %v545 = vmax.f32 %v449, 0.0
      %v546 = vmax.f32 %v452, 0.0
      %v547 = vmax.f32 %v457, 0.0
      %v548 = vmax.f32 %v460, 0.0
      %v549 = vmax.f32 %v465, 0.0
      %v550 = vmax.f32 %v468, 0.0
      %v551 = vmax.f32 %v473, 0.0
      %v552 = vmax.f32 %v476, 0.0
      %v553 = vmax.f32 %v481, 0.0
      %v554 = vmax.f32 %v484, 0.0
      %v555 = vmax.f32 %v489, 0.0
      %v556 = vmax.f32 %v492, 0.0
      %v557 = vmax.f32 %v497, 0.0
      %v558 = vmax.f32 %v500, 0.0
      %v559 = vmax.f32 %v505, 0.0
      %v560 = vmax.f32 %v508, 0.0
      %v561 = vmax.f32 %v513, 0.0
      %v562 = vmax.f32 %v516, 0.0
      %v563 = vmax.f32 %v521, 0.0
      %v564 = vmax.f32 %v524, 0.0
      %v565 = vmax.f32 %v529, 0.0
      %v566 = vmax.f32 %v532, 0.0
      %567 = vst [vmem:[%s172] sm:$0xff] %v535
      %568 = vst [vmem:[%s172 + $0x8] sm:$0xff] %v536
      %569 = vst [vmem:[%s172 + $0x10] sm:$0xff] %v537
      %570 = vst [vmem:[%s172 + $0x18] sm:$0xff] %v538
      %571 = vst [vmem:[%s172 + $0x20] sm:$0xff] %v539
      %572 = vst [vmem:[%s172 + $0x28] sm:$0xff] %v540
      %573 = vst [vmem:[%s172 + $0x30] sm:$0xff] %v541
      %574 = vst [vmem:[%s172 + $0x38] sm:$0xff] %v542
      %575 = vst [vmem:[%s172 + $0x40] sm:$0xff] %v543
      %576 = vst [vmem:[%s172 + $0x48] sm:$0xff] %v544
      %577 = vst [vmem:[%s172 + $0x50] sm:$0xff] %v545
      %578 = vst [vmem:[%s172 + $0x58] sm:$0xff] %v546
      %579 = vst [vmem:[%s172 + $0x60] sm:$0xff] %v547
      %580 = vst [vmem:[%s172 + $0x68] sm:$0xff] %v548
      %581 = vst [vmem:[%s172 + $0x70] sm:$0xff] %v549
      %582 = vst [vmem:[%s172 + $0x78] sm:$0xff] %v550
      %583 = vst [vmem:[%s172 + $0x80] sm:$0xff] %v551
      %584 = vst [vmem:[%s172 + $0x88] sm:$0xff] %v552
      %585 = vst [vmem:[%s172 + $0x90] sm:$0xff] %v553
      %586 = vst [vmem:[%s172 + $0x98] sm:$0xff] %v554
      %587 = vst [vmem:[%s172 + $0xa0] sm:$0xff] %v555
      %588 = vst [vmem:[%s172 + $0xa8] sm:$0xff] %v556
      %589 = vst [vmem:[%s172 + $0xb0] sm:$0xff] %v557
      %590 = vst [vmem:[%s172 + $0xb8] sm:$0xff] %v558
      %591 = vst [vmem:[%s172 + $0xc0] sm:$0xff] %v559
      %592 = vst [vmem:[%s172 + $0xc8] sm:$0xff] %v560
      %593 = vst [vmem:[%s172 + $0xd0] sm:$0xff] %v561
      %594 = vst [vmem:[%s172 + $0xd8] sm:$0xff] %v562
      %595 = vst [vmem:[%s172 + $0xe0] sm:$0xff] %v563
      %596 = vst [vmem:[%s172 + $0xe8] sm:$0xff] %v564
      %597 = vst [vmem:[%s172 + $0xf0] sm:$0xff] %v565
      %598 = vst [vmem:[%s172 + $0xf8] sm:$0xff] %v566
      %s599 = smul.u32 32, %s14
      %p600 = scmp.lt.s32.totalorder %s599, 95
      %s601 = scalar_select %p600, %s599, 95
      %s602 = smul.addr %s601, 8
      %s603 = scalar_lea.vmem %s3, %s602
      // Predicated region
      $region33: #{vae_forward.22} parent=31 // pred_check
        %p604 = pneg %p100
      $region34: #{vae_forward.22} parent=31 // pred_check_branch
        %606 = sbr.rel (%p604) target = $region36
      $region35: #{vae_forward.22} parent=31 // pred_region
        %s607 = smul.u32 32, %s14
      $region36: #{vae_forward.22} parent=31 // pred_fallthru
        _
    $region32: #{vae_forward.22} parent=5 // pred_fallthru
      _
    %p608 = scmp.le.s32.totalorder 2, %s9
    // Predicated region
    $region37: #{vae_forward.22} parent=5 // pred_check
      %p609 = pneg %p608
    $region38: #{vae_forward.22} parent=5 // pred_check_branch
      %611 = sbr.rel (%p609) target = $region40
    $region39: #{vae_forward.22} parent=5 // pred_region
      %s612 = ssub.s32 %s9, 2
      // Predicated region
      $region41: #{vae_forward.22} parent=39 // pred_check
        %p613 = pneg %p106
      $region42: #{vae_forward.22} parent=39 // pred_check_branch
        %615 = sbr.rel (%p613) target = $region44
      $region43: #{vae_forward.22} parent=39 // pred_region
        %s616 = smul.u32 32, %s15
        %p617 = scmp.lt.s32.totalorder %s616, 95
        %s618 = scalar_select %p617, %s616, 95
        %s619 = smul.addr %s618, 8
        %s620 = scalar_lea.vmem %s3, %s619
      $region44: #{vae_forward.22} parent=39 // pred_fallthru
        _
    $region40: #{vae_forward.22} parent=5 // pred_fallthru
      _
  $region6: #{vae_forward.22} parent=0 // loop_footer
    %s13 = sadd.s32 1, %s9
  $region7: #{vae_forward.22} parent=0 // loop_footer_branch
    %8 = sbr.rel target = $region3
  $region8: #{vae_forward.22} parent=0 // loop_exit
    _

// kernel: tile.48
$region0: #{tile.48}
  #allocation0 [shape = 's32[1]{0}', space=sflag, size = 0x4, scoped, tag = 'scoped memory for tile.48']
  %s0 = inlined_call_operand.vmem [shape: f32[3], index: 0, kind: input, shape index: {}]
  %s1 = inlined_call_operand.vmem [shape: f32[4,3], index: 1, kind: output, shape index: {}]
  // Predicated region
  $region2: #{tile.48} parent=0 // pred_check
    _
  $region3: #{tile.48} parent=0 // pred_check_branch
    %3 = sbr.rel (0) target = $region5
  $region4: #{tile.48} parent=0 // pred_region
    _
  $region5: #{tile.48} parent=0 // pred_fallthru
    _
  %v4 = vld [vmem:[%s0] ss:$0 sm:$0xff]
  %5 = vst [vmem:[%s1] sm:$0xf] %v4

// kernel: tile.49
$region0: #{tile.49}
  %s0 = inlined_call_operand.vmem [shape: f32[4,3], index: 0, kind: input, shape index: {}]
  %s1 = inlined_call_operand.vmem [shape: f32[12], index: 1, kind: output, shape index: {}]
  $region1: #{tile.49} parent=0
    #allocation0 [shape = 'u8[4096]{0}', space=vmem, size = 0x1000, scoped, tag = 'scoped mem for output reshape']
    #allocation1 [shape = 'u8[4096]{0}', space=vmem, size = 0x1000, scoped, tag = 'scoped mem for input reshape']
    %s3 = sshllo.u32 0, 4
    %v4 = vld [vmem:[%s0] sm:%s3]
    %5 = vst [vmem:[#allocation1] sm:%s3] %v4
    %v6 = vld [vmem:[#allocation1] sm:$0x1]
    %vm7 = vcmask 23552
    %8 = vst.msk [vmem:[#allocation0] sm:$0x1] %vm7, %v6
    %s9 = scalar_lea.vmem [#allocation1], 3
    %v10 = vld [vmem:[%s9] sm:$0x1]
    %11 = vrot.lane.b32.xlu0 %v10, 9
    %v12 = vpop.permute.xlu0 %11
    %vm13 = vcmask 97352
    %14 = vst.msk [vmem:[#allocation0] sm:$0x1] %vm13, %v12
    %s15 = scalar_lea.vmem [#allocation1], 2
    %v16 = vld [vmem:[%s15] sm:$0x1]
    %17 = vrot.lane.b32.xlu0 %v16, 6
    %v18 = vpop.permute.xlu0 %17
    %vm19 = vcmask 72752
    %20 = vst.msk [vmem:[#allocation0] sm:$0x1] %vm19, %v18
    %s21 = scalar_lea.vmem [#allocation1], 1
    %v22 = vld [vmem:[%s21] sm:$0x1]
    %23 = vrot.lane.b32.xlu0 %v22, 3
    %v24 = vpop.permute.xlu0 %23
    %vm25 = vcmask 48152
    %26 = vst.msk [vmem:[#allocation0] sm:$0x1] %vm25, %v24
    %s28 = sshllo.u32 0, 1
    %v30 = vld [vmem:[#allocation0] sm:%s28]
    %s31 = sshllo.u32 0, 1
    %32 = vst [vmem:[%s1] sm:%s31] %v30

// kernel: vae_forward.23
$region0: #{vae_forward.23}
  #allocation0 [shape = 'u32[]', space=smem, size = 0x4, offset = 0x4, fixed_abs, tag = 'smem constant byte address 0x4 - core index']
  #allocation1 [shape = 'u32[144,128]{1,0:T(1,128)}', space=vmem, size = 0x12000, scoped, tag = 'internal scratch']
  %s0 = inlined_call_operand.vmem [shape: bf16[2304,128], index: 0, kind: input, shape index: {}]
  %s1 = inlined_call_operand.vmem [shape: bf16[128,128], index: 1, kind: input, shape index: {}]
  %s2 = inlined_call_operand.vmem [shape: f32[1,128], index: 2, kind: input, shape index: {}]
  %s3 = inlined_call_operand.vmem [shape: f32[2304,128], index: 3, kind: output, shape index: {}]
  %s4 = sld [smem:[#allocation0]]
  $region45: #{vae_forward.23} parent=0
    _
  %s6 = ssub.s32 1, %s4
  %s7 = scalar_select 0, %s6, %s4
  loop: start=0, step=1, limit=11
  $region2: #{vae_forward.23} parent=0 // loop_pre_header
    _
  $region3: #{vae_forward.23} parent=0 // loop_header
    %s9 = sphi 0, %s13
    %p10 = scmp.ge.s32.totalorder %s9, 11
    %s19 = sphi 0, %s21
    %s22 = sphi 0, %s19
    %s23 = sphi 0, %s22
    %s39 = sphi 0, %s23
    %s43 = sphi 0, %s43
    %s45 = sphi 0, %s43
    %s46 = sphi 0, %s45
    %s60 = sphi 0, %s46
    %s64 = sphi 0, %s64
    %s66 = sphi 0, %s64
    %s67 = sphi 0, %s66
    %s81 = sphi 0, %s67
    %s87 = sphi 0, %s89
    %s90 = sphi 0, %s87
    %s91 = sphi 0, %s90
    %s107 = sphi 0, %s91
  $region4: #{vae_forward.23} parent=0 // loop_header_branch
    %12 = sbr.rel (%p10) target = $region8
  $region5: #{vae_forward.23} parent=0 // loop_body
    %s14 = ssub.s32 %s9, 1
    %s15 = ssub.s32 %s9, 2
    %s16 = sadd.s32 %s9, 1
    %s17 = ssub.s32 %s9, %s16
    %p18 = scmp.eq.s32.totalorder %s17, 0
    %s20 = sadd.s32 %s19, 1
    %s21 = scalar_select %p18, %s19, %s20
    %p24 = pneg %p18
    %p25 = scmp.eq.s32.totalorder %s9, 8
    %p26 = por %p24, %p25
    %p27 = scmp.ne.s32.totalorder %s19, %s22
    %p28 = scmp.eq.s32.totalorder %s9, 0
    %p29 = por %p27, %p28
    %p30 = scmp.ne.s32.totalorder %s19, %s22
    %p31 = scmp.eq.s32.totalorder %s14, 8
    %p32 = por %p30, %p31
    %p33 = scmp.ne.s32.totalorder %s22, %s23
    %p34 = scmp.eq.s32.totalorder %s14, 0
    %p35 = por %p33, %p34
    %p36 = scmp.ne.s32.totalorder %s22, %s23
    %p37 = scmp.eq.s32.totalorder %s15, 8
    %p38 = por %p36, %p37
    %p40 = scmp.ne.s32.totalorder %s23, %s39
    %p41 = scmp.eq.s32.totalorder %s15, 0
    %p42 = por %p40, %p41
    %s44 = sadd.s32 %s43, 1
    %p47 = scmp.eq.s32.totalorder %s9, 8
    %p48 = scmp.ne.s32.totalorder %s43, %s45
    %p49 = scmp.eq.s32.totalorder %s9, 0
    %p50 = por %p48, %p49
    %p51 = scmp.ne.s32.totalorder %s43, %s45
    %p52 = scmp.eq.s32.totalorder %s14, 8
    %p53 = por %p51, %p52
    %p54 = scmp.ne.s32.totalorder %s45, %s46
    %p55 = scmp.eq.s32.totalorder %s14, 0
    %p56 = por %p54, %p55
    %p57 = scmp.ne.s32.totalorder %s45, %s46
    %p58 = scmp.eq.s32.totalorder %s15, 8
    %p59 = por %p57, %p58
    %p61 = scmp.ne.s32.totalorder %s46, %s60
    %p62 = scmp.eq.s32.totalorder %s15, 0
    %p63 = por %p61, %p62
    %s65 = sadd.s32 %s64, 1
    %p68 = scmp.eq.s32.totalorder %s9, 8
    %p69 = scmp.ne.s32.totalorder %s64, %s66
    %p70 = scmp.eq.s32.totalorder %s9, 0
    %p71 = por %p69, %p70
    %p72 = scmp.ne.s32.totalorder %s64, %s66
    %p73 = scmp.eq.s32.totalorder %s14, 8
    %p74 = por %p72, %p73
    %p75 = scmp.ne.s32.totalorder %s66, %s67
    %p76 = scmp.eq.s32.totalorder %s14, 0
    %p77 = por %p75, %p76
    %p78 = scmp.ne.s32.totalorder %s66, %s67
    %p79 = scmp.eq.s32.totalorder %s15, 8
    %p80 = por %p78, %p79
    %p82 = scmp.ne.s32.totalorder %s67, %s81
    %p83 = scmp.eq.s32.totalorder %s15, 0
    %p84 = por %p82, %p83
    %s85 = ssub.s32 %s9, %s16
    %p86 = scmp.eq.s32.totalorder %s85, 0
    %s88 = sadd.s32 %s87, 1
    %s89 = scalar_select %p86, %s87, %s88
    %p92 = pneg %p86
    %p93 = scmp.eq.s32.totalorder %s9, 8
    %p94 = por %p92, %p93
    %p95 = scmp.ne.s32.totalorder %s87, %s90
    %p96 = scmp.eq.s32.totalorder %s9, 0
    %p97 = por %p95, %p96
    %p98 = scmp.ne.s32.totalorder %s87, %s90
    %p99 = scmp.eq.s32.totalorder %s14, 8
    %p100 = por %p98, %p99
    %p101 = scmp.ne.s32.totalorder %s90, %s91
    %p102 = scmp.eq.s32.totalorder %s14, 0
    %p103 = por %p101, %p102
    %p104 = scmp.ne.s32.totalorder %s90, %s91
    %p105 = scmp.eq.s32.totalorder %s15, 8
    %p106 = por %p104, %p105
    %p108 = scmp.ne.s32.totalorder %s91, %s107
    %p109 = scmp.eq.s32.totalorder %s15, 0
    %p110 = por %p108, %p109
    %p111 = scmp.le.s32.totalorder 1, %s9
    %p112 = scmp.lt.s32.totalorder %s9, 10
    %p113 = pnand %p111, %p112
    %p114 = pneg %p113
    // Predicated region
    $region9: #{vae_forward.23} parent=5 // pred_check
      _
    $region10: #{vae_forward.23} parent=5 // pred_check_branch
      %116 = sbr.rel (%p113) target = $region12
    $region11: #{vae_forward.23} parent=5 // pred_region
      %s117 = ssub.s32 %s9, 1
      // Predicated region
      $region13: #{vae_forward.23} parent=11 // pred_check
        %p118 = pneg %p56
      $region14: #{vae_forward.23} parent=11 // pred_check_branch
        %120 = sbr.rel (%p118) target = $region16
      $region15: #{vae_forward.23} parent=11 // pred_region
        _
      $region16: #{vae_forward.23} parent=11 // pred_fallthru
        _
      // Predicated region
      $region17: #{vae_forward.23} parent=11 // pred_check
        %p121 = pneg %p77
      $region18: #{vae_forward.23} parent=11 // pred_check_branch
        %123 = sbr.rel (%p121) target = $region20
      $region19: #{vae_forward.23} parent=11 // pred_region
        _
      $region20: #{vae_forward.23} parent=11 // pred_fallthru
        _
    $region12: #{vae_forward.23} parent=5 // pred_fallthru
      _
    %p124 = scmp.lt.s32.totalorder %s9, 9
    // Predicated region
    $region21: #{vae_forward.23} parent=5 // pred_check
      %p125 = pneg %p124
    $region22: #{vae_forward.23} parent=5 // pred_check_branch
      %127 = sbr.rel (%p125) target = $region24
    $region23: #{vae_forward.23} parent=5 // pred_region
      // Predicated region
      $region25: #{vae_forward.23} parent=23 // pred_check
        %p128 = pneg %p29
      $region26: #{vae_forward.23} parent=23 // pred_check_branch
        %130 = sbr.rel (%p128) target = $region28
      $region27: #{vae_forward.23} parent=23 // pred_region
        %s131 = smul.u32 32, %s9
        %p132 = scmp.lt.s32.totalorder %s131, 287
        %s133 = scalar_select %p132, %s131, 287
        %s134 = smul.addr %s133, 4
        %s135 = scalar_lea.vmem %s0, %s134
        %s136 = smul.u32 32, %s9
      $region28: #{vae_forward.23} parent=23 // pred_fallthru
        _
    $region24: #{vae_forward.23} parent=5 // pred_fallthru
      _
    %p137 = scmp.le.s32.totalorder 1, %s9
    %p138 = scmp.lt.s32.totalorder %s9, 10
    %p139 = pnand %p137, %p138
    %p140 = pneg %p139
    // Predicated region
    $region29: #{vae_forward.23} parent=5 // pred_check
      _
    $region30: #{vae_forward.23} parent=5 // pred_check_branch
      %142 = sbr.rel (%p139) target = $region32
    $region31: #{vae_forward.23} parent=5 // pred_region
      %s143 = ssub.s32 %s9, 1
      %s144 = smul.u32 32, %s14
      %p145 = scmp.lt.s32.totalorder %s144, 287
      %s146 = scalar_select %p145, %s144, 287
      %s147 = smul.addr %s146, 4
      %s148 = scalar_lea.vmem %s0, %s147
      %p149 = pneg %p35
      %p150 = pneg %p32
      %p151 = pneg %p56
      %p152 = pneg %p53
      %p153 = pneg %p77
      %p154 = pneg %p74
      %p155 = pneg %p103
      %p156 = pneg %p100
      %s157 = smul.u32 32, %s14
      %p158 = scmp.lt.s32.totalorder %s157, 287
      %s159 = scalar_select %p158, %s157, 287
      %s160 = smul.addr %s159, 8
      %s161 = scalar_lea.vmem %s3, %s160
      %s162 = smul.u32 32, %s14
      %p163 = scmp.lt.s32.totalorder %s162, 287
      %s164 = scalar_select %p163, %s162, 287
      %s165 = smul.addr %s164, 4
      %s166 = scalar_lea.vmem %s0, %s165
      %s167 = smul.u32 32, %s14
      %s168 = smul.u32 32, %s14
      %p169 = scmp.lt.s32.totalorder %s168, 287
      %s170 = scalar_select %p169, %s168, 287
      %s171 = smul.addr %s170, 8
      %s172 = scalar_lea.vmem %s3, %s171
      %s173 = smul.u32 32, %s14
      %v175 = vld [vmem:[%s166] sm:$0xf]
      %v176 = vld [vmem:[%s166 + $0x4] sm:$0xf]
      %v177 = vld [vmem:[%s166 + $0x8] sm:$0xf]
      %v178 = vld [vmem:[%s166 + $0xc] sm:$0xf]
      %v179 = vld [vmem:[%s166 + $0x10] sm:$0xf]
      %v180 = vld [vmem:[%s166 + $0x14] sm:$0xf]
      %v181 = vld [vmem:[%s166 + $0x18] sm:$0xf]
      %v182 = vld [vmem:[%s166 + $0x1c] sm:$0xf]
      %v183 = vld [vmem:[%s166 + $0x20] sm:$0xf]
      %v184 = vld [vmem:[%s166 + $0x24] sm:$0xf]
      %v185 = vld [vmem:[%s166 + $0x28] sm:$0xf]
      %v186 = vld [vmem:[%s166 + $0x2c] sm:$0xf]
      %v187 = vld [vmem:[%s166 + $0x30] sm:$0xf]
      %v188 = vld [vmem:[%s166 + $0x34] sm:$0xf]
      %v189 = vld [vmem:[%s166 + $0x38] sm:$0xf]
      %v190 = vld [vmem:[%s166 + $0x3c] sm:$0xf]
      %v191 = vld [vmem:[%s166 + $0x40] sm:$0xf]
      %v192 = vld [vmem:[%s166 + $0x44] sm:$0xf]
      %v193 = vld [vmem:[%s166 + $0x48] sm:$0xf]
      %v194 = vld [vmem:[%s166 + $0x4c] sm:$0xf]
      %v195 = vld [vmem:[%s166 + $0x50] sm:$0xf]
      %v196 = vld [vmem:[%s166 + $0x54] sm:$0xf]
      %v197 = vld [vmem:[%s166 + $0x58] sm:$0xf]
      %v198 = vld [vmem:[%s166 + $0x5c] sm:$0xf]
      %v199 = vld [vmem:[%s166 + $0x60] sm:$0xf]
      %v200 = vld [vmem:[%s166 + $0x64] sm:$0xf]
      %v201 = vld [vmem:[%s166 + $0x68] sm:$0xf]
      %v202 = vld [vmem:[%s166 + $0x6c] sm:$0xf]
      %v203 = vld [vmem:[%s166 + $0x70] sm:$0xf]
      %v204 = vld [vmem:[%s166 + $0x74] sm:$0xf]
      %v205 = vld [vmem:[%s166 + $0x78] sm:$0xf]
      %v206 = vld [vmem:[%s166 + $0x7c] sm:$0xf]
      %v207 = vld [vmem:[%s1] sm:$0xf]
      %v208 = vld [vmem:[%s1 + $0x4] sm:$0xf]
      %v209 = vld [vmem:[%s1 + $0x8] sm:$0xf]
      %v210 = vld [vmem:[%s1 + $0xc] sm:$0xf]
      %v211 = vld [vmem:[%s1 + $0x10] sm:$0xf]
      %v212 = vld [vmem:[%s1 + $0x14] sm:$0xf]
      %v213 = vld [vmem:[%s1 + $0x18] sm:$0xf]
      %v214 = vld [vmem:[%s1 + $0x1c] sm:$0xf]
      %v215 = vld [vmem:[%s1 + $0x20] sm:$0xf]
      %v216 = vld [vmem:[%s1 + $0x24] sm:$0xf]
      %v217 = vld [vmem:[%s1 + $0x28] sm:$0xf]
      %v218 = vld [vmem:[%s1 + $0x2c] sm:$0xf]
      %v219 = vld [vmem:[%s1 + $0x30] sm:$0xf]
      %v220 = vld [vmem:[%s1 + $0x34] sm:$0xf]
      %v221 = vld [vmem:[%s1 + $0x38] sm:$0xf]
      %v222 = vld [vmem:[%s1 + $0x3c] sm:$0xf]
      %v223 = vld [vmem:[%s2] sm:$0x1]
      %v225 = vlaneseq
      %v226 = vshrl.u32 %v225, 7
      %v227 = vsub.s32 0, %v226
      %v228 = vrot.slane %v223, %v227
      %v262 = vunpack.c.l.b16 %v175
      %v263 = vunpack.c.l.b16 %v176
      %v264 = vunpack.c.l.b16 %v177
      %v265 = vunpack.c.l.b16 %v178
      %v266 = vunpack.c.l.b16 %v179
      %v267 = vunpack.c.l.b16 %v180
      %v268 = vunpack.c.l.b16 %v181
      %v269 = vunpack.c.l.b16 %v182
      %v270 = vunpack.c.l.b16 %v183
      %v271 = vunpack.c.l.b16 %v184
      %v272 = vunpack.c.l.b16 %v185
      %v273 = vunpack.c.l.b16 %v186
      %v274 = vunpack.c.l.b16 %v187
      %v275 = vunpack.c.l.b16 %v188
      %v276 = vunpack.c.l.b16 %v189
      %v277 = vunpack.c.l.b16 %v190
      %v278 = vunpack.c.l.b16 %v191
      %v279 = vunpack.c.l.b16 %v192
      %v280 = vunpack.c.l.b16 %v193
      %v281 = vunpack.c.l.b16 %v194
      %v282 = vunpack.c.l.b16 %v195
      %v283 = vunpack.c.l.b16 %v196
      %v284 = vunpack.c.l.b16 %v197
      %v285 = vunpack.c.l.b16 %v198
      %v286 = vunpack.c.l.b16 %v199
      %v287 = vunpack.c.l.b16 %v200
      %v288 = vunpack.c.l.b16 %v201
      %v289 = vunpack.c.l.b16 %v202
      %v290 = vunpack.c.l.b16 %v203
      %v291 = vunpack.c.l.b16 %v204
      %v292 = vunpack.c.l.b16 %v205
      %v293 = vunpack.c.l.b16 %v206
      %v294 = vpack.c.b16 %v263, %v262
      %v295 = vpack.c.b16 %v265, %v264
      %v296 = vpack.c.b16 %v267, %v266
      %v297 = vpack.c.b16 %v269, %v268
      %v298 = vpack.c.b16 %v271, %v270
      %v299 = vpack.c.b16 %v273, %v272
      %v300 = vpack.c.b16 %v275, %v274
      %v301 = vpack.c.b16 %v277, %v276
      %v302 = vpack.c.b16 %v279, %v278
      %v303 = vpack.c.b16 %v281, %v280
      %v304 = vpack.c.b16 %v283, %v282
      %v305 = vpack.c.b16 %v285, %v284
      %v306 = vpack.c.b16 %v287, %v286
      %v307 = vpack.c.b16 %v289, %v288
      %v308 = vpack.c.b16 %v291, %v290
      %v309 = vpack.c.b16 %v293, %v292
      %v342 = vunpack.c.l.b16 %v207
      %v343 = vunpack.c.l.b16 %v208
      %v344 = vunpack.c.l.b16 %v209
      %v345 = vunpack.c.l.b16 %v210
      %v346 = vunpack.c.l.b16 %v211
      %v347 = vunpack.c.l.b16 %v212
      %v348 = vunpack.c.l.b16 %v213
      %v349 = vunpack.c.l.b16 %v214
      %v350 = vunpack.c.l.b16 %v215
      %v351 = vunpack.c.l.b16 %v216
      %v352 = vunpack.c.l.b16 %v217
      %v353 = vunpack.c.l.b16 %v218
      %v354 = vunpack.c.l.b16 %v219
      %v355 = vunpack.c.l.b16 %v220
      %v356 = vunpack.c.l.b16 %v221
      %v357 = vunpack.c.l.b16 %v222
      %v358 = vpack.c.b16 %v343, %v342
      %v359 = vpack.c.b16 %v345, %v344
      %v360 = vpack.c.b16 %v347, %v346
      %v361 = vpack.c.b16 %v349, %v348
      %v362 = vpack.c.b16 %v351, %v350
      %v363 = vpack.c.b16 %v353, %v352
      %v364 = vpack.c.b16 %v355, %v354
      %v365 = vpack.c.b16 %v357, %v356
      %374 = vmatprep.subr.bf16.mxu0 0
      %375 = vmatpush1.bf16.msra.mxu0 %v358
      %376 = vmatprep.subr.bf16.mxu0 0
      %377 = vmatpush1.bf16.msra.mxu0 %v359
      %378 = vmatprep.subr.bf16.mxu0 0
      %379 = vmatpush1.bf16.msra.mxu0 %v360
      %380 = vmatprep.subr.bf16.mxu0 0
      %381 = vmatpush1.bf16.msra.mxu0 %v361
      %382 = vmatprep.subr.bf16.mxu0 0
      %383 = vmatpush1.bf16.msra.mxu0 %v362
      %384 = vmatprep.subr.bf16.mxu0 0
      %385 = vmatpush1.bf16.msra.mxu0 %v363
      %386 = vmatprep.subr.bf16.mxu0 0
      %387 = vmatpush1.bf16.msra.mxu0 %v364
      %388 = vmatprep.subr.bf16.mxu0 0
      %389 = vmatpush1.bf16.msra.mxu0 %v365
      %390 = vmatprep.subr.bf16.mxu0 0
      %391 = vmatpush1.bf16.msra.mxu0 0
      %392 = vmatprep.subr.bf16.mxu0 0
      %393 = vmatpush1.bf16.msra.mxu0 0
      %394 = vmatprep.subr.bf16.mxu0 0
      %395 = vmatpush1.bf16.msra.mxu0 0
      %396 = vmatprep.subr.bf16.mxu0 0
      %397 = vmatpush1.bf16.msra.mxu0 0
      %398 = vmatprep.subr.bf16.mxu0 0
      %399 = vmatpush1.bf16.msra.mxu0 0
      %400 = vmatprep.subr.bf16.mxu0 0
      %401 = vmatpush1.bf16.msra.mxu0 0
      %402 = vmatprep.subr.bf16.mxu0 0
      %403 = vmatpush1.bf16.msra.mxu0 0
      %404 = vmatprep.subr.bf16.mxu0 0
      %405 = vmatpush1.bf16.msra.mxu0 0
      %406 = vmatprep.mubr.bf16.mxu0 0
      %407 = vmatmul.mubr.bf16.gmra.mrb[0].mxu0 %v294
      %v408 = vpop.f32.mrb[0].mxu0
      %v409 = vadd.f32 %v228, %v408
      %v410 = vpop.f32.mrb[0].mxu0
      %v411 = vpop.f32.mrb[0].mxu0
      %v412 = vadd.f32 %v228, %v411
      %v413 = vpop.f32.mrb[0].mxu0
      %414 = vmatprep.mubr.bf16.mxu0 0
      %415 = vmatmul.mubr.bf16.gmra.mrb[0].mxu0 %v295
      %v416 = vpop.f32.mrb[0].mxu0
      %v417 = vadd.f32 %v228, %v416
      %v418 = vpop.f32.mrb[0].mxu0
      %v419 = vpop.f32.mrb[0].mxu0
      %v420 = vadd.f32 %v228, %v419
      %v421 = vpop.f32.mrb[0].mxu0
      %422 = vmatprep.mubr.bf16.mxu0 0
      %423 = vmatmul.mubr.bf16.gmra.mrb[0].mxu0 %v296
      %v424 = vpop.f32.mrb[0].mxu0
      %v425 = vadd.f32 %v228, %v424
      %v426 = vpop.f32.mrb[0].mxu0
      %v427 = vpop.f32.mrb[0].mxu0
      %v428 = vadd.f32 %v228, %v427
      %v429 = vpop.f32.mrb[0].mxu0
      %430 = vmatprep.mubr.bf16.mxu0 0
      %431 = vmatmul.mubr.bf16.gmra.mrb[0].mxu0 %v297
      %v432 = vpop.f32.mrb[0].mxu0
      %v433 = vadd.f32 %v228, %v432
      %v434 = vpop.f32.mrb[0].mxu0
      %v435 = vpop.f32.mrb[0].mxu0
      %v436 = vadd.f32 %v228, %v435
      %v437 = vpop.f32.mrb[0].mxu0
      %438 = vmatprep.mubr.bf16.mxu0 0
      %439 = vmatmul.mubr.bf16.gmra.mrb[0].mxu0 %v298
      %v440 = vpop.f32.mrb[0].mxu0
      %v441 = vadd.f32 %v228, %v440
      %v442 = vpop.f32.mrb[0].mxu0
      %v443 = vpop.f32.mrb[0].mxu0
      %v444 = vadd.f32 %v228, %v443
      %v445 = vpop.f32.mrb[0].mxu0
      %446 = vmatprep.mubr.bf16.mxu0 0
      %447 = vmatmul.mubr.bf16.gmra.mrb[0].mxu0 %v299
      %v448 = vpop.f32.mrb[0].mxu0
      %v449 = vadd.f32 %v228, %v448
      %v450 = vpop.f32.mrb[0].mxu0
      %v451 = vpop.f32.mrb[0].mxu0
      %v452 = vadd.f32 %v228, %v451
      %v453 = vpop.f32.mrb[0].mxu0
      %454 = vmatprep.mubr.bf16.mxu0 0
      %455 = vmatmul.mubr.bf16.gmra.mrb[0].mxu0 %v300
      %v456 = vpop.f32.mrb[0].mxu0
      %v457 = vadd.f32 %v228, %v456
      %v458 = vpop.f32.mrb[0].mxu0
      %v459 = vpop.f32.mrb[0].mxu0
      %v460 = vadd.f32 %v228, %v459
      %v461 = vpop.f32.mrb[0].mxu0
      %462 = vmatprep.mubr.bf16.mxu0 0
      %463 = vmatmul.mubr.bf16.gmra.mrb[0].mxu0 %v301
      %v464 = vpop.f32.mrb[0].mxu0
      %v465 = vadd.f32 %v228, %v464
      %v466 = vpop.f32.mrb[0].mxu0
      %v467 = vpop.f32.mrb[0].mxu0
      %v468 = vadd.f32 %v228, %v467
      %v469 = vpop.f32.mrb[0].mxu0
      %470 = vmatprep.mubr.bf16.mxu0 0
      %471 = vmatmul.mubr.bf16.gmra.mrb[0].mxu0 %v302
      %v472 = vpop.f32.mrb[0].mxu0
      %v473 = vadd.f32 %v228, %v472
      %v474 = vpop.f32.mrb[0].mxu0
      %v475 = vpop.f32.mrb[0].mxu0
      %v476 = vadd.f32 %v228, %v475
      %v477 = vpop.f32.mrb[0].mxu0
      %478 = vmatprep.mubr.bf16.mxu0 0
      %479 = vmatmul.mubr.bf16.gmra.mrb[0].mxu0 %v303
      %v480 = vpop.f32.mrb[0].mxu0
      %v481 = vadd.f32 %v228, %v480
      %v482 = vpop.f32.mrb[0].mxu0
      %v483 = vpop.f32.mrb[0].mxu0
      %v484 = vadd.f32 %v228, %v483
      %v485 = vpop.f32.mrb[0].mxu0
      %486 = vmatprep.mubr.bf16.mxu0 0
      %487 = vmatmul.mubr.bf16.gmra.mrb[0].mxu0 %v304
      %v488 = vpop.f32.mrb[0].mxu0
      %v489 = vadd.f32 %v228, %v488
      %v490 = vpop.f32.mrb[0].mxu0
      %v491 = vpop.f32.mrb[0].mxu0
      %v492 = vadd.f32 %v228, %v491
      %v493 = vpop.f32.mrb[0].mxu0
      %494 = vmatprep.mubr.bf16.mxu0 0
      %495 = vmatmul.mubr.bf16.gmra.mrb[0].mxu0 %v305
      %v496 = vpop.f32.mrb[0].mxu0
      %v497 = vadd.f32 %v228, %v496
      %v498 = vpop.f32.mrb[0].mxu0
      %v499 = vpop.f32.mrb[0].mxu0
      %v500 = vadd.f32 %v228, %v499
      %v501 = vpop.f32.mrb[0].mxu0
      %502 = vmatprep.mubr.bf16.mxu0 0
      %503 = vmatmul.mubr.bf16.gmra.mrb[0].mxu0 %v306
      %v504 = vpop.f32.mrb[0].mxu0
      %v505 = vadd.f32 %v228, %v504
      %v506 = vpop.f32.mrb[0].mxu0
      %v507 = vpop.f32.mrb[0].mxu0
      %v508 = vadd.f32 %v228, %v507
      %v509 = vpop.f32.mrb[0].mxu0
      %510 = vmatprep.mubr.bf16.mxu0 0
      %511 = vmatmul.mubr.bf16.gmra.mrb[0].mxu0 %v307
      %v512 = vpop.f32.mrb[0].mxu0
      %v513 = vadd.f32 %v228, %v512
      %v514 = vpop.f32.mrb[0].mxu0
      %v515 = vpop.f32.mrb[0].mxu0
      %v516 = vadd.f32 %v228, %v515
      %v517 = vpop.f32.mrb[0].mxu0
      %518 = vmatprep.mubr.bf16.mxu0 0
      %519 = vmatmul.mubr.bf16.gmra.mrb[0].mxu0 %v308
      %v520 = vpop.f32.mrb[0].mxu0
      %v521 = vadd.f32 %v228, %v520
      %v522 = vpop.f32.mrb[0].mxu0
      %v523 = vpop.f32.mrb[0].mxu0
      %v524 = vadd.f32 %v228, %v523
      %v525 = vpop.f32.mrb[0].mxu0
      %526 = vmatprep.mubr.bf16.mxu0 0
      %527 = vmatmul.mubr.bf16.gmra.mrb[0].mxu0 %v309
      %v528 = vpop.f32.mrb[0].mxu0
      %v529 = vadd.f32 %v228, %v528
      %v530 = vpop.f32.mrb[0].mxu0
      %v531 = vpop.f32.mrb[0].mxu0
      %v532 = vadd.f32 %v228, %v531
      %v533 = vpop.f32.mrb[0].mxu0
      %534 = vdwg.mxu0
      %v535 = vxor.u32 %v409, 2147483648
      %v536 = vxor.u32 %v412, 2147483648
      %v537 = vxor.u32 %v417, 2147483648
      %v538 = vxor.u32 %v420, 2147483648
      %v539 = vxor.u32 %v425, 2147483648
      %v540 = vxor.u32 %v428, 2147483648
      %v541 = vxor.u32 %v433, 2147483648
      %v542 = vxor.u32 %v436, 2147483648
      %v543 = vxor.u32 %v441, 2147483648
      %v544 = vxor.u32 %v444, 2147483648
      %v545 = vxor.u32 %v449, 2147483648
      %v546 = vxor.u32 %v452, 2147483648
      %v547 = vxor.u32 %v457, 2147483648
      %v548 = vxor.u32 %v460, 2147483648
      %v549 = vxor.u32 %v465, 2147483648
      %v550 = vxor.u32 %v468, 2147483648
      %v551 = vxor.u32 %v473, 2147483648
      %v552 = vxor.u32 %v476, 2147483648
      %v553 = vxor.u32 %v481, 2147483648
      %v554 = vxor.u32 %v484, 2147483648
      %v555 = vxor.u32 %v489, 2147483648
      %v556 = vxor.u32 %v492, 2147483648
      %v557 = vxor.u32 %v497, 2147483648
      %v558 = vxor.u32 %v500, 2147483648
      %v559 = vxor.u32 %v505, 2147483648
      %v560 = vxor.u32 %v508, 2147483648
      %v561 = vxor.u32 %v513, 2147483648
      %v562 = vxor.u32 %v516, 2147483648
      %v563 = vxor.u32 %v521, 2147483648
      %v564 = vxor.u32 %v524, 2147483648
      %v565 = vxor.u32 %v529, 2147483648
      %v566 = vxor.u32 %v532, 2147483648
      %v567 = vmul.f32 %v535, 1.442695
      %v568 = vpow.pop %v567
      %v569 = vmul.f32 %v536, 1.442695
      %v570 = vpow.pop %v569
      %v571 = vmul.f32 %v537, 1.442695
      %v572 = vpow.pop %v571
      %v573 = vmul.f32 %v538, 1.442695
      %v574 = vpow.pop %v573
      %v575 = vmul.f32 %v539, 1.442695
      %v576 = vpow.pop %v575
      %v577 = vmul.f32 %v540, 1.442695
      %v578 = vpow.pop %v577
      %v579 = vmul.f32 %v541, 1.442695
      %v580 = vpow.pop %v579
      %v581 = vmul.f32 %v542, 1.442695
      %v582 = vpow.pop %v581
      %v583 = vmul.f32 %v543, 1.442695
      %v584 = vpow.pop %v583
      %v585 = vmul.f32 %v544, 1.442695
      %v586 = vpow.pop %v585
      %v587 = vmul.f32 %v545, 1.442695
      %v588 = vpow.pop %v587
      %v589 = vmul.f32 %v546, 1.442695
      %v590 = vpow.pop %v589
      %v591 = vmul.f32 %v547, 1.442695
      %v592 = vpow.pop %v591
      %v593 = vmul.f32 %v548, 1.442695
      %v594 = vpow.pop %v593
      %v595 = vmul.f32 %v549, 1.442695
      %v596 = vpow.pop %v595
      %v597 = vmul.f32 %v550, 1.442695
      %v598 = vpow.pop %v597
      %v599 = vmul.f32 %v551, 1.442695
      %v600 = vpow.pop %v599
      %v601 = vmul.f32 %v552, 1.442695
      %v602 = vpow.pop %v601
      %v603 = vmul.f32 %v553, 1.442695
      %v604 = vpow.pop %v603
      %v605 = vmul.f32 %v554, 1.442695
      %v606 = vpow.pop %v605
      %v607 = vmul.f32 %v555, 1.442695
      %v608 = vpow.pop %v607
      %v609 = vmul.f32 %v556, 1.442695
      %v610 = vpow.pop %v609
      %v611 = vmul.f32 %v557, 1.442695
      %v612 = vpow.pop %v611
      %v613 = vmul.f32 %v558, 1.442695
      %v614 = vpow.pop %v613
      %v615 = vmul.f32 %v559, 1.442695
      %v616 = vpow.pop %v615
      %v617 = vmul.f32 %v560, 1.442695
      %v618 = vpow.pop %v617
      %v619 = vmul.f32 %v561, 1.442695
      %v620 = vpow.pop %v619
      %v621 = vmul.f32 %v562, 1.442695
      %v622 = vpow.pop %v621
      %v623 = vmul.f32 %v563, 1.442695
      %v624 = vpow.pop %v623
      %v625 = vmul.f32 %v564, 1.442695
      %v626 = vpow.pop %v625
      %v627 = vmul.f32 %v565, 1.442695
      %v628 = vpow.pop %v627
      %v629 = vmul.f32 %v566, 1.442695
      %v630 = vpow.pop %v629
      %v631 = vadd.f32 %v568, 1.0
      %v632 = vadd.f32 %v570, 1.0
      %v633 = vadd.f32 %v572, 1.0
      %v634 = vadd.f32 %v574, 1.0
      %v635 = vadd.f32 %v576, 1.0
      %v636 = vadd.f32 %v578, 1.0
      %v637 = vadd.f32 %v580, 1.0
      %v638 = vadd.f32 %v582, 1.0
      %v639 = vadd.f32 %v584, 1.0
      %v640 = vadd.f32 %v586, 1.0
      %v641 = vadd.f32 %v588, 1.0
      %v642 = vadd.f32 %v590, 1.0
      %v643 = vadd.f32 %v592, 1.0
      %v644 = vadd.f32 %v594, 1.0
      %v645 = vadd.f32 %v596, 1.0
      %v646 = vadd.f32 %v598, 1.0
      %v647 = vadd.f32 %v600, 1.0
      %v648 = vadd.f32 %v602, 1.0
      %v649 = vadd.f32 %v604, 1.0
      %v650 = vadd.f32 %v606, 1.0
      %v651 = vadd.f32 %v608, 1.0
      %v652 = vadd.f32 %v610, 1.0
      %v653 = vadd.f32 %v612, 1.0
      %v654 = vadd.f32 %v614, 1.0
      %v655 = vadd.f32 %v616, 1.0
      %v656 = vadd.f32 %v618, 1.0
      %v657 = vadd.f32 %v620, 1.0
      %v658 = vadd.f32 %v622, 1.0
      %v659 = vadd.f32 %v624, 1.0
      %v660 = vadd.f32 %v626, 1.0
      %v661 = vadd.f32 %v628, 1.0
      %v662 = vadd.f32 %v630, 1.0
      %v663 = vrcp.pop %v631
      %v664 = vmul.f32 1.0, %v663
      %v665 = vrcp.pop %v632
      %v666 = vmul.f32 1.0, %v665
      %v667 = vrcp.pop %v633
      %v668 = vmul.f32 1.0, %v667
      %v669 = vrcp.pop %v634
      %v670 = vmul.f32 1.0, %v669
      %v671 = vrcp.pop %v635
      %v672 = vmul.f32 1.0, %v671
      %v673 = vrcp.pop %v636
      %v674 = vmul.f32 1.0, %v673
      %v675 = vrcp.pop %v637
      %v676 = vmul.f32 1.0, %v675
      %v677 = vrcp.pop %v638
      %v678 = vmul.f32 1.0, %v677
      %v679 = vrcp.pop %v639
      %v680 = vmul.f32 1.0, %v679
      %v681 = vrcp.pop %v640
      %v682 = vmul.f32 1.0, %v681
      %v683 = vrcp.pop %v641
      %v684 = vmul.f32 1.0, %v683
      %v685 = vrcp.pop %v642
      %v686 = vmul.f32 1.0, %v685
      %v687 = vrcp.pop %v643
      %v688 = vmul.f32 1.0, %v687
      %v689 = vrcp.pop %v644
      %v690 = vmul.f32 1.0, %v689
      %v691 = vrcp.pop %v645
      %v692 = vmul.f32 1.0, %v691
      %v693 = vrcp.pop %v646
      %v694 = vmul.f32 1.0, %v693
      %v695 = vrcp.pop %v647
      %v696 = vmul.f32 1.0, %v695
      %v697 = vrcp.pop %v648
      %v698 = vmul.f32 1.0, %v697
      %v699 = vrcp.pop %v649
      %v700 = vmul.f32 1.0, %v699
      %v701 = vrcp.pop %v650
      %v702 = vmul.f32 1.0, %v701
      %v703 = vrcp.pop %v651
      %v704 = vmul.f32 1.0, %v703
      %v705 = vrcp.pop %v652
      %v706 = vmul.f32 1.0, %v705
      %v707 = vrcp.pop %v653
      %v708 = vmul.f32 1.0, %v707
      %v709 = vrcp.pop %v654
      %v710 = vmul.f32 1.0, %v709
      %v711 = vrcp.pop %v655
      %v712 = vmul.f32 1.0, %v711
      %v713 = vrcp.pop %v656
      %v714 = vmul.f32 1.0, %v713
      %v715 = vrcp.pop %v657
      %v716 = vmul.f32 1.0, %v715
      %v717 = vrcp.pop %v658
      %v718 = vmul.f32 1.0, %v717
      %v719 = vrcp.pop %v659
      %v720 = vmul.f32 1.0, %v719
      %v721 = vrcp.pop %v660
      %v722 = vmul.f32 1.0, %v721
      %v723 = vrcp.pop %v661
      %v724 = vmul.f32 1.0, %v723
      %v725 = vrcp.pop %v662
      %v726 = vmul.f32 1.0, %v725
      %727 = vst [vmem:[%s172] sm:$0xff] %v664
      %728 = vst [vmem:[%s172 + $0x8] sm:$0xff] %v666
      %729 = vst [vmem:[%s172 + $0x10] sm:$0xff] %v668
      %730 = vst [vmem:[%s172 + $0x18] sm:$0xff] %v670
      %731 = vst [vmem:[%s172 + $0x20] sm:$0xff] %v672
      %732 = vst [vmem:[%s172 + $0x28] sm:$0xff] %v674
      %733 = vst [vmem:[%s172 + $0x30] sm:$0xff] %v676
      %734 = vst [vmem:[%s172 + $0x38] sm:$0xff] %v678
      %735 = vst [vmem:[%s172 + $0x40] sm:$0xff] %v680
      %736 = vst [vmem:[%s172 + $0x48] sm:$0xff] %v682
      %737 = vst [vmem:[%s172 + $0x50] sm:$0xff] %v684
      %738 = vst [vmem:[%s172 + $0x58] sm:$0xff] %v686
      %739 = vst [vmem:[%s172 + $0x60] sm:$0xff] %v688
      %740 = vst [vmem:[%s172 + $0x68] sm:$0xff] %v690
      %741 = vst [vmem:[%s172 + $0x70] sm:$0xff] %v692
      %742 = vst [vmem:[%s172 + $0x78] sm:$0xff] %v694
      %743 = vst [vmem:[%s172 + $0x80] sm:$0xff] %v696
      %744 = vst [vmem:[%s172 + $0x88] sm:$0xff] %v698
      %745 = vst [vmem:[%s172 + $0x90] sm:$0xff] %v700
      %746 = vst [vmem:[%s172 + $0x98] sm:$0xff] %v702
      %747 = vst [vmem:[%s172 + $0xa0] sm:$0xff] %v704
      %748 = vst [vmem:[%s172 + $0xa8] sm:$0xff] %v706
      %749 = vst [vmem:[%s172 + $0xb0] sm:$0xff] %v708
      %750 = vst [vmem:[%s172 + $0xb8] sm:$0xff] %v710
      %751 = vst [vmem:[%s172 + $0xc0] sm:$0xff] %v712
      %752 = vst [vmem:[%s172 + $0xc8] sm:$0xff] %v714
      %753 = vst [vmem:[%s172 + $0xd0] sm:$0xff] %v716
      %754 = vst [vmem:[%s172 + $0xd8] sm:$0xff] %v718
      %755 = vst [vmem:[%s172 + $0xe0] sm:$0xff] %v720
      %756 = vst [vmem:[%s172 + $0xe8] sm:$0xff] %v722
      %757 = vst [vmem:[%s172 + $0xf0] sm:$0xff] %v724
      %758 = vst [vmem:[%s172 + $0xf8] sm:$0xff] %v726
      %s759 = smul.u32 32, %s14
      %p760 = scmp.lt.s32.totalorder %s759, 287
      %s761 = scalar_select %p760, %s759, 287
      %s762 = smul.addr %s761, 8
      %s763 = scalar_lea.vmem %s3, %s762
      // Predicated region
      $region33: #{vae_forward.23} parent=31 // pred_check
        %p764 = pneg %p100
      $region34: #{vae_forward.23} parent=31 // pred_check_branch
        %766 = sbr.rel (%p764) target = $region36
      $region35: #{vae_forward.23} parent=31 // pred_region
        %s767 = smul.u32 32, %s14
      $region36: #{vae_forward.23} parent=31 // pred_fallthru
        _
    $region32: #{vae_forward.23} parent=5 // pred_fallthru
      _
    %p768 = scmp.le.s32.totalorder 2, %s9
    // Predicated region
    $region37: #{vae_forward.23} parent=5 // pred_check
      %p769 = pneg %p768
    $region38: #{vae_forward.23} parent=5 // pred_check_branch
      %771 = sbr.rel (%p769) target = $region40
    $region39: #{vae_forward.23} parent=5 // pred_region
      %s772 = ssub.s32 %s9, 2
      // Predicated region
      $region41: #{vae_forward.23} parent=39 // pred_check
        %p773 = pneg %p106
      $region42: #{vae_forward.23} parent=39 // pred_check_branch
        %775 = sbr.rel (%p773) target = $region44
      $region43: #{vae_forward.23} parent=39 // pred_region
        %s776 = smul.u32 32, %s15
        %p777 = scmp.lt.s32.totalorder %s776, 287
        %s778 = scalar_select %p777, %s776, 287
        %s779 = smul.addr %s778, 8
        %s780 = scalar_lea.vmem %s3, %s779
      $region44: #{vae_forward.23} parent=39 // pred_fallthru
        _
    $region40: #{vae_forward.23} parent=5 // pred_fallthru
      _
  $region6: #{vae_forward.23} parent=0 // loop_footer
    %s13 = sadd.s32 1, %s9
  $region7: #{vae_forward.23} parent=0 // loop_footer_branch
    %8 = sbr.rel target = $region3
  $region8: #{vae_forward.23} parent=0 // loop_exit
    _

</llo_original>
